<compile_context>
chip_gen: v7x
topology: tpu7x:2x2x1
jax: 0.10.0
libtpu: 0.0.40
codegen_flags: <defaults>
</compile_context>

<pallas_src>
import functools

import jax
import jax.numpy as jnp
from jax.experimental import pallas as pl
from jax.experimental.pallas import tpu as pltpu

EPS = 1e-5          # nn.BatchNorm1d default eps
OUT_LANES = 128     # lane-dense width used for the position slabs / output


# ---------------------------------------------------------------------------
# In-kernel helper: BatchNorm1d (training mode, gamma=1, beta=0) + ReLU
# ---------------------------------------------------------------------------
def _bn_relu(x):
    mu = jnp.mean(x, axis=0, keepdims=True)
    var = jnp.mean((x - mu) ** 2, axis=0, keepdims=True)
    return jnp.maximum((x - mu) * jax.lax.rsqrt(var + EPS), 0.0)


# ---------------------------------------------------------------------------
# Fused decoder roll-out kernel: ONE invocation covers all pred_len steps
# ---------------------------------------------------------------------------
def _rollout_kernel(
    # initial state (already lane-padded on host)
    h0_ref, p0_ref, r0_ref,
    # LSTM (spatial_embedding folded into the input path, gate blocks 128-aligned)
    wx_ref, whh_ref, bg_ref,
    # hidden2pos (lane padded to OUT_LANES)
    hp_w_ref, hp_b_ref,
    # PoolHiddenNet (pse folded into mlp_pre_pool layer 1)
    wpos_ref, wph_ref, bpool_ref,
    pp2_w_ref, pp2_b_ref,
    # decoder MLP (column-split for the [h, pool_h] concat)
    m1_wh_ref, m1_wp_ref, m1_b_ref,
    m2_w_ref, m2_b_ref,
    # output slab (pred_len, batch, OUT_LANES)
    out_ref,
    *, seq_start_end, pred_len):
    f32 = jnp.float32
    HL = whh_ref.shape[0]            # 128-padded hidden width

    h = h0_ref[...]                  # (batch, HL)   padding lanes are 0
    c = jnp.zeros_like(h)
    last_pos = p0_ref[...]           # (batch, 128)  lanes >= 2 are 0
    prev_rel = r0_ref[...]           # (batch, 128)  lanes >= 2 are 0

    for t in range(pred_len):        # static unroll: pred_len is small
        # ---- LSTM cell (gate blocks are 128-lane aligned; order i,f,g,o) ----
        gates = (jnp.dot(prev_rel, wx_ref[...], preferred_element_type=f32)
                 + jnp.dot(h, whh_ref[...], preferred_element_type=f32)
                 + bg_ref[...])                      # (batch, 4*HL)
        i_g = jax.nn.sigmoid(gates[:, 0 * HL:1 * HL])
        f_g = jax.nn.sigmoid(gates[:, 1 * HL:2 * HL])
        g_g = jnp.tanh(gates[:, 2 * HL:3 * HL])
        o_g = jax.nn.sigmoid(gates[:, 3 * HL:4 * HL])
        c = f_g * c + i_g * g_g                      # padding lanes stay 0
        h_lstm = o_g * jnp.tanh(c)                   # padding lanes stay 0

        # ---- hidden2pos: lane-dense (batch,128), columns >= 2 exactly 0 -----
        rel_full = (jnp.dot(h_lstm, hp_w_ref[...], preferred_element_type=f32)
                    + hp_b_ref[...])
        curr_pos = rel_full + last_pos               # padding lanes stay 0

        # ---- PoolHiddenNet (batch-wide matmuls hoisted out of group loop) ---
        q_all = jnp.dot(curr_pos, wpos_ref[...], preferred_element_type=f32)
        a_all = (q_all
                 + jnp.dot(h_lstm, wph_ref[...], preferred_element_type=f32)
                 + bpool_ref[...])                   # (batch, 512)

        pool_rows = []
        for (s, e) in seq_start_end:                 # static group boundaries
            n = e - s
            q_g = q_all[s:e, :]
            a_g = a_all[s:e, :]
            # row (i*n + j) of pre1 = q[j] - q[i] + hh[j] + bias  (pure VPU)
            pre1 = jnp.concatenate(
                [a_g - q_g[i:i + 1, :] for i in range(n)], axis=0)   # (n*n,512)
            h1 = _bn_relu(pre1)                      # BN over the n*n rows
            h2 = _bn_relu(jnp.dot(h1, pp2_w_ref[...], preferred_element_type=f32)
                          + pp2_b_ref[...])          # (n*n, bottleneck)
            for i in range(n):                       # max over "other" axis j
                pool_rows.append(jnp.max(h2[i * n:(i + 1) * n, :],
                                         axis=0, keepdims=True))
        pool_h = jnp.concatenate(pool_rows, axis=0)  # (batch, bottleneck), in regs

        # ---- decoder MLP on [h_lstm, pool_h] (concat avoided via col split) -
        m1 = _bn_relu(jnp.dot(h_lstm, m1_wh_ref[...], preferred_element_type=f32)
                      + jnp.dot(pool_h, m1_wp_ref[...], preferred_element_type=f32)
                      + m1_b_ref[...])
        h = _bn_relu(jnp.dot(m1, m2_w_ref[...], preferred_element_type=f32)
                     + m2_b_ref[...])                # padding lanes stay 0

        # ---- static, lane-dense per-step store + carry update --------------
        out_ref[t] = rel_full
        last_pos = curr_pos
        prev_rel = rel_full


# ---------------------------------------------------------------------------
# Host-side wrapper
# ---------------------------------------------------------------------------
@functools.partial(jax.jit, static_argnums=(2, 5))
def trajectory_generator_st_forward(weights, decoder_h, seq_start_end,
                                    obs_traj, obs_traj_rel, pred_len):
    batch = obs_traj_rel.shape[1]
    h_dim = decoder_h.shape[2]
    h_lane = weights[1].shape[0]                  # whh : (HL, 4*HL)

    # Lane-pad the initial state once on the host side of the kernel.
    h0 = jnp.zeros((batch, h_lane), jnp.float32).at[:, :h_dim].set(decoder_h[0])
    p0 = jnp.zeros((batch, OUT_LANES), jnp.float32).at[:, :2].set(obs_traj[-1])
    r0 = jnp.zeros((batch, OUT_LANES), jnp.float32).at[:, :2].set(obs_traj_rel[-1])

    operands = (h0, p0, r0) + tuple(weights)
    kernel = functools.partial(_rollout_kernel,
                               seq_start_end=tuple(tuple(g) for g in seq_start_end),
                               pred_len=pred_len)

    vmem_spec = pl.BlockSpec(memory_space=pltpu.MemorySpace.VMEM)
    out = pl.pallas_call(
        kernel,
        out_shape=jax.ShapeDtypeStruct((pred_len, batch, OUT_LANES), jnp.float32),
        in_specs=[vmem_spec] * len(operands),
        out_specs=vmem_spec,
    )(*operands)

    return out[:, :, :2]                          # (pred_len, batch, 2)


# ---------------------------------------------------------------------------
# One-time weight preprocessing: transposes, folding, gate/lane padding.
# ---------------------------------------------------------------------------
def preprocess_params(p):
    f32 = jnp.float32
    E = p["se_w"].shape[0]
    H = p["whh"].shape[1]
    M = p["m1_w"].shape[0]
    HL = 128 * ((H + 127) // 128)                 # 128-padded hidden width

    def pad_rows(w, rows):
        return jnp.zeros((rows, w.shape[1]), f32).at[:w.shape[0], :].set(w)

    def gate_blocks(w):                           # (rows,4H) -> (rows,4*HL)
        out = jnp.zeros((w.shape[0], 4 * HL), f32)
        for g in range(4):                        # PyTorch gate order i,f,g,o
            out = out.at[:, g * HL:g * HL + H].set(w[:, g * H:(g + 1) * H])
        return out

    # LSTM: spatial_embedding(2->E) folded into the input->gates weight.
    wx = pad_rows(gate_blocks(p["se_w"].T @ p["wih"].T), OUT_LANES)     # (128,4HL)
    whh = pad_rows(gate_blocks(p["whh"].T), HL)                         # (HL,4HL)
    bg = gate_blocks((p["b_ih"] + p["b_hh"]
                      + p["se_b"] @ p["wih"].T)[None, :])               # (1,4HL)

    # hidden2pos, padded so the per-step store is a full (8,128) slab.
    hp_w = jnp.zeros((HL, OUT_LANES), f32).at[:H, :2].set(p["hp_w"].T)
    hp_b = jnp.zeros((1, OUT_LANES), f32).at[:, :2].set(p["hp_b"][None, :])

    # PoolHiddenNet: spatial_embedding folded into mlp_pre_pool layer 1.
    pp1_we = p["pp1_w"][:, :E]                    # (512, E)
    pp1_wh = p["pp1_w"][:, E:]                    # (512, H)
    wpos = pad_rows(p["pse_w"].T @ pp1_we.T, OUT_LANES)                 # (128,512)
    wph = pad_rows(pp1_wh.T, HL)                                        # (HL,512)
    bpool = (p["pp1_b"] + p["pse_b"] @ pp1_we.T)[None, :]               # (1,512)

    pp2_w = p["pp2_w"].T                                                # (512,B)
    pp2_b = p["pp2_b"][None, :]

    # Decoder MLP, hidden-input rows padded; output lane-padded back to HL.
    m1_wh = pad_rows(p["m1_w"][:, :H].T, HL)                            # (HL,M)
    m1_wp = p["m1_w"][:, H:].T                                          # (B,M)
    m1_b = p["m1_b"][None, :]
    m2_w = jnp.zeros((M, HL), f32).at[:, :H].set(p["m2_w"].T)           # (M,HL)
    m2_b = jnp.zeros((1, HL), f32).at[:, :H].set(p["m2_b"][None, :])

    return (wx, whh, bg, hp_w, hp_b, wpos, wph, bpool,
            pp2_w, pp2_b, m1_wh, m1_wp, m1_b, m2_w, m2_b)


# ---------------------------------------------------------------------------
# Deterministic parameter construction (PyTorch-style shapes / init)
# ---------------------------------------------------------------------------
def init_params(key, E, H, M, B, mid=512):
    keys = jax.random.split(key, 18)

    def u(k, shape, fan_in):
        bound = 1.0 / float(fan_in) ** 0.5
        return jax.random.uniform(k, shape, jnp.float32, -bound, bound)

    p = {}
    p["se_w"] = u(keys[0], (E, 2), 2)             # Decoder.spatial_embedding
    p["se_b"] = u(keys[1], (E,), 2)
    p["wih"] = u(keys[2], (4 * H, E), H)          # Decoder.decoder (LSTM)
    p["whh"] = u(keys[3], (4 * H, H), H)
    p["b_ih"] = u(keys[4], (4 * H,), H)
    p["b_hh"] = u(keys[5], (4 * H,), H)
    p["hp_w"] = u(keys[6], (2, H), H)             # Decoder.hidden2pos
    p["hp_b"] = u(keys[7], (2,), H)
    p["pse_w"] = u(keys[8], (E, 2), 2)            # PoolHiddenNet.spatial_embedding
    p["pse_b"] = u(keys[9], (E,), 2)
    p["pp1_w"] = u(keys[10], (mid, E + H), E + H)  # mlp_pre_pool [E+H, 512, B]
    p["pp1_b"] = u(keys[11], (mid,), E + H)
    p["pp2_w"] = u(keys[12], (B, mid), mid)
    p["pp2_b"] = u(keys[13], (B,), mid)
    p["m1_w"] = u(keys[14], (M, H + B), H + B)    # Decoder.mlp [H+B, M, H]
    p["m1_b"] = u(keys[15], (M,), H + B)
    p["m2_w"] = u(keys[16], (H, M), M)
    p["m2_b"] = u(keys[17], (H,), M)
    return p


# ---------------------------------------------------------------------------
# Pure-JAX reference (direct transcription of the PyTorch forward)
# ---------------------------------------------------------------------------
def reference_forward(p, decoder_h, seq_start_end, obs_traj, obs_traj_rel, pred_len):
    H = p["whh"].shape[1]
    h = decoder_h[0]
    c = jnp.zeros_like(h)
    last_pos = obs_traj[-1]
    prev_rel = obs_traj_rel[-1]
    outs = []
    for _ in range(pred_len):
        x = prev_rel @ p["se_w"].T + p["se_b"]
        gates = x @ p["wih"].T + p["b_ih"] + h @ p["whh"].T + p["b_hh"]
        i_g = jax.nn.sigmoid(gates[:, 0:H])
        f_g = jax.nn.sigmoid(gates[:, H:2 * H])
        g_g = jnp.tanh(gates[:, 2 * H:3 * H])
        o_g = jax.nn.sigmoid(gates[:, 3 * H:4 * H])
        c = f_g * c + i_g * g_g
        h_lstm = o_g * jnp.tanh(c)
        rel_pos = h_lstm @ p["hp_w"].T + p["hp_b"]
        curr_pos = rel_pos + last_pos
        pool = []
        for (s, e) in seq_start_end:
            n = e - s
            cur_h, cur_p = h_lstm[s:e], curr_pos[s:e]
            hid1 = jnp.tile(cur_h, (n, 1))
            pos1 = jnp.tile(cur_p, (n, 1))
            pos2 = jnp.repeat(cur_p, n, axis=0)
            emb = (pos1 - pos2) @ p["pse_w"].T + p["pse_b"]
            inp = jnp.concatenate([emb, hid1], axis=1)
            z1 = _bn_relu(inp @ p["pp1_w"].T + p["pp1_b"])
            z2 = _bn_relu(z1 @ p["pp2_w"].T + p["pp2_b"])
            pool.append(z2.reshape(n, n, -1).max(axis=1))
        pool_h = jnp.concatenate(pool, axis=0)
        dec_in = jnp.concatenate([h_lstm, pool_h], axis=1)
        m1 = _bn_relu(dec_in @ p["m1_w"].T + p["m1_b"])
        h = _bn_relu(m1 @ p["m2_w"].T + p["m2_b"])
        outs.append(rel_pos)
        last_pos = curr_pos
        prev_rel = rel_pos
    return jnp.stack(outs, axis=0)


# ---------------------------------------------------------------------------
# Main
# ---------------------------------------------------------------------------
if __name__ == "__main__":
    OBS_LEN = 4
    PRED_LEN = 3
    EMBEDDING_DIM = 16
    DECODER_H_DIM = 32
    MLP_DIM = 64
    BOTTLENECK_DIM = 32
    BATCH = 8
    SEQ_START_END = ((0, 4), (4, 8))   # two sequences of 4 pedestrians each

    key = jax.random.PRNGKey(0)
    k_param, k_h, k_traj, k_rel = jax.random.split(key, 4)

    raw_params = init_params(k_param, EMBEDDING_DIM, DECODER_H_DIM, MLP_DIM,
                             BOTTLENECK_DIM, mid=512)
    weights = preprocess_params(raw_params)       # hoisted: done once

    decoder_h = jax.random.normal(k_h, (1, BATCH, DECODER_H_DIM), jnp.float32)
    obs_traj = jax.random.normal(k_traj, (OBS_LEN, BATCH, 2), jnp.float32)
    obs_traj_rel = jax.random.normal(k_rel, (OBS_LEN, BATCH, 2), jnp.float32)

    pred_traj_fake_rel = trajectory_generator_st_forward(
        weights, decoder_h, SEQ_START_END, obs_traj, obs_traj_rel, PRED_LEN)
    pred_traj_fake_rel = jax.block_until_ready(pred_traj_fake_rel)

    assert pred_traj_fake_rel.shape == (PRED_LEN, BATCH, 2)
    assert bool(jnp.all(jnp.isfinite(pred_traj_fake_rel)))

    # Validate the folded / padded / vectorized kernel against a direct port.
    ref = reference_forward(raw_params, decoder_h, SEQ_START_END,
                            obs_traj, obs_traj_rel, PRED_LEN)
    max_err = float(jnp.max(jnp.abs(pred_traj_fake_rel - ref)))
    assert max_err < 1e-2, f"mismatch vs reference: {max_err}"

    print("KERNEL_OK")
</pallas_src>

<mosaic_0001>
module attributes {stable_mosaic.version = 11 : i64} {
  func.func @_rollout_kernel(%arg0: memref<8x128xf32, #tpu.memory_space<vmem>>, %arg1: memref<8x128xf32, #tpu.memory_space<vmem>>, %arg2: memref<8x128xf32, #tpu.memory_space<vmem>>, %arg3: memref<128x512xf32, #tpu.memory_space<vmem>>, %arg4: memref<128x512xf32, #tpu.memory_space<vmem>>, %arg5: memref<1x512xf32, #tpu.memory_space<vmem>>, %arg6: memref<128x128xf32, #tpu.memory_space<vmem>>, %arg7: memref<1x128xf32, #tpu.memory_space<vmem>>, %arg8: memref<128x512xf32, #tpu.memory_space<vmem>>, %arg9: memref<128x512xf32, #tpu.memory_space<vmem>>, %arg10: memref<1x512xf32, #tpu.memory_space<vmem>>, %arg11: memref<512x32xf32, #tpu.memory_space<vmem>>, %arg12: memref<1x32xf32, #tpu.memory_space<vmem>>, %arg13: memref<128x64xf32, #tpu.memory_space<vmem>>, %arg14: memref<32x64xf32, #tpu.memory_space<vmem>>, %arg15: memref<1x64xf32, #tpu.memory_space<vmem>>, %arg16: memref<64x128xf32, #tpu.memory_space<vmem>>, %arg17: memref<1x128xf32, #tpu.memory_space<vmem>>, %arg18: memref<3x8x128xf32, #tpu.memory_space<vmem>>) attributes {dimension_semantics = [], scalar_prefetch = 0 : i64, scratch_operands = 0 : i64, tpu.core_type = #tpu.core_type<tc>} {
    %c0 = arith.constant 0 : index
    %c0_0 = arith.constant 0 : index
    %0 = vector.load %arg0[%c0, %c0_0] : memref<8x128xf32, #tpu.memory_space<vmem>>, vector<8x128xf32>
    %cst = arith.constant 0.000000e+00 : f32
    %1 = vector.broadcast %cst : f32 to vector<8x128xf32>
    %c0_1 = arith.constant 0 : index
    %c0_2 = arith.constant 0 : index
    %2 = vector.load %arg1[%c0_1, %c0_2] : memref<8x128xf32, #tpu.memory_space<vmem>>, vector<8x128xf32>
    %c0_3 = arith.constant 0 : index
    %c0_4 = arith.constant 0 : index
    %3 = vector.load %arg2[%c0_3, %c0_4] : memref<8x128xf32, #tpu.memory_space<vmem>>, vector<8x128xf32>
    %c0_5 = arith.constant 0 : index
    %c0_6 = arith.constant 0 : index
    %4 = vector.load %arg3[%c0_5, %c0_6] : memref<128x512xf32, #tpu.memory_space<vmem>>, vector<128x512xf32>
    %cst_7 = arith.constant dense<0.000000e+00> : vector<8x512xf32>
    %5 = tpu.matmul %3, %4, %cst_7 {dimension_numbers = #tpu.dot_dimension_numbers<[1], [0], [0], [1], [0, 0, 1, 1], [], []>} : vector<8x128xf32>, vector<128x512xf32>, vector<8x512xf32> -> vector<8x512xf32>
    %c0_8 = arith.constant 0 : index
    %c0_9 = arith.constant 0 : index
    %6 = vector.load %arg4[%c0_8, %c0_9] : memref<128x512xf32, #tpu.memory_space<vmem>>, vector<128x512xf32>
    %cst_10 = arith.constant dense<0.000000e+00> : vector<8x512xf32>
    %7 = tpu.matmul %0, %6, %cst_10 {dimension_numbers = #tpu.dot_dimension_numbers<[1], [0], [0], [1], [0, 0, 1, 1], [], []>} : vector<8x128xf32>, vector<128x512xf32>, vector<8x512xf32> -> vector<8x512xf32>
    %8 = arith.addf %5, %7 : vector<8x512xf32>
    %c0_11 = arith.constant 0 : index
    %c0_12 = arith.constant 0 : index
    %9 = vector.load %arg5[%c0_11, %c0_12] : memref<1x512xf32, #tpu.memory_space<vmem>>, vector<1x512xf32>
    %10 = vector.broadcast %9 : vector<1x512xf32> to vector<8x512xf32>
    %11 = arith.addf %8, %10 : vector<8x512xf32>
    %12 = vector.extract_strided_slice %11 {offsets = [0, 0], sizes = [8, 128], strides = [1, 1]} : vector<8x512xf32> to vector<8x128xf32>
    %13 = arith.negf %12 : vector<8x128xf32>
    %14 = math.exp %13 : vector<8x128xf32>
    %cst_13 = arith.constant 1.000000e+00 : f32
    %15 = vector.broadcast %cst_13 : f32 to vector<8x128xf32>
    %16 = arith.addf %15, %14 : vector<8x128xf32>
    %17 = arith.divf %15, %16 : vector<8x128xf32>
    %18 = vector.extract_strided_slice %11 {offsets = [0, 128], sizes = [8, 128], strides = [1, 1]} : vector<8x512xf32> to vector<8x128xf32>
    %19 = arith.negf %18 : vector<8x128xf32>
    %20 = math.exp %19 : vector<8x128xf32>
    %cst_14 = arith.constant 1.000000e+00 : f32
    %21 = vector.broadcast %cst_14 : f32 to vector<8x128xf32>
    %22 = arith.addf %21, %20 : vector<8x128xf32>
    %23 = arith.divf %21, %22 : vector<8x128xf32>
    %24 = vector.extract_strided_slice %11 {offsets = [0, 256], sizes = [8, 128], strides = [1, 1]} : vector<8x512xf32> to vector<8x128xf32>
    %25 = math.tanh %24 : vector<8x128xf32>
    %26 = vector.extract_strided_slice %11 {offsets = [0, 384], sizes = [8, 128], strides = [1, 1]} : vector<8x512xf32> to vector<8x128xf32>
    %27 = arith.negf %26 : vector<8x128xf32>
    %28 = math.exp %27 : vector<8x128xf32>
    %cst_15 = arith.constant 1.000000e+00 : f32
    %29 = vector.broadcast %cst_15 : f32 to vector<8x128xf32>
    %30 = arith.addf %29, %28 : vector<8x128xf32>
    %31 = arith.divf %29, %30 : vector<8x128xf32>
    %32 = arith.mulf %23, %1 : vector<8x128xf32>
    %33 = arith.mulf %17, %25 : vector<8x128xf32>
    %34 = arith.addf %32, %33 : vector<8x128xf32>
    %35 = math.tanh %34 : vector<8x128xf32>
    %36 = arith.mulf %31, %35 : vector<8x128xf32>
    %c0_16 = arith.constant 0 : index
    %c0_17 = arith.constant 0 : index
    %37 = vector.load %arg6[%c0_16, %c0_17] : memref<128x128xf32, #tpu.memory_space<vmem>>, vector<128x128xf32>
    %cst_18 = arith.constant dense<0.000000e+00> : vector<8x128xf32>
    %38 = tpu.matmul %36, %37, %cst_18 {dimension_numbers = #tpu.dot_dimension_numbers<[1], [0], [0], [1], [0, 0, 1, 1], [], []>} : vector<8x128xf32>, vector<128x128xf32>, vector<8x128xf32> -> vector<8x128xf32>
    %c0_19 = arith.constant 0 : index
    %c0_20 = arith.constant 0 : index
    %39 = vector.load %arg7[%c0_19, %c0_20] : memref<1x128xf32, #tpu.memory_space<vmem>>, vector<1x128xf32>
    %40 = vector.broadcast %39 : vector<1x128xf32> to vector<8x128xf32>
    %41 = arith.addf %38, %40 : vector<8x128xf32>
    %42 = arith.addf %41, %2 : vector<8x128xf32>
    %c0_21 = arith.constant 0 : index
    %c0_22 = arith.constant 0 : index
    %43 = vector.load %arg8[%c0_21, %c0_22] : memref<128x512xf32, #tpu.memory_space<vmem>>, vector<128x512xf32>
    %cst_23 = arith.constant dense<0.000000e+00> : vector<8x512xf32>
    %44 = tpu.matmul %42, %43, %cst_23 {dimension_numbers = #tpu.dot_dimension_numbers<[1], [0], [0], [1], [0, 0, 1, 1], [], []>} : vector<8x128xf32>, vector<128x512xf32>, vector<8x512xf32> -> vector<8x512xf32>
    %c0_24 = arith.constant 0 : index
    %c0_25 = arith.constant 0 : index
    %45 = vector.load %arg9[%c0_24, %c0_25] : memref<128x512xf32, #tpu.memory_space<vmem>>, vector<128x512xf32>
    %cst_26 = arith.constant dense<0.000000e+00> : vector<8x512xf32>
    %46 = tpu.matmul %36, %45, %cst_26 {dimension_numbers = #tpu.dot_dimension_numbers<[1], [0], [0], [1], [0, 0, 1, 1], [], []>} : vector<8x128xf32>, vector<128x512xf32>, vector<8x512xf32> -> vector<8x512xf32>
    %47 = arith.addf %44, %46 : vector<8x512xf32>
    %c0_27 = arith.constant 0 : index
    %c0_28 = arith.constant 0 : index
    %48 = vector.load %arg10[%c0_27, %c0_28] : memref<1x512xf32, #tpu.memory_space<vmem>>, vector<1x512xf32>
    %49 = vector.broadcast %48 : vector<1x512xf32> to vector<8x512xf32>
    %50 = arith.addf %47, %49 : vector<8x512xf32>
    %51 = vector.extract_strided_slice %44 {offsets = [0, 0], sizes = [4, 512], strides = [1, 1]} : vector<8x512xf32> to vector<4x512xf32>
    %52 = vector.extract_strided_slice %50 {offsets = [0, 0], sizes = [4, 512], strides = [1, 1]} : vector<8x512xf32> to vector<4x512xf32>
    %53 = vector.extract_strided_slice %51 {offsets = [0, 0], sizes = [1, 512], strides = [1, 1]} : vector<4x512xf32> to vector<1x512xf32>
    %54 = vector.broadcast %53 : vector<1x512xf32> to vector<4x512xf32>
    %55 = arith.subf %52, %54 : vector<4x512xf32>
    %56 = vector.extract_strided_slice %51 {offsets = [1, 0], sizes = [1, 512], strides = [1, 1]} : vector<4x512xf32> to vector<1x512xf32>
    %57 = vector.broadcast %56 : vector<1x512xf32> to vector<4x512xf32>
    %58 = arith.subf %52, %57 : vector<4x512xf32>
    %59 = vector.extract_strided_slice %51 {offsets = [2, 0], sizes = [1, 512], strides = [1, 1]} : vector<4x512xf32> to vector<1x512xf32>
    %60 = vector.broadcast %59 : vector<1x512xf32> to vector<4x512xf32>
    %61 = arith.subf %52, %60 : vector<4x512xf32>
    %62 = vector.extract_strided_slice %51 {offsets = [3, 0], sizes = [1, 512], strides = [1, 1]} : vector<4x512xf32> to vector<1x512xf32>
    %63 = vector.broadcast %62 : vector<1x512xf32> to vector<4x512xf32>
    %64 = arith.subf %52, %63 : vector<4x512xf32>
    %65 = tpu.concatenate %55, %58, %61, %64 in 0 : vector<4x512xf32>, vector<4x512xf32>, vector<4x512xf32>, vector<4x512xf32> -> vector<16x512xf32>
    %cst_29 = arith.constant dense<0.000000e+00> : vector<512xf32>
    %66 = vector.multi_reduction <add>, %65, %cst_29 [0] : vector<16x512xf32> to vector<512xf32>
    %67 = vector.shape_cast %66 : vector<512xf32> to vector<1x512xf32>
    %cst_30 = arith.constant 1.600000e+01 : f32
    %68 = vector.broadcast %cst_30 : f32 to vector<1x512xf32>
    %69 = arith.divf %67, %68 : vector<1x512xf32>
    %70 = vector.broadcast %69 : vector<1x512xf32> to vector<16x512xf32>
    %71 = arith.subf %65, %70 : vector<16x512xf32>
    %72 = arith.mulf %71, %71 : vector<16x512xf32>
    %cst_31 = arith.constant dense<0.000000e+00> : vector<512xf32>
    %73 = vector.multi_reduction <add>, %72, %cst_31 [0] : vector<16x512xf32> to vector<512xf32>
    %74 = vector.shape_cast %73 : vector<512xf32> to vector<1x512xf32>
    %cst_32 = arith.constant 1.600000e+01 : f32
    %75 = vector.broadcast %cst_32 : f32 to vector<1x512xf32>
    %76 = arith.divf %74, %75 : vector<1x512xf32>
    %77 = vector.broadcast %69 : vector<1x512xf32> to vector<16x512xf32>
    %78 = arith.subf %65, %77 : vector<16x512xf32>
    %cst_33 = arith.constant 9.99999974E-6 : f32
    %79 = vector.broadcast %cst_33 : f32 to vector<1x512xf32>
    %80 = arith.addf %76, %79 : vector<1x512xf32>
    %81 = math.rsqrt %80 : vector<1x512xf32>
    %82 = vector.broadcast %81 : vector<1x512xf32> to vector<16x512xf32>
    %83 = arith.mulf %78, %82 : vector<16x512xf32>
    %cst_34 = arith.constant 0.000000e+00 : f32
    %84 = vector.broadcast %cst_34 : f32 to vector<16x512xf32>
    %85 = arith.maximumf %83, %84 : vector<16x512xf32>
    %c0_35 = arith.constant 0 : index
    %c0_36 = arith.constant 0 : index
    %86 = vector.load %arg11[%c0_35, %c0_36] : memref<512x32xf32, #tpu.memory_space<vmem>>, vector<512x32xf32>
    %cst_37 = arith.constant dense<0.000000e+00> : vector<16x32xf32>
    %87 = tpu.matmul %85, %86, %cst_37 {dimension_numbers = #tpu.dot_dimension_numbers<[1], [0], [0], [1], [0, 0, 1, 1], [], []>} : vector<16x512xf32>, vector<512x32xf32>, vector<16x32xf32> -> vector<16x32xf32>
    %c0_38 = arith.constant 0 : index
    %c0_39 = arith.constant 0 : index
    %88 = vector.load %arg12[%c0_38, %c0_39] : memref<1x32xf32, #tpu.memory_space<vmem>>, vector<1x32xf32>
    %89 = vector.broadcast %88 : vector<1x32xf32> to vector<16x32xf32>
    %90 = arith.addf %87, %89 : vector<16x32xf32>
    %cst_40 = arith.constant dense<0.000000e+00> : vector<32xf32>
    %91 = vector.multi_reduction <add>, %90, %cst_40 [0] : vector<16x32xf32> to vector<32xf32>
    %92 = vector.shape_cast %91 : vector<32xf32> to vector<1x32xf32>
    %cst_41 = arith.constant 1.600000e+01 : f32
    %93 = vector.broadcast %cst_41 : f32 to vector<1x32xf32>
    %94 = arith.divf %92, %93 : vector<1x32xf32>
    %95 = vector.broadcast %94 : vector<1x32xf32> to vector<16x32xf32>
    %96 = arith.subf %90, %95 : vector<16x32xf32>
    %97 = arith.mulf %96, %96 : vector<16x32xf32>
    %cst_42 = arith.constant dense<0.000000e+00> : vector<32xf32>
    %98 = vector.multi_reduction <add>, %97, %cst_42 [0] : vector<16x32xf32> to vector<32xf32>
    %99 = vector.shape_cast %98 : vector<32xf32> to vector<1x32xf32>
    %cst_43 = arith.constant 1.600000e+01 : f32
    %100 = vector.broadcast %cst_43 : f32 to vector<1x32xf32>
    %101 = arith.divf %99, %100 : vector<1x32xf32>
    %102 = vector.broadcast %94 : vector<1x32xf32> to vector<16x32xf32>
    %103 = arith.subf %90, %102 : vector<16x32xf32>
    %cst_44 = arith.constant 9.99999974E-6 : f32
    %104 = vector.broadcast %cst_44 : f32 to vector<1x32xf32>
    %105 = arith.addf %101, %104 : vector<1x32xf32>
    %106 = math.rsqrt %105 : vector<1x32xf32>
    %107 = vector.broadcast %106 : vector<1x32xf32> to vector<16x32xf32>
    %108 = arith.mulf %103, %107 : vector<16x32xf32>
    %cst_45 = arith.constant 0.000000e+00 : f32
    %109 = vector.broadcast %cst_45 : f32 to vector<16x32xf32>
    %110 = arith.maximumf %108, %109 : vector<16x32xf32>
    %111 = vector.extract_strided_slice %110 {offsets = [0, 0], sizes = [4, 32], strides = [1, 1]} : vector<16x32xf32> to vector<4x32xf32>
    %cst_46 = arith.constant dense<0xFF800000> : vector<32xf32>
    %112 = vector.multi_reduction <maximumf>, %111, %cst_46 [0] : vector<4x32xf32> to vector<32xf32>
    %113 = vector.shape_cast %112 : vector<32xf32> to vector<1x32xf32>
    %114 = vector.extract_strided_slice %110 {offsets = [4, 0], sizes = [4, 32], strides = [1, 1]} : vector<16x32xf32> to vector<4x32xf32>
    %cst_47 = arith.constant dense<0xFF800000> : vector<32xf32>
    %115 = vector.multi_reduction <maximumf>, %114, %cst_47 [0] : vector<4x32xf32> to vector<32xf32>
    %116 = vector.shape_cast %115 : vector<32xf32> to vector<1x32xf32>
    %117 = vector.extract_strided_slice %110 {offsets = [8, 0], sizes = [4, 32], strides = [1, 1]} : vector<16x32xf32> to vector<4x32xf32>
    %cst_48 = arith.constant dense<0xFF800000> : vector<32xf32>
    %118 = vector.multi_reduction <maximumf>, %117, %cst_48 [0] : vector<4x32xf32> to vector<32xf32>
    %119 = vector.shape_cast %118 : vector<32xf32> to vector<1x32xf32>
    %120 = vector.extract_strided_slice %110 {offsets = [12, 0], sizes = [4, 32], strides = [1, 1]} : vector<16x32xf32> to vector<4x32xf32>
    %cst_49 = arith.constant dense<0xFF800000> : vector<32xf32>
    %121 = vector.multi_reduction <maximumf>, %120, %cst_49 [0] : vector<4x32xf32> to vector<32xf32>
    %122 = vector.shape_cast %121 : vector<32xf32> to vector<1x32xf32>
    %123 = vector.extract_strided_slice %44 {offsets = [4, 0], sizes = [4, 512], strides = [1, 1]} : vector<8x512xf32> to vector<4x512xf32>
    %124 = vector.extract_strided_slice %50 {offsets = [4, 0], sizes = [4, 512], strides = [1, 1]} : vector<8x512xf32> to vector<4x512xf32>
    %125 = vector.extract_strided_slice %123 {offsets = [0, 0], sizes = [1, 512], strides = [1, 1]} : vector<4x512xf32> to vector<1x512xf32>
    %126 = vector.broadcast %125 : vector<1x512xf32> to vector<4x512xf32>
    %127 = arith.subf %124, %126 : vector<4x512xf32>
    %128 = vector.extract_strided_slice %123 {offsets = [1, 0], sizes = [1, 512], strides = [1, 1]} : vector<4x512xf32> to vector<1x512xf32>
    %129 = vector.broadcast %128 : vector<1x512xf32> to vector<4x512xf32>
    %130 = arith.subf %124, %129 : vector<4x512xf32>
    %131 = vector.extract_strided_slice %123 {offsets = [2, 0], sizes = [1, 512], strides = [1, 1]} : vector<4x512xf32> to vector<1x512xf32>
    %132 = vector.broadcast %131 : vector<1x512xf32> to vector<4x512xf32>
    %133 = arith.subf %124, %132 : vector<4x512xf32>
    %134 = vector.extract_strided_slice %123 {offsets = [3, 0], sizes = [1, 512], strides = [1, 1]} : vector<4x512xf32> to vector<1x512xf32>
    %135 = vector.broadcast %134 : vector<1x512xf32> to vector<4x512xf32>
    %136 = arith.subf %124, %135 : vector<4x512xf32>
    %137 = tpu.concatenate %127, %130, %133, %136 in 0 : vector<4x512xf32>, vector<4x512xf32>, vector<4x512xf32>, vector<4x512xf32> -> vector<16x512xf32>
    %cst_50 = arith.constant dense<0.000000e+00> : vector<512xf32>
    %138 = vector.multi_reduction <add>, %137, %cst_50 [0] : vector<16x512xf32> to vector<512xf32>
    %139 = vector.shape_cast %138 : vector<512xf32> to vector<1x512xf32>
    %cst_51 = arith.constant 1.600000e+01 : f32
    %140 = vector.broadcast %cst_51 : f32 to vector<1x512xf32>
    %141 = arith.divf %139, %140 : vector<1x512xf32>
    %142 = vector.broadcast %141 : vector<1x512xf32> to vector<16x512xf32>
    %143 = arith.subf %137, %142 : vector<16x512xf32>
    %144 = arith.mulf %143, %143 : vector<16x512xf32>
    %cst_52 = arith.constant dense<0.000000e+00> : vector<512xf32>
    %145 = vector.multi_reduction <add>, %144, %cst_52 [0] : vector<16x512xf32> to vector<512xf32>
    %146 = vector.shape_cast %145 : vector<512xf32> to vector<1x512xf32>
    %cst_53 = arith.constant 1.600000e+01 : f32
    %147 = vector.broadcast %cst_53 : f32 to vector<1x512xf32>
    %148 = arith.divf %146, %147 : vector<1x512xf32>
    %149 = vector.broadcast %141 : vector<1x512xf32> to vector<16x512xf32>
    %150 = arith.subf %137, %149 : vector<16x512xf32>
    %cst_54 = arith.constant 9.99999974E-6 : f32
    %151 = vector.broadcast %cst_54 : f32 to vector<1x512xf32>
    %152 = arith.addf %148, %151 : vector<1x512xf32>
    %153 = math.rsqrt %152 : vector<1x512xf32>
    %154 = vector.broadcast %153 : vector<1x512xf32> to vector<16x512xf32>
    %155 = arith.mulf %150, %154 : vector<16x512xf32>
    %cst_55 = arith.constant 0.000000e+00 : f32
    %156 = vector.broadcast %cst_55 : f32 to vector<16x512xf32>
    %157 = arith.maximumf %155, %156 : vector<16x512xf32>
    %c0_56 = arith.constant 0 : index
    %c0_57 = arith.constant 0 : index
    %158 = vector.load %arg11[%c0_56, %c0_57] : memref<512x32xf32, #tpu.memory_space<vmem>>, vector<512x32xf32>
    %cst_58 = arith.constant dense<0.000000e+00> : vector<16x32xf32>
    %159 = tpu.matmul %157, %158, %cst_58 {dimension_numbers = #tpu.dot_dimension_numbers<[1], [0], [0], [1], [0, 0, 1, 1], [], []>} : vector<16x512xf32>, vector<512x32xf32>, vector<16x32xf32> -> vector<16x32xf32>
    %c0_59 = arith.constant 0 : index
    %c0_60 = arith.constant 0 : index
    %160 = vector.load %arg12[%c0_59, %c0_60] : memref<1x32xf32, #tpu.memory_space<vmem>>, vector<1x32xf32>
    %161 = vector.broadcast %160 : vector<1x32xf32> to vector<16x32xf32>
    %162 = arith.addf %159, %161 : vector<16x32xf32>
    %cst_61 = arith.constant dense<0.000000e+00> : vector<32xf32>
    %163 = vector.multi_reduction <add>, %162, %cst_61 [0] : vector<16x32xf32> to vector<32xf32>
    %164 = vector.shape_cast %163 : vector<32xf32> to vector<1x32xf32>
    %cst_62 = arith.constant 1.600000e+01 : f32
    %165 = vector.broadcast %cst_62 : f32 to vector<1x32xf32>
    %166 = arith.divf %164, %165 : vector<1x32xf32>
    %167 = vector.broadcast %166 : vector<1x32xf32> to vector<16x32xf32>
    %168 = arith.subf %162, %167 : vector<16x32xf32>
    %169 = arith.mulf %168, %168 : vector<16x32xf32>
    %cst_63 = arith.constant dense<0.000000e+00> : vector<32xf32>
    %170 = vector.multi_reduction <add>, %169, %cst_63 [0] : vector<16x32xf32> to vector<32xf32>
    %171 = vector.shape_cast %170 : vector<32xf32> to vector<1x32xf32>
    %cst_64 = arith.constant 1.600000e+01 : f32
    %172 = vector.broadcast %cst_64 : f32 to vector<1x32xf32>
    %173 = arith.divf %171, %172 : vector<1x32xf32>
    %174 = vector.broadcast %166 : vector<1x32xf32> to vector<16x32xf32>
    %175 = arith.subf %162, %174 : vector<16x32xf32>
    %cst_65 = arith.constant 9.99999974E-6 : f32
    %176 = vector.broadcast %cst_65 : f32 to vector<1x32xf32>
    %177 = arith.addf %173, %176 : vector<1x32xf32>
    %178 = math.rsqrt %177 : vector<1x32xf32>
    %179 = vector.broadcast %178 : vector<1x32xf32> to vector<16x32xf32>
    %180 = arith.mulf %175, %179 : vector<16x32xf32>
    %cst_66 = arith.constant 0.000000e+00 : f32
    %181 = vector.broadcast %cst_66 : f32 to vector<16x32xf32>
    %182 = arith.maximumf %180, %181 : vector<16x32xf32>
    %183 = vector.extract_strided_slice %182 {offsets = [0, 0], sizes = [4, 32], strides = [1, 1]} : vector<16x32xf32> to vector<4x32xf32>
    %cst_67 = arith.constant dense<0xFF800000> : vector<32xf32>
    %184 = vector.multi_reduction <maximumf>, %183, %cst_67 [0] : vector<4x32xf32> to vector<32xf32>
    %185 = vector.shape_cast %184 : vector<32xf32> to vector<1x32xf32>
    %186 = vector.extract_strided_slice %182 {offsets = [4, 0], sizes = [4, 32], strides = [1, 1]} : vector<16x32xf32> to vector<4x32xf32>
    %cst_68 = arith.constant dense<0xFF800000> : vector<32xf32>
    %187 = vector.multi_reduction <maximumf>, %186, %cst_68 [0] : vector<4x32xf32> to vector<32xf32>
    %188 = vector.shape_cast %187 : vector<32xf32> to vector<1x32xf32>
    %189 = vector.extract_strided_slice %182 {offsets = [8, 0], sizes = [4, 32], strides = [1, 1]} : vector<16x32xf32> to vector<4x32xf32>
    %cst_69 = arith.constant dense<0xFF800000> : vector<32xf32>
    %190 = vector.multi_reduction <maximumf>, %189, %cst_69 [0] : vector<4x32xf32> to vector<32xf32>
    %191 = vector.shape_cast %190 : vector<32xf32> to vector<1x32xf32>
    %192 = vector.extract_strided_slice %182 {offsets = [12, 0], sizes = [4, 32], strides = [1, 1]} : vector<16x32xf32> to vector<4x32xf32>
    %cst_70 = arith.constant dense<0xFF800000> : vector<32xf32>
    %193 = vector.multi_reduction <maximumf>, %192, %cst_70 [0] : vector<4x32xf32> to vector<32xf32>
    %194 = vector.shape_cast %193 : vector<32xf32> to vector<1x32xf32>
    %195 = tpu.concatenate %113, %116, %119, %122, %185, %188, %191, %194 in 0 : vector<1x32xf32>, vector<1x32xf32>, vector<1x32xf32>, vector<1x32xf32>, vector<1x32xf32>, vector<1x32xf32>, vector<1x32xf32>, vector<1x32xf32> -> vector<8x32xf32>
    %c0_71 = arith.constant 0 : index
    %c0_72 = arith.constant 0 : index
    %196 = vector.load %arg13[%c0_71, %c0_72] : memref<128x64xf32, #tpu.memory_space<vmem>>, vector<128x64xf32>
    %cst_73 = arith.constant dense<0.000000e+00> : vector<8x64xf32>
    %197 = tpu.matmul %36, %196, %cst_73 {dimension_numbers = #tpu.dot_dimension_numbers<[1], [0], [0], [1], [0, 0, 1, 1], [], []>} : vector<8x128xf32>, vector<128x64xf32>, vector<8x64xf32> -> vector<8x64xf32>
    %c0_74 = arith.constant 0 : index
    %c0_75 = arith.constant 0 : index
    %198 = vector.load %arg14[%c0_74, %c0_75] : memref<32x64xf32, #tpu.memory_space<vmem>>, vector<32x64xf32>
    %cst_76 = arith.constant dense<0.000000e+00> : vector<8x64xf32>
    %199 = tpu.matmul %195, %198, %cst_76 {dimension_numbers = #tpu.dot_dimension_numbers<[1], [0], [0], [1], [0, 0, 1, 1], [], []>} : vector<8x32xf32>, vector<32x64xf32>, vector<8x64xf32> -> vector<8x64xf32>
    %200 = arith.addf %197, %199 : vector<8x64xf32>
    %c0_77 = arith.constant 0 : index
    %c0_78 = arith.constant 0 : index
    %201 = vector.load %arg15[%c0_77, %c0_78] : memref<1x64xf32, #tpu.memory_space<vmem>>, vector<1x64xf32>
    %202 = vector.broadcast %201 : vector<1x64xf32> to vector<8x64xf32>
    %203 = arith.addf %200, %202 : vector<8x64xf32>
    %cst_79 = arith.constant dense<0.000000e+00> : vector<64xf32>
    %204 = vector.multi_reduction <add>, %203, %cst_79 [0] : vector<8x64xf32> to vector<64xf32>
    %205 = vector.shape_cast %204 : vector<64xf32> to vector<1x64xf32>
    %cst_80 = arith.constant 8.000000e+00 : f32
    %206 = vector.broadcast %cst_80 : f32 to vector<1x64xf32>
    %207 = arith.divf %205, %206 : vector<1x64xf32>
    %208 = vector.broadcast %207 : vector<1x64xf32> to vector<8x64xf32>
    %209 = arith.subf %203, %208 : vector<8x64xf32>
    %210 = arith.mulf %209, %209 : vector<8x64xf32>
    %cst_81 = arith.constant dense<0.000000e+00> : vector<64xf32>
    %211 = vector.multi_reduction <add>, %210, %cst_81 [0] : vector<8x64xf32> to vector<64xf32>
    %212 = vector.shape_cast %211 : vector<64xf32> to vector<1x64xf32>
    %cst_82 = arith.constant 8.000000e+00 : f32
    %213 = vector.broadcast %cst_82 : f32 to vector<1x64xf32>
    %214 = arith.divf %212, %213 : vector<1x64xf32>
    %215 = vector.broadcast %207 : vector<1x64xf32> to vector<8x64xf32>
    %216 = arith.subf %203, %215 : vector<8x64xf32>
    %cst_83 = arith.constant 9.99999974E-6 : f32
    %217 = vector.broadcast %cst_83 : f32 to vector<1x64xf32>
    %218 = arith.addf %214, %217 : vector<1x64xf32>
    %219 = math.rsqrt %218 : vector<1x64xf32>
    %220 = vector.broadcast %219 : vector<1x64xf32> to vector<8x64xf32>
    %221 = arith.mulf %216, %220 : vector<8x64xf32>
    %cst_84 = arith.constant 0.000000e+00 : f32
    %222 = vector.broadcast %cst_84 : f32 to vector<8x64xf32>
    %223 = arith.maximumf %221, %222 : vector<8x64xf32>
    %c0_85 = arith.constant 0 : index
    %c0_86 = arith.constant 0 : index
    %224 = vector.load %arg16[%c0_85, %c0_86] : memref<64x128xf32, #tpu.memory_space<vmem>>, vector<64x128xf32>
    %cst_87 = arith.constant dense<0.000000e+00> : vector<8x128xf32>
    %225 = tpu.matmul %223, %224, %cst_87 {dimension_numbers = #tpu.dot_dimension_numbers<[1], [0], [0], [1], [0, 0, 1, 1], [], []>} : vector<8x64xf32>, vector<64x128xf32>, vector<8x128xf32> -> vector<8x128xf32>
    %c0_88 = arith.constant 0 : index
    %c0_89 = arith.constant 0 : index
    %226 = vector.load %arg17[%c0_88, %c0_89] : memref<1x128xf32, #tpu.memory_space<vmem>>, vector<1x128xf32>
    %227 = vector.broadcast %226 : vector<1x128xf32> to vector<8x128xf32>
    %228 = arith.addf %225, %227 : vector<8x128xf32>
    %cst_90 = arith.constant dense<0.000000e+00> : vector<128xf32>
    %229 = vector.multi_reduction <add>, %228, %cst_90 [0] : vector<8x128xf32> to vector<128xf32>
    %230 = vector.shape_cast %229 : vector<128xf32> to vector<1x128xf32>
    %cst_91 = arith.constant 8.000000e+00 : f32
    %231 = vector.broadcast %cst_91 : f32 to vector<1x128xf32>
    %232 = arith.divf %230, %231 : vector<1x128xf32>
    %233 = vector.broadcast %232 : vector<1x128xf32> to vector<8x128xf32>
    %234 = arith.subf %228, %233 : vector<8x128xf32>
    %235 = arith.mulf %234, %234 : vector<8x128xf32>
    %cst_92 = arith.constant dense<0.000000e+00> : vector<128xf32>
    %236 = vector.multi_reduction <add>, %235, %cst_92 [0] : vector<8x128xf32> to vector<128xf32>
    %237 = vector.shape_cast %236 : vector<128xf32> to vector<1x128xf32>
    %cst_93 = arith.constant 8.000000e+00 : f32
    %238 = vector.broadcast %cst_93 : f32 to vector<1x128xf32>
    %239 = arith.divf %237, %238 : vector<1x128xf32>
    %240 = vector.broadcast %232 : vector<1x128xf32> to vector<8x128xf32>
    %241 = arith.subf %228, %240 : vector<8x128xf32>
    %cst_94 = arith.constant 9.99999974E-6 : f32
    %242 = vector.broadcast %cst_94 : f32 to vector<1x128xf32>
    %243 = arith.addf %239, %242 : vector<1x128xf32>
    %244 = math.rsqrt %243 : vector<1x128xf32>
    %245 = vector.broadcast %244 : vector<1x128xf32> to vector<8x128xf32>
    %246 = arith.mulf %241, %245 : vector<8x128xf32>
    %cst_95 = arith.constant 0.000000e+00 : f32
    %247 = vector.broadcast %cst_95 : f32 to vector<8x128xf32>
    %248 = arith.maximumf %246, %247 : vector<8x128xf32>
    %c0_96 = arith.constant 0 : index
    %c0_97 = arith.constant 0 : index
    %c0_98 = arith.constant 0 : index
    %249 = vector.load %arg18[%c0_96, %c0_97, %c0_98] : memref<3x8x128xf32, #tpu.memory_space<vmem>>, vector<1x8x128xf32>
    %250 = vector.shape_cast %249 : vector<1x8x128xf32> to vector<8x128xf32>
    %251 = vector.shape_cast %41 : vector<8x128xf32> to vector<1x8x128xf32>
    tpu.vector_store %arg18[%c0_96, %c0_97, %c0_98], %251 {strides = array<i32>} : memref<3x8x128xf32, #tpu.memory_space<vmem>>, vector<1x8x128xf32>,
    %c0_99 = arith.constant 0 : index
    %c0_100 = arith.constant 0 : index
    %252 = vector.load %arg3[%c0_99, %c0_100] : memref<128x512xf32, #tpu.memory_space<vmem>>, vector<128x512xf32>
    %cst_101 = arith.constant dense<0.000000e+00> : vector<8x512xf32>
    %253 = tpu.matmul %41, %252, %cst_101 {dimension_numbers = #tpu.dot_dimension_numbers<[1], [0], [0], [1], [0, 0, 1, 1], [], []>} : vector<8x128xf32>, vector<128x512xf32>, vector<8x512xf32> -> vector<8x512xf32>
    %c0_102 = arith.constant 0 : index
    %c0_103 = arith.constant 0 : index
    %254 = vector.load %arg4[%c0_102, %c0_103] : memref<128x512xf32, #tpu.memory_space<vmem>>, vector<128x512xf32>
    %cst_104 = arith.constant dense<0.000000e+00> : vector<8x512xf32>
    %255 = tpu.matmul %248, %254, %cst_104 {dimension_numbers = #tpu.dot_dimension_numbers<[1], [0], [0], [1], [0, 0, 1, 1], [], []>} : vector<8x128xf32>, vector<128x512xf32>, vector<8x512xf32> -> vector<8x512xf32>
    %256 = arith.addf %253, %255 : vector<8x512xf32>
    %c0_105 = arith.constant 0 : index
    %c0_106 = arith.constant 0 : index
    %257 = vector.load %arg5[%c0_105, %c0_106] : memref<1x512xf32, #tpu.memory_space<vmem>>, vector<1x512xf32>
    %258 = vector.broadcast %257 : vector<1x512xf32> to vector<8x512xf32>
    %259 = arith.addf %256, %258 : vector<8x512xf32>
    %260 = vector.extract_strided_slice %259 {offsets = [0, 0], sizes = [8, 128], strides = [1, 1]} : vector<8x512xf32> to vector<8x128xf32>
    %261 = arith.negf %260 : vector<8x128xf32>
    %262 = math.exp %261 : vector<8x128xf32>
    %cst_107 = arith.constant 1.000000e+00 : f32
    %263 = vector.broadcast %cst_107 : f32 to vector<8x128xf32>
    %264 = arith.addf %263, %262 : vector<8x128xf32>
    %265 = arith.divf %263, %264 : vector<8x128xf32>
    %266 = vector.extract_strided_slice %259 {offsets = [0, 128], sizes = [8, 128], strides = [1, 1]} : vector<8x512xf32> to vector<8x128xf32>
    %267 = arith.negf %266 : vector<8x128xf32>
    %268 = math.exp %267 : vector<8x128xf32>
    %cst_108 = arith.constant 1.000000e+00 : f32
    %269 = vector.broadcast %cst_108 : f32 to vector<8x128xf32>
    %270 = arith.addf %269, %268 : vector<8x128xf32>
    %271 = arith.divf %269, %270 : vector<8x128xf32>
    %272 = vector.extract_strided_slice %259 {offsets = [0, 256], sizes = [8, 128], strides = [1, 1]} : vector<8x512xf32> to vector<8x128xf32>
    %273 = math.tanh %272 : vector<8x128xf32>
    %274 = vector.extract_strided_slice %259 {offsets = [0, 384], sizes = [8, 128], strides = [1, 1]} : vector<8x512xf32> to vector<8x128xf32>
    %275 = arith.negf %274 : vector<8x128xf32>
    %276 = math.exp %275 : vector<8x128xf32>
    %cst_109 = arith.constant 1.000000e+00 : f32
    %277 = vector.broadcast %cst_109 : f32 to vector<8x128xf32>
    %278 = arith.addf %277, %276 : vector<8x128xf32>
    %279 = arith.divf %277, %278 : vector<8x128xf32>
    %280 = arith.mulf %271, %34 : vector<8x128xf32>
    %281 = arith.mulf %265, %273 : vector<8x128xf32>
    %282 = arith.addf %280, %281 : vector<8x128xf32>
    %283 = math.tanh %282 : vector<8x128xf32>
    %284 = arith.mulf %279, %283 : vector<8x128xf32>
    %c0_110 = arith.constant 0 : index
    %c0_111 = arith.constant 0 : index
    %285 = vector.load %arg6[%c0_110, %c0_111] : memref<128x128xf32, #tpu.memory_space<vmem>>, vector<128x128xf32>
    %cst_112 = arith.constant dense<0.000000e+00> : vector<8x128xf32>
    %286 = tpu.matmul %284, %285, %cst_112 {dimension_numbers = #tpu.dot_dimension_numbers<[1], [0], [0], [1], [0, 0, 1, 1], [], []>} : vector<8x128xf32>, vector<128x128xf32>, vector<8x128xf32> -> vector<8x128xf32>
    %c0_113 = arith.constant 0 : index
    %c0_114 = arith.constant 0 : index
    %287 = vector.load %arg7[%c0_113, %c0_114] : memref<1x128xf32, #tpu.memory_space<vmem>>, vector<1x128xf32>
    %288 = vector.broadcast %287 : vector<1x128xf32> to vector<8x128xf32>
    %289 = arith.addf %286, %288 : vector<8x128xf32>
    %290 = arith.addf %289, %42 : vector<8x128xf32>
    %c0_115 = arith.constant 0 : index
    %c0_116 = arith.constant 0 : index
    %291 = vector.load %arg8[%c0_115, %c0_116] : memref<128x512xf32, #tpu.memory_space<vmem>>, vector<128x512xf32>
    %cst_117 = arith.constant dense<0.000000e+00> : vector<8x512xf32>
    %292 = tpu.matmul %290, %291, %cst_117 {dimension_numbers = #tpu.dot_dimension_numbers<[1], [0], [0], [1], [0, 0, 1, 1], [], []>} : vector<8x128xf32>, vector<128x512xf32>, vector<8x512xf32> -> vector<8x512xf32>
    %c0_118 = arith.constant 0 : index
    %c0_119 = arith.constant 0 : index
    %293 = vector.load %arg9[%c0_118, %c0_119] : memref<128x512xf32, #tpu.memory_space<vmem>>, vector<128x512xf32>
    %cst_120 = arith.constant dense<0.000000e+00> : vector<8x512xf32>
    %294 = tpu.matmul %284, %293, %cst_120 {dimension_numbers = #tpu.dot_dimension_numbers<[1], [0], [0], [1], [0, 0, 1, 1], [], []>} : vector<8x128xf32>, vector<128x512xf32>, vector<8x512xf32> -> vector<8x512xf32>
    %295 = arith.addf %292, %294 : vector<8x512xf32>
    %c0_121 = arith.constant 0 : index
    %c0_122 = arith.constant 0 : index
    %296 = vector.load %arg10[%c0_121, %c0_122] : memref<1x512xf32, #tpu.memory_space<vmem>>, vector<1x512xf32>
    %297 = vector.broadcast %296 : vector<1x512xf32> to vector<8x512xf32>
    %298 = arith.addf %295, %297 : vector<8x512xf32>
    %299 = vector.extract_strided_slice %292 {offsets = [0, 0], sizes = [4, 512], strides = [1, 1]} : vector<8x512xf32> to vector<4x512xf32>
    %300 = vector.extract_strided_slice %298 {offsets = [0, 0], sizes = [4, 512], strides = [1, 1]} : vector<8x512xf32> to vector<4x512xf32>
    %301 = vector.extract_strided_slice %299 {offsets = [0, 0], sizes = [1, 512], strides = [1, 1]} : vector<4x512xf32> to vector<1x512xf32>
    %302 = vector.broadcast %301 : vector<1x512xf32> to vector<4x512xf32>
    %303 = arith.subf %300, %302 : vector<4x512xf32>
    %304 = vector.extract_strided_slice %299 {offsets = [1, 0], sizes = [1, 512], strides = [1, 1]} : vector<4x512xf32> to vector<1x512xf32>
    %305 = vector.broadcast %304 : vector<1x512xf32> to vector<4x512xf32>
    %306 = arith.subf %300, %305 : vector<4x512xf32>
    %307 = vector.extract_strided_slice %299 {offsets = [2, 0], sizes = [1, 512], strides = [1, 1]} : vector<4x512xf32> to vector<1x512xf32>
    %308 = vector.broadcast %307 : vector<1x512xf32> to vector<4x512xf32>
    %309 = arith.subf %300, %308 : vector<4x512xf32>
    %310 = vector.extract_strided_slice %299 {offsets = [3, 0], sizes = [1, 512], strides = [1, 1]} : vector<4x512xf32> to vector<1x512xf32>
    %311 = vector.broadcast %310 : vector<1x512xf32> to vector<4x512xf32>
    %312 = arith.subf %300, %311 : vector<4x512xf32>
    %313 = tpu.concatenate %303, %306, %309, %312 in 0 : vector<4x512xf32>, vector<4x512xf32>, vector<4x512xf32>, vector<4x512xf32> -> vector<16x512xf32>
    %cst_123 = arith.constant dense<0.000000e+00> : vector<512xf32>
    %314 = vector.multi_reduction <add>, %313, %cst_123 [0] : vector<16x512xf32> to vector<512xf32>
    %315 = vector.shape_cast %314 : vector<512xf32> to vector<1x512xf32>
    %cst_124 = arith.constant 1.600000e+01 : f32
    %316 = vector.broadcast %cst_124 : f32 to vector<1x512xf32>
    %317 = arith.divf %315, %316 : vector<1x512xf32>
    %318 = vector.broadcast %317 : vector<1x512xf32> to vector<16x512xf32>
    %319 = arith.subf %313, %318 : vector<16x512xf32>
    %320 = arith.mulf %319, %319 : vector<16x512xf32>
    %cst_125 = arith.constant dense<0.000000e+00> : vector<512xf32>
    %321 = vector.multi_reduction <add>, %320, %cst_125 [0] : vector<16x512xf32> to vector<512xf32>
    %322 = vector.shape_cast %321 : vector<512xf32> to vector<1x512xf32>
    %cst_126 = arith.constant 1.600000e+01 : f32
    %323 = vector.broadcast %cst_126 : f32 to vector<1x512xf32>
    %324 = arith.divf %322, %323 : vector<1x512xf32>
    %325 = vector.broadcast %317 : vector<1x512xf32> to vector<16x512xf32>
    %326 = arith.subf %313, %325 : vector<16x512xf32>
    %cst_127 = arith.constant 9.99999974E-6 : f32
    %327 = vector.broadcast %cst_127 : f32 to vector<1x512xf32>
    %328 = arith.addf %324, %327 : vector<1x512xf32>
    %329 = math.rsqrt %328 : vector<1x512xf32>
    %330 = vector.broadcast %329 : vector<1x512xf32> to vector<16x512xf32>
    %331 = arith.mulf %326, %330 : vector<16x512xf32>
    %cst_128 = arith.constant 0.000000e+00 : f32
    %332 = vector.broadcast %cst_128 : f32 to vector<16x512xf32>
    %333 = arith.maximumf %331, %332 : vector<16x512xf32>
    %c0_129 = arith.constant 0 : index
    %c0_130 = arith.constant 0 : index
    %334 = vector.load %arg11[%c0_129, %c0_130] : memref<512x32xf32, #tpu.memory_space<vmem>>, vector<512x32xf32>
    %cst_131 = arith.constant dense<0.000000e+00> : vector<16x32xf32>
    %335 = tpu.matmul %333, %334, %cst_131 {dimension_numbers = #tpu.dot_dimension_numbers<[1], [0], [0], [1], [0, 0, 1, 1], [], []>} : vector<16x512xf32>, vector<512x32xf32>, vector<16x32xf32> -> vector<16x32xf32>
    %c0_132 = arith.constant 0 : index
    %c0_133 = arith.constant 0 : index
    %336 = vector.load %arg12[%c0_132, %c0_133] : memref<1x32xf32, #tpu.memory_space<vmem>>, vector<1x32xf32>
    %337 = vector.broadcast %336 : vector<1x32xf32> to vector<16x32xf32>
    %338 = arith.addf %335, %337 : vector<16x32xf32>
    %cst_134 = arith.constant dense<0.000000e+00> : vector<32xf32>
    %339 = vector.multi_reduction <add>, %338, %cst_134 [0] : vector<16x32xf32> to vector<32xf32>
    %340 = vector.shape_cast %339 : vector<32xf32> to vector<1x32xf32>
    %cst_135 = arith.constant 1.600000e+01 : f32
    %341 = vector.broadcast %cst_135 : f32 to vector<1x32xf32>
    %342 = arith.divf %340, %341 : vector<1x32xf32>
    %343 = vector.broadcast %342 : vector<1x32xf32> to vector<16x32xf32>
    %344 = arith.subf %338, %343 : vector<16x32xf32>
    %345 = arith.mulf %344, %344 : vector<16x32xf32>
    %cst_136 = arith.constant dense<0.000000e+00> : vector<32xf32>
    %346 = vector.multi_reduction <add>, %345, %cst_136 [0] : vector<16x32xf32> to vector<32xf32>
    %347 = vector.shape_cast %346 : vector<32xf32> to vector<1x32xf32>
    %cst_137 = arith.constant 1.600000e+01 : f32
    %348 = vector.broadcast %cst_137 : f32 to vector<1x32xf32>
    %349 = arith.divf %347, %348 : vector<1x32xf32>
    %350 = vector.broadcast %342 : vector<1x32xf32> to vector<16x32xf32>
    %351 = arith.subf %338, %350 : vector<16x32xf32>
    %cst_138 = arith.constant 9.99999974E-6 : f32
    %352 = vector.broadcast %cst_138 : f32 to vector<1x32xf32>
    %353 = arith.addf %349, %352 : vector<1x32xf32>
    %354 = math.rsqrt %353 : vector<1x32xf32>
    %355 = vector.broadcast %354 : vector<1x32xf32> to vector<16x32xf32>
    %356 = arith.mulf %351, %355 : vector<16x32xf32>
    %cst_139 = arith.constant 0.000000e+00 : f32
    %357 = vector.broadcast %cst_139 : f32 to vector<16x32xf32>
    %358 = arith.maximumf %356, %357 : vector<16x32xf32>
    %359 = vector.extract_strided_slice %358 {offsets = [0, 0], sizes = [4, 32], strides = [1, 1]} : vector<16x32xf32> to vector<4x32xf32>
    %cst_140 = arith.constant dense<0xFF800000> : vector<32xf32>
    %360 = vector.multi_reduction <maximumf>, %359, %cst_140 [0] : vector<4x32xf32> to vector<32xf32>
    %361 = vector.shape_cast %360 : vector<32xf32> to vector<1x32xf32>
    %362 = vector.extract_strided_slice %358 {offsets = [4, 0], sizes = [4, 32], strides = [1, 1]} : vector<16x32xf32> to vector<4x32xf32>
    %cst_141 = arith.constant dense<0xFF800000> : vector<32xf32>
    %363 = vector.multi_reduction <maximumf>, %362, %cst_141 [0] : vector<4x32xf32> to vector<32xf32>
    %364 = vector.shape_cast %363 : vector<32xf32> to vector<1x32xf32>
    %365 = vector.extract_strided_slice %358 {offsets = [8, 0], sizes = [4, 32], strides = [1, 1]} : vector<16x32xf32> to vector<4x32xf32>
    %cst_142 = arith.constant dense<0xFF800000> : vector<32xf32>
    %366 = vector.multi_reduction <maximumf>, %365, %cst_142 [0] : vector<4x32xf32> to vector<32xf32>
    %367 = vector.shape_cast %366 : vector<32xf32> to vector<1x32xf32>
    %368 = vector.extract_strided_slice %358 {offsets = [12, 0], sizes = [4, 32], strides = [1, 1]} : vector<16x32xf32> to vector<4x32xf32>
    %cst_143 = arith.constant dense<0xFF800000> : vector<32xf32>
    %369 = vector.multi_reduction <maximumf>, %368, %cst_143 [0] : vector<4x32xf32> to vector<32xf32>
    %370 = vector.shape_cast %369 : vector<32xf32> to vector<1x32xf32>
    %371 = vector.extract_strided_slice %292 {offsets = [4, 0], sizes = [4, 512], strides = [1, 1]} : vector<8x512xf32> to vector<4x512xf32>
    %372 = vector.extract_strided_slice %298 {offsets = [4, 0], sizes = [4, 512], strides = [1, 1]} : vector<8x512xf32> to vector<4x512xf32>
    %373 = vector.extract_strided_slice %371 {offsets = [0, 0], sizes = [1, 512], strides = [1, 1]} : vector<4x512xf32> to vector<1x512xf32>
    %374 = vector.broadcast %373 : vector<1x512xf32> to vector<4x512xf32>
    %375 = arith.subf %372, %374 : vector<4x512xf32>
    %376 = vector.extract_strided_slice %371 {offsets = [1, 0], sizes = [1, 512], strides = [1, 1]} : vector<4x512xf32> to vector<1x512xf32>
    %377 = vector.broadcast %376 : vector<1x512xf32> to vector<4x512xf32>
    %378 = arith.subf %372, %377 : vector<4x512xf32>
    %379 = vector.extract_strided_slice %371 {offsets = [2, 0], sizes = [1, 512], strides = [1, 1]} : vector<4x512xf32> to vector<1x512xf32>
    %380 = vector.broadcast %379 : vector<1x512xf32> to vector<4x512xf32>
    %381 = arith.subf %372, %380 : vector<4x512xf32>
    %382 = vector.extract_strided_slice %371 {offsets = [3, 0], sizes = [1, 512], strides = [1, 1]} : vector<4x512xf32> to vector<1x512xf32>
    %383 = vector.broadcast %382 : vector<1x512xf32> to vector<4x512xf32>
    %384 = arith.subf %372, %383 : vector<4x512xf32>
    %385 = tpu.concatenate %375, %378, %381, %384 in 0 : vector<4x512xf32>, vector<4x512xf32>, vector<4x512xf32>, vector<4x512xf32> -> vector<16x512xf32>
    %cst_144 = arith.constant dense<0.000000e+00> : vector<512xf32>
    %386 = vector.multi_reduction <add>, %385, %cst_144 [0] : vector<16x512xf32> to vector<512xf32>
    %387 = vector.shape_cast %386 : vector<512xf32> to vector<1x512xf32>
    %cst_145 = arith.constant 1.600000e+01 : f32
    %388 = vector.broadcast %cst_145 : f32 to vector<1x512xf32>
    %389 = arith.divf %387, %388 : vector<1x512xf32>
    %390 = vector.broadcast %389 : vector<1x512xf32> to vector<16x512xf32>
    %391 = arith.subf %385, %390 : vector<16x512xf32>
    %392 = arith.mulf %391, %391 : vector<16x512xf32>
    %cst_146 = arith.constant dense<0.000000e+00> : vector<512xf32>
    %393 = vector.multi_reduction <add>, %392, %cst_146 [0] : vector<16x512xf32> to vector<512xf32>
    %394 = vector.shape_cast %393 : vector<512xf32> to vector<1x512xf32>
    %cst_147 = arith.constant 1.600000e+01 : f32
    %395 = vector.broadcast %cst_147 : f32 to vector<1x512xf32>
    %396 = arith.divf %394, %395 : vector<1x512xf32>
    %397 = vector.broadcast %389 : vector<1x512xf32> to vector<16x512xf32>
    %398 = arith.subf %385, %397 : vector<16x512xf32>
    %cst_148 = arith.constant 9.99999974E-6 : f32
    %399 = vector.broadcast %cst_148 : f32 to vector<1x512xf32>
    %400 = arith.addf %396, %399 : vector<1x512xf32>
    %401 = math.rsqrt %400 : vector<1x512xf32>
    %402 = vector.broadcast %401 : vector<1x512xf32> to vector<16x512xf32>
    %403 = arith.mulf %398, %402 : vector<16x512xf32>
    %cst_149 = arith.constant 0.000000e+00 : f32
    %404 = vector.broadcast %cst_149 : f32 to vector<16x512xf32>
    %405 = arith.maximumf %403, %404 : vector<16x512xf32>
    %c0_150 = arith.constant 0 : index
    %c0_151 = arith.constant 0 : index
    %406 = vector.load %arg11[%c0_150, %c0_151] : memref<512x32xf32, #tpu.memory_space<vmem>>, vector<512x32xf32>
    %cst_152 = arith.constant dense<0.000000e+00> : vector<16x32xf32>
    %407 = tpu.matmul %405, %406, %cst_152 {dimension_numbers = #tpu.dot_dimension_numbers<[1], [0], [0], [1], [0, 0, 1, 1], [], []>} : vector<16x512xf32>, vector<512x32xf32>, vector<16x32xf32> -> vector<16x32xf32>
    %c0_153 = arith.constant 0 : index
    %c0_154 = arith.constant 0 : index
    %408 = vector.load %arg12[%c0_153, %c0_154] : memref<1x32xf32, #tpu.memory_space<vmem>>, vector<1x32xf32>
    %409 = vector.broadcast %408 : vector<1x32xf32> to vector<16x32xf32>
    %410 = arith.addf %407, %409 : vector<16x32xf32>
    %cst_155 = arith.constant dense<0.000000e+00> : vector<32xf32>
    %411 = vector.multi_reduction <add>, %410, %cst_155 [0] : vector<16x32xf32> to vector<32xf32>
    %412 = vector.shape_cast %411 : vector<32xf32> to vector<1x32xf32>
    %cst_156 = arith.constant 1.600000e+01 : f32
    %413 = vector.broadcast %cst_156 : f32 to vector<1x32xf32>
    %414 = arith.divf %412, %413 : vector<1x32xf32>
    %415 = vector.broadcast %414 : vector<1x32xf32> to vector<16x32xf32>
    %416 = arith.subf %410, %415 : vector<16x32xf32>
    %417 = arith.mulf %416, %416 : vector<16x32xf32>
    %cst_157 = arith.constant dense<0.000000e+00> : vector<32xf32>
    %418 = vector.multi_reduction <add>, %417, %cst_157 [0] : vector<16x32xf32> to vector<32xf32>
    %419 = vector.shape_cast %418 : vector<32xf32> to vector<1x32xf32>
    %cst_158 = arith.constant 1.600000e+01 : f32
    %420 = vector.broadcast %cst_158 : f32 to vector<1x32xf32>
    %421 = arith.divf %419, %420 : vector<1x32xf32>
    %422 = vector.broadcast %414 : vector<1x32xf32> to vector<16x32xf32>
    %423 = arith.subf %410, %422 : vector<16x32xf32>
    %cst_159 = arith.constant 9.99999974E-6 : f32
    %424 = vector.broadcast %cst_159 : f32 to vector<1x32xf32>
    %425 = arith.addf %421, %424 : vector<1x32xf32>
    %426 = math.rsqrt %425 : vector<1x32xf32>
    %427 = vector.broadcast %426 : vector<1x32xf32> to vector<16x32xf32>
    %428 = arith.mulf %423, %427 : vector<16x32xf32>
    %cst_160 = arith.constant 0.000000e+00 : f32
    %429 = vector.broadcast %cst_160 : f32 to vector<16x32xf32>
    %430 = arith.maximumf %428, %429 : vector<16x32xf32>
    %431 = vector.extract_strided_slice %430 {offsets = [0, 0], sizes = [4, 32], strides = [1, 1]} : vector<16x32xf32> to vector<4x32xf32>
    %cst_161 = arith.constant dense<0xFF800000> : vector<32xf32>
    %432 = vector.multi_reduction <maximumf>, %431, %cst_161 [0] : vector<4x32xf32> to vector<32xf32>
    %433 = vector.shape_cast %432 : vector<32xf32> to vector<1x32xf32>
    %434 = vector.extract_strided_slice %430 {offsets = [4, 0], sizes = [4, 32], strides = [1, 1]} : vector<16x32xf32> to vector<4x32xf32>
    %cst_162 = arith.constant dense<0xFF800000> : vector<32xf32>
    %435 = vector.multi_reduction <maximumf>, %434, %cst_162 [0] : vector<4x32xf32> to vector<32xf32>
    %436 = vector.shape_cast %435 : vector<32xf32> to vector<1x32xf32>
    %437 = vector.extract_strided_slice %430 {offsets = [8, 0], sizes = [4, 32], strides = [1, 1]} : vector<16x32xf32> to vector<4x32xf32>
    %cst_163 = arith.constant dense<0xFF800000> : vector<32xf32>
    %438 = vector.multi_reduction <maximumf>, %437, %cst_163 [0] : vector<4x32xf32> to vector<32xf32>
    %439 = vector.shape_cast %438 : vector<32xf32> to vector<1x32xf32>
    %440 = vector.extract_strided_slice %430 {offsets = [12, 0], sizes = [4, 32], strides = [1, 1]} : vector<16x32xf32> to vector<4x32xf32>
    %cst_164 = arith.constant dense<0xFF800000> : vector<32xf32>
    %441 = vector.multi_reduction <maximumf>, %440, %cst_164 [0] : vector<4x32xf32> to vector<32xf32>
    %442 = vector.shape_cast %441 : vector<32xf32> to vector<1x32xf32>
    %443 = tpu.concatenate %361, %364, %367, %370, %433, %436, %439, %442 in 0 : vector<1x32xf32>, vector<1x32xf32>, vector<1x32xf32>, vector<1x32xf32>, vector<1x32xf32>, vector<1x32xf32>, vector<1x32xf32>, vector<1x32xf32> -> vector<8x32xf32>
    %c0_165 = arith.constant 0 : index
    %c0_166 = arith.constant 0 : index
    %444 = vector.load %arg13[%c0_165, %c0_166] : memref<128x64xf32, #tpu.memory_space<vmem>>, vector<128x64xf32>
    %cst_167 = arith.constant dense<0.000000e+00> : vector<8x64xf32>
    %445 = tpu.matmul %284, %444, %cst_167 {dimension_numbers = #tpu.dot_dimension_numbers<[1], [0], [0], [1], [0, 0, 1, 1], [], []>} : vector<8x128xf32>, vector<128x64xf32>, vector<8x64xf32> -> vector<8x64xf32>
    %c0_168 = arith.constant 0 : index
    %c0_169 = arith.constant 0 : index
    %446 = vector.load %arg14[%c0_168, %c0_169] : memref<32x64xf32, #tpu.memory_space<vmem>>, vector<32x64xf32>
    %cst_170 = arith.constant dense<0.000000e+00> : vector<8x64xf32>
    %447 = tpu.matmul %443, %446, %cst_170 {dimension_numbers = #tpu.dot_dimension_numbers<[1], [0], [0], [1], [0, 0, 1, 1], [], []>} : vector<8x32xf32>, vector<32x64xf32>, vector<8x64xf32> -> vector<8x64xf32>
    %448 = arith.addf %445, %447 : vector<8x64xf32>
    %c0_171 = arith.constant 0 : index
    %c0_172 = arith.constant 0 : index
    %449 = vector.load %arg15[%c0_171, %c0_172] : memref<1x64xf32, #tpu.memory_space<vmem>>, vector<1x64xf32>
    %450 = vector.broadcast %449 : vector<1x64xf32> to vector<8x64xf32>
    %451 = arith.addf %448, %450 : vector<8x64xf32>
    %cst_173 = arith.constant dense<0.000000e+00> : vector<64xf32>
    %452 = vector.multi_reduction <add>, %451, %cst_173 [0] : vector<8x64xf32> to vector<64xf32>
    %453 = vector.shape_cast %452 : vector<64xf32> to vector<1x64xf32>
    %cst_174 = arith.constant 8.000000e+00 : f32
    %454 = vector.broadcast %cst_174 : f32 to vector<1x64xf32>
    %455 = arith.divf %453, %454 : vector<1x64xf32>
    %456 = vector.broadcast %455 : vector<1x64xf32> to vector<8x64xf32>
    %457 = arith.subf %451, %456 : vector<8x64xf32>
    %458 = arith.mulf %457, %457 : vector<8x64xf32>
    %cst_175 = arith.constant dense<0.000000e+00> : vector<64xf32>
    %459 = vector.multi_reduction <add>, %458, %cst_175 [0] : vector<8x64xf32> to vector<64xf32>
    %460 = vector.shape_cast %459 : vector<64xf32> to vector<1x64xf32>
    %cst_176 = arith.constant 8.000000e+00 : f32
    %461 = vector.broadcast %cst_176 : f32 to vector<1x64xf32>
    %462 = arith.divf %460, %461 : vector<1x64xf32>
    %463 = vector.broadcast %455 : vector<1x64xf32> to vector<8x64xf32>
    %464 = arith.subf %451, %463 : vector<8x64xf32>
    %cst_177 = arith.constant 9.99999974E-6 : f32
    %465 = vector.broadcast %cst_177 : f32 to vector<1x64xf32>
    %466 = arith.addf %462, %465 : vector<1x64xf32>
    %467 = math.rsqrt %466 : vector<1x64xf32>
    %468 = vector.broadcast %467 : vector<1x64xf32> to vector<8x64xf32>
    %469 = arith.mulf %464, %468 : vector<8x64xf32>
    %cst_178 = arith.constant 0.000000e+00 : f32
    %470 = vector.broadcast %cst_178 : f32 to vector<8x64xf32>
    %471 = arith.maximumf %469, %470 : vector<8x64xf32>
    %c0_179 = arith.constant 0 : index
    %c0_180 = arith.constant 0 : index
    %472 = vector.load %arg16[%c0_179, %c0_180] : memref<64x128xf32, #tpu.memory_space<vmem>>, vector<64x128xf32>
    %cst_181 = arith.constant dense<0.000000e+00> : vector<8x128xf32>
    %473 = tpu.matmul %471, %472, %cst_181 {dimension_numbers = #tpu.dot_dimension_numbers<[1], [0], [0], [1], [0, 0, 1, 1], [], []>} : vector<8x64xf32>, vector<64x128xf32>, vector<8x128xf32> -> vector<8x128xf32>
    %c0_182 = arith.constant 0 : index
    %c0_183 = arith.constant 0 : index
    %474 = vector.load %arg17[%c0_182, %c0_183] : memref<1x128xf32, #tpu.memory_space<vmem>>, vector<1x128xf32>
    %475 = vector.broadcast %474 : vector<1x128xf32> to vector<8x128xf32>
    %476 = arith.addf %473, %475 : vector<8x128xf32>
    %cst_184 = arith.constant dense<0.000000e+00> : vector<128xf32>
    %477 = vector.multi_reduction <add>, %476, %cst_184 [0] : vector<8x128xf32> to vector<128xf32>
    %478 = vector.shape_cast %477 : vector<128xf32> to vector<1x128xf32>
    %cst_185 = arith.constant 8.000000e+00 : f32
    %479 = vector.broadcast %cst_185 : f32 to vector<1x128xf32>
    %480 = arith.divf %478, %479 : vector<1x128xf32>
    %481 = vector.broadcast %480 : vector<1x128xf32> to vector<8x128xf32>
    %482 = arith.subf %476, %481 : vector<8x128xf32>
    %483 = arith.mulf %482, %482 : vector<8x128xf32>
    %cst_186 = arith.constant dense<0.000000e+00> : vector<128xf32>
    %484 = vector.multi_reduction <add>, %483, %cst_186 [0] : vector<8x128xf32> to vector<128xf32>
    %485 = vector.shape_cast %484 : vector<128xf32> to vector<1x128xf32>
    %cst_187 = arith.constant 8.000000e+00 : f32
    %486 = vector.broadcast %cst_187 : f32 to vector<1x128xf32>
    %487 = arith.divf %485, %486 : vector<1x128xf32>
    %488 = vector.broadcast %480 : vector<1x128xf32> to vector<8x128xf32>
    %489 = arith.subf %476, %488 : vector<8x128xf32>
    %cst_188 = arith.constant 9.99999974E-6 : f32
    %490 = vector.broadcast %cst_188 : f32 to vector<1x128xf32>
    %491 = arith.addf %487, %490 : vector<1x128xf32>
    %492 = math.rsqrt %491 : vector<1x128xf32>
    %493 = vector.broadcast %492 : vector<1x128xf32> to vector<8x128xf32>
    %494 = arith.mulf %489, %493 : vector<8x128xf32>
    %cst_189 = arith.constant 0.000000e+00 : f32
    %495 = vector.broadcast %cst_189 : f32 to vector<8x128xf32>
    %496 = arith.maximumf %494, %495 : vector<8x128xf32>
    %c1 = arith.constant 1 : index
    %c0_190 = arith.constant 0 : index
    %c0_191 = arith.constant 0 : index
    %497 = vector.load %arg18[%c1, %c0_190, %c0_191] : memref<3x8x128xf32, #tpu.memory_space<vmem>>, vector<1x8x128xf32>
    %498 = vector.shape_cast %497 : vector<1x8x128xf32> to vector<8x128xf32>
    %499 = vector.shape_cast %289 : vector<8x128xf32> to vector<1x8x128xf32>
    tpu.vector_store %arg18[%c1, %c0_190, %c0_191], %499 {strides = array<i32>} : memref<3x8x128xf32, #tpu.memory_space<vmem>>, vector<1x8x128xf32>,
    %c0_192 = arith.constant 0 : index
    %c0_193 = arith.constant 0 : index
    %500 = vector.load %arg3[%c0_192, %c0_193] : memref<128x512xf32, #tpu.memory_space<vmem>>, vector<128x512xf32>
    %cst_194 = arith.constant dense<0.000000e+00> : vector<8x512xf32>
    %501 = tpu.matmul %289, %500, %cst_194 {dimension_numbers = #tpu.dot_dimension_numbers<[1], [0], [0], [1], [0, 0, 1, 1], [], []>} : vector<8x128xf32>, vector<128x512xf32>, vector<8x512xf32> -> vector<8x512xf32>
    %c0_195 = arith.constant 0 : index
    %c0_196 = arith.constant 0 : index
    %502 = vector.load %arg4[%c0_195, %c0_196] : memref<128x512xf32, #tpu.memory_space<vmem>>, vector<128x512xf32>
    %cst_197 = arith.constant dense<0.000000e+00> : vector<8x512xf32>
    %503 = tpu.matmul %496, %502, %cst_197 {dimension_numbers = #tpu.dot_dimension_numbers<[1], [0], [0], [1], [0, 0, 1, 1], [], []>} : vector<8x128xf32>, vector<128x512xf32>, vector<8x512xf32> -> vector<8x512xf32>
    %504 = arith.addf %501, %503 : vector<8x512xf32>
    %c0_198 = arith.constant 0 : index
    %c0_199 = arith.constant 0 : index
    %505 = vector.load %arg5[%c0_198, %c0_199] : memref<1x512xf32, #tpu.memory_space<vmem>>, vector<1x512xf32>
    %506 = vector.broadcast %505 : vector<1x512xf32> to vector<8x512xf32>
    %507 = arith.addf %504, %506 : vector<8x512xf32>
    %508 = vector.extract_strided_slice %507 {offsets = [0, 0], sizes = [8, 128], strides = [1, 1]} : vector<8x512xf32> to vector<8x128xf32>
    %509 = arith.negf %508 : vector<8x128xf32>
    %510 = math.exp %509 : vector<8x128xf32>
    %cst_200 = arith.constant 1.000000e+00 : f32
    %511 = vector.broadcast %cst_200 : f32 to vector<8x128xf32>
    %512 = arith.addf %511, %510 : vector<8x128xf32>
    %513 = arith.divf %511, %512 : vector<8x128xf32>
    %514 = vector.extract_strided_slice %507 {offsets = [0, 128], sizes = [8, 128], strides = [1, 1]} : vector<8x512xf32> to vector<8x128xf32>
    %515 = arith.negf %514 : vector<8x128xf32>
    %516 = math.exp %515 : vector<8x128xf32>
    %cst_201 = arith.constant 1.000000e+00 : f32
    %517 = vector.broadcast %cst_201 : f32 to vector<8x128xf32>
    %518 = arith.addf %517, %516 : vector<8x128xf32>
    %519 = arith.divf %517, %518 : vector<8x128xf32>
    %520 = vector.extract_strided_slice %507 {offsets = [0, 256], sizes = [8, 128], strides = [1, 1]} : vector<8x512xf32> to vector<8x128xf32>
    %521 = math.tanh %520 : vector<8x128xf32>
    %522 = vector.extract_strided_slice %507 {offsets = [0, 384], sizes = [8, 128], strides = [1, 1]} : vector<8x512xf32> to vector<8x128xf32>
    %523 = arith.negf %522 : vector<8x128xf32>
    %524 = math.exp %523 : vector<8x128xf32>
    %cst_202 = arith.constant 1.000000e+00 : f32
    %525 = vector.broadcast %cst_202 : f32 to vector<8x128xf32>
    %526 = arith.addf %525, %524 : vector<8x128xf32>
    %527 = arith.divf %525, %526 : vector<8x128xf32>
    %528 = arith.mulf %519, %282 : vector<8x128xf32>
    %529 = arith.mulf %513, %521 : vector<8x128xf32>
    %530 = arith.addf %528, %529 : vector<8x128xf32>
    %531 = math.tanh %530 : vector<8x128xf32>
    %532 = arith.mulf %527, %531 : vector<8x128xf32>
    %c0_203 = arith.constant 0 : index
    %c0_204 = arith.constant 0 : index
    %533 = vector.load %arg6[%c0_203, %c0_204] : memref<128x128xf32, #tpu.memory_space<vmem>>, vector<128x128xf32>
    %cst_205 = arith.constant dense<0.000000e+00> : vector<8x128xf32>
    %534 = tpu.matmul %532, %533, %cst_205 {dimension_numbers = #tpu.dot_dimension_numbers<[1], [0], [0], [1], [0, 0, 1, 1], [], []>} : vector<8x128xf32>, vector<128x128xf32>, vector<8x128xf32> -> vector<8x128xf32>
    %c0_206 = arith.constant 0 : index
    %c0_207 = arith.constant 0 : index
    %535 = vector.load %arg7[%c0_206, %c0_207] : memref<1x128xf32, #tpu.memory_space<vmem>>, vector<1x128xf32>
    %536 = vector.broadcast %535 : vector<1x128xf32> to vector<8x128xf32>
    %537 = arith.addf %534, %536 : vector<8x128xf32>
    %c2 = arith.constant 2 : index
    %c0_208 = arith.constant 0 : index
    %c0_209 = arith.constant 0 : index
    %538 = vector.load %arg18[%c2, %c0_208, %c0_209] : memref<3x8x128xf32, #tpu.memory_space<vmem>>, vector<1x8x128xf32>
    %539 = vector.shape_cast %538 : vector<1x8x128xf32> to vector<8x128xf32>
    %540 = vector.shape_cast %537 : vector<8x128xf32> to vector<1x8x128xf32>
    tpu.vector_store %arg18[%c2, %c0_208, %c0_209], %540 {strides = array<i32>} : memref<3x8x128xf32, #tpu.memory_space<vmem>>, vector<1x8x128xf32>,
    return
  }
}

</mosaic_0001>

<llo_original>
// kernel: trajectory_generator_st_forward.1
$region0: #{trajectory_generator_st_forward.1}
  #allocation0 [shape = 'u32[]', space=smem, size = 0x4, offset = 0x4, fixed_abs, tag = 'smem constant byte address 0x4 - core index']
  #allocation1 [shape = 'u32[144,128]{1,0:T(1,128)}', space=vmem, size = 0x12000, scoped, tag = 'internal scratch']
  %s0 = inlined_call_operand.vmem [shape: f32[8,128], index: 0, kind: input, shape index: {}]
  %s1 = inlined_call_operand.vmem [shape: f32[8,128], index: 1, kind: input, shape index: {}]
  %s2 = inlined_call_operand.vmem [shape: f32[8,128], index: 2, kind: input, shape index: {}]
  %s3 = inlined_call_operand.vmem [shape: f32[128,512], index: 3, kind: input, shape index: {}]
  %s4 = inlined_call_operand.hbm [shape: f32[128,512], index: 4, kind: input, shape index: {}]
  %s5 = inlined_call_operand.vmem [shape: f32[1,512], index: 5, kind: input, shape index: {}]
  %s6 = inlined_call_operand.vmem [shape: f32[128,128], index: 6, kind: input, shape index: {}]
  %s7 = inlined_call_operand.vmem [shape: f32[1,128], index: 7, kind: input, shape index: {}]
  %s8 = inlined_call_operand.hbm [shape: f32[128,512], index: 8, kind: input, shape index: {}]
  %s9 = inlined_call_operand.hbm [shape: f32[128,512], index: 9, kind: input, shape index: {}]
  %s10 = inlined_call_operand.vmem [shape: f32[1,512], index: 10, kind: input, shape index: {}]
  %s11 = inlined_call_operand.vmem [shape: f32[512,32], index: 11, kind: input, shape index: {}]
  %s12 = inlined_call_operand.vmem [shape: f32[1,32], index: 12, kind: input, shape index: {}]
  %s13 = inlined_call_operand.vmem [shape: f32[128,64], index: 13, kind: input, shape index: {}]
  %s14 = inlined_call_operand.vmem [shape: f32[32,64], index: 14, kind: input, shape index: {}]
  %s15 = inlined_call_operand.vmem [shape: f32[1,64], index: 15, kind: input, shape index: {}]
  %s16 = inlined_call_operand.vmem [shape: f32[64,128], index: 16, kind: input, shape index: {}]
  %s17 = inlined_call_operand.vmem [shape: f32[1,128], index: 17, kind: input, shape index: {}]
  %s18 = inlined_call_operand.vmem [shape: f32[3,8,128], index: 18, kind: output, shape index: {}]
  %s19 = sld [smem:[#allocation0]]
  $region94: #{trajectory_generator_st_forward.1} parent=0
    _
  %s21 = ssub.s32 1, %s19
  %s22 = scalar_select 0, %s21, %s19
  $region1: #{trajectory_generator_st_forward.1} parent=0
    #allocation2 [shape = 'u8[262144]{0}', space=vmem, size = 0x40000, scoped, tag = 'input window, operand 4, single buffered']
    #allocation3 [shape = 's32[1]{0}', space=sflag, size = 0x4, scoped, tag = 'scoped memory for trajectory_generator_st_forward.1']
    #allocation4 [shape = 'u8[262144]{0}', space=vmem, size = 0x40000, scoped, tag = 'input window, operand 8, single buffered']
    #allocation5 [shape = 's32[1]{0}', space=sflag, size = 0x4, scoped, tag = 'scoped memory for trajectory_generator_st_forward.1']
    #allocation6 [shape = 'u8[262144]{0}', space=vmem, size = 0x40000, scoped, tag = 'input window, operand 9, single buffered']
    %23 = vsyncpa [#allocation3], 0
    %24 = vsyncpa [#allocation5], 0
    // Predicated region
    $region2: #{trajectory_generator_st_forward.1} parent=1 // pred_check
      _
    $region3: #{trajectory_generator_st_forward.1} parent=1 // pred_check_branch
      %26 = sbr.rel (0) target = $region5
    $region4: #{trajectory_generator_st_forward.1} parent=1 // pred_region
      _
    $region5: #{trajectory_generator_st_forward.1} parent=1 // pred_fallthru
      _
    // Predicated region
    $region6: #{trajectory_generator_st_forward.1} parent=1 // pred_check
      _
    $region7: #{trajectory_generator_st_forward.1} parent=1 // pred_check_branch
      %28 = sbr.rel (0) target = $region9
    $region8: #{trajectory_generator_st_forward.1} parent=1 // pred_region
      _
    $region9: #{trajectory_generator_st_forward.1} parent=1 // pred_fallthru
      _
    // Predicated region
    $region10: #{trajectory_generator_st_forward.1} parent=1 // pred_check
      _
    $region11: #{trajectory_generator_st_forward.1} parent=1 // pred_check_branch
      %30 = sbr.rel (0) target = $region13
    $region12: #{trajectory_generator_st_forward.1} parent=1 // pred_region
      _
    $region13: #{trajectory_generator_st_forward.1} parent=1 // pred_fallthru
      _
    // Predicated region
    $region14: #{trajectory_generator_st_forward.1} parent=1 // pred_check
      _
    $region15: #{trajectory_generator_st_forward.1} parent=1 // pred_check_branch
      %32 = sbr.rel (0) target = $region17
    $region16: #{trajectory_generator_st_forward.1} parent=1 // pred_region
      _
    $region17: #{trajectory_generator_st_forward.1} parent=1 // pred_fallthru
      _
    // Predicated region
    $region18: #{trajectory_generator_st_forward.1} parent=1 // pred_check
      _
    $region19: #{trajectory_generator_st_forward.1} parent=1 // pred_check_branch
      %34 = sbr.rel (0) target = $region21
    $region20: #{trajectory_generator_st_forward.1} parent=1 // pred_region
      %s36 = ssub.s32 8192, 8192
      %37 = vsyncadd [#allocation3], %s36
      %s38 = sshll.u32 [#allocation2], 4
      %s39 = int_to_ptr.vmem [resolvable:$true] %s38
      %44 = dma.hbm_to_vmem [thread:$0]  %s4, 8192, %s39, [#allocation3], 512, 512, 32
    $region21: #{trajectory_generator_st_forward.1} parent=1 // pred_fallthru
      _
    // Predicated region
    $region22: #{trajectory_generator_st_forward.1} parent=1 // pred_check
      _
    $region23: #{trajectory_generator_st_forward.1} parent=1 // pred_check_branch
      %46 = sbr.rel (0) target = $region25
    $region24: #{trajectory_generator_st_forward.1} parent=1 // pred_region
      _
    $region25: #{trajectory_generator_st_forward.1} parent=1 // pred_fallthru
      _
    // Predicated region
    $region26: #{trajectory_generator_st_forward.1} parent=1 // pred_check
      _
    $region27: #{trajectory_generator_st_forward.1} parent=1 // pred_check_branch
      %48 = sbr.rel (0) target = $region29
    $region28: #{trajectory_generator_st_forward.1} parent=1 // pred_region
      _
    $region29: #{trajectory_generator_st_forward.1} parent=1 // pred_fallthru
      _
    // Predicated region
    $region30: #{trajectory_generator_st_forward.1} parent=1 // pred_check
      _
    $region31: #{trajectory_generator_st_forward.1} parent=1 // pred_check_branch
      %50 = sbr.rel (0) target = $region33
    $region32: #{trajectory_generator_st_forward.1} parent=1 // pred_region
      _
    $region33: #{trajectory_generator_st_forward.1} parent=1 // pred_fallthru
      _
    // Predicated region
    $region34: #{trajectory_generator_st_forward.1} parent=1 // pred_check
      _
    $region35: #{trajectory_generator_st_forward.1} parent=1 // pred_check_branch
      %52 = sbr.rel (0) target = $region37
    $region36: #{trajectory_generator_st_forward.1} parent=1 // pred_region
      %s54 = ssub.s32 8192, 8192
      %55 = vsyncadd [#allocation5], %s54
      %s56 = sshll.u32 [#allocation4], 4
      %s57 = int_to_ptr.vmem [resolvable:$true] %s56
      %62 = dma.hbm_to_vmem [thread:$0]  %s8, 8192, %s57, [#allocation5], 512, 512, 32
    $region37: #{trajectory_generator_st_forward.1} parent=1 // pred_fallthru
      _
    // Predicated region
    $region38: #{trajectory_generator_st_forward.1} parent=1 // pred_check
      _
    $region39: #{trajectory_generator_st_forward.1} parent=1 // pred_check_branch
      %64 = sbr.rel (0) target = $region41
    $region40: #{trajectory_generator_st_forward.1} parent=1 // pred_region
      %s66 = ssub.s32 8192, 8192
      %67 = vsyncadd [#allocation5], %s66
      %s68 = sshll.u32 [#allocation6], 4
      %s69 = int_to_ptr.vmem [resolvable:$true] %s68
      %74 = dma.hbm_to_vmem [thread:$0]  %s9, 8192, %s69, [#allocation5], 512, 512, 32
    $region41: #{trajectory_generator_st_forward.1} parent=1 // pred_fallthru
      _
    // Predicated region
    $region42: #{trajectory_generator_st_forward.1} parent=1 // pred_check
      _
    $region43: #{trajectory_generator_st_forward.1} parent=1 // pred_check_branch
      %76 = sbr.rel (0) target = $region45
    $region44: #{trajectory_generator_st_forward.1} parent=1 // pred_region
      _
    $region45: #{trajectory_generator_st_forward.1} parent=1 // pred_fallthru
      _
    // Predicated region
    $region46: #{trajectory_generator_st_forward.1} parent=1 // pred_check
      _
    $region47: #{trajectory_generator_st_forward.1} parent=1 // pred_check_branch
      %78 = sbr.rel (0) target = $region49
    $region48: #{trajectory_generator_st_forward.1} parent=1 // pred_region
      _
    $region49: #{trajectory_generator_st_forward.1} parent=1 // pred_fallthru
      _
    // Predicated region
    $region50: #{trajectory_generator_st_forward.1} parent=1 // pred_check
      _
    $region51: #{trajectory_generator_st_forward.1} parent=1 // pred_check_branch
      %80 = sbr.rel (0) target = $region53
    $region52: #{trajectory_generator_st_forward.1} parent=1 // pred_region
      _
    $region53: #{trajectory_generator_st_forward.1} parent=1 // pred_fallthru
      _
    // Predicated region
    $region54: #{trajectory_generator_st_forward.1} parent=1 // pred_check
      _
    $region55: #{trajectory_generator_st_forward.1} parent=1 // pred_check_branch
      %82 = sbr.rel (0) target = $region57
    $region56: #{trajectory_generator_st_forward.1} parent=1 // pred_region
      _
    $region57: #{trajectory_generator_st_forward.1} parent=1 // pred_fallthru
      _
    // Predicated region
    $region58: #{trajectory_generator_st_forward.1} parent=1 // pred_check
      _
    $region59: #{trajectory_generator_st_forward.1} parent=1 // pred_check_branch
      %84 = sbr.rel (0) target = $region61
    $region60: #{trajectory_generator_st_forward.1} parent=1 // pred_region
      _
    $region61: #{trajectory_generator_st_forward.1} parent=1 // pred_fallthru
      _
    // Predicated region
    $region62: #{trajectory_generator_st_forward.1} parent=1 // pred_check
      _
    $region63: #{trajectory_generator_st_forward.1} parent=1 // pred_check_branch
      %86 = sbr.rel (0) target = $region65
    $region64: #{trajectory_generator_st_forward.1} parent=1 // pred_region
      _
    $region65: #{trajectory_generator_st_forward.1} parent=1 // pred_fallthru
      _
    // Predicated region
    $region66: #{trajectory_generator_st_forward.1} parent=1 // pred_check
      _
    $region67: #{trajectory_generator_st_forward.1} parent=1 // pred_check_branch
      %88 = sbr.rel (0) target = $region69
    $region68: #{trajectory_generator_st_forward.1} parent=1 // pred_region
      _
    $region69: #{trajectory_generator_st_forward.1} parent=1 // pred_fallthru
      _
    // Predicated region
    $region70: #{trajectory_generator_st_forward.1} parent=1 // pred_check
      _
    $region71: #{trajectory_generator_st_forward.1} parent=1 // pred_check_branch
      %90 = sbr.rel (0) target = $region73
    $region72: #{trajectory_generator_st_forward.1} parent=1 // pred_region
      _
    $region73: #{trajectory_generator_st_forward.1} parent=1 // pred_fallthru
      _
    // Predicated region
    $region74: #{trajectory_generator_st_forward.1} parent=1 // pred_check
      _
    $region75: #{trajectory_generator_st_forward.1} parent=1 // pred_check_branch
      %92 = sbr.rel (0) target = $region77
    $region76: #{trajectory_generator_st_forward.1} parent=1 // pred_region
      %93 = dma.done [#allocation3], 8192
    $region77: #{trajectory_generator_st_forward.1} parent=1 // pred_fallthru
      _
    // Predicated region
    $region78: #{trajectory_generator_st_forward.1} parent=1 // pred_check
      _
    $region79: #{trajectory_generator_st_forward.1} parent=1 // pred_check_branch
      %95 = sbr.rel (0) target = $region81
    $region80: #{trajectory_generator_st_forward.1} parent=1 // pred_region
      %96 = dma.done [#allocation5], 8192
    $region81: #{trajectory_generator_st_forward.1} parent=1 // pred_fallthru
      _
    // Predicated region
    $region82: #{trajectory_generator_st_forward.1} parent=1 // pred_check
      _
    $region83: #{trajectory_generator_st_forward.1} parent=1 // pred_check_branch
      %98 = sbr.rel (0) target = $region85
    $region84: #{trajectory_generator_st_forward.1} parent=1 // pred_region
      %99 = dma.done [#allocation5], 8192
    $region85: #{trajectory_generator_st_forward.1} parent=1 // pred_fallthru
      _
    %v100 = vld [vmem:[%s0] sm:$0xff]
    %v101 = vld [vmem:[%s1] sm:$0xff]
    %v102 = vld [vmem:[%s2] sm:$0xff]
    %v103 = vld [vmem:[%s3] sm:$0xff]
    %v104 = vld [vmem:[%s3 + $0x8] sm:$0xff]
    %v105 = vld [vmem:[%s3 + $0x10] sm:$0xff]
    %v106 = vld [vmem:[%s3 + $0x18] sm:$0xff]
    %v107 = vld [vmem:[%s3 + $0x20] sm:$0xff]
    %v108 = vld [vmem:[%s3 + $0x28] sm:$0xff]
    %v109 = vld [vmem:[%s3 + $0x30] sm:$0xff]
    %v110 = vld [vmem:[%s3 + $0x38] sm:$0xff]
    %v111 = vld [vmem:[%s3 + $0x40] sm:$0xff]
    %v112 = vld [vmem:[%s3 + $0x48] sm:$0xff]
    %v113 = vld [vmem:[%s3 + $0x50] sm:$0xff]
    %v114 = vld [vmem:[%s3 + $0x58] sm:$0xff]
    %v115 = vld [vmem:[%s3 + $0x60] sm:$0xff]
    %v116 = vld [vmem:[%s3 + $0x68] sm:$0xff]
    %v117 = vld [vmem:[%s3 + $0x70] sm:$0xff]
    %v118 = vld [vmem:[%s3 + $0x78] sm:$0xff]
    %v119 = vld [vmem:[%s3 + $0x80] sm:$0xff]
    %v120 = vld [vmem:[%s3 + $0x88] sm:$0xff]
    %v121 = vld [vmem:[%s3 + $0x90] sm:$0xff]
    %v122 = vld [vmem:[%s3 + $0x98] sm:$0xff]
    %v123 = vld [vmem:[%s3 + $0xa0] sm:$0xff]
    %v124 = vld [vmem:[%s3 + $0xa8] sm:$0xff]
    %v125 = vld [vmem:[%s3 + $0xb0] sm:$0xff]
    %v126 = vld [vmem:[%s3 + $0xb8] sm:$0xff]
    %v127 = vld [vmem:[%s3 + $0xc0] sm:$0xff]
    %v128 = vld [vmem:[%s3 + $0xc8] sm:$0xff]
    %v129 = vld [vmem:[%s3 + $0xd0] sm:$0xff]
    %v130 = vld [vmem:[%s3 + $0xd8] sm:$0xff]
    %v131 = vld [vmem:[%s3 + $0xe0] sm:$0xff]
    %v132 = vld [vmem:[%s3 + $0xe8] sm:$0xff]
    %v133 = vld [vmem:[%s3 + $0xf0] sm:$0xff]
    %v134 = vld [vmem:[%s3 + $0xf8] sm:$0xff]
    %v135 = vld [vmem:[%s3 + $0x100] sm:$0xff]
    %v136 = vld [vmem:[%s3 + $0x108] sm:$0xff]
    %v137 = vld [vmem:[%s3 + $0x110] sm:$0xff]
    %v138 = vld [vmem:[%s3 + $0x118] sm:$0xff]
    %v139 = vld [vmem:[%s3 + $0x120] sm:$0xff]
    %v140 = vld [vmem:[%s3 + $0x128] sm:$0xff]
    %v141 = vld [vmem:[%s3 + $0x130] sm:$0xff]
    %v142 = vld [vmem:[%s3 + $0x138] sm:$0xff]
    %v143 = vld [vmem:[%s3 + $0x140] sm:$0xff]
    %v144 = vld [vmem:[%s3 + $0x148] sm:$0xff]
    %v145 = vld [vmem:[%s3 + $0x150] sm:$0xff]
    %v146 = vld [vmem:[%s3 + $0x158] sm:$0xff]
    %v147 = vld [vmem:[%s3 + $0x160] sm:$0xff]
    %v148 = vld [vmem:[%s3 + $0x168] sm:$0xff]
    %v149 = vld [vmem:[%s3 + $0x170] sm:$0xff]
    %v150 = vld [vmem:[%s3 + $0x178] sm:$0xff]
    %v151 = vld [vmem:[%s3 + $0x180] sm:$0xff]
    %v152 = vld [vmem:[%s3 + $0x188] sm:$0xff]
    %v153 = vld [vmem:[%s3 + $0x190] sm:$0xff]
    %v154 = vld [vmem:[%s3 + $0x198] sm:$0xff]
    %v155 = vld [vmem:[%s3 + $0x1a0] sm:$0xff]
    %v156 = vld [vmem:[%s3 + $0x1a8] sm:$0xff]
    %v157 = vld [vmem:[%s3 + $0x1b0] sm:$0xff]
    %v158 = vld [vmem:[%s3 + $0x1b8] sm:$0xff]
    %v159 = vld [vmem:[%s3 + $0x1c0] sm:$0xff]
    %v160 = vld [vmem:[%s3 + $0x1c8] sm:$0xff]
    %v161 = vld [vmem:[%s3 + $0x1d0] sm:$0xff]
    %v162 = vld [vmem:[%s3 + $0x1d8] sm:$0xff]
    %v163 = vld [vmem:[%s3 + $0x1e0] sm:$0xff]
    %v164 = vld [vmem:[%s3 + $0x1e8] sm:$0xff]
    %v165 = vld [vmem:[%s3 + $0x1f0] sm:$0xff]
    %v166 = vld [vmem:[%s3 + $0x1f8] sm:$0xff]
    %v167 = vld [vmem:[#allocation2] sm:$0xff]
    %v168 = vld [vmem:[#allocation2 + $0x8] sm:$0xff]
    %v169 = vld [vmem:[#allocation2 + $0x10] sm:$0xff]
    %v170 = vld [vmem:[#allocation2 + $0x18] sm:$0xff]
    %v171 = vld [vmem:[#allocation2 + $0x20] sm:$0xff]
    %v172 = vld [vmem:[#allocation2 + $0x28] sm:$0xff]
    %v173 = vld [vmem:[#allocation2 + $0x30] sm:$0xff]
    %v174 = vld [vmem:[#allocation2 + $0x38] sm:$0xff]
    %v175 = vld [vmem:[#allocation2 + $0x40] sm:$0xff]
    %v176 = vld [vmem:[#allocation2 + $0x48] sm:$0xff]
    %v177 = vld [vmem:[#allocation2 + $0x50] sm:$0xff]
    %v178 = vld [vmem:[#allocation2 + $0x58] sm:$0xff]
    %v179 = vld [vmem:[#allocation2 + $0x60] sm:$0xff]
    %v180 = vld [vmem:[#allocation2 + $0x68] sm:$0xff]
    %v181 = vld [vmem:[#allocation2 + $0x70] sm:$0xff]
    %v182 = vld [vmem:[#allocation2 + $0x78] sm:$0xff]
    %v183 = vld [vmem:[#allocation2 + $0x80] sm:$0xff]
    %v184 = vld [vmem:[#allocation2 + $0x88] sm:$0xff]
    %v185 = vld [vmem:[#allocation2 + $0x90] sm:$0xff]
    %v186 = vld [vmem:[#allocation2 + $0x98] sm:$0xff]
    %v187 = vld [vmem:[#allocation2 + $0xa0] sm:$0xff]
    %v188 = vld [vmem:[#allocation2 + $0xa8] sm:$0xff]
    %v189 = vld [vmem:[#allocation2 + $0xb0] sm:$0xff]
    %v190 = vld [vmem:[#allocation2 + $0xb8] sm:$0xff]
    %v191 = vld [vmem:[#allocation2 + $0xc0] sm:$0xff]
    %v192 = vld [vmem:[#allocation2 + $0xc8] sm:$0xff]
    %v193 = vld [vmem:[#allocation2 + $0xd0] sm:$0xff]
    %v194 = vld [vmem:[#allocation2 + $0xd8] sm:$0xff]
    %v195 = vld [vmem:[#allocation2 + $0xe0] sm:$0xff]
    %v196 = vld [vmem:[#allocation2 + $0xe8] sm:$0xff]
    %v197 = vld [vmem:[#allocation2 + $0xf0] sm:$0xff]
    %v198 = vld [vmem:[#allocation2 + $0xf8] sm:$0xff]
    %v199 = vld [vmem:[#allocation2 + $0x100] sm:$0xff]
    %v200 = vld [vmem:[#allocation2 + $0x108] sm:$0xff]
    %v201 = vld [vmem:[#allocation2 + $0x110] sm:$0xff]
    %v202 = vld [vmem:[#allocation2 + $0x118] sm:$0xff]
    %v203 = vld [vmem:[#allocation2 + $0x120] sm:$0xff]
    %v204 = vld [vmem:[#allocation2 + $0x128] sm:$0xff]
    %v205 = vld [vmem:[#allocation2 + $0x130] sm:$0xff]
    %v206 = vld [vmem:[#allocation2 + $0x138] sm:$0xff]
    %v207 = vld [vmem:[#allocation2 + $0x140] sm:$0xff]
    %v208 = vld [vmem:[#allocation2 + $0x148] sm:$0xff]
    %v209 = vld [vmem:[#allocation2 + $0x150] sm:$0xff]
    %v210 = vld [vmem:[#allocation2 + $0x158] sm:$0xff]
    %v211 = vld [vmem:[#allocation2 + $0x160] sm:$0xff]
    %v212 = vld [vmem:[#allocation2 + $0x168] sm:$0xff]
    %v213 = vld [vmem:[#allocation2 + $0x170] sm:$0xff]
    %v214 = vld [vmem:[#allocation2 + $0x178] sm:$0xff]
    %v215 = vld [vmem:[#allocation2 + $0x180] sm:$0xff]
    %v216 = vld [vmem:[#allocation2 + $0x188] sm:$0xff]
    %v217 = vld [vmem:[#allocation2 + $0x190] sm:$0xff]
    %v218 = vld [vmem:[#allocation2 + $0x198] sm:$0xff]
    %v219 = vld [vmem:[#allocation2 + $0x1a0] sm:$0xff]
    %v220 = vld [vmem:[#allocation2 + $0x1a8] sm:$0xff]
    %v221 = vld [vmem:[#allocation2 + $0x1b0] sm:$0xff]
    %v222 = vld [vmem:[#allocation2 + $0x1b8] sm:$0xff]
    %v223 = vld [vmem:[#allocation2 + $0x1c0] sm:$0xff]
    %v224 = vld [vmem:[#allocation2 + $0x1c8] sm:$0xff]
    %v225 = vld [vmem:[#allocation2 + $0x1d0] sm:$0xff]
    %v226 = vld [vmem:[#allocation2 + $0x1d8] sm:$0xff]
    %v227 = vld [vmem:[#allocation2 + $0x1e0] sm:$0xff]
    %v228 = vld [vmem:[#allocation2 + $0x1e8] sm:$0xff]
    %v229 = vld [vmem:[#allocation2 + $0x1f0] sm:$0xff]
    %v230 = vld [vmem:[#allocation2 + $0x1f8] sm:$0xff]
    %231 = vmatprep.subr.mxu0 %v168
    %232 = vmatpush1.msra.mxu0 %v167
    %233 = vmatprep.subr.mxu0 %v172
    %234 = vmatpush1.msra.mxu0 %v171
    %235 = vmatprep.subr.mxu0 %v176
    %236 = vmatpush1.msra.mxu0 %v175
    %237 = vmatprep.subr.mxu0 %v180
    %238 = vmatpush1.msra.mxu0 %v179
    %239 = vmatprep.subr.mxu0 %v184
    %240 = vmatpush1.msra.mxu0 %v183
    %241 = vmatprep.subr.mxu0 %v188
    %242 = vmatpush1.msra.mxu0 %v187
    %243 = vmatprep.subr.mxu0 %v192
    %244 = vmatpush1.msra.mxu0 %v191
    %245 = vmatprep.subr.mxu0 %v196
    %246 = vmatpush1.msra.mxu0 %v195
    %247 = vmatprep.subr.mxu0 %v200
    %248 = vmatpush1.msra.mxu0 %v199
    %249 = vmatprep.subr.mxu0 %v204
    %250 = vmatpush1.msra.mxu0 %v203
    %251 = vmatprep.subr.mxu0 %v208
    %252 = vmatpush1.msra.mxu0 %v207
    %253 = vmatprep.subr.mxu0 %v212
    %254 = vmatpush1.msra.mxu0 %v211
    %255 = vmatprep.subr.mxu0 %v216
    %256 = vmatpush1.msra.mxu0 %v215
    %257 = vmatprep.subr.mxu0 %v220
    %258 = vmatpush1.msra.mxu0 %v219
    %259 = vmatprep.subr.mxu0 %v224
    %260 = vmatpush1.msra.mxu0 %v223
    %261 = vmatprep.subr.mxu0 %v228
    %262 = vmatpush1.msra.mxu0 %v227
    %263 = vmatprep.subr.mxu0 0.0
    %264 = vmatpush1.msra.mxu0 0.0
    %265 = vmatprep.subr.mxu0 0.0
    %266 = vmatpush1.msra.mxu0 0.0
    %267 = vmatprep.subr.mxu0 0.0
    %268 = vmatpush1.msra.mxu0 0.0
    %269 = vmatprep.subr.mxu0 0.0
    %270 = vmatpush1.msra.mxu0 0.0
    %271 = vmatprep.subr.mxu0 0.0
    %272 = vmatpush1.msra.mxu0 0.0
    %273 = vmatprep.subr.mxu0 0.0
    %274 = vmatpush1.msra.mxu0 0.0
    %275 = vmatprep.subr.mxu0 0.0
    %276 = vmatpush1.msra.mxu0 0.0
    %277 = vmatprep.subr.mxu0 0.0
    %278 = vmatpush1.msra.mxu0 0.0
    %279 = vmatprep.subr.mxu0 0.0
    %280 = vmatpush1.msra.mxu0 0.0
    %281 = vmatprep.subr.mxu0 0.0
    %282 = vmatpush1.msra.mxu0 0.0
    %283 = vmatprep.subr.mxu0 0.0
    %284 = vmatpush1.msra.mxu0 0.0
    %285 = vmatprep.subr.mxu0 0.0
    %286 = vmatpush1.msra.mxu0 0.0
    %287 = vmatprep.subr.mxu0 0.0
    %288 = vmatpush1.msra.mxu0 0.0
    %289 = vmatprep.subr.mxu0 0.0
    %290 = vmatpush1.msra.mxu0 0.0
    %291 = vmatprep.subr.mxu0 0.0
    %292 = vmatpush1.msra.mxu0 0.0
    %293 = vmatprep.subr.mxu0 0.0
    %294 = vmatpush1.msra.mxu0 0.0
    %295 = vmatprep.mubr.f32.mxu0 0.0
    %296 = vmatmul.mubr.f32.gmra.mrb[0].mxu0 %v100
    %v297 = vpop.f32.mrb[0].mxu0
    %v298 = vadd.f32 0.0, %v297
    %v299 = vpop.f32.mrb[0].mxu0
    %v300 = vadd.f32 0.0, %v299
    %301 = vdwg.mxu0
    %302 = vmatprep.subr.mxu0 %v170
    %303 = vmatpush1.msra.mxu0 %v169
    %304 = vmatprep.subr.mxu0 %v174
    %305 = vmatpush1.msra.mxu0 %v173
    %306 = vmatprep.subr.mxu0 %v178
    %307 = vmatpush1.msra.mxu0 %v177
    %308 = vmatprep.subr.mxu0 %v182
    %309 = vmatpush1.msra.mxu0 %v181
    %310 = vmatprep.subr.mxu0 %v186
    %311 = vmatpush1.msra.mxu0 %v185
    %312 = vmatprep.subr.mxu0 %v190
    %313 = vmatpush1.msra.mxu0 %v189
    %314 = vmatprep.subr.mxu0 %v194
    %315 = vmatpush1.msra.mxu0 %v193
    %316 = vmatprep.subr.mxu0 %v198
    %317 = vmatpush1.msra.mxu0 %v197
    %318 = vmatprep.subr.mxu0 %v202
    %319 = vmatpush1.msra.mxu0 %v201
    %320 = vmatprep.subr.mxu0 %v206
    %321 = vmatpush1.msra.mxu0 %v205
    %322 = vmatprep.subr.mxu0 %v210
    %323 = vmatpush1.msra.mxu0 %v209
    %324 = vmatprep.subr.mxu0 %v214
    %325 = vmatpush1.msra.mxu0 %v213
    %326 = vmatprep.subr.mxu0 %v218
    %327 = vmatpush1.msra.mxu0 %v217
    %328 = vmatprep.subr.mxu0 %v222
    %329 = vmatpush1.msra.mxu0 %v221
    %330 = vmatprep.subr.mxu0 %v226
    %331 = vmatpush1.msra.mxu0 %v225
    %332 = vmatprep.subr.mxu0 %v230
    %333 = vmatpush1.msra.mxu0 %v229
    %334 = vmatprep.subr.mxu0 0.0
    %335 = vmatpush1.msra.mxu0 0.0
    %336 = vmatprep.subr.mxu0 0.0
    %337 = vmatpush1.msra.mxu0 0.0
    %338 = vmatprep.subr.mxu0 0.0
    %339 = vmatpush1.msra.mxu0 0.0
    %340 = vmatprep.subr.mxu0 0.0
    %341 = vmatpush1.msra.mxu0 0.0
    %342 = vmatprep.subr.mxu0 0.0
    %343 = vmatpush1.msra.mxu0 0.0
    %344 = vmatprep.subr.mxu0 0.0
    %345 = vmatpush1.msra.mxu0 0.0
    %346 = vmatprep.subr.mxu0 0.0
    %347 = vmatpush1.msra.mxu0 0.0
    %348 = vmatprep.subr.mxu0 0.0
    %349 = vmatpush1.msra.mxu0 0.0
    %350 = vmatprep.subr.mxu0 0.0
    %351 = vmatpush1.msra.mxu0 0.0
    %352 = vmatprep.subr.mxu0 0.0
    %353 = vmatpush1.msra.mxu0 0.0
    %354 = vmatprep.subr.mxu0 0.0
    %355 = vmatpush1.msra.mxu0 0.0
    %356 = vmatprep.subr.mxu0 0.0
    %357 = vmatpush1.msra.mxu0 0.0
    %358 = vmatprep.subr.mxu0 0.0
    %359 = vmatpush1.msra.mxu0 0.0
    %360 = vmatprep.subr.mxu0 0.0
    %361 = vmatpush1.msra.mxu0 0.0
    %362 = vmatprep.subr.mxu0 0.0
    %363 = vmatpush1.msra.mxu0 0.0
    %364 = vmatprep.subr.mxu0 0.0
    %365 = vmatpush1.msra.mxu0 0.0
    %366 = vmatprep.mubr.f32.mxu0 0.0
    %367 = vmatmul.mubr.f32.gmra.mrb[0].mxu0 %v100
    %v368 = vpop.f32.mrb[0].mxu0
    %v369 = vadd.f32 0.0, %v368
    %v370 = vpop.f32.mrb[0].mxu0
    %v371 = vadd.f32 0.0, %v370
    %372 = vdwg.mxu0
    %373 = vmatprep.subr.mxu0 %v104
    %374 = vmatpush1.msra.mxu0 %v103
    %375 = vmatprep.subr.mxu0 %v108
    %376 = vmatpush1.msra.mxu0 %v107
    %377 = vmatprep.subr.mxu0 %v112
    %378 = vmatpush1.msra.mxu0 %v111
    %379 = vmatprep.subr.mxu0 %v116
    %380 = vmatpush1.msra.mxu0 %v115
    %381 = vmatprep.subr.mxu0 %v120
    %382 = vmatpush1.msra.mxu0 %v119
    %383 = vmatprep.subr.mxu0 %v124
    %384 = vmatpush1.msra.mxu0 %v123
    %385 = vmatprep.subr.mxu0 %v128
    %386 = vmatpush1.msra.mxu0 %v127
    %387 = vmatprep.subr.mxu0 %v132
    %388 = vmatpush1.msra.mxu0 %v131
    %389 = vmatprep.subr.mxu0 %v136
    %390 = vmatpush1.msra.mxu0 %v135
    %391 = vmatprep.subr.mxu0 %v140
    %392 = vmatpush1.msra.mxu0 %v139
    %393 = vmatprep.subr.mxu0 %v144
    %394 = vmatpush1.msra.mxu0 %v143
    %395 = vmatprep.subr.mxu0 %v148
    %396 = vmatpush1.msra.mxu0 %v147
    %397 = vmatprep.subr.mxu0 %v152
    %398 = vmatpush1.msra.mxu0 %v151
    %399 = vmatprep.subr.mxu0 %v156
    %400 = vmatpush1.msra.mxu0 %v155
    %401 = vmatprep.subr.mxu0 %v160
    %402 = vmatpush1.msra.mxu0 %v159
    %403 = vmatprep.subr.mxu0 %v164
    %404 = vmatpush1.msra.mxu0 %v163
    %405 = vmatprep.subr.mxu0 0.0
    %406 = vmatpush1.msra.mxu0 0.0
    %407 = vmatprep.subr.mxu0 0.0
    %408 = vmatpush1.msra.mxu0 0.0
    %409 = vmatprep.subr.mxu0 0.0
    %410 = vmatpush1.msra.mxu0 0.0
    %411 = vmatprep.subr.mxu0 0.0
    %412 = vmatpush1.msra.mxu0 0.0
    %413 = vmatprep.subr.mxu0 0.0
    %414 = vmatpush1.msra.mxu0 0.0
    %415 = vmatprep.subr.mxu0 0.0
    %416 = vmatpush1.msra.mxu0 0.0
    %417 = vmatprep.subr.mxu0 0.0
    %418 = vmatpush1.msra.mxu0 0.0
    %419 = vmatprep.subr.mxu0 0.0
    %420 = vmatpush1.msra.mxu0 0.0
    %421 = vmatprep.subr.mxu0 0.0
    %422 = vmatpush1.msra.mxu0 0.0
    %423 = vmatprep.subr.mxu0 0.0
    %424 = vmatpush1.msra.mxu0 0.0
    %425 = vmatprep.subr.mxu0 0.0
    %426 = vmatpush1.msra.mxu0 0.0
    %427 = vmatprep.subr.mxu0 0.0
    %428 = vmatpush1.msra.mxu0 0.0
    %429 = vmatprep.subr.mxu0 0.0
    %430 = vmatpush1.msra.mxu0 0.0
    %431 = vmatprep.subr.mxu0 0.0
    %432 = vmatpush1.msra.mxu0 0.0
    %433 = vmatprep.subr.mxu0 0.0
    %434 = vmatpush1.msra.mxu0 0.0
    %435 = vmatprep.subr.mxu0 0.0
    %436 = vmatpush1.msra.mxu0 0.0
    %437 = vmatprep.mubr.f32.mxu0 0.0
    %438 = vmatmul.mubr.f32.gmra.mrb[0].mxu0 %v102
    %v439 = vpop.f32.mrb[0].mxu0
    %v440 = vadd.f32 %v298, %v439
    %v441 = vpop.f32.mrb[0].mxu0
    %v442 = vadd.f32 %v300, %v441
    %443 = vdwg.mxu0
    %444 = vmatprep.subr.mxu0 %v106
    %445 = vmatpush1.msra.mxu0 %v105
    %446 = vmatprep.subr.mxu0 %v110
    %447 = vmatpush1.msra.mxu0 %v109
    %448 = vmatprep.subr.mxu0 %v114
    %449 = vmatpush1.msra.mxu0 %v113
    %450 = vmatprep.subr.mxu0 %v118
    %451 = vmatpush1.msra.mxu0 %v117
    %452 = vmatprep.subr.mxu0 %v122
    %453 = vmatpush1.msra.mxu0 %v121
    %454 = vmatprep.subr.mxu0 %v126
    %455 = vmatpush1.msra.mxu0 %v125
    %456 = vmatprep.subr.mxu0 %v130
    %457 = vmatpush1.msra.mxu0 %v129
    %458 = vmatprep.subr.mxu0 %v134
    %459 = vmatpush1.msra.mxu0 %v133
    %460 = vmatprep.subr.mxu0 %v138
    %461 = vmatpush1.msra.mxu0 %v137
    %462 = vmatprep.subr.mxu0 %v142
    %463 = vmatpush1.msra.mxu0 %v141
    %464 = vmatprep.subr.mxu0 %v146
    %465 = vmatpush1.msra.mxu0 %v145
    %466 = vmatprep.subr.mxu0 %v150
    %467 = vmatpush1.msra.mxu0 %v149
    %468 = vmatprep.subr.mxu0 %v154
    %469 = vmatpush1.msra.mxu0 %v153
    %470 = vmatprep.subr.mxu0 %v158
    %471 = vmatpush1.msra.mxu0 %v157
    %472 = vmatprep.subr.mxu0 %v162
    %473 = vmatpush1.msra.mxu0 %v161
    %474 = vmatprep.subr.mxu0 %v166
    %475 = vmatpush1.msra.mxu0 %v165
    %476 = vmatprep.subr.mxu0 0.0
    %477 = vmatpush1.msra.mxu0 0.0
    %478 = vmatprep.subr.mxu0 0.0
    %479 = vmatpush1.msra.mxu0 0.0
    %480 = vmatprep.subr.mxu0 0.0
    %481 = vmatpush1.msra.mxu0 0.0
    %482 = vmatprep.subr.mxu0 0.0
    %483 = vmatpush1.msra.mxu0 0.0
    %484 = vmatprep.subr.mxu0 0.0
    %485 = vmatpush1.msra.mxu0 0.0
    %486 = vmatprep.subr.mxu0 0.0
    %487 = vmatpush1.msra.mxu0 0.0
    %488 = vmatprep.subr.mxu0 0.0
    %489 = vmatpush1.msra.mxu0 0.0
    %490 = vmatprep.subr.mxu0 0.0
    %491 = vmatpush1.msra.mxu0 0.0
    %492 = vmatprep.subr.mxu0 0.0
    %493 = vmatpush1.msra.mxu0 0.0
    %494 = vmatprep.subr.mxu0 0.0
    %495 = vmatpush1.msra.mxu0 0.0
    %496 = vmatprep.subr.mxu0 0.0
    %497 = vmatpush1.msra.mxu0 0.0
    %498 = vmatprep.subr.mxu0 0.0
    %499 = vmatpush1.msra.mxu0 0.0
    %500 = vmatprep.subr.mxu0 0.0
    %501 = vmatpush1.msra.mxu0 0.0
    %502 = vmatprep.subr.mxu0 0.0
    %503 = vmatpush1.msra.mxu0 0.0
    %504 = vmatprep.subr.mxu0 0.0
    %505 = vmatpush1.msra.mxu0 0.0
    %506 = vmatprep.subr.mxu0 0.0
    %507 = vmatpush1.msra.mxu0 0.0
    %508 = vmatprep.mubr.f32.mxu0 0.0
    %509 = vmatmul.mubr.f32.gmra.mrb[0].mxu0 %v102
    %v510 = vpop.f32.mrb[0].mxu0
    %v511 = vadd.f32 %v369, %v510
    %v512 = vpop.f32.mrb[0].mxu0
    %v513 = vadd.f32 %v371, %v512
    %514 = vdwg.mxu0
    %v515 = vld [vmem:[%s5] sm:$0xf]
    %v517 = vlaneseq
    %v518 = vshrl.u32 %v517, 7
    %v519 = vsub.s32 0, %v518
    %v520 = vrot.slane %v515, %v519
    %v521 = vlaneseq
    %v522 = vshrl.u32 %v521, 7
    %v523 = vsub.s32 1, %v522
    %v524 = vrot.slane %v515, %v523
    %v525 = vlaneseq
    %v526 = vshrl.u32 %v525, 7
    %v527 = vsub.s32 2, %v526
    %v528 = vrot.slane %v515, %v527
    %v529 = vlaneseq
    %v530 = vshrl.u32 %v529, 7
    %v531 = vsub.s32 3, %v530
    %v532 = vrot.slane %v515, %v531
    %v537 = vadd.f32 %v440, %v520
    %v538 = vadd.f32 %v442, %v524
    %v539 = vadd.f32 %v511, %v528
    %v540 = vadd.f32 %v513, %v532
    %v541 = vxor.u32 %v537, 2147483648
    %v542 = vmul.f32 %v541, 1.442695
    %v543 = vpow.pop %v542
    %v544 = vadd.f32 %v543, 1.0
    %v545 = vrcp.pop %v544
    %v546 = vmul.f32 1.0, %v545
    %v547 = vxor.u32 %v538, 2147483648
    %v548 = vmul.f32 %v547, 1.442695
    %v549 = vpow.pop %v548
    %v550 = vadd.f32 %v549, 1.0
    %v551 = vrcp.pop %v550
    %v552 = vmul.f32 1.0, %v551
    %v553 = vtanh.pop %v539
    %v554 = vxor.u32 %v540, 2147483648
    %v555 = vmul.f32 %v554, 1.442695
    %v556 = vpow.pop %v555
    %v557 = vadd.f32 %v556, 1.0
    %v558 = vrcp.pop %v557
    %v559 = vmul.f32 1.0, %v558
    %v560 = vmul.f32 %v552, 0.0
    %v561 = vmul.f32 %v546, %v553
    %v562 = vadd.f32 %v560, %v561
    %v563 = vtanh.pop %v562
    %v564 = vmul.f32 %v559, %v563
    %v565 = vld [vmem:[%s6] sm:$0xff]
    %v566 = vld [vmem:[%s6 + $0x8] sm:$0xff]
    %v567 = vld [vmem:[%s6 + $0x10] sm:$0xff]
    %v568 = vld [vmem:[%s6 + $0x18] sm:$0xff]
    %v569 = vld [vmem:[%s6 + $0x20] sm:$0xff]
    %v570 = vld [vmem:[%s6 + $0x28] sm:$0xff]
    %v571 = vld [vmem:[%s6 + $0x30] sm:$0xff]
    %v572 = vld [vmem:[%s6 + $0x38] sm:$0xff]
    %v573 = vld [vmem:[%s6 + $0x40] sm:$0xff]
    %v574 = vld [vmem:[%s6 + $0x48] sm:$0xff]
    %v575 = vld [vmem:[%s6 + $0x50] sm:$0xff]
    %v576 = vld [vmem:[%s6 + $0x58] sm:$0xff]
    %v577 = vld [vmem:[%s6 + $0x60] sm:$0xff]
    %v578 = vld [vmem:[%s6 + $0x68] sm:$0xff]
    %v579 = vld [vmem:[%s6 + $0x70] sm:$0xff]
    %v580 = vld [vmem:[%s6 + $0x78] sm:$0xff]
    %v581 = vld [vmem:[%s7] sm:$0x1]
    %v583 = vlaneseq
    %v584 = vshrl.u32 %v583, 7
    %v585 = vsub.s32 0, %v584
    %v586 = vrot.slane %v581, %v585
    %588 = vmatprep.subr.mxu0 0.0
    %589 = vmatpush1.msra.mxu0 %v565
    %590 = vmatprep.subr.mxu0 0.0
    %591 = vmatpush1.msra.mxu0 %v566
    %592 = vmatprep.subr.mxu0 0.0
    %593 = vmatpush1.msra.mxu0 %v567
    %594 = vmatprep.subr.mxu0 0.0
    %595 = vmatpush1.msra.mxu0 %v568
    %596 = vmatprep.subr.mxu0 0.0
    %597 = vmatpush1.msra.mxu0 %v569
    %598 = vmatprep.subr.mxu0 0.0
    %599 = vmatpush1.msra.mxu0 %v570
    %600 = vmatprep.subr.mxu0 0.0
    %601 = vmatpush1.msra.mxu0 %v571
    %602 = vmatprep.subr.mxu0 0.0
    %603 = vmatpush1.msra.mxu0 %v572
    %604 = vmatprep.subr.mxu0 0.0
    %605 = vmatpush1.msra.mxu0 %v573
    %606 = vmatprep.subr.mxu0 0.0
    %607 = vmatpush1.msra.mxu0 %v574
    %608 = vmatprep.subr.mxu0 0.0
    %609 = vmatpush1.msra.mxu0 %v575
    %610 = vmatprep.subr.mxu0 0.0
    %611 = vmatpush1.msra.mxu0 %v576
    %612 = vmatprep.subr.mxu0 0.0
    %613 = vmatpush1.msra.mxu0 %v577
    %614 = vmatprep.subr.mxu0 0.0
    %615 = vmatpush1.msra.mxu0 %v578
    %616 = vmatprep.subr.mxu0 0.0
    %617 = vmatpush1.msra.mxu0 %v579
    %618 = vmatprep.subr.mxu0 0.0
    %619 = vmatpush1.msra.mxu0 %v580
    %620 = vmatprep.subr.mxu0 0.0
    %621 = vmatpush1.msra.mxu0 0.0
    %622 = vmatprep.subr.mxu0 0.0
    %623 = vmatpush1.msra.mxu0 0.0
    %624 = vmatprep.subr.mxu0 0.0
    %625 = vmatpush1.msra.mxu0 0.0
    %626 = vmatprep.subr.mxu0 0.0
    %627 = vmatpush1.msra.mxu0 0.0
    %628 = vmatprep.subr.mxu0 0.0
    %629 = vmatpush1.msra.mxu0 0.0
    %630 = vmatprep.subr.mxu0 0.0
    %631 = vmatpush1.msra.mxu0 0.0
    %632 = vmatprep.subr.mxu0 0.0
    %633 = vmatpush1.msra.mxu0 0.0
    %634 = vmatprep.subr.mxu0 0.0
    %635 = vmatpush1.msra.mxu0 0.0
    %636 = vmatprep.subr.mxu0 0.0
    %637 = vmatpush1.msra.mxu0 0.0
    %638 = vmatprep.subr.mxu0 0.0
    %639 = vmatpush1.msra.mxu0 0.0
    %640 = vmatprep.subr.mxu0 0.0
    %641 = vmatpush1.msra.mxu0 0.0
    %642 = vmatprep.subr.mxu0 0.0
    %643 = vmatpush1.msra.mxu0 0.0
    %644 = vmatprep.subr.mxu0 0.0
    %645 = vmatpush1.msra.mxu0 0.0
    %646 = vmatprep.subr.mxu0 0.0
    %647 = vmatpush1.msra.mxu0 0.0
    %648 = vmatprep.subr.mxu0 0.0
    %649 = vmatpush1.msra.mxu0 0.0
    %650 = vmatprep.subr.mxu0 0.0
    %651 = vmatpush1.msra.mxu0 0.0
    %652 = vmatprep.mubr.f32.mxu0 0.0
    %653 = vmatmul.mubr.f32.gmra.mrb[0].mxu0 %v564
    %v654 = vpop.f32.mrb[0].mxu0
    %v655 = vadd.f32 %v586, %v654
    %v656 = vpop.f32.mrb[0].mxu0
    %657 = vdwg.mxu0
    %v658 = vadd.f32 %v655, %v101
    %v659 = vld [vmem:[#allocation4] sm:$0xff]
    %v660 = vld [vmem:[#allocation4 + $0x8] sm:$0xff]
    %v661 = vld [vmem:[#allocation4 + $0x10] sm:$0xff]
    %v662 = vld [vmem:[#allocation4 + $0x18] sm:$0xff]
    %v663 = vld [vmem:[#allocation4 + $0x20] sm:$0xff]
    %v664 = vld [vmem:[#allocation4 + $0x28] sm:$0xff]
    %v665 = vld [vmem:[#allocation4 + $0x30] sm:$0xff]
    %v666 = vld [vmem:[#allocation4 + $0x38] sm:$0xff]
    %v667 = vld [vmem:[#allocation4 + $0x40] sm:$0xff]
    %v668 = vld [vmem:[#allocation4 + $0x48] sm:$0xff]
    %v669 = vld [vmem:[#allocation4 + $0x50] sm:$0xff]
    %v670 = vld [vmem:[#allocation4 + $0x58] sm:$0xff]
    %v671 = vld [vmem:[#allocation4 + $0x60] sm:$0xff]
    %v672 = vld [vmem:[#allocation4 + $0x68] sm:$0xff]
    %v673 = vld [vmem:[#allocation4 + $0x70] sm:$0xff]
    %v674 = vld [vmem:[#allocation4 + $0x78] sm:$0xff]
    %v675 = vld [vmem:[#allocation4 + $0x80] sm:$0xff]
    %v676 = vld [vmem:[#allocation4 + $0x88] sm:$0xff]
    %v677 = vld [vmem:[#allocation4 + $0x90] sm:$0xff]
    %v678 = vld [vmem:[#allocation4 + $0x98] sm:$0xff]
    %v679 = vld [vmem:[#allocation4 + $0xa0] sm:$0xff]
    %v680 = vld [vmem:[#allocation4 + $0xa8] sm:$0xff]
    %v681 = vld [vmem:[#allocation4 + $0xb0] sm:$0xff]
    %v682 = vld [vmem:[#allocation4 + $0xb8] sm:$0xff]
    %v683 = vld [vmem:[#allocation4 + $0xc0] sm:$0xff]
    %v684 = vld [vmem:[#allocation4 + $0xc8] sm:$0xff]
    %v685 = vld [vmem:[#allocation4 + $0xd0] sm:$0xff]
    %v686 = vld [vmem:[#allocation4 + $0xd8] sm:$0xff]
    %v687 = vld [vmem:[#allocation4 + $0xe0] sm:$0xff]
    %v688 = vld [vmem:[#allocation4 + $0xe8] sm:$0xff]
    %v689 = vld [vmem:[#allocation4 + $0xf0] sm:$0xff]
    %v690 = vld [vmem:[#allocation4 + $0xf8] sm:$0xff]
    %v691 = vld [vmem:[#allocation4 + $0x100] sm:$0xff]
    %v692 = vld [vmem:[#allocation4 + $0x108] sm:$0xff]
    %v693 = vld [vmem:[#allocation4 + $0x110] sm:$0xff]
    %v694 = vld [vmem:[#allocation4 + $0x118] sm:$0xff]
    %v695 = vld [vmem:[#allocation4 + $0x120] sm:$0xff]
    %v696 = vld [vmem:[#allocation4 + $0x128] sm:$0xff]
    %v697 = vld [vmem:[#allocation4 + $0x130] sm:$0xff]
    %v698 = vld [vmem:[#allocation4 + $0x138] sm:$0xff]
    %v699 = vld [vmem:[#allocation4 + $0x140] sm:$0xff]
    %v700 = vld [vmem:[#allocation4 + $0x148] sm:$0xff]
    %v701 = vld [vmem:[#allocation4 + $0x150] sm:$0xff]
    %v702 = vld [vmem:[#allocation4 + $0x158] sm:$0xff]
    %v703 = vld [vmem:[#allocation4 + $0x160] sm:$0xff]
    %v704 = vld [vmem:[#allocation4 + $0x168] sm:$0xff]
    %v705 = vld [vmem:[#allocation4 + $0x170] sm:$0xff]
    %v706 = vld [vmem:[#allocation4 + $0x178] sm:$0xff]
    %v707 = vld [vmem:[#allocation4 + $0x180] sm:$0xff]
    %v708 = vld [vmem:[#allocation4 + $0x188] sm:$0xff]
    %v709 = vld [vmem:[#allocation4 + $0x190] sm:$0xff]
    %v710 = vld [vmem:[#allocation4 + $0x198] sm:$0xff]
    %v711 = vld [vmem:[#allocation4 + $0x1a0] sm:$0xff]
    %v712 = vld [vmem:[#allocation4 + $0x1a8] sm:$0xff]
    %v713 = vld [vmem:[#allocation4 + $0x1b0] sm:$0xff]
    %v714 = vld [vmem:[#allocation4 + $0x1b8] sm:$0xff]
    %v715 = vld [vmem:[#allocation4 + $0x1c0] sm:$0xff]
    %v716 = vld [vmem:[#allocation4 + $0x1c8] sm:$0xff]
    %v717 = vld [vmem:[#allocation4 + $0x1d0] sm:$0xff]
    %v718 = vld [vmem:[#allocation4 + $0x1d8] sm:$0xff]
    %v719 = vld [vmem:[#allocation4 + $0x1e0] sm:$0xff]
    %v720 = vld [vmem:[#allocation4 + $0x1e8] sm:$0xff]
    %v721 = vld [vmem:[#allocation4 + $0x1f0] sm:$0xff]
    %v722 = vld [vmem:[#allocation4 + $0x1f8] sm:$0xff]
    %723 = vmatprep.subr.mxu0 %v660
    %724 = vmatpush1.msra.mxu0 %v659
    %725 = vmatprep.subr.mxu0 %v664
    %726 = vmatpush1.msra.mxu0 %v663
    %727 = vmatprep.subr.mxu0 %v668
    %728 = vmatpush1.msra.mxu0 %v667
    %729 = vmatprep.subr.mxu0 %v672
    %730 = vmatpush1.msra.mxu0 %v671
    %731 = vmatprep.subr.mxu0 %v676
    %732 = vmatpush1.msra.mxu0 %v675
    %733 = vmatprep.subr.mxu0 %v680
    %734 = vmatpush1.msra.mxu0 %v679
    %735 = vmatprep.subr.mxu0 %v684
    %736 = vmatpush1.msra.mxu0 %v683
    %737 = vmatprep.subr.mxu0 %v688
    %738 = vmatpush1.msra.mxu0 %v687
    %739 = vmatprep.subr.mxu0 %v692
    %740 = vmatpush1.msra.mxu0 %v691
    %741 = vmatprep.subr.mxu0 %v696
    %742 = vmatpush1.msra.mxu0 %v695
    %743 = vmatprep.subr.mxu0 %v700
    %744 = vmatpush1.msra.mxu0 %v699
    %745 = vmatprep.subr.mxu0 %v704
    %746 = vmatpush1.msra.mxu0 %v703
    %747 = vmatprep.subr.mxu0 %v708
    %748 = vmatpush1.msra.mxu0 %v707
    %749 = vmatprep.subr.mxu0 %v712
    %750 = vmatpush1.msra.mxu0 %v711
    %751 = vmatprep.subr.mxu0 %v716
    %752 = vmatpush1.msra.mxu0 %v715
    %753 = vmatprep.subr.mxu0 %v720
    %754 = vmatpush1.msra.mxu0 %v719
    %755 = vmatprep.subr.mxu0 0.0
    %756 = vmatpush1.msra.mxu0 0.0
    %757 = vmatprep.subr.mxu0 0.0
    %758 = vmatpush1.msra.mxu0 0.0
    %759 = vmatprep.subr.mxu0 0.0
    %760 = vmatpush1.msra.mxu0 0.0
    %761 = vmatprep.subr.mxu0 0.0
    %762 = vmatpush1.msra.mxu0 0.0
    %763 = vmatprep.subr.mxu0 0.0
    %764 = vmatpush1.msra.mxu0 0.0
    %765 = vmatprep.subr.mxu0 0.0
    %766 = vmatpush1.msra.mxu0 0.0
    %767 = vmatprep.subr.mxu0 0.0
    %768 = vmatpush1.msra.mxu0 0.0
    %769 = vmatprep.subr.mxu0 0.0
    %770 = vmatpush1.msra.mxu0 0.0
    %771 = vmatprep.subr.mxu0 0.0
    %772 = vmatpush1.msra.mxu0 0.0
    %773 = vmatprep.subr.mxu0 0.0
    %774 = vmatpush1.msra.mxu0 0.0
    %775 = vmatprep.subr.mxu0 0.0
    %776 = vmatpush1.msra.mxu0 0.0
    %777 = vmatprep.subr.mxu0 0.0
    %778 = vmatpush1.msra.mxu0 0.0
    %779 = vmatprep.subr.mxu0 0.0
    %780 = vmatpush1.msra.mxu0 0.0
    %781 = vmatprep.subr.mxu0 0.0
    %782 = vmatpush1.msra.mxu0 0.0
    %783 = vmatprep.subr.mxu0 0.0
    %784 = vmatpush1.msra.mxu0 0.0
    %785 = vmatprep.subr.mxu0 0.0
    %786 = vmatpush1.msra.mxu0 0.0
    %787 = vmatprep.mubr.f32.mxu0 0.0
    %788 = vmatmul.mubr.f32.gmra.mrb[0].mxu0 %v658
    %v789 = vpop.f32.mrb[0].mxu0
    %v790 = vadd.f32 0.0, %v789
    %v791 = vpop.f32.mrb[0].mxu0
    %v792 = vadd.f32 0.0, %v791
    %793 = vdwg.mxu0
    %794 = vmatprep.subr.mxu0 %v662
    %795 = vmatpush1.msra.mxu0 %v661
    %796 = vmatprep.subr.mxu0 %v666
    %797 = vmatpush1.msra.mxu0 %v665
    %798 = vmatprep.subr.mxu0 %v670
    %799 = vmatpush1.msra.mxu0 %v669
    %800 = vmatprep.subr.mxu0 %v674
    %801 = vmatpush1.msra.mxu0 %v673
    %802 = vmatprep.subr.mxu0 %v678
    %803 = vmatpush1.msra.mxu0 %v677
    %804 = vmatprep.subr.mxu0 %v682
    %805 = vmatpush1.msra.mxu0 %v681
    %806 = vmatprep.subr.mxu0 %v686
    %807 = vmatpush1.msra.mxu0 %v685
    %808 = vmatprep.subr.mxu0 %v690
    %809 = vmatpush1.msra.mxu0 %v689
    %810 = vmatprep.subr.mxu0 %v694
    %811 = vmatpush1.msra.mxu0 %v693
    %812 = vmatprep.subr.mxu0 %v698
    %813 = vmatpush1.msra.mxu0 %v697
    %814 = vmatprep.subr.mxu0 %v702
    %815 = vmatpush1.msra.mxu0 %v701
    %816 = vmatprep.subr.mxu0 %v706
    %817 = vmatpush1.msra.mxu0 %v705
    %818 = vmatprep.subr.mxu0 %v710
    %819 = vmatpush1.msra.mxu0 %v709
    %820 = vmatprep.subr.mxu0 %v714
    %821 = vmatpush1.msra.mxu0 %v713
    %822 = vmatprep.subr.mxu0 %v718
    %823 = vmatpush1.msra.mxu0 %v717
    %824 = vmatprep.subr.mxu0 %v722
    %825 = vmatpush1.msra.mxu0 %v721
    %826 = vmatprep.subr.mxu0 0.0
    %827 = vmatpush1.msra.mxu0 0.0
    %828 = vmatprep.subr.mxu0 0.0
    %829 = vmatpush1.msra.mxu0 0.0
    %830 = vmatprep.subr.mxu0 0.0
    %831 = vmatpush1.msra.mxu0 0.0
    %832 = vmatprep.subr.mxu0 0.0
    %833 = vmatpush1.msra.mxu0 0.0
    %834 = vmatprep.subr.mxu0 0.0
    %835 = vmatpush1.msra.mxu0 0.0
    %836 = vmatprep.subr.mxu0 0.0
    %837 = vmatpush1.msra.mxu0 0.0
    %838 = vmatprep.subr.mxu0 0.0
    %839 = vmatpush1.msra.mxu0 0.0
    %840 = vmatprep.subr.mxu0 0.0
    %841 = vmatpush1.msra.mxu0 0.0
    %842 = vmatprep.subr.mxu0 0.0
    %843 = vmatpush1.msra.mxu0 0.0
    %844 = vmatprep.subr.mxu0 0.0
    %845 = vmatpush1.msra.mxu0 0.0
    %846 = vmatprep.subr.mxu0 0.0
    %847 = vmatpush1.msra.mxu0 0.0
    %848 = vmatprep.subr.mxu0 0.0
    %849 = vmatpush1.msra.mxu0 0.0
    %850 = vmatprep.subr.mxu0 0.0
    %851 = vmatpush1.msra.mxu0 0.0
    %852 = vmatprep.subr.mxu0 0.0
    %853 = vmatpush1.msra.mxu0 0.0
    %854 = vmatprep.subr.mxu0 0.0
    %855 = vmatpush1.msra.mxu0 0.0
    %856 = vmatprep.subr.mxu0 0.0
    %857 = vmatpush1.msra.mxu0 0.0
    %858 = vmatprep.mubr.f32.mxu0 0.0
    %859 = vmatmul.mubr.f32.gmra.mrb[0].mxu0 %v658
    %v860 = vpop.f32.mrb[0].mxu0
    %v861 = vadd.f32 0.0, %v860
    %v862 = vpop.f32.mrb[0].mxu0
    %v863 = vadd.f32 0.0, %v862
    %864 = vdwg.mxu0
    %v865 = vld [vmem:[#allocation6] sm:$0xff]
    %v866 = vld [vmem:[#allocation6 + $0x8] sm:$0xff]
    %v867 = vld [vmem:[#allocation6 + $0x10] sm:$0xff]
    %v868 = vld [vmem:[#allocation6 + $0x18] sm:$0xff]
    %v869 = vld [vmem:[#allocation6 + $0x20] sm:$0xff]
    %v870 = vld [vmem:[#allocation6 + $0x28] sm:$0xff]
    %v871 = vld [vmem:[#allocation6 + $0x30] sm:$0xff]
    %v872 = vld [vmem:[#allocation6 + $0x38] sm:$0xff]
    %v873 = vld [vmem:[#allocation6 + $0x40] sm:$0xff]
    %v874 = vld [vmem:[#allocation6 + $0x48] sm:$0xff]
    %v875 = vld [vmem:[#allocation6 + $0x50] sm:$0xff]
    %v876 = vld [vmem:[#allocation6 + $0x58] sm:$0xff]
    %v877 = vld [vmem:[#allocation6 + $0x60] sm:$0xff]
    %v878 = vld [vmem:[#allocation6 + $0x68] sm:$0xff]
    %v879 = vld [vmem:[#allocation6 + $0x70] sm:$0xff]
    %v880 = vld [vmem:[#allocation6 + $0x78] sm:$0xff]
    %v881 = vld [vmem:[#allocation6 + $0x80] sm:$0xff]
    %v882 = vld [vmem:[#allocation6 + $0x88] sm:$0xff]
    %v883 = vld [vmem:[#allocation6 + $0x90] sm:$0xff]
    %v884 = vld [vmem:[#allocation6 + $0x98] sm:$0xff]
    %v885 = vld [vmem:[#allocation6 + $0xa0] sm:$0xff]
    %v886 = vld [vmem:[#allocation6 + $0xa8] sm:$0xff]
    %v887 = vld [vmem:[#allocation6 + $0xb0] sm:$0xff]
    %v888 = vld [vmem:[#allocation6 + $0xb8] sm:$0xff]
    %v889 = vld [vmem:[#allocation6 + $0xc0] sm:$0xff]
    %v890 = vld [vmem:[#allocation6 + $0xc8] sm:$0xff]
    %v891 = vld [vmem:[#allocation6 + $0xd0] sm:$0xff]
    %v892 = vld [vmem:[#allocation6 + $0xd8] sm:$0xff]
    %v893 = vld [vmem:[#allocation6 + $0xe0] sm:$0xff]
    %v894 = vld [vmem:[#allocation6 + $0xe8] sm:$0xff]
    %v895 = vld [vmem:[#allocation6 + $0xf0] sm:$0xff]
    %v896 = vld [vmem:[#allocation6 + $0xf8] sm:$0xff]
    %v897 = vld [vmem:[#allocation6 + $0x100] sm:$0xff]
    %v898 = vld [vmem:[#allocation6 + $0x108] sm:$0xff]
    %v899 = vld [vmem:[#allocation6 + $0x110] sm:$0xff]
    %v900 = vld [vmem:[#allocation6 + $0x118] sm:$0xff]
    %v901 = vld [vmem:[#allocation6 + $0x120] sm:$0xff]
    %v902 = vld [vmem:[#allocation6 + $0x128] sm:$0xff]
    %v903 = vld [vmem:[#allocation6 + $0x130] sm:$0xff]
    %v904 = vld [vmem:[#allocation6 + $0x138] sm:$0xff]
    %v905 = vld [vmem:[#allocation6 + $0x140] sm:$0xff]
    %v906 = vld [vmem:[#allocation6 + $0x148] sm:$0xff]
    %v907 = vld [vmem:[#allocation6 + $0x150] sm:$0xff]
    %v908 = vld [vmem:[#allocation6 + $0x158] sm:$0xff]
    %v909 = vld [vmem:[#allocation6 + $0x160] sm:$0xff]
    %v910 = vld [vmem:[#allocation6 + $0x168] sm:$0xff]
    %v911 = vld [vmem:[#allocation6 + $0x170] sm:$0xff]
    %v912 = vld [vmem:[#allocation6 + $0x178] sm:$0xff]
    %v913 = vld [vmem:[#allocation6 + $0x180] sm:$0xff]
    %v914 = vld [vmem:[#allocation6 + $0x188] sm:$0xff]
    %v915 = vld [vmem:[#allocation6 + $0x190] sm:$0xff]
    %v916 = vld [vmem:[#allocation6 + $0x198] sm:$0xff]
    %v917 = vld [vmem:[#allocation6 + $0x1a0] sm:$0xff]
    %v918 = vld [vmem:[#allocation6 + $0x1a8] sm:$0xff]
    %v919 = vld [vmem:[#allocation6 + $0x1b0] sm:$0xff]
    %v920 = vld [vmem:[#allocation6 + $0x1b8] sm:$0xff]
    %v921 = vld [vmem:[#allocation6 + $0x1c0] sm:$0xff]
    %v922 = vld [vmem:[#allocation6 + $0x1c8] sm:$0xff]
    %v923 = vld [vmem:[#allocation6 + $0x1d0] sm:$0xff]
    %v924 = vld [vmem:[#allocation6 + $0x1d8] sm:$0xff]
    %v925 = vld [vmem:[#allocation6 + $0x1e0] sm:$0xff]
    %v926 = vld [vmem:[#allocation6 + $0x1e8] sm:$0xff]
    %v927 = vld [vmem:[#allocation6 + $0x1f0] sm:$0xff]
    %v928 = vld [vmem:[#allocation6 + $0x1f8] sm:$0xff]
    %929 = vmatprep.subr.mxu0 %v866
    %930 = vmatpush1.msra.mxu0 %v865
    %931 = vmatprep.subr.mxu0 %v870
    %932 = vmatpush1.msra.mxu0 %v869
    %933 = vmatprep.subr.mxu0 %v874
    %934 = vmatpush1.msra.mxu0 %v873
    %935 = vmatprep.subr.mxu0 %v878
    %936 = vmatpush1.msra.mxu0 %v877
    %937 = vmatprep.subr.mxu0 %v882
    %938 = vmatpush1.msra.mxu0 %v881
    %939 = vmatprep.subr.mxu0 %v886
    %940 = vmatpush1.msra.mxu0 %v885
    %941 = vmatprep.subr.mxu0 %v890
    %942 = vmatpush1.msra.mxu0 %v889
    %943 = vmatprep.subr.mxu0 %v894
    %944 = vmatpush1.msra.mxu0 %v893
    %945 = vmatprep.subr.mxu0 %v898
    %946 = vmatpush1.msra.mxu0 %v897
    %947 = vmatprep.subr.mxu0 %v902
    %948 = vmatpush1.msra.mxu0 %v901
    %949 = vmatprep.subr.mxu0 %v906
    %950 = vmatpush1.msra.mxu0 %v905
    %951 = vmatprep.subr.mxu0 %v910
    %952 = vmatpush1.msra.mxu0 %v909
    %953 = vmatprep.subr.mxu0 %v914
    %954 = vmatpush1.msra.mxu0 %v913
    %955 = vmatprep.subr.mxu0 %v918
    %956 = vmatpush1.msra.mxu0 %v917
    %957 = vmatprep.subr.mxu0 %v922
    %958 = vmatpush1.msra.mxu0 %v921
    %959 = vmatprep.subr.mxu0 %v926
    %960 = vmatpush1.msra.mxu0 %v925
    %961 = vmatprep.subr.mxu0 0.0
    %962 = vmatpush1.msra.mxu0 0.0
    %963 = vmatprep.subr.mxu0 0.0
    %964 = vmatpush1.msra.mxu0 0.0
    %965 = vmatprep.subr.mxu0 0.0
    %966 = vmatpush1.msra.mxu0 0.0
    %967 = vmatprep.subr.mxu0 0.0
    %968 = vmatpush1.msra.mxu0 0.0
    %969 = vmatprep.subr.mxu0 0.0
    %970 = vmatpush1.msra.mxu0 0.0
    %971 = vmatprep.subr.mxu0 0.0
    %972 = vmatpush1.msra.mxu0 0.0
    %973 = vmatprep.subr.mxu0 0.0
    %974 = vmatpush1.msra.mxu0 0.0
    %975 = vmatprep.subr.mxu0 0.0
    %976 = vmatpush1.msra.mxu0 0.0
    %977 = vmatprep.subr.mxu0 0.0
    %978 = vmatpush1.msra.mxu0 0.0
    %979 = vmatprep.subr.mxu0 0.0
    %980 = vmatpush1.msra.mxu0 0.0
    %981 = vmatprep.subr.mxu0 0.0
    %982 = vmatpush1.msra.mxu0 0.0
    %983 = vmatprep.subr.mxu0 0.0
    %984 = vmatpush1.msra.mxu0 0.0
    %985 = vmatprep.subr.mxu0 0.0
    %986 = vmatpush1.msra.mxu0 0.0
    %987 = vmatprep.subr.mxu0 0.0
    %988 = vmatpush1.msra.mxu0 0.0
    %989 = vmatprep.subr.mxu0 0.0
    %990 = vmatpush1.msra.mxu0 0.0
    %991 = vmatprep.subr.mxu0 0.0
    %992 = vmatpush1.msra.mxu0 0.0
    %993 = vmatprep.mubr.f32.mxu0 0.0
    %994 = vmatmul.mubr.f32.gmra.mrb[0].mxu0 %v564
    %v995 = vpop.f32.mrb[0].mxu0
    %v996 = vadd.f32 0.0, %v995
    %v997 = vpop.f32.mrb[0].mxu0
    %v998 = vadd.f32 0.0, %v997
    %999 = vdwg.mxu0
    %1000 = vmatprep.subr.mxu0 %v868
    %1001 = vmatpush1.msra.mxu0 %v867
    %1002 = vmatprep.subr.mxu0 %v872
    %1003 = vmatpush1.msra.mxu0 %v871
    %1004 = vmatprep.subr.mxu0 %v876
    %1005 = vmatpush1.msra.mxu0 %v875
    %1006 = vmatprep.subr.mxu0 %v880
    %1007 = vmatpush1.msra.mxu0 %v879
    %1008 = vmatprep.subr.mxu0 %v884
    %1009 = vmatpush1.msra.mxu0 %v883
    %1010 = vmatprep.subr.mxu0 %v888
    %1011 = vmatpush1.msra.mxu0 %v887
    %1012 = vmatprep.subr.mxu0 %v892
    %1013 = vmatpush1.msra.mxu0 %v891
    %1014 = vmatprep.subr.mxu0 %v896
    %1015 = vmatpush1.msra.mxu0 %v895
    %1016 = vmatprep.subr.mxu0 %v900
    %1017 = vmatpush1.msra.mxu0 %v899
    %1018 = vmatprep.subr.mxu0 %v904
    %1019 = vmatpush1.msra.mxu0 %v903
    %1020 = vmatprep.subr.mxu0 %v908
    %1021 = vmatpush1.msra.mxu0 %v907
    %1022 = vmatprep.subr.mxu0 %v912
    %1023 = vmatpush1.msra.mxu0 %v911
    %1024 = vmatprep.subr.mxu0 %v916
    %1025 = vmatpush1.msra.mxu0 %v915
    %1026 = vmatprep.subr.mxu0 %v920
    %1027 = vmatpush1.msra.mxu0 %v919
    %1028 = vmatprep.subr.mxu0 %v924
    %1029 = vmatpush1.msra.mxu0 %v923
    %1030 = vmatprep.subr.mxu0 %v928
    %1031 = vmatpush1.msra.mxu0 %v927
    %1032 = vmatprep.subr.mxu0 0.0
    %1033 = vmatpush1.msra.mxu0 0.0
    %1034 = vmatprep.subr.mxu0 0.0
    %1035 = vmatpush1.msra.mxu0 0.0
    %1036 = vmatprep.subr.mxu0 0.0
    %1037 = vmatpush1.msra.mxu0 0.0
    %1038 = vmatprep.subr.mxu0 0.0
    %1039 = vmatpush1.msra.mxu0 0.0
    %1040 = vmatprep.subr.mxu0 0.0
    %1041 = vmatpush1.msra.mxu0 0.0
    %1042 = vmatprep.subr.mxu0 0.0
    %1043 = vmatpush1.msra.mxu0 0.0
    %1044 = vmatprep.subr.mxu0 0.0
    %1045 = vmatpush1.msra.mxu0 0.0
    %1046 = vmatprep.subr.mxu0 0.0
    %1047 = vmatpush1.msra.mxu0 0.0
    %1048 = vmatprep.subr.mxu0 0.0
    %1049 = vmatpush1.msra.mxu0 0.0
    %1050 = vmatprep.subr.mxu0 0.0
    %1051 = vmatpush1.msra.mxu0 0.0
    %1052 = vmatprep.subr.mxu0 0.0
    %1053 = vmatpush1.msra.mxu0 0.0
    %1054 = vmatprep.subr.mxu0 0.0
    %1055 = vmatpush1.msra.mxu0 0.0
    %1056 = vmatprep.subr.mxu0 0.0
    %1057 = vmatpush1.msra.mxu0 0.0
    %1058 = vmatprep.subr.mxu0 0.0
    %1059 = vmatpush1.msra.mxu0 0.0
    %1060 = vmatprep.subr.mxu0 0.0
    %1061 = vmatpush1.msra.mxu0 0.0
    %1062 = vmatprep.subr.mxu0 0.0
    %1063 = vmatpush1.msra.mxu0 0.0
    %1064 = vmatprep.mubr.f32.mxu0 0.0
    %1065 = vmatmul.mubr.f32.gmra.mrb[0].mxu0 %v564
    %v1066 = vpop.f32.mrb[0].mxu0
    %v1067 = vadd.f32 0.0, %v1066
    %v1068 = vpop.f32.mrb[0].mxu0
    %v1069 = vadd.f32 0.0, %v1068
    %1070 = vdwg.mxu0
    %v1071 = vadd.f32 %v790, %v996
    %v1072 = vadd.f32 %v792, %v998
    %v1073 = vadd.f32 %v861, %v1067
    %v1074 = vadd.f32 %v863, %v1069
    %v1075 = vld [vmem:[%s10] sm:$0xf]
    %v1077 = vlaneseq
    %v1078 = vshrl.u32 %v1077, 7
    %v1079 = vsub.s32 0, %v1078
    %v1080 = vrot.slane %v1075, %v1079
    %v1081 = vlaneseq
    %v1082 = vshrl.u32 %v1081, 7
    %v1083 = vsub.s32 1, %v1082
    %v1084 = vrot.slane %v1075, %v1083
    %v1085 = vlaneseq
    %v1086 = vshrl.u32 %v1085, 7
    %v1087 = vsub.s32 2, %v1086
    %v1088 = vrot.slane %v1075, %v1087
    %v1089 = vlaneseq
    %v1090 = vshrl.u32 %v1089, 7
    %v1091 = vsub.s32 3, %v1090
    %v1092 = vrot.slane %v1075, %v1091
    %v1097 = vadd.f32 %v1071, %v1080
    %v1098 = vadd.f32 %v1072, %v1084
    %v1099 = vadd.f32 %v1073, %v1088
    %v1100 = vadd.f32 %v1074, %v1092
    %v1101 = vlaneseq
    %v1102 = vshrl.u32 %v1101, 7
    %v1103 = vsub.s32 0, %v1102
    %v1104 = vrot.slane %v790, %v1103
    %v1105 = vlaneseq
    %v1106 = vshrl.u32 %v1105, 7
    %v1107 = vsub.s32 0, %v1106
    %v1108 = vrot.slane %v792, %v1107
    %v1109 = vlaneseq
    %v1110 = vshrl.u32 %v1109, 7
    %v1111 = vsub.s32 0, %v1110
    %v1112 = vrot.slane %v861, %v1111
    %v1113 = vlaneseq
    %v1114 = vshrl.u32 %v1113, 7
    %v1115 = vsub.s32 0, %v1114
    %v1116 = vrot.slane %v863, %v1115
    %v1117 = vsub.f32 %v1097, %v1104
    %v1118 = vsub.f32 %v1098, %v1108
    %v1119 = vsub.f32 %v1099, %v1112
    %v1120 = vsub.f32 %v1100, %v1116
    %v1121 = vlaneseq
    %v1122 = vshrl.u32 %v1121, 7
    %v1123 = vsub.s32 1, %v1122
    %v1124 = vrot.slane %v790, %v1123
    %v1125 = vlaneseq
    %v1126 = vshrl.u32 %v1125, 7
    %v1127 = vsub.s32 1, %v1126
    %v1128 = vrot.slane %v792, %v1127
    %v1129 = vlaneseq
    %v1130 = vshrl.u32 %v1129, 7
    %v1131 = vsub.s32 1, %v1130
    %v1132 = vrot.slane %v861, %v1131
    %v1133 = vlaneseq
    %v1134 = vshrl.u32 %v1133, 7
    %v1135 = vsub.s32 1, %v1134
    %v1136 = vrot.slane %v863, %v1135
    %v1137 = vsub.f32 %v1097, %v1124
    %v1138 = vsub.f32 %v1098, %v1128
    %v1139 = vsub.f32 %v1099, %v1132
    %v1140 = vsub.f32 %v1100, %v1136
    %v1141 = vlaneseq
    %v1142 = vshrl.u32 %v1141, 7
    %v1143 = vsub.s32 2, %v1142
    %v1144 = vrot.slane %v790, %v1143
    %v1145 = vlaneseq
    %v1146 = vshrl.u32 %v1145, 7
    %v1147 = vsub.s32 2, %v1146
    %v1148 = vrot.slane %v792, %v1147
    %v1149 = vlaneseq
    %v1150 = vshrl.u32 %v1149, 7
    %v1151 = vsub.s32 2, %v1150
    %v1152 = vrot.slane %v861, %v1151
    %v1153 = vlaneseq
    %v1154 = vshrl.u32 %v1153, 7
    %v1155 = vsub.s32 2, %v1154
    %v1156 = vrot.slane %v863, %v1155
    %v1157 = vsub.f32 %v1097, %v1144
    %v1158 = vsub.f32 %v1098, %v1148
    %v1159 = vsub.f32 %v1099, %v1152
    %v1160 = vsub.f32 %v1100, %v1156
    %v1161 = vlaneseq
    %v1162 = vshrl.u32 %v1161, 7
    %v1163 = vsub.s32 3, %v1162
    %v1164 = vrot.slane %v790, %v1163
    %v1165 = vlaneseq
    %v1166 = vshrl.u32 %v1165, 7
    %v1167 = vsub.s32 3, %v1166
    %v1168 = vrot.slane %v792, %v1167
    %v1169 = vlaneseq
    %v1170 = vshrl.u32 %v1169, 7
    %v1171 = vsub.s32 3, %v1170
    %v1172 = vrot.slane %v861, %v1171
    %v1173 = vlaneseq
    %v1174 = vshrl.u32 %v1173, 7
    %v1175 = vsub.s32 3, %v1174
    %v1176 = vrot.slane %v863, %v1175
    %v1177 = vsub.f32 %v1097, %v1164
    %v1178 = vsub.f32 %v1098, %v1168
    %v1179 = vsub.f32 %v1099, %v1172
    %v1180 = vsub.f32 %v1100, %v1176
    %v1185 = vrot.slane %v1137, 4
    %v1186 = vrot.slane %v1138, 4
    %v1187 = vrot.slane %v1139, 4
    %v1188 = vrot.slane %v1140, 4
    %v1197 = vrot.slane %v1177, 4
    %v1198 = vrot.slane %v1178, 4
    %v1199 = vrot.slane %v1179, 4
    %v1200 = vrot.slane %v1180, 4
    %vm1205 = vcmask 1043456
    %v1206 = vsel %vm1205, %v1117, %v1185
    %v1207 = vsel %vm1205, %v1118, %v1186
    %v1208 = vsel %vm1205, %v1119, %v1187
    %v1209 = vsel %vm1205, %v1120, %v1188
    %v1210 = vsel %vm1205, %v1157, %v1197
    %v1211 = vsel %vm1205, %v1158, %v1198
    %v1212 = vsel %vm1205, %v1159, %v1199
    %v1213 = vsel %vm1205, %v1160, %v1200
    %v1214 = vadd.f32 %v1206, %v1210
    %v1215 = vrot.slane %v1214, 4
    %v1216 = vadd.f32 %v1214, %v1215
    %v1217 = vrot.slane %v1216, 2
    %v1218 = vadd.f32 %v1216, %v1217
    %v1219 = vrot.slane %v1218, 1
    %v1220 = vadd.f32 %v1218, %v1219
    %v1221 = vadd.f32 %v1207, %v1211
    %v1222 = vrot.slane %v1221, 4
    %v1223 = vadd.f32 %v1221, %v1222
    %v1224 = vrot.slane %v1223, 2
    %v1225 = vadd.f32 %v1223, %v1224
    %v1226 = vrot.slane %v1225, 1
    %v1227 = vadd.f32 %v1225, %v1226
    %v1228 = vadd.f32 %v1208, %v1212
    %v1229 = vrot.slane %v1228, 4
    %v1230 = vadd.f32 %v1228, %v1229
    %v1231 = vrot.slane %v1230, 2
    %v1232 = vadd.f32 %v1230, %v1231
    %v1233 = vrot.slane %v1232, 1
    %v1234 = vadd.f32 %v1232, %v1233
    %v1235 = vadd.f32 %v1209, %v1213
    %v1236 = vrot.slane %v1235, 4
    %v1237 = vadd.f32 %v1235, %v1236
    %v1238 = vrot.slane %v1237, 2
    %v1239 = vadd.f32 %v1237, %v1238
    %v1240 = vrot.slane %v1239, 1
    %v1241 = vadd.f32 %v1239, %v1240
    %v1242 = vrcp.pop 16.0
    %v1243 = vmul.f32 %v1220, %v1242
    %v1244 = vmul.f32 %v1227, %v1242
    %v1245 = vmul.f32 %v1234, %v1242
    %v1246 = vmul.f32 %v1241, %v1242
    %v1247 = vsub.f32 %v1206, %v1243
    %v1248 = vsub.f32 %v1207, %v1244
    %v1249 = vsub.f32 %v1208, %v1245
    %v1250 = vsub.f32 %v1209, %v1246
    %v1251 = vsub.f32 %v1210, %v1243
    %v1252 = vsub.f32 %v1211, %v1244
    %v1253 = vsub.f32 %v1212, %v1245
    %v1254 = vsub.f32 %v1213, %v1246
    %v1255 = vmul.f32 %v1247, %v1247
    %v1256 = vmul.f32 %v1248, %v1248
    %v1257 = vmul.f32 %v1249, %v1249
    %v1258 = vmul.f32 %v1250, %v1250
    %v1259 = vmul.f32 %v1251, %v1251
    %v1260 = vmul.f32 %v1252, %v1252
    %v1261 = vmul.f32 %v1253, %v1253
    %v1262 = vmul.f32 %v1254, %v1254
    %v1263 = vadd.f32 %v1255, %v1259
    %v1264 = vrot.slane %v1263, 4
    %v1265 = vadd.f32 %v1263, %v1264
    %v1266 = vrot.slane %v1265, 2
    %v1267 = vadd.f32 %v1265, %v1266
    %v1268 = vrot.slane %v1267, 1
    %v1269 = vadd.f32 %v1267, %v1268
    %v1270 = vadd.f32 %v1256, %v1260
    %v1271 = vrot.slane %v1270, 4
    %v1272 = vadd.f32 %v1270, %v1271
    %v1273 = vrot.slane %v1272, 2
    %v1274 = vadd.f32 %v1272, %v1273
    %v1275 = vrot.slane %v1274, 1
    %v1276 = vadd.f32 %v1274, %v1275
    %v1277 = vadd.f32 %v1257, %v1261
    %v1278 = vrot.slane %v1277, 4
    %v1279 = vadd.f32 %v1277, %v1278
    %v1280 = vrot.slane %v1279, 2
    %v1281 = vadd.f32 %v1279, %v1280
    %v1282 = vrot.slane %v1281, 1
    %v1283 = vadd.f32 %v1281, %v1282
    %v1284 = vadd.f32 %v1258, %v1262
    %v1285 = vrot.slane %v1284, 4
    %v1286 = vadd.f32 %v1284, %v1285
    %v1287 = vrot.slane %v1286, 2
    %v1288 = vadd.f32 %v1286, %v1287
    %v1289 = vrot.slane %v1288, 1
    %v1290 = vadd.f32 %v1288, %v1289
    %v1291 = vmul.f32 %v1269, %v1242
    %v1292 = vmul.f32 %v1276, %v1242
    %v1293 = vmul.f32 %v1283, %v1242
    %v1294 = vmul.f32 %v1290, %v1242
    %v1295 = vadd.f32 %v1291, 1e-05
    %v1296 = vadd.f32 %v1292, 1e-05
    %v1297 = vadd.f32 %v1293, 1e-05
    %v1298 = vadd.f32 %v1294, 1e-05
    %v1299 = vrsqrt.pop %v1295
    %v1300 = vrsqrt.pop %v1296
    %v1301 = vrsqrt.pop %v1297
    %v1302 = vrsqrt.pop %v1298
    %v1303 = vmul.f32 %v1247, %v1299
    %v1304 = vmul.f32 %v1248, %v1300
    %v1305 = vmul.f32 %v1249, %v1301
    %v1306 = vmul.f32 %v1250, %v1302
    %v1307 = vmul.f32 %v1251, %v1299
    %v1308 = vmul.f32 %v1252, %v1300
    %v1309 = vmul.f32 %v1253, %v1301
    %v1310 = vmul.f32 %v1254, %v1302
    %v1311 = vmax.f32 %v1303, 0.0
    %v1312 = vmax.f32 %v1304, 0.0
    %v1313 = vmax.f32 %v1305, 0.0
    %v1314 = vmax.f32 %v1306, 0.0
    %v1315 = vmax.f32 %v1307, 0.0
    %v1316 = vmax.f32 %v1308, 0.0
    %v1317 = vmax.f32 %v1309, 0.0
    %v1318 = vmax.f32 %v1310, 0.0
    %v1319 = vld [vmem:[%s11] sm:$0xff]
    %v1320 = vld [vmem:[%s11 + $0x8] sm:$0xff]
    %v1321 = vld [vmem:[%s11 + $0x10] sm:$0xff]
    %v1322 = vld [vmem:[%s11 + $0x18] sm:$0xff]
    %v1323 = vld [vmem:[%s11 + $0x20] sm:$0xff]
    %v1324 = vld [vmem:[%s11 + $0x28] sm:$0xff]
    %v1325 = vld [vmem:[%s11 + $0x30] sm:$0xff]
    %v1326 = vld [vmem:[%s11 + $0x38] sm:$0xff]
    %v1327 = vld [vmem:[%s11 + $0x40] sm:$0xff]
    %v1328 = vld [vmem:[%s11 + $0x48] sm:$0xff]
    %v1329 = vld [vmem:[%s11 + $0x50] sm:$0xff]
    %v1330 = vld [vmem:[%s11 + $0x58] sm:$0xff]
    %v1331 = vld [vmem:[%s11 + $0x60] sm:$0xff]
    %v1332 = vld [vmem:[%s11 + $0x68] sm:$0xff]
    %v1333 = vld [vmem:[%s11 + $0x70] sm:$0xff]
    %v1334 = vld [vmem:[%s11 + $0x78] sm:$0xff]
    %v1335 = vld [vmem:[%s11 + $0x80] sm:$0xff]
    %v1336 = vld [vmem:[%s11 + $0x88] sm:$0xff]
    %v1337 = vld [vmem:[%s11 + $0x90] sm:$0xff]
    %v1338 = vld [vmem:[%s11 + $0x98] sm:$0xff]
    %v1339 = vld [vmem:[%s11 + $0xa0] sm:$0xff]
    %v1340 = vld [vmem:[%s11 + $0xa8] sm:$0xff]
    %v1341 = vld [vmem:[%s11 + $0xb0] sm:$0xff]
    %v1342 = vld [vmem:[%s11 + $0xb8] sm:$0xff]
    %v1343 = vld [vmem:[%s11 + $0xc0] sm:$0xff]
    %v1344 = vld [vmem:[%s11 + $0xc8] sm:$0xff]
    %v1345 = vld [vmem:[%s11 + $0xd0] sm:$0xff]
    %v1346 = vld [vmem:[%s11 + $0xd8] sm:$0xff]
    %v1347 = vld [vmem:[%s11 + $0xe0] sm:$0xff]
    %v1348 = vld [vmem:[%s11 + $0xe8] sm:$0xff]
    %v1349 = vld [vmem:[%s11 + $0xf0] sm:$0xff]
    %v1350 = vld [vmem:[%s11 + $0xf8] sm:$0xff]
    %v1351 = vld [vmem:[%s11 + $0x100] sm:$0xff]
    %v1352 = vld [vmem:[%s11 + $0x108] sm:$0xff]
    %v1353 = vld [vmem:[%s11 + $0x110] sm:$0xff]
    %v1354 = vld [vmem:[%s11 + $0x118] sm:$0xff]
    %v1355 = vld [vmem:[%s11 + $0x120] sm:$0xff]
    %v1356 = vld [vmem:[%s11 + $0x128] sm:$0xff]
    %v1357 = vld [vmem:[%s11 + $0x130] sm:$0xff]
    %v1358 = vld [vmem:[%s11 + $0x138] sm:$0xff]
    %v1359 = vld [vmem:[%s11 + $0x140] sm:$0xff]
    %v1360 = vld [vmem:[%s11 + $0x148] sm:$0xff]
    %v1361 = vld [vmem:[%s11 + $0x150] sm:$0xff]
    %v1362 = vld [vmem:[%s11 + $0x158] sm:$0xff]
    %v1363 = vld [vmem:[%s11 + $0x160] sm:$0xff]
    %v1364 = vld [vmem:[%s11 + $0x168] sm:$0xff]
    %v1365 = vld [vmem:[%s11 + $0x170] sm:$0xff]
    %v1366 = vld [vmem:[%s11 + $0x178] sm:$0xff]
    %v1367 = vld [vmem:[%s11 + $0x180] sm:$0xff]
    %v1368 = vld [vmem:[%s11 + $0x188] sm:$0xff]
    %v1369 = vld [vmem:[%s11 + $0x190] sm:$0xff]
    %v1370 = vld [vmem:[%s11 + $0x198] sm:$0xff]
    %v1371 = vld [vmem:[%s11 + $0x1a0] sm:$0xff]
    %v1372 = vld [vmem:[%s11 + $0x1a8] sm:$0xff]
    %v1373 = vld [vmem:[%s11 + $0x1b0] sm:$0xff]
    %v1374 = vld [vmem:[%s11 + $0x1b8] sm:$0xff]
    %v1375 = vld [vmem:[%s11 + $0x1c0] sm:$0xff]
    %v1376 = vld [vmem:[%s11 + $0x1c8] sm:$0xff]
    %v1377 = vld [vmem:[%s11 + $0x1d0] sm:$0xff]
    %v1378 = vld [vmem:[%s11 + $0x1d8] sm:$0xff]
    %v1379 = vld [vmem:[%s11 + $0x1e0] sm:$0xff]
    %v1380 = vld [vmem:[%s11 + $0x1e8] sm:$0xff]
    %v1381 = vld [vmem:[%s11 + $0x1f0] sm:$0xff]
    %v1382 = vld [vmem:[%s11 + $0x1f8] sm:$0xff]
    %v1383 = vld [vmem:[%s12] sm:$0x1]
    %v1385 = vlaneseq
    %v1386 = vshrl.u32 %v1385, 7
    %v1387 = vsub.s32 0, %v1386
    %v1388 = vrot.slane %v1383, %v1387
    %1390 = vmatprep.subr.mxu0 0.0
    %1391 = vmatpush1.msra.mxu0 %v1319
    %1392 = vmatprep.subr.mxu0 0.0
    %1393 = vmatpush1.msra.mxu0 %v1320
    %1394 = vmatprep.subr.mxu0 0.0
    %1395 = vmatpush1.msra.mxu0 %v1321
    %1396 = vmatprep.subr.mxu0 0.0
    %1397 = vmatpush1.msra.mxu0 %v1322
    %1398 = vmatprep.subr.mxu0 0.0
    %1399 = vmatpush1.msra.mxu0 %v1323
    %1400 = vmatprep.subr.mxu0 0.0
    %1401 = vmatpush1.msra.mxu0 %v1324
    %1402 = vmatprep.subr.mxu0 0.0
    %1403 = vmatpush1.msra.mxu0 %v1325
    %1404 = vmatprep.subr.mxu0 0.0
    %1405 = vmatpush1.msra.mxu0 %v1326
    %1406 = vmatprep.subr.mxu0 0.0
    %1407 = vmatpush1.msra.mxu0 %v1327
    %1408 = vmatprep.subr.mxu0 0.0
    %1409 = vmatpush1.msra.mxu0 %v1328
    %1410 = vmatprep.subr.mxu0 0.0
    %1411 = vmatpush1.msra.mxu0 %v1329
    %1412 = vmatprep.subr.mxu0 0.0
    %1413 = vmatpush1.msra.mxu0 %v1330
    %1414 = vmatprep.subr.mxu0 0.0
    %1415 = vmatpush1.msra.mxu0 %v1331
    %1416 = vmatprep.subr.mxu0 0.0
    %1417 = vmatpush1.msra.mxu0 %v1332
    %1418 = vmatprep.subr.mxu0 0.0
    %1419 = vmatpush1.msra.mxu0 %v1333
    %1420 = vmatprep.subr.mxu0 0.0
    %1421 = vmatpush1.msra.mxu0 %v1334
    %1422 = vmatprep.subr.mxu0 0.0
    %1423 = vmatpush1.msra.mxu0 %v1335
    %1424 = vmatprep.subr.mxu0 0.0
    %1425 = vmatpush1.msra.mxu0 %v1336
    %1426 = vmatprep.subr.mxu0 0.0
    %1427 = vmatpush1.msra.mxu0 %v1337
    %1428 = vmatprep.subr.mxu0 0.0
    %1429 = vmatpush1.msra.mxu0 %v1338
    %1430 = vmatprep.subr.mxu0 0.0
    %1431 = vmatpush1.msra.mxu0 %v1339
    %1432 = vmatprep.subr.mxu0 0.0
    %1433 = vmatpush1.msra.mxu0 %v1340
    %1434 = vmatprep.subr.mxu0 0.0
    %1435 = vmatpush1.msra.mxu0 %v1341
    %1436 = vmatprep.subr.mxu0 0.0
    %1437 = vmatpush1.msra.mxu0 %v1342
    %1438 = vmatprep.subr.mxu0 0.0
    %1439 = vmatpush1.msra.mxu0 %v1343
    %1440 = vmatprep.subr.mxu0 0.0
    %1441 = vmatpush1.msra.mxu0 %v1344
    %1442 = vmatprep.subr.mxu0 0.0
    %1443 = vmatpush1.msra.mxu0 %v1345
    %1444 = vmatprep.subr.mxu0 0.0
    %1445 = vmatpush1.msra.mxu0 %v1346
    %1446 = vmatprep.subr.mxu0 0.0
    %1447 = vmatpush1.msra.mxu0 %v1347
    %1448 = vmatprep.subr.mxu0 0.0
    %1449 = vmatpush1.msra.mxu0 %v1348
    %1450 = vmatprep.subr.mxu0 0.0
    %1451 = vmatpush1.msra.mxu0 %v1349
    %1452 = vmatprep.subr.mxu0 0.0
    %1453 = vmatpush1.msra.mxu0 %v1350
    %1454 = vmatprep.mubr.f32.mxu0 %v1312
    %1455 = vmatmul.mubr.f32.gmra.mrb[0].mxu0 %v1311
    %v1456 = vpop.f32.mrb[0].mxu0
    %v1457 = vadd.f32 %v1388, %v1456
    %v1458 = vpop.f32.mrb[0].mxu0
    %1459 = vmatprep.mubr.f32.mxu0 %v1316
    %1460 = vmatmul.mubr.f32.gmra.mrb[0].mxu0 %v1315
    %v1461 = vpop.f32.mrb[0].mxu0
    %v1462 = vadd.f32 %v1388, %v1461
    %v1463 = vpop.f32.mrb[0].mxu0
    %1464 = vdwg.mxu0
    %1465 = vmatprep.subr.mxu0 0.0
    %1466 = vmatpush1.msra.mxu0 %v1351
    %1467 = vmatprep.subr.mxu0 0.0
    %1468 = vmatpush1.msra.mxu0 %v1352
    %1469 = vmatprep.subr.mxu0 0.0
    %1470 = vmatpush1.msra.mxu0 %v1353
    %1471 = vmatprep.subr.mxu0 0.0
    %1472 = vmatpush1.msra.mxu0 %v1354
    %1473 = vmatprep.subr.mxu0 0.0
    %1474 = vmatpush1.msra.mxu0 %v1355
    %1475 = vmatprep.subr.mxu0 0.0
    %1476 = vmatpush1.msra.mxu0 %v1356
    %1477 = vmatprep.subr.mxu0 0.0
    %1478 = vmatpush1.msra.mxu0 %v1357
    %1479 = vmatprep.subr.mxu0 0.0
    %1480 = vmatpush1.msra.mxu0 %v1358
    %1481 = vmatprep.subr.mxu0 0.0
    %1482 = vmatpush1.msra.mxu0 %v1359
    %1483 = vmatprep.subr.mxu0 0.0
    %1484 = vmatpush1.msra.mxu0 %v1360
    %1485 = vmatprep.subr.mxu0 0.0
    %1486 = vmatpush1.msra.mxu0 %v1361
    %1487 = vmatprep.subr.mxu0 0.0
    %1488 = vmatpush1.msra.mxu0 %v1362
    %1489 = vmatprep.subr.mxu0 0.0
    %1490 = vmatpush1.msra.mxu0 %v1363
    %1491 = vmatprep.subr.mxu0 0.0
    %1492 = vmatpush1.msra.mxu0 %v1364
    %1493 = vmatprep.subr.mxu0 0.0
    %1494 = vmatpush1.msra.mxu0 %v1365
    %1495 = vmatprep.subr.mxu0 0.0
    %1496 = vmatpush1.msra.mxu0 %v1366
    %1497 = vmatprep.subr.mxu0 0.0
    %1498 = vmatpush1.msra.mxu0 %v1367
    %1499 = vmatprep.subr.mxu0 0.0
    %1500 = vmatpush1.msra.mxu0 %v1368
    %1501 = vmatprep.subr.mxu0 0.0
    %1502 = vmatpush1.msra.mxu0 %v1369
    %1503 = vmatprep.subr.mxu0 0.0
    %1504 = vmatpush1.msra.mxu0 %v1370
    %1505 = vmatprep.subr.mxu0 0.0
    %1506 = vmatpush1.msra.mxu0 %v1371
    %1507 = vmatprep.subr.mxu0 0.0
    %1508 = vmatpush1.msra.mxu0 %v1372
    %1509 = vmatprep.subr.mxu0 0.0
    %1510 = vmatpush1.msra.mxu0 %v1373
    %1511 = vmatprep.subr.mxu0 0.0
    %1512 = vmatpush1.msra.mxu0 %v1374
    %1513 = vmatprep.subr.mxu0 0.0
    %1514 = vmatpush1.msra.mxu0 %v1375
    %1515 = vmatprep.subr.mxu0 0.0
    %1516 = vmatpush1.msra.mxu0 %v1376
    %1517 = vmatprep.subr.mxu0 0.0
    %1518 = vmatpush1.msra.mxu0 %v1377
    %1519 = vmatprep.subr.mxu0 0.0
    %1520 = vmatpush1.msra.mxu0 %v1378
    %1521 = vmatprep.subr.mxu0 0.0
    %1522 = vmatpush1.msra.mxu0 %v1379
    %1523 = vmatprep.subr.mxu0 0.0
    %1524 = vmatpush1.msra.mxu0 %v1380
    %1525 = vmatprep.subr.mxu0 0.0
    %1526 = vmatpush1.msra.mxu0 %v1381
    %1527 = vmatprep.subr.mxu0 0.0
    %1528 = vmatpush1.msra.mxu0 %v1382
    %1529 = vmatprep.mubr.f32.mxu0 %v1314
    %1530 = vmatmul.mubr.f32.gmra.mrb[0].mxu0 %v1313
    %v1531 = vpop.f32.mrb[0].mxu0
    %v1532 = vadd.f32 %v1457, %v1531
    %v1533 = vpop.f32.mrb[0].mxu0
    %1534 = vmatprep.mubr.f32.mxu0 %v1318
    %1535 = vmatmul.mubr.f32.gmra.mrb[0].mxu0 %v1317
    %v1536 = vpop.f32.mrb[0].mxu0
    %v1537 = vadd.f32 %v1462, %v1536
    %v1538 = vpop.f32.mrb[0].mxu0
    %1539 = vdwg.mxu0
    %vm1540 = vcmask 261120
    %v1541 = vsel %vm1540, %v1532, 0.0
    %v1542 = vsel %vm1540, %v1537, 0.0
    %v1543 = vadd.f32 %v1541, %v1542
    %v1544 = vrot.slane %v1543, 4
    %v1545 = vadd.f32 %v1543, %v1544
    %v1546 = vrot.slane %v1545, 2
    %v1547 = vadd.f32 %v1545, %v1546
    %v1548 = vrot.slane %v1547, 1
    %v1549 = vadd.f32 %v1547, %v1548
    %v1550 = vmul.f32 %v1549, %v1242
    %v1551 = vsub.f32 %v1532, %v1550
    %v1552 = vsub.f32 %v1537, %v1550
    %v1553 = vmul.f32 %v1551, %v1551
    %v1554 = vmul.f32 %v1552, %v1552
    %v1555 = vsel %vm1540, %v1553, 0.0
    %v1556 = vsel %vm1540, %v1554, 0.0
    %v1557 = vadd.f32 %v1555, %v1556
    %v1558 = vrot.slane %v1557, 4
    %v1559 = vadd.f32 %v1557, %v1558
    %v1560 = vrot.slane %v1559, 2
    %v1561 = vadd.f32 %v1559, %v1560
    %v1562 = vrot.slane %v1561, 1
    %v1563 = vadd.f32 %v1561, %v1562
    %v1564 = vmul.f32 %v1563, %v1242
    %v1565 = vadd.f32 %v1564, 1e-05
    %v1566 = vrsqrt.pop %v1565
    %v1567 = vmul.f32 %v1551, %v1566
    %v1568 = vmul.f32 %v1552, %v1566
    %v1569 = vmax.f32 %v1567, 0.0
    %v1570 = vmax.f32 %v1568, 0.0
    %vm1571 = vcmask 257024
    %v1572 = vsel %vm1571, %v1569, -inf
    %v1573 = vrot.slane %v1572, 4
    %v1574 = vmax.f32 %v1572, %v1573
    %v1575 = vrot.slane %v1574, 2
    %v1576 = vmax.f32 %v1574, %v1575
    %v1577 = vrot.slane %v1576, 1
    %v1578 = vmax.f32 %v1576, %v1577
    %vm1579 = vcmask 261124
    %v1580 = vsel %vm1579, %v1569, -inf
    %v1581 = vrot.slane %v1580, 4
    %v1582 = vmax.f32 %v1580, %v1581
    %v1583 = vrot.slane %v1582, 2
    %v1584 = vmax.f32 %v1582, %v1583
    %v1585 = vrot.slane %v1584, 1
    %v1586 = vmax.f32 %v1584, %v1585
    %v1587 = vsel %vm1571, %v1570, -inf
    %v1588 = vrot.slane %v1587, 4
    %v1589 = vmax.f32 %v1587, %v1588
    %v1590 = vrot.slane %v1589, 2
    %v1591 = vmax.f32 %v1589, %v1590
    %v1592 = vrot.slane %v1591, 1
    %v1593 = vmax.f32 %v1591, %v1592
    %v1594 = vsel %vm1579, %v1570, -inf
    %v1595 = vrot.slane %v1594, 4
    %v1596 = vmax.f32 %v1594, %v1595
    %v1597 = vrot.slane %v1596, 2
    %v1598 = vmax.f32 %v1596, %v1597
    %v1599 = vrot.slane %v1598, 1
    %v1600 = vmax.f32 %v1598, %v1599
    %v1601 = vlaneseq
    %v1602 = vshrl.u32 %v1601, 7
    %v1603 = vsub.s32 4, %v1602
    %v1604 = vrot.slane %v790, %v1603
    %v1605 = vlaneseq
    %v1606 = vshrl.u32 %v1605, 7
    %v1607 = vsub.s32 4, %v1606
    %v1608 = vrot.slane %v792, %v1607
    %v1609 = vlaneseq
    %v1610 = vshrl.u32 %v1609, 7
    %v1611 = vsub.s32 4, %v1610
    %v1612 = vrot.slane %v861, %v1611
    %v1613 = vlaneseq
    %v1614 = vshrl.u32 %v1613, 7
    %v1615 = vsub.s32 4, %v1614
    %v1616 = vrot.slane %v863, %v1615
    %v1617 = vsub.f32 %v1097, %v1604
    %v1618 = vsub.f32 %v1098, %v1608
    %v1619 = vsub.f32 %v1099, %v1612
    %v1620 = vsub.f32 %v1100, %v1616
    %v1621 = vlaneseq
    %v1622 = vshrl.u32 %v1621, 7
    %v1623 = vsub.s32 5, %v1622
    %v1624 = vrot.slane %v790, %v1623
    %v1625 = vlaneseq
    %v1626 = vshrl.u32 %v1625, 7
    %v1627 = vsub.s32 5, %v1626
    %v1628 = vrot.slane %v792, %v1627
    %v1629 = vlaneseq
    %v1630 = vshrl.u32 %v1629, 7
    %v1631 = vsub.s32 5, %v1630
    %v1632 = vrot.slane %v861, %v1631
    %v1633 = vlaneseq
    %v1634 = vshrl.u32 %v1633, 7
    %v1635 = vsub.s32 5, %v1634
    %v1636 = vrot.slane %v863, %v1635
    %v1637 = vsub.f32 %v1097, %v1624
    %v1638 = vsub.f32 %v1098, %v1628
    %v1639 = vsub.f32 %v1099, %v1632
    %v1640 = vsub.f32 %v1100, %v1636
    %v1641 = vlaneseq
    %v1642 = vshrl.u32 %v1641, 7
    %v1643 = vsub.s32 6, %v1642
    %v1644 = vrot.slane %v790, %v1643
    %v1645 = vlaneseq
    %v1646 = vshrl.u32 %v1645, 7
    %v1647 = vsub.s32 6, %v1646
    %v1648 = vrot.slane %v792, %v1647
    %v1649 = vlaneseq
    %v1650 = vshrl.u32 %v1649, 7
    %v1651 = vsub.s32 6, %v1650
    %v1652 = vrot.slane %v861, %v1651
    %v1653 = vlaneseq
    %v1654 = vshrl.u32 %v1653, 7
    %v1655 = vsub.s32 6, %v1654
    %v1656 = vrot.slane %v863, %v1655
    %v1657 = vsub.f32 %v1097, %v1644
    %v1658 = vsub.f32 %v1098, %v1648
    %v1659 = vsub.f32 %v1099, %v1652
    %v1660 = vsub.f32 %v1100, %v1656
    %v1661 = vlaneseq
    %v1662 = vshrl.u32 %v1661, 7
    %v1663 = vsub.s32 7, %v1662
    %v1664 = vrot.slane %v790, %v1663
    %v1665 = vlaneseq
    %v1666 = vshrl.u32 %v1665, 7
    %v1667 = vsub.s32 7, %v1666
    %v1668 = vrot.slane %v792, %v1667
    %v1669 = vlaneseq
    %v1670 = vshrl.u32 %v1669, 7
    %v1671 = vsub.s32 7, %v1670
    %v1672 = vrot.slane %v861, %v1671
    %v1673 = vlaneseq
    %v1674 = vshrl.u32 %v1673, 7
    %v1675 = vsub.s32 7, %v1674
    %v1676 = vrot.slane %v863, %v1675
    %v1677 = vsub.f32 %v1097, %v1664
    %v1678 = vsub.f32 %v1098, %v1668
    %v1679 = vsub.f32 %v1099, %v1672
    %v1680 = vsub.f32 %v1100, %v1676
    %v1685 = vrot.slane %v1617, 4
    %v1686 = vrot.slane %v1618, 4
    %v1687 = vrot.slane %v1619, 4
    %v1688 = vrot.slane %v1620, 4
    %v1697 = vrot.slane %v1657, 4
    %v1698 = vrot.slane %v1658, 4
    %v1699 = vrot.slane %v1659, 4
    %v1700 = vrot.slane %v1660, 4
    %v1705 = vsel %vm1205, %v1685, %v1637
    %v1706 = vsel %vm1205, %v1686, %v1638
    %v1707 = vsel %vm1205, %v1687, %v1639
    %v1708 = vsel %vm1205, %v1688, %v1640
    %v1709 = vsel %vm1205, %v1697, %v1677
    %v1710 = vsel %vm1205, %v1698, %v1678
    %v1711 = vsel %vm1205, %v1699, %v1679
    %v1712 = vsel %vm1205, %v1700, %v1680
    %v1713 = vadd.f32 %v1705, %v1709
    %v1714 = vrot.slane %v1713, 4
    %v1715 = vadd.f32 %v1713, %v1714
    %v1716 = vrot.slane %v1715, 2
    %v1717 = vadd.f32 %v1715, %v1716
    %v1718 = vrot.slane %v1717, 1
    %v1719 = vadd.f32 %v1717, %v1718
    %v1720 = vadd.f32 %v1706, %v1710
    %v1721 = vrot.slane %v1720, 4
    %v1722 = vadd.f32 %v1720, %v1721
    %v1723 = vrot.slane %v1722, 2
    %v1724 = vadd.f32 %v1722, %v1723
    %v1725 = vrot.slane %v1724, 1
    %v1726 = vadd.f32 %v1724, %v1725
    %v1727 = vadd.f32 %v1707, %v1711
    %v1728 = vrot.slane %v1727, 4
    %v1729 = vadd.f32 %v1727, %v1728
    %v1730 = vrot.slane %v1729, 2
    %v1731 = vadd.f32 %v1729, %v1730
    %v1732 = vrot.slane %v1731, 1
    %v1733 = vadd.f32 %v1731, %v1732
    %v1734 = vadd.f32 %v1708, %v1712
    %v1735 = vrot.slane %v1734, 4
    %v1736 = vadd.f32 %v1734, %v1735
    %v1737 = vrot.slane %v1736, 2
    %v1738 = vadd.f32 %v1736, %v1737
    %v1739 = vrot.slane %v1738, 1
    %v1740 = vadd.f32 %v1738, %v1739
    %v1741 = vmul.f32 %v1719, %v1242
    %v1742 = vmul.f32 %v1726, %v1242
    %v1743 = vmul.f32 %v1733, %v1242
    %v1744 = vmul.f32 %v1740, %v1242
    %v1745 = vsub.f32 %v1705, %v1741
    %v1746 = vsub.f32 %v1706, %v1742
    %v1747 = vsub.f32 %v1707, %v1743
    %v1748 = vsub.f32 %v1708, %v1744
    %v1749 = vsub.f32 %v1709, %v1741
    %v1750 = vsub.f32 %v1710, %v1742
    %v1751 = vsub.f32 %v1711, %v1743
    %v1752 = vsub.f32 %v1712, %v1744
    %v1753 = vmul.f32 %v1745, %v1745
    %v1754 = vmul.f32 %v1746, %v1746
    %v1755 = vmul.f32 %v1747, %v1747
    %v1756 = vmul.f32 %v1748, %v1748
    %v1757 = vmul.f32 %v1749, %v1749
    %v1758 = vmul.f32 %v1750, %v1750
    %v1759 = vmul.f32 %v1751, %v1751
    %v1760 = vmul.f32 %v1752, %v1752
    %v1761 = vadd.f32 %v1753, %v1757
    %v1762 = vrot.slane %v1761, 4
    %v1763 = vadd.f32 %v1761, %v1762
    %v1764 = vrot.slane %v1763, 2
    %v1765 = vadd.f32 %v1763, %v1764
    %v1766 = vrot.slane %v1765, 1
    %v1767 = vadd.f32 %v1765, %v1766
    %v1768 = vadd.f32 %v1754, %v1758
    %v1769 = vrot.slane %v1768, 4
    %v1770 = vadd.f32 %v1768, %v1769
    %v1771 = vrot.slane %v1770, 2
    %v1772 = vadd.f32 %v1770, %v1771
    %v1773 = vrot.slane %v1772, 1
    %v1774 = vadd.f32 %v1772, %v1773
    %v1775 = vadd.f32 %v1755, %v1759
    %v1776 = vrot.slane %v1775, 4
    %v1777 = vadd.f32 %v1775, %v1776
    %v1778 = vrot.slane %v1777, 2
    %v1779 = vadd.f32 %v1777, %v1778
    %v1780 = vrot.slane %v1779, 1
    %v1781 = vadd.f32 %v1779, %v1780
    %v1782 = vadd.f32 %v1756, %v1760
    %v1783 = vrot.slane %v1782, 4
    %v1784 = vadd.f32 %v1782, %v1783
    %v1785 = vrot.slane %v1784, 2
    %v1786 = vadd.f32 %v1784, %v1785
    %v1787 = vrot.slane %v1786, 1
    %v1788 = vadd.f32 %v1786, %v1787
    %v1789 = vmul.f32 %v1767, %v1242
    %v1790 = vmul.f32 %v1774, %v1242
    %v1791 = vmul.f32 %v1781, %v1242
    %v1792 = vmul.f32 %v1788, %v1242
    %v1793 = vadd.f32 %v1789, 1e-05
    %v1794 = vadd.f32 %v1790, 1e-05
    %v1795 = vadd.f32 %v1791, 1e-05
    %v1796 = vadd.f32 %v1792, 1e-05
    %v1797 = vrsqrt.pop %v1793
    %v1798 = vrsqrt.pop %v1794
    %v1799 = vrsqrt.pop %v1795
    %v1800 = vrsqrt.pop %v1796
    %v1801 = vmul.f32 %v1745, %v1797
    %v1802 = vmul.f32 %v1746, %v1798
    %v1803 = vmul.f32 %v1747, %v1799
    %v1804 = vmul.f32 %v1748, %v1800
    %v1805 = vmul.f32 %v1749, %v1797
    %v1806 = vmul.f32 %v1750, %v1798
    %v1807 = vmul.f32 %v1751, %v1799
    %v1808 = vmul.f32 %v1752, %v1800
    %v1809 = vmax.f32 %v1801, 0.0
    %v1810 = vmax.f32 %v1802, 0.0
    %v1811 = vmax.f32 %v1803, 0.0
    %v1812 = vmax.f32 %v1804, 0.0
    %v1813 = vmax.f32 %v1805, 0.0
    %v1814 = vmax.f32 %v1806, 0.0
    %v1815 = vmax.f32 %v1807, 0.0
    %v1816 = vmax.f32 %v1808, 0.0
    %1817 = vmatprep.subr.mxu0 0.0
    %1818 = vmatpush1.msra.mxu0 %v1319
    %1819 = vmatprep.subr.mxu0 0.0
    %1820 = vmatpush1.msra.mxu0 %v1320
    %1821 = vmatprep.subr.mxu0 0.0
    %1822 = vmatpush1.msra.mxu0 %v1321
    %1823 = vmatprep.subr.mxu0 0.0
    %1824 = vmatpush1.msra.mxu0 %v1322
    %1825 = vmatprep.subr.mxu0 0.0
    %1826 = vmatpush1.msra.mxu0 %v1323
    %1827 = vmatprep.subr.mxu0 0.0
    %1828 = vmatpush1.msra.mxu0 %v1324
    %1829 = vmatprep.subr.mxu0 0.0
    %1830 = vmatpush1.msra.mxu0 %v1325
    %1831 = vmatprep.subr.mxu0 0.0
    %1832 = vmatpush1.msra.mxu0 %v1326
    %1833 = vmatprep.subr.mxu0 0.0
    %1834 = vmatpush1.msra.mxu0 %v1327
    %1835 = vmatprep.subr.mxu0 0.0
    %1836 = vmatpush1.msra.mxu0 %v1328
    %1837 = vmatprep.subr.mxu0 0.0
    %1838 = vmatpush1.msra.mxu0 %v1329
    %1839 = vmatprep.subr.mxu0 0.0
    %1840 = vmatpush1.msra.mxu0 %v1330
    %1841 = vmatprep.subr.mxu0 0.0
    %1842 = vmatpush1.msra.mxu0 %v1331
    %1843 = vmatprep.subr.mxu0 0.0
    %1844 = vmatpush1.msra.mxu0 %v1332
    %1845 = vmatprep.subr.mxu0 0.0
    %1846 = vmatpush1.msra.mxu0 %v1333
    %1847 = vmatprep.subr.mxu0 0.0
    %1848 = vmatpush1.msra.mxu0 %v1334
    %1849 = vmatprep.subr.mxu0 0.0
    %1850 = vmatpush1.msra.mxu0 %v1335
    %1851 = vmatprep.subr.mxu0 0.0
    %1852 = vmatpush1.msra.mxu0 %v1336
    %1853 = vmatprep.subr.mxu0 0.0
    %1854 = vmatpush1.msra.mxu0 %v1337
    %1855 = vmatprep.subr.mxu0 0.0
    %1856 = vmatpush1.msra.mxu0 %v1338
    %1857 = vmatprep.subr.mxu0 0.0
    %1858 = vmatpush1.msra.mxu0 %v1339
    %1859 = vmatprep.subr.mxu0 0.0
    %1860 = vmatpush1.msra.mxu0 %v1340
    %1861 = vmatprep.subr.mxu0 0.0
    %1862 = vmatpush1.msra.mxu0 %v1341
    %1863 = vmatprep.subr.mxu0 0.0
    %1864 = vmatpush1.msra.mxu0 %v1342
    %1865 = vmatprep.subr.mxu0 0.0
    %1866 = vmatpush1.msra.mxu0 %v1343
    %1867 = vmatprep.subr.mxu0 0.0
    %1868 = vmatpush1.msra.mxu0 %v1344
    %1869 = vmatprep.subr.mxu0 0.0
    %1870 = vmatpush1.msra.mxu0 %v1345
    %1871 = vmatprep.subr.mxu0 0.0
    %1872 = vmatpush1.msra.mxu0 %v1346
    %1873 = vmatprep.subr.mxu0 0.0
    %1874 = vmatpush1.msra.mxu0 %v1347
    %1875 = vmatprep.subr.mxu0 0.0
    %1876 = vmatpush1.msra.mxu0 %v1348
    %1877 = vmatprep.subr.mxu0 0.0
    %1878 = vmatpush1.msra.mxu0 %v1349
    %1879 = vmatprep.subr.mxu0 0.0
    %1880 = vmatpush1.msra.mxu0 %v1350
    %1881 = vmatprep.mubr.f32.mxu0 %v1810
    %1882 = vmatmul.mubr.f32.gmra.mrb[0].mxu0 %v1809
    %v1883 = vpop.f32.mrb[0].mxu0
    %v1884 = vadd.f32 %v1388, %v1883
    %v1885 = vpop.f32.mrb[0].mxu0
    %1886 = vmatprep.mubr.f32.mxu0 %v1814
    %1887 = vmatmul.mubr.f32.gmra.mrb[0].mxu0 %v1813
    %v1888 = vpop.f32.mrb[0].mxu0
    %v1889 = vadd.f32 %v1388, %v1888
    %v1890 = vpop.f32.mrb[0].mxu0
    %1891 = vdwg.mxu0
    %1892 = vmatprep.subr.mxu0 0.0
    %1893 = vmatpush1.msra.mxu0 %v1351
    %1894 = vmatprep.subr.mxu0 0.0
    %1895 = vmatpush1.msra.mxu0 %v1352
    %1896 = vmatprep.subr.mxu0 0.0
    %1897 = vmatpush1.msra.mxu0 %v1353
    %1898 = vmatprep.subr.mxu0 0.0
    %1899 = vmatpush1.msra.mxu0 %v1354
    %1900 = vmatprep.subr.mxu0 0.0
    %1901 = vmatpush1.msra.mxu0 %v1355
    %1902 = vmatprep.subr.mxu0 0.0
    %1903 = vmatpush1.msra.mxu0 %v1356
    %1904 = vmatprep.subr.mxu0 0.0
    %1905 = vmatpush1.msra.mxu0 %v1357
    %1906 = vmatprep.subr.mxu0 0.0
    %1907 = vmatpush1.msra.mxu0 %v1358
    %1908 = vmatprep.subr.mxu0 0.0
    %1909 = vmatpush1.msra.mxu0 %v1359
    %1910 = vmatprep.subr.mxu0 0.0
    %1911 = vmatpush1.msra.mxu0 %v1360
    %1912 = vmatprep.subr.mxu0 0.0
    %1913 = vmatpush1.msra.mxu0 %v1361
    %1914 = vmatprep.subr.mxu0 0.0
    %1915 = vmatpush1.msra.mxu0 %v1362
    %1916 = vmatprep.subr.mxu0 0.0
    %1917 = vmatpush1.msra.mxu0 %v1363
    %1918 = vmatprep.subr.mxu0 0.0
    %1919 = vmatpush1.msra.mxu0 %v1364
    %1920 = vmatprep.subr.mxu0 0.0
    %1921 = vmatpush1.msra.mxu0 %v1365
    %1922 = vmatprep.subr.mxu0 0.0
    %1923 = vmatpush1.msra.mxu0 %v1366
    %1924 = vmatprep.subr.mxu0 0.0
    %1925 = vmatpush1.msra.mxu0 %v1367
    %1926 = vmatprep.subr.mxu0 0.0
    %1927 = vmatpush1.msra.mxu0 %v1368
    %1928 = vmatprep.subr.mxu0 0.0
    %1929 = vmatpush1.msra.mxu0 %v1369
    %1930 = vmatprep.subr.mxu0 0.0
    %1931 = vmatpush1.msra.mxu0 %v1370
    %1932 = vmatprep.subr.mxu0 0.0
    %1933 = vmatpush1.msra.mxu0 %v1371
    %1934 = vmatprep.subr.mxu0 0.0
    %1935 = vmatpush1.msra.mxu0 %v1372
    %1936 = vmatprep.subr.mxu0 0.0
    %1937 = vmatpush1.msra.mxu0 %v1373
    %1938 = vmatprep.subr.mxu0 0.0
    %1939 = vmatpush1.msra.mxu0 %v1374
    %1940 = vmatprep.subr.mxu0 0.0
    %1941 = vmatpush1.msra.mxu0 %v1375
    %1942 = vmatprep.subr.mxu0 0.0
    %1943 = vmatpush1.msra.mxu0 %v1376
    %1944 = vmatprep.subr.mxu0 0.0
    %1945 = vmatpush1.msra.mxu0 %v1377
    %1946 = vmatprep.subr.mxu0 0.0
    %1947 = vmatpush1.msra.mxu0 %v1378
    %1948 = vmatprep.subr.mxu0 0.0
    %1949 = vmatpush1.msra.mxu0 %v1379
    %1950 = vmatprep.subr.mxu0 0.0
    %1951 = vmatpush1.msra.mxu0 %v1380
    %1952 = vmatprep.subr.mxu0 0.0
    %1953 = vmatpush1.msra.mxu0 %v1381
    %1954 = vmatprep.subr.mxu0 0.0
    %1955 = vmatpush1.msra.mxu0 %v1382
    %1956 = vmatprep.mubr.f32.mxu0 %v1812
    %1957 = vmatmul.mubr.f32.gmra.mrb[0].mxu0 %v1811
    %v1958 = vpop.f32.mrb[0].mxu0
    %v1959 = vadd.f32 %v1884, %v1958
    %v1960 = vpop.f32.mrb[0].mxu0
    %1961 = vmatprep.mubr.f32.mxu0 %v1816
    %1962 = vmatmul.mubr.f32.gmra.mrb[0].mxu0 %v1815
    %v1963 = vpop.f32.mrb[0].mxu0
    %v1964 = vadd.f32 %v1889, %v1963
    %v1965 = vpop.f32.mrb[0].mxu0
    %1966 = vdwg.mxu0
    %v1967 = vsel %vm1540, %v1959, 0.0
    %v1968 = vsel %vm1540, %v1964, 0.0
    %v1969 = vadd.f32 %v1967, %v1968
    %v1970 = vrot.slane %v1969, 4
    %v1971 = vadd.f32 %v1969, %v1970
    %v1972 = vrot.slane %v1971, 2
    %v1973 = vadd.f32 %v1971, %v1972
    %v1974 = vrot.slane %v1973, 1
    %v1975 = vadd.f32 %v1973, %v1974
    %v1976 = vmul.f32 %v1975, %v1242
    %v1977 = vsub.f32 %v1959, %v1976
    %v1978 = vsub.f32 %v1964, %v1976
    %v1979 = vmul.f32 %v1977, %v1977
    %v1980 = vmul.f32 %v1978, %v1978
    %v1981 = vsel %vm1540, %v1979, 0.0
    %v1982 = vsel %vm1540, %v1980, 0.0
    %v1983 = vadd.f32 %v1981, %v1982
    %v1984 = vrot.slane %v1983, 4
    %v1985 = vadd.f32 %v1983, %v1984
    %v1986 = vrot.slane %v1985, 2
    %v1987 = vadd.f32 %v1985, %v1986
    %v1988 = vrot.slane %v1987, 1
    %v1989 = vadd.f32 %v1987, %v1988
    %v1990 = vmul.f32 %v1989, %v1242
    %v1991 = vadd.f32 %v1990, 1e-05
    %v1992 = vrsqrt.pop %v1991
    %v1993 = vmul.f32 %v1977, %v1992
    %v1994 = vmul.f32 %v1978, %v1992
    %v1995 = vmax.f32 %v1993, 0.0
    %v1996 = vmax.f32 %v1994, 0.0
    %v1997 = vsel %vm1571, %v1995, -inf
    %v1998 = vrot.slane %v1997, 4
    %v1999 = vmax.f32 %v1997, %v1998
    %v2000 = vrot.slane %v1999, 2
    %v2001 = vmax.f32 %v1999, %v2000
    %v2002 = vrot.slane %v2001, 1
    %v2003 = vmax.f32 %v2001, %v2002
    %v2004 = vsel %vm1579, %v1995, -inf
    %v2005 = vrot.slane %v2004, 4
    %v2006 = vmax.f32 %v2004, %v2005
    %v2007 = vrot.slane %v2006, 2
    %v2008 = vmax.f32 %v2006, %v2007
    %v2009 = vrot.slane %v2008, 1
    %v2010 = vmax.f32 %v2008, %v2009
    %v2011 = vsel %vm1571, %v1996, -inf
    %v2012 = vrot.slane %v2011, 4
    %v2013 = vmax.f32 %v2011, %v2012
    %v2014 = vrot.slane %v2013, 2
    %v2015 = vmax.f32 %v2013, %v2014
    %v2016 = vrot.slane %v2015, 1
    %v2017 = vmax.f32 %v2015, %v2016
    %v2018 = vsel %vm1579, %v1996, -inf
    %v2019 = vrot.slane %v2018, 4
    %v2020 = vmax.f32 %v2018, %v2019
    %v2021 = vrot.slane %v2020, 2
    %v2022 = vmax.f32 %v2020, %v2021
    %v2023 = vrot.slane %v2022, 1
    %v2024 = vmax.f32 %v2022, %v2023
    %vm2025 = vcmask 1040384
    %v2026 = vsel %vm2025, %v1578, %v1586
    %vm2027 = vcmask 1041408
    %v2028 = vsel %vm2027, %v2026, %v1593
    %vm2029 = vcmask 1042432
    %v2030 = vsel %vm2029, %v2028, %v1600
    %v2031 = vsel %vm1205, %v2030, %v2003
    %vm2032 = vcmask 1044480
    %v2033 = vsel %vm2032, %v2031, %v2010
    %vm2034 = vcmask 1045504
    %v2035 = vsel %vm2034, %v2033, %v2017
    %vm2036 = vcmask 1046528
    %v2037 = vsel %vm2036, %v2035, %v2024
    %v2038 = vld [vmem:[%s13] sm:$0xff]
    %v2039 = vld [vmem:[%s13 + $0x8] sm:$0xff]
    %v2040 = vld [vmem:[%s13 + $0x10] sm:$0xff]
    %v2041 = vld [vmem:[%s13 + $0x18] sm:$0xff]
    %v2042 = vld [vmem:[%s13 + $0x20] sm:$0xff]
    %v2043 = vld [vmem:[%s13 + $0x28] sm:$0xff]
    %v2044 = vld [vmem:[%s13 + $0x30] sm:$0xff]
    %v2045 = vld [vmem:[%s13 + $0x38] sm:$0xff]
    %v2046 = vld [vmem:[%s13 + $0x40] sm:$0xff]
    %v2047 = vld [vmem:[%s13 + $0x48] sm:$0xff]
    %v2048 = vld [vmem:[%s13 + $0x50] sm:$0xff]
    %v2049 = vld [vmem:[%s13 + $0x58] sm:$0xff]
    %v2050 = vld [vmem:[%s13 + $0x60] sm:$0xff]
    %v2051 = vld [vmem:[%s13 + $0x68] sm:$0xff]
    %v2052 = vld [vmem:[%s13 + $0x70] sm:$0xff]
    %v2053 = vld [vmem:[%s13 + $0x78] sm:$0xff]
    %v2054 = vld [vmem:[%s14] sm:$0xff]
    %v2055 = vld [vmem:[%s14 + $0x8] sm:$0xff]
    %v2056 = vld [vmem:[%s14 + $0x10] sm:$0xff]
    %v2057 = vld [vmem:[%s14 + $0x18] sm:$0xff]
    %v2059 = vsel %vm1540, %v2037, 0
    %2061 = vmatprep.subr.mxu0 0.0
    %2062 = vmatpush1.msra.mxu0 %v2054
    %2063 = vmatprep.subr.mxu0 0.0
    %2064 = vmatpush1.msra.mxu0 %v2055
    %2065 = vmatprep.subr.mxu0 0.0
    %2066 = vmatpush1.msra.mxu0 %v2056
    %2067 = vmatprep.subr.mxu0 0.0
    %2068 = vmatpush1.msra.mxu0 %v2057
    %2069 = vmatprep.subr.mxu0 0.0
    %2070 = vmatpush1.msra.mxu0 0.0
    %2071 = vmatprep.subr.mxu0 0.0
    %2072 = vmatpush1.msra.mxu0 0.0
    %2073 = vmatprep.subr.mxu0 0.0
    %2074 = vmatpush1.msra.mxu0 0.0
    %2075 = vmatprep.subr.mxu0 0.0
    %2076 = vmatpush1.msra.mxu0 0.0
    %2077 = vmatprep.subr.mxu0 0.0
    %2078 = vmatpush1.msra.mxu0 0.0
    %2079 = vmatprep.subr.mxu0 0.0
    %2080 = vmatpush1.msra.mxu0 0.0
    %2081 = vmatprep.subr.mxu0 0.0
    %2082 = vmatpush1.msra.mxu0 0.0
    %2083 = vmatprep.subr.mxu0 0.0
    %2084 = vmatpush1.msra.mxu0 0.0
    %2085 = vmatprep.subr.mxu0 0.0
    %2086 = vmatpush1.msra.mxu0 0.0
    %2087 = vmatprep.subr.mxu0 0.0
    %2088 = vmatpush1.msra.mxu0 0.0
    %2089 = vmatprep.subr.mxu0 0.0
    %2090 = vmatpush1.msra.mxu0 0.0
    %2091 = vmatprep.subr.mxu0 0.0
    %2092 = vmatpush1.msra.mxu0 0.0
    %2093 = vmatprep.subr.mxu0 0.0
    %2094 = vmatpush1.msra.mxu0 0.0
    %2095 = vmatprep.subr.mxu0 0.0
    %2096 = vmatpush1.msra.mxu0 0.0
    %2097 = vmatprep.subr.mxu0 0.0
    %2098 = vmatpush1.msra.mxu0 0.0
    %2099 = vmatprep.subr.mxu0 0.0
    %2100 = vmatpush1.msra.mxu0 0.0
    %2101 = vmatprep.subr.mxu0 0.0
    %2102 = vmatpush1.msra.mxu0 0.0
    %2103 = vmatprep.subr.mxu0 0.0
    %2104 = vmatpush1.msra.mxu0 0.0
    %2105 = vmatprep.subr.mxu0 0.0
    %2106 = vmatpush1.msra.mxu0 0.0
    %2107 = vmatprep.subr.mxu0 0.0
    %2108 = vmatpush1.msra.mxu0 0.0
    %2109 = vmatprep.subr.mxu0 0.0
    %2110 = vmatpush1.msra.mxu0 0.0
    %2111 = vmatprep.subr.mxu0 0.0
    %2112 = vmatpush1.msra.mxu0 0.0
    %2113 = vmatprep.subr.mxu0 0.0
    %2114 = vmatpush1.msra.mxu0 0.0
    %2115 = vmatprep.subr.mxu0 0.0
    %2116 = vmatpush1.msra.mxu0 0.0
    %2117 = vmatprep.subr.mxu0 0.0
    %2118 = vmatpush1.msra.mxu0 0.0
    %2119 = vmatprep.subr.mxu0 0.0
    %2120 = vmatpush1.msra.mxu0 0.0
    %2121 = vmatprep.subr.mxu0 0.0
    %2122 = vmatpush1.msra.mxu0 0.0
    %2123 = vmatprep.subr.mxu0 0.0
    %2124 = vmatpush1.msra.mxu0 0.0
    %2125 = vmatprep.mubr.f32.mxu0 0.0
    %2126 = vmatmul.mubr.f32.gmra.mrb[0].mxu0 %v2059
    %v2127 = vpop.f32.mrb[0].mxu0
    %v2128 = vadd.f32 0.0, %v2127
    %v2129 = vpop.f32.mrb[0].mxu0
    %2130 = vdwg.mxu0
    %2131 = vmatprep.subr.mxu0 0.0
    %2132 = vmatpush1.msra.mxu0 %v2038
    %2133 = vmatprep.subr.mxu0 0.0
    %2134 = vmatpush1.msra.mxu0 %v2039
    %2135 = vmatprep.subr.mxu0 0.0
    %2136 = vmatpush1.msra.mxu0 %v2040
    %2137 = vmatprep.subr.mxu0 0.0
    %2138 = vmatpush1.msra.mxu0 %v2041
    %2139 = vmatprep.subr.mxu0 0.0
    %2140 = vmatpush1.msra.mxu0 %v2042
    %2141 = vmatprep.subr.mxu0 0.0
    %2142 = vmatpush1.msra.mxu0 %v2043
    %2143 = vmatprep.subr.mxu0 0.0
    %2144 = vmatpush1.msra.mxu0 %v2044
    %2145 = vmatprep.subr.mxu0 0.0
    %2146 = vmatpush1.msra.mxu0 %v2045
    %2147 = vmatprep.subr.mxu0 0.0
    %2148 = vmatpush1.msra.mxu0 %v2046
    %2149 = vmatprep.subr.mxu0 0.0
    %2150 = vmatpush1.msra.mxu0 %v2047
    %2151 = vmatprep.subr.mxu0 0.0
    %2152 = vmatpush1.msra.mxu0 %v2048
    %2153 = vmatprep.subr.mxu0 0.0
    %2154 = vmatpush1.msra.mxu0 %v2049
    %2155 = vmatprep.subr.mxu0 0.0
    %2156 = vmatpush1.msra.mxu0 %v2050
    %2157 = vmatprep.subr.mxu0 0.0
    %2158 = vmatpush1.msra.mxu0 %v2051
    %2159 = vmatprep.subr.mxu0 0.0
    %2160 = vmatpush1.msra.mxu0 %v2052
    %2161 = vmatprep.subr.mxu0 0.0
    %2162 = vmatpush1.msra.mxu0 %v2053
    %2163 = vmatprep.subr.mxu0 0.0
    %2164 = vmatpush1.msra.mxu0 0.0
    %2165 = vmatprep.subr.mxu0 0.0
    %2166 = vmatpush1.msra.mxu0 0.0
    %2167 = vmatprep.subr.mxu0 0.0
    %2168 = vmatpush1.msra.mxu0 0.0
    %2169 = vmatprep.subr.mxu0 0.0
    %2170 = vmatpush1.msra.mxu0 0.0
    %2171 = vmatprep.subr.mxu0 0.0
    %2172 = vmatpush1.msra.mxu0 0.0
    %2173 = vmatprep.subr.mxu0 0.0
    %2174 = vmatpush1.msra.mxu0 0.0
    %2175 = vmatprep.subr.mxu0 0.0
    %2176 = vmatpush1.msra.mxu0 0.0
    %2177 = vmatprep.subr.mxu0 0.0
    %2178 = vmatpush1.msra.mxu0 0.0
    %2179 = vmatprep.subr.mxu0 0.0
    %2180 = vmatpush1.msra.mxu0 0.0
    %2181 = vmatprep.subr.mxu0 0.0
    %2182 = vmatpush1.msra.mxu0 0.0
    %2183 = vmatprep.subr.mxu0 0.0
    %2184 = vmatpush1.msra.mxu0 0.0
    %2185 = vmatprep.subr.mxu0 0.0
    %2186 = vmatpush1.msra.mxu0 0.0
    %2187 = vmatprep.subr.mxu0 0.0
    %2188 = vmatpush1.msra.mxu0 0.0
    %2189 = vmatprep.subr.mxu0 0.0
    %2190 = vmatpush1.msra.mxu0 0.0
    %2191 = vmatprep.subr.mxu0 0.0
    %2192 = vmatpush1.msra.mxu0 0.0
    %2193 = vmatprep.subr.mxu0 0.0
    %2194 = vmatpush1.msra.mxu0 0.0
    %2195 = vmatprep.mubr.f32.mxu0 0.0
    %2196 = vmatmul.mubr.f32.gmra.mrb[0].mxu0 %v564
    %v2197 = vpop.f32.mrb[0].mxu0
    %v2198 = vadd.f32 %v2128, %v2197
    %v2199 = vpop.f32.mrb[0].mxu0
    %2200 = vdwg.mxu0
    %v2201 = vld [vmem:[%s15] sm:$0x1]
    %v2203 = vlaneseq
    %v2204 = vshrl.u32 %v2203, 7
    %v2205 = vsub.s32 0, %v2204
    %v2206 = vrot.slane %v2201, %v2205
    %v2208 = vadd.f32 %v2198, %v2206
    %vm2209 = vcmask 523264
    %v2210 = vsel %vm2209, %v2208, 0.0
    %v2211 = vrot.slane %v2210, 4
    %v2212 = vadd.f32 %v2210, %v2211
    %v2213 = vrot.slane %v2212, 2
    %v2214 = vadd.f32 %v2212, %v2213
    %v2215 = vrot.slane %v2214, 1
    %v2216 = vadd.f32 %v2214, %v2215
    %v2217 = vrcp.pop 8.0
    %v2218 = vmul.f32 %v2216, %v2217
    %v2219 = vsub.f32 %v2208, %v2218
    %v2220 = vmul.f32 %v2219, %v2219
    %v2221 = vsel %vm2209, %v2220, 0.0
    %v2222 = vrot.slane %v2221, 4
    %v2223 = vadd.f32 %v2221, %v2222
    %v2224 = vrot.slane %v2223, 2
    %v2225 = vadd.f32 %v2223, %v2224
    %v2226 = vrot.slane %v2225, 1
    %v2227 = vadd.f32 %v2225, %v2226
    %v2228 = vmul.f32 %v2227, %v2217
    %v2229 = vadd.f32 %v2228, 1e-05
    %v2230 = vrsqrt.pop %v2229
    %v2231 = vmul.f32 %v2219, %v2230
    %v2232 = vmax.f32 %v2231, 0.0
    %v2233 = vld [vmem:[%s16] sm:$0xff]
    %v2234 = vld [vmem:[%s16 + $0x8] sm:$0xff]
    %v2235 = vld [vmem:[%s16 + $0x10] sm:$0xff]
    %v2236 = vld [vmem:[%s16 + $0x18] sm:$0xff]
    %v2237 = vld [vmem:[%s16 + $0x20] sm:$0xff]
    %v2238 = vld [vmem:[%s16 + $0x28] sm:$0xff]
    %v2239 = vld [vmem:[%s16 + $0x30] sm:$0xff]
    %v2240 = vld [vmem:[%s16 + $0x38] sm:$0xff]
    %v2241 = vld [vmem:[%s17] sm:$0x1]
    %v2243 = vlaneseq
    %v2244 = vshrl.u32 %v2243, 7
    %v2245 = vsub.s32 0, %v2244
    %v2246 = vrot.slane %v2241, %v2245
    %v2249 = vsel %vm2209, %v2232, 0
    %2251 = vmatprep.subr.mxu0 0.0
    %2252 = vmatpush1.msra.mxu0 %v2233
    %2253 = vmatprep.subr.mxu0 0.0
    %2254 = vmatpush1.msra.mxu0 %v2234
    %2255 = vmatprep.subr.mxu0 0.0
    %2256 = vmatpush1.msra.mxu0 %v2235
    %2257 = vmatprep.subr.mxu0 0.0
    %2258 = vmatpush1.msra.mxu0 %v2236
    %2259 = vmatprep.subr.mxu0 0.0
    %2260 = vmatpush1.msra.mxu0 %v2237
    %2261 = vmatprep.subr.mxu0 0.0
    %2262 = vmatpush1.msra.mxu0 %v2238
    %2263 = vmatprep.subr.mxu0 0.0
    %2264 = vmatpush1.msra.mxu0 %v2239
    %2265 = vmatprep.subr.mxu0 0.0
    %2266 = vmatpush1.msra.mxu0 %v2240
    %2267 = vmatprep.subr.mxu0 0.0
    %2268 = vmatpush1.msra.mxu0 0.0
    %2269 = vmatprep.subr.mxu0 0.0
    %2270 = vmatpush1.msra.mxu0 0.0
    %2271 = vmatprep.subr.mxu0 0.0
    %2272 = vmatpush1.msra.mxu0 0.0
    %2273 = vmatprep.subr.mxu0 0.0
    %2274 = vmatpush1.msra.mxu0 0.0
    %2275 = vmatprep.subr.mxu0 0.0
    %2276 = vmatpush1.msra.mxu0 0.0
    %2277 = vmatprep.subr.mxu0 0.0
    %2278 = vmatpush1.msra.mxu0 0.0
    %2279 = vmatprep.subr.mxu0 0.0
    %2280 = vmatpush1.msra.mxu0 0.0
    %2281 = vmatprep.subr.mxu0 0.0
    %2282 = vmatpush1.msra.mxu0 0.0
    %2283 = vmatprep.subr.mxu0 0.0
    %2284 = vmatpush1.msra.mxu0 0.0
    %2285 = vmatprep.subr.mxu0 0.0
    %2286 = vmatpush1.msra.mxu0 0.0
    %2287 = vmatprep.subr.mxu0 0.0
    %2288 = vmatpush1.msra.mxu0 0.0
    %2289 = vmatprep.subr.mxu0 0.0
    %2290 = vmatpush1.msra.mxu0 0.0
    %2291 = vmatprep.subr.mxu0 0.0
    %2292 = vmatpush1.msra.mxu0 0.0
    %2293 = vmatprep.subr.mxu0 0.0
    %2294 = vmatpush1.msra.mxu0 0.0
    %2295 = vmatprep.subr.mxu0 0.0
    %2296 = vmatpush1.msra.mxu0 0.0
    %2297 = vmatprep.subr.mxu0 0.0
    %2298 = vmatpush1.msra.mxu0 0.0
    %2299 = vmatprep.subr.mxu0 0.0
    %2300 = vmatpush1.msra.mxu0 0.0
    %2301 = vmatprep.subr.mxu0 0.0
    %2302 = vmatpush1.msra.mxu0 0.0
    %2303 = vmatprep.subr.mxu0 0.0
    %2304 = vmatpush1.msra.mxu0 0.0
    %2305 = vmatprep.subr.mxu0 0.0
    %2306 = vmatpush1.msra.mxu0 0.0
    %2307 = vmatprep.subr.mxu0 0.0
    %2308 = vmatpush1.msra.mxu0 0.0
    %2309 = vmatprep.subr.mxu0 0.0
    %2310 = vmatpush1.msra.mxu0 0.0
    %2311 = vmatprep.subr.mxu0 0.0
    %2312 = vmatpush1.msra.mxu0 0.0
    %2313 = vmatprep.subr.mxu0 0.0
    %2314 = vmatpush1.msra.mxu0 0.0
    %2315 = vmatprep.mubr.f32.mxu0 0.0
    %2316 = vmatmul.mubr.f32.gmra.mrb[0].mxu0 %v2249
    %v2317 = vpop.f32.mrb[0].mxu0
    %v2318 = vadd.f32 %v2246, %v2317
    %v2319 = vpop.f32.mrb[0].mxu0
    %2320 = vdwg.mxu0
    %v2321 = vrot.slane %v2318, 4
    %v2322 = vadd.f32 %v2318, %v2321
    %v2323 = vrot.slane %v2322, 2
    %v2324 = vadd.f32 %v2322, %v2323
    %v2325 = vrot.slane %v2324, 1
    %v2326 = vadd.f32 %v2324, %v2325
    %v2327 = vmul.f32 %v2326, %v2217
    %v2328 = vsub.f32 %v2318, %v2327
    %v2329 = vmul.f32 %v2328, %v2328
    %v2330 = vrot.slane %v2329, 4
    %v2331 = vadd.f32 %v2329, %v2330
    %v2332 = vrot.slane %v2331, 2
    %v2333 = vadd.f32 %v2331, %v2332
    %v2334 = vrot.slane %v2333, 1
    %v2335 = vadd.f32 %v2333, %v2334
    %v2336 = vmul.f32 %v2335, %v2217
    %v2337 = vadd.f32 %v2336, 1e-05
    %v2338 = vrsqrt.pop %v2337
    %v2339 = vmul.f32 %v2328, %v2338
    %v2340 = vmax.f32 %v2339, 0.0
    %2341 = vst [vmem:[%s18] sm:$0xff] %v655
    %v2342 = vld [vmem:[%s3] sm:$0xff]
    %v2343 = vld [vmem:[%s3 + $0x8] sm:$0xff]
    %v2344 = vld [vmem:[%s3 + $0x10] sm:$0xff]
    %v2345 = vld [vmem:[%s3 + $0x18] sm:$0xff]
    %v2346 = vld [vmem:[%s3 + $0x20] sm:$0xff]
    %v2347 = vld [vmem:[%s3 + $0x28] sm:$0xff]
    %v2348 = vld [vmem:[%s3 + $0x30] sm:$0xff]
    %v2349 = vld [vmem:[%s3 + $0x38] sm:$0xff]
    %v2350 = vld [vmem:[%s3 + $0x40] sm:$0xff]
    %v2351 = vld [vmem:[%s3 + $0x48] sm:$0xff]
    %v2352 = vld [vmem:[%s3 + $0x50] sm:$0xff]
    %v2353 = vld [vmem:[%s3 + $0x58] sm:$0xff]
    %v2354 = vld [vmem:[%s3 + $0x60] sm:$0xff]
    %v2355 = vld [vmem:[%s3 + $0x68] sm:$0xff]
    %v2356 = vld [vmem:[%s3 + $0x70] sm:$0xff]
    %v2357 = vld [vmem:[%s3 + $0x78] sm:$0xff]
    %v2358 = vld [vmem:[%s3 + $0x80] sm:$0xff]
    %v2359 = vld [vmem:[%s3 + $0x88] sm:$0xff]
    %v2360 = vld [vmem:[%s3 + $0x90] sm:$0xff]
    %v2361 = vld [vmem:[%s3 + $0x98] sm:$0xff]
    %v2362 = vld [vmem:[%s3 + $0xa0] sm:$0xff]
    %v2363 = vld [vmem:[%s3 + $0xa8] sm:$0xff]
    %v2364 = vld [vmem:[%s3 + $0xb0] sm:$0xff]
    %v2365 = vld [vmem:[%s3 + $0xb8] sm:$0xff]
    %v2366 = vld [vmem:[%s3 + $0xc0] sm:$0xff]
    %v2367 = vld [vmem:[%s3 + $0xc8] sm:$0xff]
    %v2368 = vld [vmem:[%s3 + $0xd0] sm:$0xff]
    %v2369 = vld [vmem:[%s3 + $0xd8] sm:$0xff]
    %v2370 = vld [vmem:[%s3 + $0xe0] sm:$0xff]
    %v2371 = vld [vmem:[%s3 + $0xe8] sm:$0xff]
    %v2372 = vld [vmem:[%s3 + $0xf0] sm:$0xff]
    %v2373 = vld [vmem:[%s3 + $0xf8] sm:$0xff]
    %v2374 = vld [vmem:[%s3 + $0x100] sm:$0xff]
    %v2375 = vld [vmem:[%s3 + $0x108] sm:$0xff]
    %v2376 = vld [vmem:[%s3 + $0x110] sm:$0xff]
    %v2377 = vld [vmem:[%s3 + $0x118] sm:$0xff]
    %v2378 = vld [vmem:[%s3 + $0x120] sm:$0xff]
    %v2379 = vld [vmem:[%s3 + $0x128] sm:$0xff]
    %v2380 = vld [vmem:[%s3 + $0x130] sm:$0xff]
    %v2381 = vld [vmem:[%s3 + $0x138] sm:$0xff]
    %v2382 = vld [vmem:[%s3 + $0x140] sm:$0xff]
    %v2383 = vld [vmem:[%s3 + $0x148] sm:$0xff]
    %v2384 = vld [vmem:[%s3 + $0x150] sm:$0xff]
    %v2385 = vld [vmem:[%s3 + $0x158] sm:$0xff]
    %v2386 = vld [vmem:[%s3 + $0x160] sm:$0xff]
    %v2387 = vld [vmem:[%s3 + $0x168] sm:$0xff]
    %v2388 = vld [vmem:[%s3 + $0x170] sm:$0xff]
    %v2389 = vld [vmem:[%s3 + $0x178] sm:$0xff]
    %v2390 = vld [vmem:[%s3 + $0x180] sm:$0xff]
    %v2391 = vld [vmem:[%s3 + $0x188] sm:$0xff]
    %v2392 = vld [vmem:[%s3 + $0x190] sm:$0xff]
    %v2393 = vld [vmem:[%s3 + $0x198] sm:$0xff]
    %v2394 = vld [vmem:[%s3 + $0x1a0] sm:$0xff]
    %v2395 = vld [vmem:[%s3 + $0x1a8] sm:$0xff]
    %v2396 = vld [vmem:[%s3 + $0x1b0] sm:$0xff]
    %v2397 = vld [vmem:[%s3 + $0x1b8] sm:$0xff]
    %v2398 = vld [vmem:[%s3 + $0x1c0] sm:$0xff]
    %v2399 = vld [vmem:[%s3 + $0x1c8] sm:$0xff]
    %v2400 = vld [vmem:[%s3 + $0x1d0] sm:$0xff]
    %v2401 = vld [vmem:[%s3 + $0x1d8] sm:$0xff]
    %v2402 = vld [vmem:[%s3 + $0x1e0] sm:$0xff]
    %v2403 = vld [vmem:[%s3 + $0x1e8] sm:$0xff]
    %v2404 = vld [vmem:[%s3 + $0x1f0] sm:$0xff]
    %v2405 = vld [vmem:[%s3 + $0x1f8] sm:$0xff]
    %v2406 = vld [vmem:[#allocation2] sm:$0xff]
    %v2407 = vld [vmem:[#allocation2 + $0x8] sm:$0xff]
    %v2408 = vld [vmem:[#allocation2 + $0x10] sm:$0xff]
    %v2409 = vld [vmem:[#allocation2 + $0x18] sm:$0xff]
    %v2410 = vld [vmem:[#allocation2 + $0x20] sm:$0xff]
    %v2411 = vld [vmem:[#allocation2 + $0x28] sm:$0xff]
    %v2412 = vld [vmem:[#allocation2 + $0x30] sm:$0xff]
    %v2413 = vld [vmem:[#allocation2 + $0x38] sm:$0xff]
    %v2414 = vld [vmem:[#allocation2 + $0x40] sm:$0xff]
    %v2415 = vld [vmem:[#allocation2 + $0x48] sm:$0xff]
    %v2416 = vld [vmem:[#allocation2 + $0x50] sm:$0xff]
    %v2417 = vld [vmem:[#allocation2 + $0x58] sm:$0xff]
    %v2418 = vld [vmem:[#allocation2 + $0x60] sm:$0xff]
    %v2419 = vld [vmem:[#allocation2 + $0x68] sm:$0xff]
    %v2420 = vld [vmem:[#allocation2 + $0x70] sm:$0xff]
    %v2421 = vld [vmem:[#allocation2 + $0x78] sm:$0xff]
    %v2422 = vld [vmem:[#allocation2 + $0x80] sm:$0xff]
    %v2423 = vld [vmem:[#allocation2 + $0x88] sm:$0xff]
    %v2424 = vld [vmem:[#allocation2 + $0x90] sm:$0xff]
    %v2425 = vld [vmem:[#allocation2 + $0x98] sm:$0xff]
    %v2426 = vld [vmem:[#allocation2 + $0xa0] sm:$0xff]
    %v2427 = vld [vmem:[#allocation2 + $0xa8] sm:$0xff]
    %v2428 = vld [vmem:[#allocation2 + $0xb0] sm:$0xff]
    %v2429 = vld [vmem:[#allocation2 + $0xb8] sm:$0xff]
    %v2430 = vld [vmem:[#allocation2 + $0xc0] sm:$0xff]
    %v2431 = vld [vmem:[#allocation2 + $0xc8] sm:$0xff]
    %v2432 = vld [vmem:[#allocation2 + $0xd0] sm:$0xff]
    %v2433 = vld [vmem:[#allocation2 + $0xd8] sm:$0xff]
    %v2434 = vld [vmem:[#allocation2 + $0xe0] sm:$0xff]
    %v2435 = vld [vmem:[#allocation2 + $0xe8] sm:$0xff]
    %v2436 = vld [vmem:[#allocation2 + $0xf0] sm:$0xff]
    %v2437 = vld [vmem:[#allocation2 + $0xf8] sm:$0xff]
    %v2438 = vld [vmem:[#allocation2 + $0x100] sm:$0xff]
    %v2439 = vld [vmem:[#allocation2 + $0x108] sm:$0xff]
    %v2440 = vld [vmem:[#allocation2 + $0x110] sm:$0xff]
    %v2441 = vld [vmem:[#allocation2 + $0x118] sm:$0xff]
    %v2442 = vld [vmem:[#allocation2 + $0x120] sm:$0xff]
    %v2443 = vld [vmem:[#allocation2 + $0x128] sm:$0xff]
    %v2444 = vld [vmem:[#allocation2 + $0x130] sm:$0xff]
    %v2445 = vld [vmem:[#allocation2 + $0x138] sm:$0xff]
    %v2446 = vld [vmem:[#allocation2 + $0x140] sm:$0xff]
    %v2447 = vld [vmem:[#allocation2 + $0x148] sm:$0xff]
    %v2448 = vld [vmem:[#allocation2 + $0x150] sm:$0xff]
    %v2449 = vld [vmem:[#allocation2 + $0x158] sm:$0xff]
    %v2450 = vld [vmem:[#allocation2 + $0x160] sm:$0xff]
    %v2451 = vld [vmem:[#allocation2 + $0x168] sm:$0xff]
    %v2452 = vld [vmem:[#allocation2 + $0x170] sm:$0xff]
    %v2453 = vld [vmem:[#allocation2 + $0x178] sm:$0xff]
    %v2454 = vld [vmem:[#allocation2 + $0x180] sm:$0xff]
    %v2455 = vld [vmem:[#allocation2 + $0x188] sm:$0xff]
    %v2456 = vld [vmem:[#allocation2 + $0x190] sm:$0xff]
    %v2457 = vld [vmem:[#allocation2 + $0x198] sm:$0xff]
    %v2458 = vld [vmem:[#allocation2 + $0x1a0] sm:$0xff]
    %v2459 = vld [vmem:[#allocation2 + $0x1a8] sm:$0xff]
    %v2460 = vld [vmem:[#allocation2 + $0x1b0] sm:$0xff]
    %v2461 = vld [vmem:[#allocation2 + $0x1b8] sm:$0xff]
    %v2462 = vld [vmem:[#allocation2 + $0x1c0] sm:$0xff]
    %v2463 = vld [vmem:[#allocation2 + $0x1c8] sm:$0xff]
    %v2464 = vld [vmem:[#allocation2 + $0x1d0] sm:$0xff]
    %v2465 = vld [vmem:[#allocation2 + $0x1d8] sm:$0xff]
    %v2466 = vld [vmem:[#allocation2 + $0x1e0] sm:$0xff]
    %v2467 = vld [vmem:[#allocation2 + $0x1e8] sm:$0xff]
    %v2468 = vld [vmem:[#allocation2 + $0x1f0] sm:$0xff]
    %v2469 = vld [vmem:[#allocation2 + $0x1f8] sm:$0xff]
    %2470 = vmatprep.subr.mxu0 %v2407
    %2471 = vmatpush1.msra.mxu0 %v2406
    %2472 = vmatprep.subr.mxu0 %v2411
    %2473 = vmatpush1.msra.mxu0 %v2410
    %2474 = vmatprep.subr.mxu0 %v2415
    %2475 = vmatpush1.msra.mxu0 %v2414
    %2476 = vmatprep.subr.mxu0 %v2419
    %2477 = vmatpush1.msra.mxu0 %v2418
    %2478 = vmatprep.subr.mxu0 %v2423
    %2479 = vmatpush1.msra.mxu0 %v2422
    %2480 = vmatprep.subr.mxu0 %v2427
    %2481 = vmatpush1.msra.mxu0 %v2426
    %2482 = vmatprep.subr.mxu0 %v2431
    %2483 = vmatpush1.msra.mxu0 %v2430
    %2484 = vmatprep.subr.mxu0 %v2435
    %2485 = vmatpush1.msra.mxu0 %v2434
    %2486 = vmatprep.subr.mxu0 %v2439
    %2487 = vmatpush1.msra.mxu0 %v2438
    %2488 = vmatprep.subr.mxu0 %v2443
    %2489 = vmatpush1.msra.mxu0 %v2442
    %2490 = vmatprep.subr.mxu0 %v2447
    %2491 = vmatpush1.msra.mxu0 %v2446
    %2492 = vmatprep.subr.mxu0 %v2451
    %2493 = vmatpush1.msra.mxu0 %v2450
    %2494 = vmatprep.subr.mxu0 %v2455
    %2495 = vmatpush1.msra.mxu0 %v2454
    %2496 = vmatprep.subr.mxu0 %v2459
    %2497 = vmatpush1.msra.mxu0 %v2458
    %2498 = vmatprep.subr.mxu0 %v2463
    %2499 = vmatpush1.msra.mxu0 %v2462
    %2500 = vmatprep.subr.mxu0 %v2467
    %2501 = vmatpush1.msra.mxu0 %v2466
    %2502 = vmatprep.subr.mxu0 0.0
    %2503 = vmatpush1.msra.mxu0 0.0
    %2504 = vmatprep.subr.mxu0 0.0
    %2505 = vmatpush1.msra.mxu0 0.0
    %2506 = vmatprep.subr.mxu0 0.0
    %2507 = vmatpush1.msra.mxu0 0.0
    %2508 = vmatprep.subr.mxu0 0.0
    %2509 = vmatpush1.msra.mxu0 0.0
    %2510 = vmatprep.subr.mxu0 0.0
    %2511 = vmatpush1.msra.mxu0 0.0
    %2512 = vmatprep.subr.mxu0 0.0
    %2513 = vmatpush1.msra.mxu0 0.0
    %2514 = vmatprep.subr.mxu0 0.0
    %2515 = vmatpush1.msra.mxu0 0.0
    %2516 = vmatprep.subr.mxu0 0.0
    %2517 = vmatpush1.msra.mxu0 0.0
    %2518 = vmatprep.subr.mxu0 0.0
    %2519 = vmatpush1.msra.mxu0 0.0
    %2520 = vmatprep.subr.mxu0 0.0
    %2521 = vmatpush1.msra.mxu0 0.0
    %2522 = vmatprep.subr.mxu0 0.0
    %2523 = vmatpush1.msra.mxu0 0.0
    %2524 = vmatprep.subr.mxu0 0.0
    %2525 = vmatpush1.msra.mxu0 0.0
    %2526 = vmatprep.subr.mxu0 0.0
    %2527 = vmatpush1.msra.mxu0 0.0
    %2528 = vmatprep.subr.mxu0 0.0
    %2529 = vmatpush1.msra.mxu0 0.0
    %2530 = vmatprep.subr.mxu0 0.0
    %2531 = vmatpush1.msra.mxu0 0.0
    %2532 = vmatprep.subr.mxu0 0.0
    %2533 = vmatpush1.msra.mxu0 0.0
    %2534 = vmatprep.mubr.f32.mxu0 0.0
    %2535 = vmatmul.mubr.f32.gmra.mrb[0].mxu0 %v2340
    %v2536 = vpop.f32.mrb[0].mxu0
    %v2537 = vadd.f32 0.0, %v2536
    %v2538 = vpop.f32.mrb[0].mxu0
    %v2539 = vadd.f32 0.0, %v2538
    %2540 = vdwg.mxu0
    %2541 = vmatprep.subr.mxu0 %v2409
    %2542 = vmatpush1.msra.mxu0 %v2408
    %2543 = vmatprep.subr.mxu0 %v2413
    %2544 = vmatpush1.msra.mxu0 %v2412
    %2545 = vmatprep.subr.mxu0 %v2417
    %2546 = vmatpush1.msra.mxu0 %v2416
    %2547 = vmatprep.subr.mxu0 %v2421
    %2548 = vmatpush1.msra.mxu0 %v2420
    %2549 = vmatprep.subr.mxu0 %v2425
    %2550 = vmatpush1.msra.mxu0 %v2424
    %2551 = vmatprep.subr.mxu0 %v2429
    %2552 = vmatpush1.msra.mxu0 %v2428
    %2553 = vmatprep.subr.mxu0 %v2433
    %2554 = vmatpush1.msra.mxu0 %v2432
    %2555 = vmatprep.subr.mxu0 %v2437
    %2556 = vmatpush1.msra.mxu0 %v2436
    %2557 = vmatprep.subr.mxu0 %v2441
    %2558 = vmatpush1.msra.mxu0 %v2440
    %2559 = vmatprep.subr.mxu0 %v2445
    %2560 = vmatpush1.msra.mxu0 %v2444
    %2561 = vmatprep.subr.mxu0 %v2449
    %2562 = vmatpush1.msra.mxu0 %v2448
    %2563 = vmatprep.subr.mxu0 %v2453
    %2564 = vmatpush1.msra.mxu0 %v2452
    %2565 = vmatprep.subr.mxu0 %v2457
    %2566 = vmatpush1.msra.mxu0 %v2456
    %2567 = vmatprep.subr.mxu0 %v2461
    %2568 = vmatpush1.msra.mxu0 %v2460
    %2569 = vmatprep.subr.mxu0 %v2465
    %2570 = vmatpush1.msra.mxu0 %v2464
    %2571 = vmatprep.subr.mxu0 %v2469
    %2572 = vmatpush1.msra.mxu0 %v2468
    %2573 = vmatprep.subr.mxu0 0.0
    %2574 = vmatpush1.msra.mxu0 0.0
    %2575 = vmatprep.subr.mxu0 0.0
    %2576 = vmatpush1.msra.mxu0 0.0
    %2577 = vmatprep.subr.mxu0 0.0
    %2578 = vmatpush1.msra.mxu0 0.0
    %2579 = vmatprep.subr.mxu0 0.0
    %2580 = vmatpush1.msra.mxu0 0.0
    %2581 = vmatprep.subr.mxu0 0.0
    %2582 = vmatpush1.msra.mxu0 0.0
    %2583 = vmatprep.subr.mxu0 0.0
    %2584 = vmatpush1.msra.mxu0 0.0
    %2585 = vmatprep.subr.mxu0 0.0
    %2586 = vmatpush1.msra.mxu0 0.0
    %2587 = vmatprep.subr.mxu0 0.0
    %2588 = vmatpush1.msra.mxu0 0.0
    %2589 = vmatprep.subr.mxu0 0.0
    %2590 = vmatpush1.msra.mxu0 0.0
    %2591 = vmatprep.subr.mxu0 0.0
    %2592 = vmatpush1.msra.mxu0 0.0
    %2593 = vmatprep.subr.mxu0 0.0
    %2594 = vmatpush1.msra.mxu0 0.0
    %2595 = vmatprep.subr.mxu0 0.0
    %2596 = vmatpush1.msra.mxu0 0.0
    %2597 = vmatprep.subr.mxu0 0.0
    %2598 = vmatpush1.msra.mxu0 0.0
    %2599 = vmatprep.subr.mxu0 0.0
    %2600 = vmatpush1.msra.mxu0 0.0
    %2601 = vmatprep.subr.mxu0 0.0
    %2602 = vmatpush1.msra.mxu0 0.0
    %2603 = vmatprep.subr.mxu0 0.0
    %2604 = vmatpush1.msra.mxu0 0.0
    %2605 = vmatprep.mubr.f32.mxu0 0.0
    %2606 = vmatmul.mubr.f32.gmra.mrb[0].mxu0 %v2340
    %v2607 = vpop.f32.mrb[0].mxu0
    %v2608 = vadd.f32 0.0, %v2607
    %v2609 = vpop.f32.mrb[0].mxu0
    %v2610 = vadd.f32 0.0, %v2609
    %2611 = vdwg.mxu0
    %2612 = vmatprep.subr.mxu0 %v2343
    %2613 = vmatpush1.msra.mxu0 %v2342
    %2614 = vmatprep.subr.mxu0 %v2347
    %2615 = vmatpush1.msra.mxu0 %v2346
    %2616 = vmatprep.subr.mxu0 %v2351
    %2617 = vmatpush1.msra.mxu0 %v2350
    %2618 = vmatprep.subr.mxu0 %v2355
    %2619 = vmatpush1.msra.mxu0 %v2354
    %2620 = vmatprep.subr.mxu0 %v2359
    %2621 = vmatpush1.msra.mxu0 %v2358
    %2622 = vmatprep.subr.mxu0 %v2363
    %2623 = vmatpush1.msra.mxu0 %v2362
    %2624 = vmatprep.subr.mxu0 %v2367
    %2625 = vmatpush1.msra.mxu0 %v2366
    %2626 = vmatprep.subr.mxu0 %v2371
    %2627 = vmatpush1.msra.mxu0 %v2370
    %2628 = vmatprep.subr.mxu0 %v2375
    %2629 = vmatpush1.msra.mxu0 %v2374
    %2630 = vmatprep.subr.mxu0 %v2379
    %2631 = vmatpush1.msra.mxu0 %v2378
    %2632 = vmatprep.subr.mxu0 %v2383
    %2633 = vmatpush1.msra.mxu0 %v2382
    %2634 = vmatprep.subr.mxu0 %v2387
    %2635 = vmatpush1.msra.mxu0 %v2386
    %2636 = vmatprep.subr.mxu0 %v2391
    %2637 = vmatpush1.msra.mxu0 %v2390
    %2638 = vmatprep.subr.mxu0 %v2395
    %2639 = vmatpush1.msra.mxu0 %v2394
    %2640 = vmatprep.subr.mxu0 %v2399
    %2641 = vmatpush1.msra.mxu0 %v2398
    %2642 = vmatprep.subr.mxu0 %v2403
    %2643 = vmatpush1.msra.mxu0 %v2402
    %2644 = vmatprep.subr.mxu0 0.0
    %2645 = vmatpush1.msra.mxu0 0.0
    %2646 = vmatprep.subr.mxu0 0.0
    %2647 = vmatpush1.msra.mxu0 0.0
    %2648 = vmatprep.subr.mxu0 0.0
    %2649 = vmatpush1.msra.mxu0 0.0
    %2650 = vmatprep.subr.mxu0 0.0
    %2651 = vmatpush1.msra.mxu0 0.0
    %2652 = vmatprep.subr.mxu0 0.0
    %2653 = vmatpush1.msra.mxu0 0.0
    %2654 = vmatprep.subr.mxu0 0.0
    %2655 = vmatpush1.msra.mxu0 0.0
    %2656 = vmatprep.subr.mxu0 0.0
    %2657 = vmatpush1.msra.mxu0 0.0
    %2658 = vmatprep.subr.mxu0 0.0
    %2659 = vmatpush1.msra.mxu0 0.0
    %2660 = vmatprep.subr.mxu0 0.0
    %2661 = vmatpush1.msra.mxu0 0.0
    %2662 = vmatprep.subr.mxu0 0.0
    %2663 = vmatpush1.msra.mxu0 0.0
    %2664 = vmatprep.subr.mxu0 0.0
    %2665 = vmatpush1.msra.mxu0 0.0
    %2666 = vmatprep.subr.mxu0 0.0
    %2667 = vmatpush1.msra.mxu0 0.0
    %2668 = vmatprep.subr.mxu0 0.0
    %2669 = vmatpush1.msra.mxu0 0.0
    %2670 = vmatprep.subr.mxu0 0.0
    %2671 = vmatpush1.msra.mxu0 0.0
    %2672 = vmatprep.subr.mxu0 0.0
    %2673 = vmatpush1.msra.mxu0 0.0
    %2674 = vmatprep.subr.mxu0 0.0
    %2675 = vmatpush1.msra.mxu0 0.0
    %2676 = vmatprep.mubr.f32.mxu0 0.0
    %2677 = vmatmul.mubr.f32.gmra.mrb[0].mxu0 %v655
    %v2678 = vpop.f32.mrb[0].mxu0
    %v2679 = vadd.f32 %v2537, %v2678
    %v2680 = vpop.f32.mrb[0].mxu0
    %v2681 = vadd.f32 %v2539, %v2680
    %2682 = vdwg.mxu0
    %2683 = vmatprep.subr.mxu0 %v2345
    %2684 = vmatpush1.msra.mxu0 %v2344
    %2685 = vmatprep.subr.mxu0 %v2349
    %2686 = vmatpush1.msra.mxu0 %v2348
    %2687 = vmatprep.subr.mxu0 %v2353
    %2688 = vmatpush1.msra.mxu0 %v2352
    %2689 = vmatprep.subr.mxu0 %v2357
    %2690 = vmatpush1.msra.mxu0 %v2356
    %2691 = vmatprep.subr.mxu0 %v2361
    %2692 = vmatpush1.msra.mxu0 %v2360
    %2693 = vmatprep.subr.mxu0 %v2365
    %2694 = vmatpush1.msra.mxu0 %v2364
    %2695 = vmatprep.subr.mxu0 %v2369
    %2696 = vmatpush1.msra.mxu0 %v2368
    %2697 = vmatprep.subr.mxu0 %v2373
    %2698 = vmatpush1.msra.mxu0 %v2372
    %2699 = vmatprep.subr.mxu0 %v2377
    %2700 = vmatpush1.msra.mxu0 %v2376
    %2701 = vmatprep.subr.mxu0 %v2381
    %2702 = vmatpush1.msra.mxu0 %v2380
    %2703 = vmatprep.subr.mxu0 %v2385
    %2704 = vmatpush1.msra.mxu0 %v2384
    %2705 = vmatprep.subr.mxu0 %v2389
    %2706 = vmatpush1.msra.mxu0 %v2388
    %2707 = vmatprep.subr.mxu0 %v2393
    %2708 = vmatpush1.msra.mxu0 %v2392
    %2709 = vmatprep.subr.mxu0 %v2397
    %2710 = vmatpush1.msra.mxu0 %v2396
    %2711 = vmatprep.subr.mxu0 %v2401
    %2712 = vmatpush1.msra.mxu0 %v2400
    %2713 = vmatprep.subr.mxu0 %v2405
    %2714 = vmatpush1.msra.mxu0 %v2404
    %2715 = vmatprep.subr.mxu0 0.0
    %2716 = vmatpush1.msra.mxu0 0.0
    %2717 = vmatprep.subr.mxu0 0.0
    %2718 = vmatpush1.msra.mxu0 0.0
    %2719 = vmatprep.subr.mxu0 0.0
    %2720 = vmatpush1.msra.mxu0 0.0
    %2721 = vmatprep.subr.mxu0 0.0
    %2722 = vmatpush1.msra.mxu0 0.0
    %2723 = vmatprep.subr.mxu0 0.0
    %2724 = vmatpush1.msra.mxu0 0.0
    %2725 = vmatprep.subr.mxu0 0.0
    %2726 = vmatpush1.msra.mxu0 0.0
    %2727 = vmatprep.subr.mxu0 0.0
    %2728 = vmatpush1.msra.mxu0 0.0
    %2729 = vmatprep.subr.mxu0 0.0
    %2730 = vmatpush1.msra.mxu0 0.0
    %2731 = vmatprep.subr.mxu0 0.0
    %2732 = vmatpush1.msra.mxu0 0.0
    %2733 = vmatprep.subr.mxu0 0.0
    %2734 = vmatpush1.msra.mxu0 0.0
    %2735 = vmatprep.subr.mxu0 0.0
    %2736 = vmatpush1.msra.mxu0 0.0
    %2737 = vmatprep.subr.mxu0 0.0
    %2738 = vmatpush1.msra.mxu0 0.0
    %2739 = vmatprep.subr.mxu0 0.0
    %2740 = vmatpush1.msra.mxu0 0.0
    %2741 = vmatprep.subr.mxu0 0.0
    %2742 = vmatpush1.msra.mxu0 0.0
    %2743 = vmatprep.subr.mxu0 0.0
    %2744 = vmatpush1.msra.mxu0 0.0
    %2745 = vmatprep.subr.mxu0 0.0
    %2746 = vmatpush1.msra.mxu0 0.0
    %2747 = vmatprep.mubr.f32.mxu0 0.0
    %2748 = vmatmul.mubr.f32.gmra.mrb[0].mxu0 %v655
    %v2749 = vpop.f32.mrb[0].mxu0
    %v2750 = vadd.f32 %v2608, %v2749
    %v2751 = vpop.f32.mrb[0].mxu0
    %v2752 = vadd.f32 %v2610, %v2751
    %2753 = vdwg.mxu0
    %v2754 = vld [vmem:[%s5] sm:$0xf]
    %v2756 = vlaneseq
    %v2757 = vshrl.u32 %v2756, 7
    %v2758 = vsub.s32 0, %v2757
    %v2759 = vrot.slane %v2754, %v2758
    %v2760 = vlaneseq
    %v2761 = vshrl.u32 %v2760, 7
    %v2762 = vsub.s32 1, %v2761
    %v2763 = vrot.slane %v2754, %v2762
    %v2764 = vlaneseq
    %v2765 = vshrl.u32 %v2764, 7
    %v2766 = vsub.s32 2, %v2765
    %v2767 = vrot.slane %v2754, %v2766
    %v2768 = vlaneseq
    %v2769 = vshrl.u32 %v2768, 7
    %v2770 = vsub.s32 3, %v2769
    %v2771 = vrot.slane %v2754, %v2770
    %v2776 = vadd.f32 %v2679, %v2759
    %v2777 = vadd.f32 %v2681, %v2763
    %v2778 = vadd.f32 %v2750, %v2767
    %v2779 = vadd.f32 %v2752, %v2771
    %v2780 = vxor.u32 %v2776, 2147483648
    %v2781 = vmul.f32 %v2780, 1.442695
    %v2782 = vpow.pop %v2781
    %v2783 = vadd.f32 %v2782, 1.0
    %v2784 = vrcp.pop %v2783
    %v2785 = vmul.f32 1.0, %v2784
    %v2786 = vxor.u32 %v2777, 2147483648
    %v2787 = vmul.f32 %v2786, 1.442695
    %v2788 = vpow.pop %v2787
    %v2789 = vadd.f32 %v2788, 1.0
    %v2790 = vrcp.pop %v2789
    %v2791 = vmul.f32 1.0, %v2790
    %v2792 = vtanh.pop %v2778
    %v2793 = vxor.u32 %v2779, 2147483648
    %v2794 = vmul.f32 %v2793, 1.442695
    %v2795 = vpow.pop %v2794
    %v2796 = vadd.f32 %v2795, 1.0
    %v2797 = vrcp.pop %v2796
    %v2798 = vmul.f32 1.0, %v2797
    %v2799 = vmul.f32 %v2791, %v562
    %v2800 = vmul.f32 %v2785, %v2792
    %v2801 = vadd.f32 %v2799, %v2800
    %v2802 = vtanh.pop %v2801
    %v2803 = vmul.f32 %v2798, %v2802
    %v2804 = vld [vmem:[%s6] sm:$0xff]
    %v2805 = vld [vmem:[%s6 + $0x8] sm:$0xff]
    %v2806 = vld [vmem:[%s6 + $0x10] sm:$0xff]
    %v2807 = vld [vmem:[%s6 + $0x18] sm:$0xff]
    %v2808 = vld [vmem:[%s6 + $0x20] sm:$0xff]
    %v2809 = vld [vmem:[%s6 + $0x28] sm:$0xff]
    %v2810 = vld [vmem:[%s6 + $0x30] sm:$0xff]
    %v2811 = vld [vmem:[%s6 + $0x38] sm:$0xff]
    %v2812 = vld [vmem:[%s6 + $0x40] sm:$0xff]
    %v2813 = vld [vmem:[%s6 + $0x48] sm:$0xff]
    %v2814 = vld [vmem:[%s6 + $0x50] sm:$0xff]
    %v2815 = vld [vmem:[%s6 + $0x58] sm:$0xff]
    %v2816 = vld [vmem:[%s6 + $0x60] sm:$0xff]
    %v2817 = vld [vmem:[%s6 + $0x68] sm:$0xff]
    %v2818 = vld [vmem:[%s6 + $0x70] sm:$0xff]
    %v2819 = vld [vmem:[%s6 + $0x78] sm:$0xff]
    %v2820 = vld [vmem:[%s7] sm:$0x1]
    %v2822 = vlaneseq
    %v2823 = vshrl.u32 %v2822, 7
    %v2824 = vsub.s32 0, %v2823
    %v2825 = vrot.slane %v2820, %v2824
    %2827 = vmatprep.subr.mxu0 0.0
    %2828 = vmatpush1.msra.mxu0 %v2804
    %2829 = vmatprep.subr.mxu0 0.0
    %2830 = vmatpush1.msra.mxu0 %v2805
    %2831 = vmatprep.subr.mxu0 0.0
    %2832 = vmatpush1.msra.mxu0 %v2806
    %2833 = vmatprep.subr.mxu0 0.0
    %2834 = vmatpush1.msra.mxu0 %v2807
    %2835 = vmatprep.subr.mxu0 0.0
    %2836 = vmatpush1.msra.mxu0 %v2808
    %2837 = vmatprep.subr.mxu0 0.0
    %2838 = vmatpush1.msra.mxu0 %v2809
    %2839 = vmatprep.subr.mxu0 0.0
    %2840 = vmatpush1.msra.mxu0 %v2810
    %2841 = vmatprep.subr.mxu0 0.0
    %2842 = vmatpush1.msra.mxu0 %v2811
    %2843 = vmatprep.subr.mxu0 0.0
    %2844 = vmatpush1.msra.mxu0 %v2812
    %2845 = vmatprep.subr.mxu0 0.0
    %2846 = vmatpush1.msra.mxu0 %v2813
    %2847 = vmatprep.subr.mxu0 0.0
    %2848 = vmatpush1.msra.mxu0 %v2814
    %2849 = vmatprep.subr.mxu0 0.0
    %2850 = vmatpush1.msra.mxu0 %v2815
    %2851 = vmatprep.subr.mxu0 0.0
    %2852 = vmatpush1.msra.mxu0 %v2816
    %2853 = vmatprep.subr.mxu0 0.0
    %2854 = vmatpush1.msra.mxu0 %v2817
    %2855 = vmatprep.subr.mxu0 0.0
    %2856 = vmatpush1.msra.mxu0 %v2818
    %2857 = vmatprep.subr.mxu0 0.0
    %2858 = vmatpush1.msra.mxu0 %v2819
    %2859 = vmatprep.subr.mxu0 0.0
    %2860 = vmatpush1.msra.mxu0 0.0
    %2861 = vmatprep.subr.mxu0 0.0
    %2862 = vmatpush1.msra.mxu0 0.0
    %2863 = vmatprep.subr.mxu0 0.0
    %2864 = vmatpush1.msra.mxu0 0.0
    %2865 = vmatprep.subr.mxu0 0.0
    %2866 = vmatpush1.msra.mxu0 0.0
    %2867 = vmatprep.subr.mxu0 0.0
    %2868 = vmatpush1.msra.mxu0 0.0
    %2869 = vmatprep.subr.mxu0 0.0
    %2870 = vmatpush1.msra.mxu0 0.0
    %2871 = vmatprep.subr.mxu0 0.0
    %2872 = vmatpush1.msra.mxu0 0.0
    %2873 = vmatprep.subr.mxu0 0.0
    %2874 = vmatpush1.msra.mxu0 0.0
    %2875 = vmatprep.subr.mxu0 0.0
    %2876 = vmatpush1.msra.mxu0 0.0
    %2877 = vmatprep.subr.mxu0 0.0
    %2878 = vmatpush1.msra.mxu0 0.0
    %2879 = vmatprep.subr.mxu0 0.0
    %2880 = vmatpush1.msra.mxu0 0.0
    %2881 = vmatprep.subr.mxu0 0.0
    %2882 = vmatpush1.msra.mxu0 0.0
    %2883 = vmatprep.subr.mxu0 0.0
    %2884 = vmatpush1.msra.mxu0 0.0
    %2885 = vmatprep.subr.mxu0 0.0
    %2886 = vmatpush1.msra.mxu0 0.0
    %2887 = vmatprep.subr.mxu0 0.0
    %2888 = vmatpush1.msra.mxu0 0.0
    %2889 = vmatprep.subr.mxu0 0.0
    %2890 = vmatpush1.msra.mxu0 0.0
    %2891 = vmatprep.mubr.f32.mxu0 0.0
    %2892 = vmatmul.mubr.f32.gmra.mrb[0].mxu0 %v2803
    %v2893 = vpop.f32.mrb[0].mxu0
    %v2894 = vadd.f32 %v2825, %v2893
    %v2895 = vpop.f32.mrb[0].mxu0
    %2896 = vdwg.mxu0
    %v2897 = vadd.f32 %v2894, %v658
    %v2898 = vld [vmem:[#allocation4] sm:$0xff]
    %v2899 = vld [vmem:[#allocation4 + $0x8] sm:$0xff]
    %v2900 = vld [vmem:[#allocation4 + $0x10] sm:$0xff]
    %v2901 = vld [vmem:[#allocation4 + $0x18] sm:$0xff]
    %v2902 = vld [vmem:[#allocation4 + $0x20] sm:$0xff]
    %v2903 = vld [vmem:[#allocation4 + $0x28] sm:$0xff]
    %v2904 = vld [vmem:[#allocation4 + $0x30] sm:$0xff]
    %v2905 = vld [vmem:[#allocation4 + $0x38] sm:$0xff]
    %v2906 = vld [vmem:[#allocation4 + $0x40] sm:$0xff]
    %v2907 = vld [vmem:[#allocation4 + $0x48] sm:$0xff]
    %v2908 = vld [vmem:[#allocation4 + $0x50] sm:$0xff]
    %v2909 = vld [vmem:[#allocation4 + $0x58] sm:$0xff]
    %v2910 = vld [vmem:[#allocation4 + $0x60] sm:$0xff]
    %v2911 = vld [vmem:[#allocation4 + $0x68] sm:$0xff]
    %v2912 = vld [vmem:[#allocation4 + $0x70] sm:$0xff]
    %v2913 = vld [vmem:[#allocation4 + $0x78] sm:$0xff]
    %v2914 = vld [vmem:[#allocation4 + $0x80] sm:$0xff]
    %v2915 = vld [vmem:[#allocation4 + $0x88] sm:$0xff]
    %v2916 = vld [vmem:[#allocation4 + $0x90] sm:$0xff]
    %v2917 = vld [vmem:[#allocation4 + $0x98] sm:$0xff]
    %v2918 = vld [vmem:[#allocation4 + $0xa0] sm:$0xff]
    %v2919 = vld [vmem:[#allocation4 + $0xa8] sm:$0xff]
    %v2920 = vld [vmem:[#allocation4 + $0xb0] sm:$0xff]
    %v2921 = vld [vmem:[#allocation4 + $0xb8] sm:$0xff]
    %v2922 = vld [vmem:[#allocation4 + $0xc0] sm:$0xff]
    %v2923 = vld [vmem:[#allocation4 + $0xc8] sm:$0xff]
    %v2924 = vld [vmem:[#allocation4 + $0xd0] sm:$0xff]
    %v2925 = vld [vmem:[#allocation4 + $0xd8] sm:$0xff]
    %v2926 = vld [vmem:[#allocation4 + $0xe0] sm:$0xff]
    %v2927 = vld [vmem:[#allocation4 + $0xe8] sm:$0xff]
    %v2928 = vld [vmem:[#allocation4 + $0xf0] sm:$0xff]
    %v2929 = vld [vmem:[#allocation4 + $0xf8] sm:$0xff]
    %v2930 = vld [vmem:[#allocation4 + $0x100] sm:$0xff]
    %v2931 = vld [vmem:[#allocation4 + $0x108] sm:$0xff]
    %v2932 = vld [vmem:[#allocation4 + $0x110] sm:$0xff]
    %v2933 = vld [vmem:[#allocation4 + $0x118] sm:$0xff]
    %v2934 = vld [vmem:[#allocation4 + $0x120] sm:$0xff]
    %v2935 = vld [vmem:[#allocation4 + $0x128] sm:$0xff]
    %v2936 = vld [vmem:[#allocation4 + $0x130] sm:$0xff]
    %v2937 = vld [vmem:[#allocation4 + $0x138] sm:$0xff]
    %v2938 = vld [vmem:[#allocation4 + $0x140] sm:$0xff]
    %v2939 = vld [vmem:[#allocation4 + $0x148] sm:$0xff]
    %v2940 = vld [vmem:[#allocation4 + $0x150] sm:$0xff]
    %v2941 = vld [vmem:[#allocation4 + $0x158] sm:$0xff]
    %v2942 = vld [vmem:[#allocation4 + $0x160] sm:$0xff]
    %v2943 = vld [vmem:[#allocation4 + $0x168] sm:$0xff]
    %v2944 = vld [vmem:[#allocation4 + $0x170] sm:$0xff]
    %v2945 = vld [vmem:[#allocation4 + $0x178] sm:$0xff]
    %v2946 = vld [vmem:[#allocation4 + $0x180] sm:$0xff]
    %v2947 = vld [vmem:[#allocation4 + $0x188] sm:$0xff]
    %v2948 = vld [vmem:[#allocation4 + $0x190] sm:$0xff]
    %v2949 = vld [vmem:[#allocation4 + $0x198] sm:$0xff]
    %v2950 = vld [vmem:[#allocation4 + $0x1a0] sm:$0xff]
    %v2951 = vld [vmem:[#allocation4 + $0x1a8] sm:$0xff]
    %v2952 = vld [vmem:[#allocation4 + $0x1b0] sm:$0xff]
    %v2953 = vld [vmem:[#allocation4 + $0x1b8] sm:$0xff]
    %v2954 = vld [vmem:[#allocation4 + $0x1c0] sm:$0xff]
    %v2955 = vld [vmem:[#allocation4 + $0x1c8] sm:$0xff]
    %v2956 = vld [vmem:[#allocation4 + $0x1d0] sm:$0xff]
    %v2957 = vld [vmem:[#allocation4 + $0x1d8] sm:$0xff]
    %v2958 = vld [vmem:[#allocation4 + $0x1e0] sm:$0xff]
    %v2959 = vld [vmem:[#allocation4 + $0x1e8] sm:$0xff]
    %v2960 = vld [vmem:[#allocation4 + $0x1f0] sm:$0xff]
    %v2961 = vld [vmem:[#allocation4 + $0x1f8] sm:$0xff]
    %2962 = vmatprep.subr.mxu0 %v2899
    %2963 = vmatpush1.msra.mxu0 %v2898
    %2964 = vmatprep.subr.mxu0 %v2903
    %2965 = vmatpush1.msra.mxu0 %v2902
    %2966 = vmatprep.subr.mxu0 %v2907
    %2967 = vmatpush1.msra.mxu0 %v2906
    %2968 = vmatprep.subr.mxu0 %v2911
    %2969 = vmatpush1.msra.mxu0 %v2910
    %2970 = vmatprep.subr.mxu0 %v2915
    %2971 = vmatpush1.msra.mxu0 %v2914
    %2972 = vmatprep.subr.mxu0 %v2919
    %2973 = vmatpush1.msra.mxu0 %v2918
    %2974 = vmatprep.subr.mxu0 %v2923
    %2975 = vmatpush1.msra.mxu0 %v2922
    %2976 = vmatprep.subr.mxu0 %v2927
    %2977 = vmatpush1.msra.mxu0 %v2926
    %2978 = vmatprep.subr.mxu0 %v2931
    %2979 = vmatpush1.msra.mxu0 %v2930
    %2980 = vmatprep.subr.mxu0 %v2935
    %2981 = vmatpush1.msra.mxu0 %v2934
    %2982 = vmatprep.subr.mxu0 %v2939
    %2983 = vmatpush1.msra.mxu0 %v2938
    %2984 = vmatprep.subr.mxu0 %v2943
    %2985 = vmatpush1.msra.mxu0 %v2942
    %2986 = vmatprep.subr.mxu0 %v2947
    %2987 = vmatpush1.msra.mxu0 %v2946
    %2988 = vmatprep.subr.mxu0 %v2951
    %2989 = vmatpush1.msra.mxu0 %v2950
    %2990 = vmatprep.subr.mxu0 %v2955
    %2991 = vmatpush1.msra.mxu0 %v2954
    %2992 = vmatprep.subr.mxu0 %v2959
    %2993 = vmatpush1.msra.mxu0 %v2958
    %2994 = vmatprep.subr.mxu0 0.0
    %2995 = vmatpush1.msra.mxu0 0.0
    %2996 = vmatprep.subr.mxu0 0.0
    %2997 = vmatpush1.msra.mxu0 0.0
    %2998 = vmatprep.subr.mxu0 0.0
    %2999 = vmatpush1.msra.mxu0 0.0
    %3000 = vmatprep.subr.mxu0 0.0
    %3001 = vmatpush1.msra.mxu0 0.0
    %3002 = vmatprep.subr.mxu0 0.0
    %3003 = vmatpush1.msra.mxu0 0.0
    %3004 = vmatprep.subr.mxu0 0.0
    %3005 = vmatpush1.msra.mxu0 0.0
    %3006 = vmatprep.subr.mxu0 0.0
    %3007 = vmatpush1.msra.mxu0 0.0
    %3008 = vmatprep.subr.mxu0 0.0
    %3009 = vmatpush1.msra.mxu0 0.0
    %3010 = vmatprep.subr.mxu0 0.0
    %3011 = vmatpush1.msra.mxu0 0.0
    %3012 = vmatprep.subr.mxu0 0.0
    %3013 = vmatpush1.msra.mxu0 0.0
    %3014 = vmatprep.subr.mxu0 0.0
    %3015 = vmatpush1.msra.mxu0 0.0
    %3016 = vmatprep.subr.mxu0 0.0
    %3017 = vmatpush1.msra.mxu0 0.0
    %3018 = vmatprep.subr.mxu0 0.0
    %3019 = vmatpush1.msra.mxu0 0.0
    %3020 = vmatprep.subr.mxu0 0.0
    %3021 = vmatpush1.msra.mxu0 0.0
    %3022 = vmatprep.subr.mxu0 0.0
    %3023 = vmatpush1.msra.mxu0 0.0
    %3024 = vmatprep.subr.mxu0 0.0
    %3025 = vmatpush1.msra.mxu0 0.0
    %3026 = vmatprep.mubr.f32.mxu0 0.0
    %3027 = vmatmul.mubr.f32.gmra.mrb[0].mxu0 %v2897
    %v3028 = vpop.f32.mrb[0].mxu0
    %v3029 = vadd.f32 0.0, %v3028
    %v3030 = vpop.f32.mrb[0].mxu0
    %v3031 = vadd.f32 0.0, %v3030
    %3032 = vdwg.mxu0
    %3033 = vmatprep.subr.mxu0 %v2901
    %3034 = vmatpush1.msra.mxu0 %v2900
    %3035 = vmatprep.subr.mxu0 %v2905
    %3036 = vmatpush1.msra.mxu0 %v2904
    %3037 = vmatprep.subr.mxu0 %v2909
    %3038 = vmatpush1.msra.mxu0 %v2908
    %3039 = vmatprep.subr.mxu0 %v2913
    %3040 = vmatpush1.msra.mxu0 %v2912
    %3041 = vmatprep.subr.mxu0 %v2917
    %3042 = vmatpush1.msra.mxu0 %v2916
    %3043 = vmatprep.subr.mxu0 %v2921
    %3044 = vmatpush1.msra.mxu0 %v2920
    %3045 = vmatprep.subr.mxu0 %v2925
    %3046 = vmatpush1.msra.mxu0 %v2924
    %3047 = vmatprep.subr.mxu0 %v2929
    %3048 = vmatpush1.msra.mxu0 %v2928
    %3049 = vmatprep.subr.mxu0 %v2933
    %3050 = vmatpush1.msra.mxu0 %v2932
    %3051 = vmatprep.subr.mxu0 %v2937
    %3052 = vmatpush1.msra.mxu0 %v2936
    %3053 = vmatprep.subr.mxu0 %v2941
    %3054 = vmatpush1.msra.mxu0 %v2940
    %3055 = vmatprep.subr.mxu0 %v2945
    %3056 = vmatpush1.msra.mxu0 %v2944
    %3057 = vmatprep.subr.mxu0 %v2949
    %3058 = vmatpush1.msra.mxu0 %v2948
    %3059 = vmatprep.subr.mxu0 %v2953
    %3060 = vmatpush1.msra.mxu0 %v2952
    %3061 = vmatprep.subr.mxu0 %v2957
    %3062 = vmatpush1.msra.mxu0 %v2956
    %3063 = vmatprep.subr.mxu0 %v2961
    %3064 = vmatpush1.msra.mxu0 %v2960
    %3065 = vmatprep.subr.mxu0 0.0
    %3066 = vmatpush1.msra.mxu0 0.0
    %3067 = vmatprep.subr.mxu0 0.0
    %3068 = vmatpush1.msra.mxu0 0.0
    %3069 = vmatprep.subr.mxu0 0.0
    %3070 = vmatpush1.msra.mxu0 0.0
    %3071 = vmatprep.subr.mxu0 0.0
    %3072 = vmatpush1.msra.mxu0 0.0
    %3073 = vmatprep.subr.mxu0 0.0
    %3074 = vmatpush1.msra.mxu0 0.0
    %3075 = vmatprep.subr.mxu0 0.0
    %3076 = vmatpush1.msra.mxu0 0.0
    %3077 = vmatprep.subr.mxu0 0.0
    %3078 = vmatpush1.msra.mxu0 0.0
    %3079 = vmatprep.subr.mxu0 0.0
    %3080 = vmatpush1.msra.mxu0 0.0
    %3081 = vmatprep.subr.mxu0 0.0
    %3082 = vmatpush1.msra.mxu0 0.0
    %3083 = vmatprep.subr.mxu0 0.0
    %3084 = vmatpush1.msra.mxu0 0.0
    %3085 = vmatprep.subr.mxu0 0.0
    %3086 = vmatpush1.msra.mxu0 0.0
    %3087 = vmatprep.subr.mxu0 0.0
    %3088 = vmatpush1.msra.mxu0 0.0
    %3089 = vmatprep.subr.mxu0 0.0
    %3090 = vmatpush1.msra.mxu0 0.0
    %3091 = vmatprep.subr.mxu0 0.0
    %3092 = vmatpush1.msra.mxu0 0.0
    %3093 = vmatprep.subr.mxu0 0.0
    %3094 = vmatpush1.msra.mxu0 0.0
    %3095 = vmatprep.subr.mxu0 0.0
    %3096 = vmatpush1.msra.mxu0 0.0
    %3097 = vmatprep.mubr.f32.mxu0 0.0
    %3098 = vmatmul.mubr.f32.gmra.mrb[0].mxu0 %v2897
    %v3099 = vpop.f32.mrb[0].mxu0
    %v3100 = vadd.f32 0.0, %v3099
    %v3101 = vpop.f32.mrb[0].mxu0
    %v3102 = vadd.f32 0.0, %v3101
    %3103 = vdwg.mxu0
    %v3104 = vld [vmem:[#allocation6] sm:$0xff]
    %v3105 = vld [vmem:[#allocation6 + $0x8] sm:$0xff]
    %v3106 = vld [vmem:[#allocation6 + $0x10] sm:$0xff]
    %v3107 = vld [vmem:[#allocation6 + $0x18] sm:$0xff]
    %v3108 = vld [vmem:[#allocation6 + $0x20] sm:$0xff]
    %v3109 = vld [vmem:[#allocation6 + $0x28] sm:$0xff]
    %v3110 = vld [vmem:[#allocation6 + $0x30] sm:$0xff]
    %v3111 = vld [vmem:[#allocation6 + $0x38] sm:$0xff]
    %v3112 = vld [vmem:[#allocation6 + $0x40] sm:$0xff]
    %v3113 = vld [vmem:[#allocation6 + $0x48] sm:$0xff]
    %v3114 = vld [vmem:[#allocation6 + $0x50] sm:$0xff]
    %v3115 = vld [vmem:[#allocation6 + $0x58] sm:$0xff]
    %v3116 = vld [vmem:[#allocation6 + $0x60] sm:$0xff]
    %v3117 = vld [vmem:[#allocation6 + $0x68] sm:$0xff]
    %v3118 = vld [vmem:[#allocation6 + $0x70] sm:$0xff]
    %v3119 = vld [vmem:[#allocation6 + $0x78] sm:$0xff]
    %v3120 = vld [vmem:[#allocation6 + $0x80] sm:$0xff]
    %v3121 = vld [vmem:[#allocation6 + $0x88] sm:$0xff]
    %v3122 = vld [vmem:[#allocation6 + $0x90] sm:$0xff]
    %v3123 = vld [vmem:[#allocation6 + $0x98] sm:$0xff]
    %v3124 = vld [vmem:[#allocation6 + $0xa0] sm:$0xff]
    %v3125 = vld [vmem:[#allocation6 + $0xa8] sm:$0xff]
    %v3126 = vld [vmem:[#allocation6 + $0xb0] sm:$0xff]
    %v3127 = vld [vmem:[#allocation6 + $0xb8] sm:$0xff]
    %v3128 = vld [vmem:[#allocation6 + $0xc0] sm:$0xff]
    %v3129 = vld [vmem:[#allocation6 + $0xc8] sm:$0xff]
    %v3130 = vld [vmem:[#allocation6 + $0xd0] sm:$0xff]
    %v3131 = vld [vmem:[#allocation6 + $0xd8] sm:$0xff]
    %v3132 = vld [vmem:[#allocation6 + $0xe0] sm:$0xff]
    %v3133 = vld [vmem:[#allocation6 + $0xe8] sm:$0xff]
    %v3134 = vld [vmem:[#allocation6 + $0xf0] sm:$0xff]
    %v3135 = vld [vmem:[#allocation6 + $0xf8] sm:$0xff]
    %v3136 = vld [vmem:[#allocation6 + $0x100] sm:$0xff]
    %v3137 = vld [vmem:[#allocation6 + $0x108] sm:$0xff]
    %v3138 = vld [vmem:[#allocation6 + $0x110] sm:$0xff]
    %v3139 = vld [vmem:[#allocation6 + $0x118] sm:$0xff]
    %v3140 = vld [vmem:[#allocation6 + $0x120] sm:$0xff]
    %v3141 = vld [vmem:[#allocation6 + $0x128] sm:$0xff]
    %v3142 = vld [vmem:[#allocation6 + $0x130] sm:$0xff]
    %v3143 = vld [vmem:[#allocation6 + $0x138] sm:$0xff]
    %v3144 = vld [vmem:[#allocation6 + $0x140] sm:$0xff]
    %v3145 = vld [vmem:[#allocation6 + $0x148] sm:$0xff]
    %v3146 = vld [vmem:[#allocation6 + $0x150] sm:$0xff]
    %v3147 = vld [vmem:[#allocation6 + $0x158] sm:$0xff]
    %v3148 = vld [vmem:[#allocation6 + $0x160] sm:$0xff]
    %v3149 = vld [vmem:[#allocation6 + $0x168] sm:$0xff]
    %v3150 = vld [vmem:[#allocation6 + $0x170] sm:$0xff]
    %v3151 = vld [vmem:[#allocation6 + $0x178] sm:$0xff]
    %v3152 = vld [vmem:[#allocation6 + $0x180] sm:$0xff]
    %v3153 = vld [vmem:[#allocation6 + $0x188] sm:$0xff]
    %v3154 = vld [vmem:[#allocation6 + $0x190] sm:$0xff]
    %v3155 = vld [vmem:[#allocation6 + $0x198] sm:$0xff]
    %v3156 = vld [vmem:[#allocation6 + $0x1a0] sm:$0xff]
    %v3157 = vld [vmem:[#allocation6 + $0x1a8] sm:$0xff]
    %v3158 = vld [vmem:[#allocation6 + $0x1b0] sm:$0xff]
    %v3159 = vld [vmem:[#allocation6 + $0x1b8] sm:$0xff]
    %v3160 = vld [vmem:[#allocation6 + $0x1c0] sm:$0xff]
    %v3161 = vld [vmem:[#allocation6 + $0x1c8] sm:$0xff]
    %v3162 = vld [vmem:[#allocation6 + $0x1d0] sm:$0xff]
    %v3163 = vld [vmem:[#allocation6 + $0x1d8] sm:$0xff]
    %v3164 = vld [vmem:[#allocation6 + $0x1e0] sm:$0xff]
    %v3165 = vld [vmem:[#allocation6 + $0x1e8] sm:$0xff]
    %v3166 = vld [vmem:[#allocation6 + $0x1f0] sm:$0xff]
    %v3167 = vld [vmem:[#allocation6 + $0x1f8] sm:$0xff]
    %3168 = vmatprep.subr.mxu0 %v3105
    %3169 = vmatpush1.msra.mxu0 %v3104
    %3170 = vmatprep.subr.mxu0 %v3109
    %3171 = vmatpush1.msra.mxu0 %v3108
    %3172 = vmatprep.subr.mxu0 %v3113
    %3173 = vmatpush1.msra.mxu0 %v3112
    %3174 = vmatprep.subr.mxu0 %v3117
    %3175 = vmatpush1.msra.mxu0 %v3116
    %3176 = vmatprep.subr.mxu0 %v3121
    %3177 = vmatpush1.msra.mxu0 %v3120
    %3178 = vmatprep.subr.mxu0 %v3125
    %3179 = vmatpush1.msra.mxu0 %v3124
    %3180 = vmatprep.subr.mxu0 %v3129
    %3181 = vmatpush1.msra.mxu0 %v3128
    %3182 = vmatprep.subr.mxu0 %v3133
    %3183 = vmatpush1.msra.mxu0 %v3132
    %3184 = vmatprep.subr.mxu0 %v3137
    %3185 = vmatpush1.msra.mxu0 %v3136
    %3186 = vmatprep.subr.mxu0 %v3141
    %3187 = vmatpush1.msra.mxu0 %v3140
    %3188 = vmatprep.subr.mxu0 %v3145
    %3189 = vmatpush1.msra.mxu0 %v3144
    %3190 = vmatprep.subr.mxu0 %v3149
    %3191 = vmatpush1.msra.mxu0 %v3148
    %3192 = vmatprep.subr.mxu0 %v3153
    %3193 = vmatpush1.msra.mxu0 %v3152
    %3194 = vmatprep.subr.mxu0 %v3157
    %3195 = vmatpush1.msra.mxu0 %v3156
    %3196 = vmatprep.subr.mxu0 %v3161
    %3197 = vmatpush1.msra.mxu0 %v3160
    %3198 = vmatprep.subr.mxu0 %v3165
    %3199 = vmatpush1.msra.mxu0 %v3164
    %3200 = vmatprep.subr.mxu0 0.0
    %3201 = vmatpush1.msra.mxu0 0.0
    %3202 = vmatprep.subr.mxu0 0.0
    %3203 = vmatpush1.msra.mxu0 0.0
    %3204 = vmatprep.subr.mxu0 0.0
    %3205 = vmatpush1.msra.mxu0 0.0
    %3206 = vmatprep.subr.mxu0 0.0
    %3207 = vmatpush1.msra.mxu0 0.0
    %3208 = vmatprep.subr.mxu0 0.0
    %3209 = vmatpush1.msra.mxu0 0.0
    %3210 = vmatprep.subr.mxu0 0.0
    %3211 = vmatpush1.msra.mxu0 0.0
    %3212 = vmatprep.subr.mxu0 0.0
    %3213 = vmatpush1.msra.mxu0 0.0
    %3214 = vmatprep.subr.mxu0 0.0
    %3215 = vmatpush1.msra.mxu0 0.0
    %3216 = vmatprep.subr.mxu0 0.0
    %3217 = vmatpush1.msra.mxu0 0.0
    %3218 = vmatprep.subr.mxu0 0.0
    %3219 = vmatpush1.msra.mxu0 0.0
    %3220 = vmatprep.subr.mxu0 0.0
    %3221 = vmatpush1.msra.mxu0 0.0
    %3222 = vmatprep.subr.mxu0 0.0
    %3223 = vmatpush1.msra.mxu0 0.0
    %3224 = vmatprep.subr.mxu0 0.0
    %3225 = vmatpush1.msra.mxu0 0.0
    %3226 = vmatprep.subr.mxu0 0.0
    %3227 = vmatpush1.msra.mxu0 0.0
    %3228 = vmatprep.subr.mxu0 0.0
    %3229 = vmatpush1.msra.mxu0 0.0
    %3230 = vmatprep.subr.mxu0 0.0
    %3231 = vmatpush1.msra.mxu0 0.0
    %3232 = vmatprep.mubr.f32.mxu0 0.0
    %3233 = vmatmul.mubr.f32.gmra.mrb[0].mxu0 %v2803
    %v3234 = vpop.f32.mrb[0].mxu0
    %v3235 = vadd.f32 0.0, %v3234
    %v3236 = vpop.f32.mrb[0].mxu0
    %v3237 = vadd.f32 0.0, %v3236
    %3238 = vdwg.mxu0
    %3239 = vmatprep.subr.mxu0 %v3107
    %3240 = vmatpush1.msra.mxu0 %v3106
    %3241 = vmatprep.subr.mxu0 %v3111
    %3242 = vmatpush1.msra.mxu0 %v3110
    %3243 = vmatprep.subr.mxu0 %v3115
    %3244 = vmatpush1.msra.mxu0 %v3114
    %3245 = vmatprep.subr.mxu0 %v3119
    %3246 = vmatpush1.msra.mxu0 %v3118
    %3247 = vmatprep.subr.mxu0 %v3123
    %3248 = vmatpush1.msra.mxu0 %v3122
    %3249 = vmatprep.subr.mxu0 %v3127
    %3250 = vmatpush1.msra.mxu0 %v3126
    %3251 = vmatprep.subr.mxu0 %v3131
    %3252 = vmatpush1.msra.mxu0 %v3130
    %3253 = vmatprep.subr.mxu0 %v3135
    %3254 = vmatpush1.msra.mxu0 %v3134
    %3255 = vmatprep.subr.mxu0 %v3139
    %3256 = vmatpush1.msra.mxu0 %v3138
    %3257 = vmatprep.subr.mxu0 %v3143
    %3258 = vmatpush1.msra.mxu0 %v3142
    %3259 = vmatprep.subr.mxu0 %v3147
    %3260 = vmatpush1.msra.mxu0 %v3146
    %3261 = vmatprep.subr.mxu0 %v3151
    %3262 = vmatpush1.msra.mxu0 %v3150
    %3263 = vmatprep.subr.mxu0 %v3155
    %3264 = vmatpush1.msra.mxu0 %v3154
    %3265 = vmatprep.subr.mxu0 %v3159
    %3266 = vmatpush1.msra.mxu0 %v3158
    %3267 = vmatprep.subr.mxu0 %v3163
    %3268 = vmatpush1.msra.mxu0 %v3162
    %3269 = vmatprep.subr.mxu0 %v3167
    %3270 = vmatpush1.msra.mxu0 %v3166
    %3271 = vmatprep.subr.mxu0 0.0
    %3272 = vmatpush1.msra.mxu0 0.0
    %3273 = vmatprep.subr.mxu0 0.0
    %3274 = vmatpush1.msra.mxu0 0.0
    %3275 = vmatprep.subr.mxu0 0.0
    %3276 = vmatpush1.msra.mxu0 0.0
    %3277 = vmatprep.subr.mxu0 0.0
    %3278 = vmatpush1.msra.mxu0 0.0
    %3279 = vmatprep.subr.mxu0 0.0
    %3280 = vmatpush1.msra.mxu0 0.0
    %3281 = vmatprep.subr.mxu0 0.0
    %3282 = vmatpush1.msra.mxu0 0.0
    %3283 = vmatprep.subr.mxu0 0.0
    %3284 = vmatpush1.msra.mxu0 0.0
    %3285 = vmatprep.subr.mxu0 0.0
    %3286 = vmatpush1.msra.mxu0 0.0
    %3287 = vmatprep.subr.mxu0 0.0
    %3288 = vmatpush1.msra.mxu0 0.0
    %3289 = vmatprep.subr.mxu0 0.0
    %3290 = vmatpush1.msra.mxu0 0.0
    %3291 = vmatprep.subr.mxu0 0.0
    %3292 = vmatpush1.msra.mxu0 0.0
    %3293 = vmatprep.subr.mxu0 0.0
    %3294 = vmatpush1.msra.mxu0 0.0
    %3295 = vmatprep.subr.mxu0 0.0
    %3296 = vmatpush1.msra.mxu0 0.0
    %3297 = vmatprep.subr.mxu0 0.0
    %3298 = vmatpush1.msra.mxu0 0.0
    %3299 = vmatprep.subr.mxu0 0.0
    %3300 = vmatpush1.msra.mxu0 0.0
    %3301 = vmatprep.subr.mxu0 0.0
    %3302 = vmatpush1.msra.mxu0 0.0
    %3303 = vmatprep.mubr.f32.mxu0 0.0
    %3304 = vmatmul.mubr.f32.gmra.mrb[0].mxu0 %v2803
    %v3305 = vpop.f32.mrb[0].mxu0
    %v3306 = vadd.f32 0.0, %v3305
    %v3307 = vpop.f32.mrb[0].mxu0
    %v3308 = vadd.f32 0.0, %v3307
    %3309 = vdwg.mxu0
    %v3310 = vadd.f32 %v3029, %v3235
    %v3311 = vadd.f32 %v3031, %v3237
    %v3312 = vadd.f32 %v3100, %v3306
    %v3313 = vadd.f32 %v3102, %v3308
    %v3314 = vld [vmem:[%s10] sm:$0xf]
    %v3316 = vlaneseq
    %v3317 = vshrl.u32 %v3316, 7
    %v3318 = vsub.s32 0, %v3317
    %v3319 = vrot.slane %v3314, %v3318
    %v3320 = vlaneseq
    %v3321 = vshrl.u32 %v3320, 7
    %v3322 = vsub.s32 1, %v3321
    %v3323 = vrot.slane %v3314, %v3322
    %v3324 = vlaneseq
    %v3325 = vshrl.u32 %v3324, 7
    %v3326 = vsub.s32 2, %v3325
    %v3327 = vrot.slane %v3314, %v3326
    %v3328 = vlaneseq
    %v3329 = vshrl.u32 %v3328, 7
    %v3330 = vsub.s32 3, %v3329
    %v3331 = vrot.slane %v3314, %v3330
    %v3336 = vadd.f32 %v3310, %v3319
    %v3337 = vadd.f32 %v3311, %v3323
    %v3338 = vadd.f32 %v3312, %v3327
    %v3339 = vadd.f32 %v3313, %v3331
    %v3340 = vlaneseq
    %v3341 = vshrl.u32 %v3340, 7
    %v3342 = vsub.s32 0, %v3341
    %v3343 = vrot.slane %v3029, %v3342
    %v3344 = vlaneseq
    %v3345 = vshrl.u32 %v3344, 7
    %v3346 = vsub.s32 0, %v3345
    %v3347 = vrot.slane %v3031, %v3346
    %v3348 = vlaneseq
    %v3349 = vshrl.u32 %v3348, 7
    %v3350 = vsub.s32 0, %v3349
    %v3351 = vrot.slane %v3100, %v3350
    %v3352 = vlaneseq
    %v3353 = vshrl.u32 %v3352, 7
    %v3354 = vsub.s32 0, %v3353
    %v3355 = vrot.slane %v3102, %v3354
    %v3356 = vsub.f32 %v3336, %v3343
    %v3357 = vsub.f32 %v3337, %v3347
    %v3358 = vsub.f32 %v3338, %v3351
    %v3359 = vsub.f32 %v3339, %v3355
    %v3360 = vlaneseq
    %v3361 = vshrl.u32 %v3360, 7
    %v3362 = vsub.s32 1, %v3361
    %v3363 = vrot.slane %v3029, %v3362
    %v3364 = vlaneseq
    %v3365 = vshrl.u32 %v3364, 7
    %v3366 = vsub.s32 1, %v3365
    %v3367 = vrot.slane %v3031, %v3366
    %v3368 = vlaneseq
    %v3369 = vshrl.u32 %v3368, 7
    %v3370 = vsub.s32 1, %v3369
    %v3371 = vrot.slane %v3100, %v3370
    %v3372 = vlaneseq
    %v3373 = vshrl.u32 %v3372, 7
    %v3374 = vsub.s32 1, %v3373
    %v3375 = vrot.slane %v3102, %v3374
    %v3376 = vsub.f32 %v3336, %v3363
    %v3377 = vsub.f32 %v3337, %v3367
    %v3378 = vsub.f32 %v3338, %v3371
    %v3379 = vsub.f32 %v3339, %v3375
    %v3380 = vlaneseq
    %v3381 = vshrl.u32 %v3380, 7
    %v3382 = vsub.s32 2, %v3381
    %v3383 = vrot.slane %v3029, %v3382
    %v3384 = vlaneseq
    %v3385 = vshrl.u32 %v3384, 7
    %v3386 = vsub.s32 2, %v3385
    %v3387 = vrot.slane %v3031, %v3386
    %v3388 = vlaneseq
    %v3389 = vshrl.u32 %v3388, 7
    %v3390 = vsub.s32 2, %v3389
    %v3391 = vrot.slane %v3100, %v3390
    %v3392 = vlaneseq
    %v3393 = vshrl.u32 %v3392, 7
    %v3394 = vsub.s32 2, %v3393
    %v3395 = vrot.slane %v3102, %v3394
    %v3396 = vsub.f32 %v3336, %v3383
    %v3397 = vsub.f32 %v3337, %v3387
    %v3398 = vsub.f32 %v3338, %v3391
    %v3399 = vsub.f32 %v3339, %v3395
    %v3400 = vlaneseq
    %v3401 = vshrl.u32 %v3400, 7
    %v3402 = vsub.s32 3, %v3401
    %v3403 = vrot.slane %v3029, %v3402
    %v3404 = vlaneseq
    %v3405 = vshrl.u32 %v3404, 7
    %v3406 = vsub.s32 3, %v3405
    %v3407 = vrot.slane %v3031, %v3406
    %v3408 = vlaneseq
    %v3409 = vshrl.u32 %v3408, 7
    %v3410 = vsub.s32 3, %v3409
    %v3411 = vrot.slane %v3100, %v3410
    %v3412 = vlaneseq
    %v3413 = vshrl.u32 %v3412, 7
    %v3414 = vsub.s32 3, %v3413
    %v3415 = vrot.slane %v3102, %v3414
    %v3416 = vsub.f32 %v3336, %v3403
    %v3417 = vsub.f32 %v3337, %v3407
    %v3418 = vsub.f32 %v3338, %v3411
    %v3419 = vsub.f32 %v3339, %v3415
    %v3424 = vrot.slane %v3376, 4
    %v3425 = vrot.slane %v3377, 4
    %v3426 = vrot.slane %v3378, 4
    %v3427 = vrot.slane %v3379, 4
    %v3436 = vrot.slane %v3416, 4
    %v3437 = vrot.slane %v3417, 4
    %v3438 = vrot.slane %v3418, 4
    %v3439 = vrot.slane %v3419, 4
    %v3444 = vsel %vm1205, %v3356, %v3424
    %v3445 = vsel %vm1205, %v3357, %v3425
    %v3446 = vsel %vm1205, %v3358, %v3426
    %v3447 = vsel %vm1205, %v3359, %v3427
    %v3448 = vsel %vm1205, %v3396, %v3436
    %v3449 = vsel %vm1205, %v3397, %v3437
    %v3450 = vsel %vm1205, %v3398, %v3438
    %v3451 = vsel %vm1205, %v3399, %v3439
    %v3452 = vadd.f32 %v3444, %v3448
    %v3453 = vrot.slane %v3452, 4
    %v3454 = vadd.f32 %v3452, %v3453
    %v3455 = vrot.slane %v3454, 2
    %v3456 = vadd.f32 %v3454, %v3455
    %v3457 = vrot.slane %v3456, 1
    %v3458 = vadd.f32 %v3456, %v3457
    %v3459 = vadd.f32 %v3445, %v3449
    %v3460 = vrot.slane %v3459, 4
    %v3461 = vadd.f32 %v3459, %v3460
    %v3462 = vrot.slane %v3461, 2
    %v3463 = vadd.f32 %v3461, %v3462
    %v3464 = vrot.slane %v3463, 1
    %v3465 = vadd.f32 %v3463, %v3464
    %v3466 = vadd.f32 %v3446, %v3450
    %v3467 = vrot.slane %v3466, 4
    %v3468 = vadd.f32 %v3466, %v3467
    %v3469 = vrot.slane %v3468, 2
    %v3470 = vadd.f32 %v3468, %v3469
    %v3471 = vrot.slane %v3470, 1
    %v3472 = vadd.f32 %v3470, %v3471
    %v3473 = vadd.f32 %v3447, %v3451
    %v3474 = vrot.slane %v3473, 4
    %v3475 = vadd.f32 %v3473, %v3474
    %v3476 = vrot.slane %v3475, 2
    %v3477 = vadd.f32 %v3475, %v3476
    %v3478 = vrot.slane %v3477, 1
    %v3479 = vadd.f32 %v3477, %v3478
    %v3480 = vmul.f32 %v3458, %v1242
    %v3481 = vmul.f32 %v3465, %v1242
    %v3482 = vmul.f32 %v3472, %v1242
    %v3483 = vmul.f32 %v3479, %v1242
    %v3484 = vsub.f32 %v3444, %v3480
    %v3485 = vsub.f32 %v3445, %v3481
    %v3486 = vsub.f32 %v3446, %v3482
    %v3487 = vsub.f32 %v3447, %v3483
    %v3488 = vsub.f32 %v3448, %v3480
    %v3489 = vsub.f32 %v3449, %v3481
    %v3490 = vsub.f32 %v3450, %v3482
    %v3491 = vsub.f32 %v3451, %v3483
    %v3492 = vmul.f32 %v3484, %v3484
    %v3493 = vmul.f32 %v3485, %v3485
    %v3494 = vmul.f32 %v3486, %v3486
    %v3495 = vmul.f32 %v3487, %v3487
    %v3496 = vmul.f32 %v3488, %v3488
    %v3497 = vmul.f32 %v3489, %v3489
    %v3498 = vmul.f32 %v3490, %v3490
    %v3499 = vmul.f32 %v3491, %v3491
    %v3500 = vadd.f32 %v3492, %v3496
    %v3501 = vrot.slane %v3500, 4
    %v3502 = vadd.f32 %v3500, %v3501
    %v3503 = vrot.slane %v3502, 2
    %v3504 = vadd.f32 %v3502, %v3503
    %v3505 = vrot.slane %v3504, 1
    %v3506 = vadd.f32 %v3504, %v3505
    %v3507 = vadd.f32 %v3493, %v3497
    %v3508 = vrot.slane %v3507, 4
    %v3509 = vadd.f32 %v3507, %v3508
    %v3510 = vrot.slane %v3509, 2
    %v3511 = vadd.f32 %v3509, %v3510
    %v3512 = vrot.slane %v3511, 1
    %v3513 = vadd.f32 %v3511, %v3512
    %v3514 = vadd.f32 %v3494, %v3498
    %v3515 = vrot.slane %v3514, 4
    %v3516 = vadd.f32 %v3514, %v3515
    %v3517 = vrot.slane %v3516, 2
    %v3518 = vadd.f32 %v3516, %v3517
    %v3519 = vrot.slane %v3518, 1
    %v3520 = vadd.f32 %v3518, %v3519
    %v3521 = vadd.f32 %v3495, %v3499
    %v3522 = vrot.slane %v3521, 4
    %v3523 = vadd.f32 %v3521, %v3522
    %v3524 = vrot.slane %v3523, 2
    %v3525 = vadd.f32 %v3523, %v3524
    %v3526 = vrot.slane %v3525, 1
    %v3527 = vadd.f32 %v3525, %v3526
    %v3528 = vmul.f32 %v3506, %v1242
    %v3529 = vmul.f32 %v3513, %v1242
    %v3530 = vmul.f32 %v3520, %v1242
    %v3531 = vmul.f32 %v3527, %v1242
    %v3532 = vadd.f32 %v3528, 1e-05
    %v3533 = vadd.f32 %v3529, 1e-05
    %v3534 = vadd.f32 %v3530, 1e-05
    %v3535 = vadd.f32 %v3531, 1e-05
    %v3536 = vrsqrt.pop %v3532
    %v3537 = vrsqrt.pop %v3533
    %v3538 = vrsqrt.pop %v3534
    %v3539 = vrsqrt.pop %v3535
    %v3540 = vmul.f32 %v3484, %v3536
    %v3541 = vmul.f32 %v3485, %v3537
    %v3542 = vmul.f32 %v3486, %v3538
    %v3543 = vmul.f32 %v3487, %v3539
    %v3544 = vmul.f32 %v3488, %v3536
    %v3545 = vmul.f32 %v3489, %v3537
    %v3546 = vmul.f32 %v3490, %v3538
    %v3547 = vmul.f32 %v3491, %v3539
    %v3548 = vmax.f32 %v3540, 0.0
    %v3549 = vmax.f32 %v3541, 0.0
    %v3550 = vmax.f32 %v3542, 0.0
    %v3551 = vmax.f32 %v3543, 0.0
    %v3552 = vmax.f32 %v3544, 0.0
    %v3553 = vmax.f32 %v3545, 0.0
    %v3554 = vmax.f32 %v3546, 0.0
    %v3555 = vmax.f32 %v3547, 0.0
    %v3556 = vld [vmem:[%s11] sm:$0xff]
    %v3557 = vld [vmem:[%s11 + $0x8] sm:$0xff]
    %v3558 = vld [vmem:[%s11 + $0x10] sm:$0xff]
    %v3559 = vld [vmem:[%s11 + $0x18] sm:$0xff]
    %v3560 = vld [vmem:[%s11 + $0x20] sm:$0xff]
    %v3561 = vld [vmem:[%s11 + $0x28] sm:$0xff]
    %v3562 = vld [vmem:[%s11 + $0x30] sm:$0xff]
    %v3563 = vld [vmem:[%s11 + $0x38] sm:$0xff]
    %v3564 = vld [vmem:[%s11 + $0x40] sm:$0xff]
    %v3565 = vld [vmem:[%s11 + $0x48] sm:$0xff]
    %v3566 = vld [vmem:[%s11 + $0x50] sm:$0xff]
    %v3567 = vld [vmem:[%s11 + $0x58] sm:$0xff]
    %v3568 = vld [vmem:[%s11 + $0x60] sm:$0xff]
    %v3569 = vld [vmem:[%s11 + $0x68] sm:$0xff]
    %v3570 = vld [vmem:[%s11 + $0x70] sm:$0xff]
    %v3571 = vld [vmem:[%s11 + $0x78] sm:$0xff]
    %v3572 = vld [vmem:[%s11 + $0x80] sm:$0xff]
    %v3573 = vld [vmem:[%s11 + $0x88] sm:$0xff]
    %v3574 = vld [vmem:[%s11 + $0x90] sm:$0xff]
    %v3575 = vld [vmem:[%s11 + $0x98] sm:$0xff]
    %v3576 = vld [vmem:[%s11 + $0xa0] sm:$0xff]
    %v3577 = vld [vmem:[%s11 + $0xa8] sm:$0xff]
    %v3578 = vld [vmem:[%s11 + $0xb0] sm:$0xff]
    %v3579 = vld [vmem:[%s11 + $0xb8] sm:$0xff]
    %v3580 = vld [vmem:[%s11 + $0xc0] sm:$0xff]
    %v3581 = vld [vmem:[%s11 + $0xc8] sm:$0xff]
    %v3582 = vld [vmem:[%s11 + $0xd0] sm:$0xff]
    %v3583 = vld [vmem:[%s11 + $0xd8] sm:$0xff]
    %v3584 = vld [vmem:[%s11 + $0xe0] sm:$0xff]
    %v3585 = vld [vmem:[%s11 + $0xe8] sm:$0xff]
    %v3586 = vld [vmem:[%s11 + $0xf0] sm:$0xff]
    %v3587 = vld [vmem:[%s11 + $0xf8] sm:$0xff]
    %v3588 = vld [vmem:[%s11 + $0x100] sm:$0xff]
    %v3589 = vld [vmem:[%s11 + $0x108] sm:$0xff]
    %v3590 = vld [vmem:[%s11 + $0x110] sm:$0xff]
    %v3591 = vld [vmem:[%s11 + $0x118] sm:$0xff]
    %v3592 = vld [vmem:[%s11 + $0x120] sm:$0xff]
    %v3593 = vld [vmem:[%s11 + $0x128] sm:$0xff]
    %v3594 = vld [vmem:[%s11 + $0x130] sm:$0xff]
    %v3595 = vld [vmem:[%s11 + $0x138] sm:$0xff]
    %v3596 = vld [vmem:[%s11 + $0x140] sm:$0xff]
    %v3597 = vld [vmem:[%s11 + $0x148] sm:$0xff]
    %v3598 = vld [vmem:[%s11 + $0x150] sm:$0xff]
    %v3599 = vld [vmem:[%s11 + $0x158] sm:$0xff]
    %v3600 = vld [vmem:[%s11 + $0x160] sm:$0xff]
    %v3601 = vld [vmem:[%s11 + $0x168] sm:$0xff]
    %v3602 = vld [vmem:[%s11 + $0x170] sm:$0xff]
    %v3603 = vld [vmem:[%s11 + $0x178] sm:$0xff]
    %v3604 = vld [vmem:[%s11 + $0x180] sm:$0xff]
    %v3605 = vld [vmem:[%s11 + $0x188] sm:$0xff]
    %v3606 = vld [vmem:[%s11 + $0x190] sm:$0xff]
    %v3607 = vld [vmem:[%s11 + $0x198] sm:$0xff]
    %v3608 = vld [vmem:[%s11 + $0x1a0] sm:$0xff]
    %v3609 = vld [vmem:[%s11 + $0x1a8] sm:$0xff]
    %v3610 = vld [vmem:[%s11 + $0x1b0] sm:$0xff]
    %v3611 = vld [vmem:[%s11 + $0x1b8] sm:$0xff]
    %v3612 = vld [vmem:[%s11 + $0x1c0] sm:$0xff]
    %v3613 = vld [vmem:[%s11 + $0x1c8] sm:$0xff]
    %v3614 = vld [vmem:[%s11 + $0x1d0] sm:$0xff]
    %v3615 = vld [vmem:[%s11 + $0x1d8] sm:$0xff]
    %v3616 = vld [vmem:[%s11 + $0x1e0] sm:$0xff]
    %v3617 = vld [vmem:[%s11 + $0x1e8] sm:$0xff]
    %v3618 = vld [vmem:[%s11 + $0x1f0] sm:$0xff]
    %v3619 = vld [vmem:[%s11 + $0x1f8] sm:$0xff]
    %v3620 = vld [vmem:[%s12] sm:$0x1]
    %v3622 = vlaneseq
    %v3623 = vshrl.u32 %v3622, 7
    %v3624 = vsub.s32 0, %v3623
    %v3625 = vrot.slane %v3620, %v3624
    %3627 = vmatprep.subr.mxu0 0.0
    %3628 = vmatpush1.msra.mxu0 %v3556
    %3629 = vmatprep.subr.mxu0 0.0
    %3630 = vmatpush1.msra.mxu0 %v3557
    %3631 = vmatprep.subr.mxu0 0.0
    %3632 = vmatpush1.msra.mxu0 %v3558
    %3633 = vmatprep.subr.mxu0 0.0
    %3634 = vmatpush1.msra.mxu0 %v3559
    %3635 = vmatprep.subr.mxu0 0.0
    %3636 = vmatpush1.msra.mxu0 %v3560
    %3637 = vmatprep.subr.mxu0 0.0
    %3638 = vmatpush1.msra.mxu0 %v3561
    %3639 = vmatprep.subr.mxu0 0.0
    %3640 = vmatpush1.msra.mxu0 %v3562
    %3641 = vmatprep.subr.mxu0 0.0
    %3642 = vmatpush1.msra.mxu0 %v3563
    %3643 = vmatprep.subr.mxu0 0.0
    %3644 = vmatpush1.msra.mxu0 %v3564
    %3645 = vmatprep.subr.mxu0 0.0
    %3646 = vmatpush1.msra.mxu0 %v3565
    %3647 = vmatprep.subr.mxu0 0.0
    %3648 = vmatpush1.msra.mxu0 %v3566
    %3649 = vmatprep.subr.mxu0 0.0
    %3650 = vmatpush1.msra.mxu0 %v3567
    %3651 = vmatprep.subr.mxu0 0.0
    %3652 = vmatpush1.msra.mxu0 %v3568
    %3653 = vmatprep.subr.mxu0 0.0
    %3654 = vmatpush1.msra.mxu0 %v3569
    %3655 = vmatprep.subr.mxu0 0.0
    %3656 = vmatpush1.msra.mxu0 %v3570
    %3657 = vmatprep.subr.mxu0 0.0
    %3658 = vmatpush1.msra.mxu0 %v3571
    %3659 = vmatprep.subr.mxu0 0.0
    %3660 = vmatpush1.msra.mxu0 %v3572
    %3661 = vmatprep.subr.mxu0 0.0
    %3662 = vmatpush1.msra.mxu0 %v3573
    %3663 = vmatprep.subr.mxu0 0.0
    %3664 = vmatpush1.msra.mxu0 %v3574
    %3665 = vmatprep.subr.mxu0 0.0
    %3666 = vmatpush1.msra.mxu0 %v3575
    %3667 = vmatprep.subr.mxu0 0.0
    %3668 = vmatpush1.msra.mxu0 %v3576
    %3669 = vmatprep.subr.mxu0 0.0
    %3670 = vmatpush1.msra.mxu0 %v3577
    %3671 = vmatprep.subr.mxu0 0.0
    %3672 = vmatpush1.msra.mxu0 %v3578
    %3673 = vmatprep.subr.mxu0 0.0
    %3674 = vmatpush1.msra.mxu0 %v3579
    %3675 = vmatprep.subr.mxu0 0.0
    %3676 = vmatpush1.msra.mxu0 %v3580
    %3677 = vmatprep.subr.mxu0 0.0
    %3678 = vmatpush1.msra.mxu0 %v3581
    %3679 = vmatprep.subr.mxu0 0.0
    %3680 = vmatpush1.msra.mxu0 %v3582
    %3681 = vmatprep.subr.mxu0 0.0
    %3682 = vmatpush1.msra.mxu0 %v3583
    %3683 = vmatprep.subr.mxu0 0.0
    %3684 = vmatpush1.msra.mxu0 %v3584
    %3685 = vmatprep.subr.mxu0 0.0
    %3686 = vmatpush1.msra.mxu0 %v3585
    %3687 = vmatprep.subr.mxu0 0.0
    %3688 = vmatpush1.msra.mxu0 %v3586
    %3689 = vmatprep.subr.mxu0 0.0
    %3690 = vmatpush1.msra.mxu0 %v3587
    %3691 = vmatprep.mubr.f32.mxu0 %v3549
    %3692 = vmatmul.mubr.f32.gmra.mrb[0].mxu0 %v3548
    %v3693 = vpop.f32.mrb[0].mxu0
    %v3694 = vadd.f32 %v3625, %v3693
    %v3695 = vpop.f32.mrb[0].mxu0
    %3696 = vmatprep.mubr.f32.mxu0 %v3553
    %3697 = vmatmul.mubr.f32.gmra.mrb[0].mxu0 %v3552
    %v3698 = vpop.f32.mrb[0].mxu0
    %v3699 = vadd.f32 %v3625, %v3698
    %v3700 = vpop.f32.mrb[0].mxu0
    %3701 = vdwg.mxu0
    %3702 = vmatprep.subr.mxu0 0.0
    %3703 = vmatpush1.msra.mxu0 %v3588
    %3704 = vmatprep.subr.mxu0 0.0
    %3705 = vmatpush1.msra.mxu0 %v3589
    %3706 = vmatprep.subr.mxu0 0.0
    %3707 = vmatpush1.msra.mxu0 %v3590
    %3708 = vmatprep.subr.mxu0 0.0
    %3709 = vmatpush1.msra.mxu0 %v3591
    %3710 = vmatprep.subr.mxu0 0.0
    %3711 = vmatpush1.msra.mxu0 %v3592
    %3712 = vmatprep.subr.mxu0 0.0
    %3713 = vmatpush1.msra.mxu0 %v3593
    %3714 = vmatprep.subr.mxu0 0.0
    %3715 = vmatpush1.msra.mxu0 %v3594
    %3716 = vmatprep.subr.mxu0 0.0
    %3717 = vmatpush1.msra.mxu0 %v3595
    %3718 = vmatprep.subr.mxu0 0.0
    %3719 = vmatpush1.msra.mxu0 %v3596
    %3720 = vmatprep.subr.mxu0 0.0
    %3721 = vmatpush1.msra.mxu0 %v3597
    %3722 = vmatprep.subr.mxu0 0.0
    %3723 = vmatpush1.msra.mxu0 %v3598
    %3724 = vmatprep.subr.mxu0 0.0
    %3725 = vmatpush1.msra.mxu0 %v3599
    %3726 = vmatprep.subr.mxu0 0.0
    %3727 = vmatpush1.msra.mxu0 %v3600
    %3728 = vmatprep.subr.mxu0 0.0
    %3729 = vmatpush1.msra.mxu0 %v3601
    %3730 = vmatprep.subr.mxu0 0.0
    %3731 = vmatpush1.msra.mxu0 %v3602
    %3732 = vmatprep.subr.mxu0 0.0
    %3733 = vmatpush1.msra.mxu0 %v3603
    %3734 = vmatprep.subr.mxu0 0.0
    %3735 = vmatpush1.msra.mxu0 %v3604
    %3736 = vmatprep.subr.mxu0 0.0
    %3737 = vmatpush1.msra.mxu0 %v3605
    %3738 = vmatprep.subr.mxu0 0.0
    %3739 = vmatpush1.msra.mxu0 %v3606
    %3740 = vmatprep.subr.mxu0 0.0
    %3741 = vmatpush1.msra.mxu0 %v3607
    %3742 = vmatprep.subr.mxu0 0.0
    %3743 = vmatpush1.msra.mxu0 %v3608
    %3744 = vmatprep.subr.mxu0 0.0
    %3745 = vmatpush1.msra.mxu0 %v3609
    %3746 = vmatprep.subr.mxu0 0.0
    %3747 = vmatpush1.msra.mxu0 %v3610
    %3748 = vmatprep.subr.mxu0 0.0
    %3749 = vmatpush1.msra.mxu0 %v3611
    %3750 = vmatprep.subr.mxu0 0.0
    %3751 = vmatpush1.msra.mxu0 %v3612
    %3752 = vmatprep.subr.mxu0 0.0
    %3753 = vmatpush1.msra.mxu0 %v3613
    %3754 = vmatprep.subr.mxu0 0.0
    %3755 = vmatpush1.msra.mxu0 %v3614
    %3756 = vmatprep.subr.mxu0 0.0
    %3757 = vmatpush1.msra.mxu0 %v3615
    %3758 = vmatprep.subr.mxu0 0.0
    %3759 = vmatpush1.msra.mxu0 %v3616
    %3760 = vmatprep.subr.mxu0 0.0
    %3761 = vmatpush1.msra.mxu0 %v3617
    %3762 = vmatprep.subr.mxu0 0.0
    %3763 = vmatpush1.msra.mxu0 %v3618
    %3764 = vmatprep.subr.mxu0 0.0
    %3765 = vmatpush1.msra.mxu0 %v3619
    %3766 = vmatprep.mubr.f32.mxu0 %v3551
    %3767 = vmatmul.mubr.f32.gmra.mrb[0].mxu0 %v3550
    %v3768 = vpop.f32.mrb[0].mxu0
    %v3769 = vadd.f32 %v3694, %v3768
    %v3770 = vpop.f32.mrb[0].mxu0
    %3771 = vmatprep.mubr.f32.mxu0 %v3555
    %3772 = vmatmul.mubr.f32.gmra.mrb[0].mxu0 %v3554
    %v3773 = vpop.f32.mrb[0].mxu0
    %v3774 = vadd.f32 %v3699, %v3773
    %v3775 = vpop.f32.mrb[0].mxu0
    %3776 = vdwg.mxu0
    %v3777 = vsel %vm1540, %v3769, 0.0
    %v3778 = vsel %vm1540, %v3774, 0.0
    %v3779 = vadd.f32 %v3777, %v3778
    %v3780 = vrot.slane %v3779, 4
    %v3781 = vadd.f32 %v3779, %v3780
    %v3782 = vrot.slane %v3781, 2
    %v3783 = vadd.f32 %v3781, %v3782
    %v3784 = vrot.slane %v3783, 1
    %v3785 = vadd.f32 %v3783, %v3784
    %v3786 = vmul.f32 %v3785, %v1242
    %v3787 = vsub.f32 %v3769, %v3786
    %v3788 = vsub.f32 %v3774, %v3786
    %v3789 = vmul.f32 %v3787, %v3787
    %v3790 = vmul.f32 %v3788, %v3788
    %v3791 = vsel %vm1540, %v3789, 0.0
    %v3792 = vsel %vm1540, %v3790, 0.0
    %v3793 = vadd.f32 %v3791, %v3792
    %v3794 = vrot.slane %v3793, 4
    %v3795 = vadd.f32 %v3793, %v3794
    %v3796 = vrot.slane %v3795, 2
    %v3797 = vadd.f32 %v3795, %v3796
    %v3798 = vrot.slane %v3797, 1
    %v3799 = vadd.f32 %v3797, %v3798
    %v3800 = vmul.f32 %v3799, %v1242
    %v3801 = vadd.f32 %v3800, 1e-05
    %v3802 = vrsqrt.pop %v3801
    %v3803 = vmul.f32 %v3787, %v3802
    %v3804 = vmul.f32 %v3788, %v3802
    %v3805 = vmax.f32 %v3803, 0.0
    %v3806 = vmax.f32 %v3804, 0.0
    %v3807 = vsel %vm1571, %v3805, -inf
    %v3808 = vrot.slane %v3807, 4
    %v3809 = vmax.f32 %v3807, %v3808
    %v3810 = vrot.slane %v3809, 2
    %v3811 = vmax.f32 %v3809, %v3810
    %v3812 = vrot.slane %v3811, 1
    %v3813 = vmax.f32 %v3811, %v3812
    %v3814 = vsel %vm1579, %v3805, -inf
    %v3815 = vrot.slane %v3814, 4
    %v3816 = vmax.f32 %v3814, %v3815
    %v3817 = vrot.slane %v3816, 2
    %v3818 = vmax.f32 %v3816, %v3817
    %v3819 = vrot.slane %v3818, 1
    %v3820 = vmax.f32 %v3818, %v3819
    %v3821 = vsel %vm1571, %v3806, -inf
    %v3822 = vrot.slane %v3821, 4
    %v3823 = vmax.f32 %v3821, %v3822
    %v3824 = vrot.slane %v3823, 2
    %v3825 = vmax.f32 %v3823, %v3824
    %v3826 = vrot.slane %v3825, 1
    %v3827 = vmax.f32 %v3825, %v3826
    %v3828 = vsel %vm1579, %v3806, -inf
    %v3829 = vrot.slane %v3828, 4
    %v3830 = vmax.f32 %v3828, %v3829
    %v3831 = vrot.slane %v3830, 2
    %v3832 = vmax.f32 %v3830, %v3831
    %v3833 = vrot.slane %v3832, 1
    %v3834 = vmax.f32 %v3832, %v3833
    %v3835 = vlaneseq
    %v3836 = vshrl.u32 %v3835, 7
    %v3837 = vsub.s32 4, %v3836
    %v3838 = vrot.slane %v3029, %v3837
    %v3839 = vlaneseq
    %v3840 = vshrl.u32 %v3839, 7
    %v3841 = vsub.s32 4, %v3840
    %v3842 = vrot.slane %v3031, %v3841
    %v3843 = vlaneseq
    %v3844 = vshrl.u32 %v3843, 7
    %v3845 = vsub.s32 4, %v3844
    %v3846 = vrot.slane %v3100, %v3845
    %v3847 = vlaneseq
    %v3848 = vshrl.u32 %v3847, 7
    %v3849 = vsub.s32 4, %v3848
    %v3850 = vrot.slane %v3102, %v3849
    %v3851 = vsub.f32 %v3336, %v3838
    %v3852 = vsub.f32 %v3337, %v3842
    %v3853 = vsub.f32 %v3338, %v3846
    %v3854 = vsub.f32 %v3339, %v3850
    %v3855 = vlaneseq
    %v3856 = vshrl.u32 %v3855, 7
    %v3857 = vsub.s32 5, %v3856
    %v3858 = vrot.slane %v3029, %v3857
    %v3859 = vlaneseq
    %v3860 = vshrl.u32 %v3859, 7
    %v3861 = vsub.s32 5, %v3860
    %v3862 = vrot.slane %v3031, %v3861
    %v3863 = vlaneseq
    %v3864 = vshrl.u32 %v3863, 7
    %v3865 = vsub.s32 5, %v3864
    %v3866 = vrot.slane %v3100, %v3865
    %v3867 = vlaneseq
    %v3868 = vshrl.u32 %v3867, 7
    %v3869 = vsub.s32 5, %v3868
    %v3870 = vrot.slane %v3102, %v3869
    %v3871 = vsub.f32 %v3336, %v3858
    %v3872 = vsub.f32 %v3337, %v3862
    %v3873 = vsub.f32 %v3338, %v3866
    %v3874 = vsub.f32 %v3339, %v3870
    %v3875 = vlaneseq
    %v3876 = vshrl.u32 %v3875, 7
    %v3877 = vsub.s32 6, %v3876
    %v3878 = vrot.slane %v3029, %v3877
    %v3879 = vlaneseq
    %v3880 = vshrl.u32 %v3879, 7
    %v3881 = vsub.s32 6, %v3880
    %v3882 = vrot.slane %v3031, %v3881
    %v3883 = vlaneseq
    %v3884 = vshrl.u32 %v3883, 7
    %v3885 = vsub.s32 6, %v3884
    %v3886 = vrot.slane %v3100, %v3885
    %v3887 = vlaneseq
    %v3888 = vshrl.u32 %v3887, 7
    %v3889 = vsub.s32 6, %v3888
    %v3890 = vrot.slane %v3102, %v3889
    %v3891 = vsub.f32 %v3336, %v3878
    %v3892 = vsub.f32 %v3337, %v3882
    %v3893 = vsub.f32 %v3338, %v3886
    %v3894 = vsub.f32 %v3339, %v3890
    %v3895 = vlaneseq
    %v3896 = vshrl.u32 %v3895, 7
    %v3897 = vsub.s32 7, %v3896
    %v3898 = vrot.slane %v3029, %v3897
    %v3899 = vlaneseq
    %v3900 = vshrl.u32 %v3899, 7
    %v3901 = vsub.s32 7, %v3900
    %v3902 = vrot.slane %v3031, %v3901
    %v3903 = vlaneseq
    %v3904 = vshrl.u32 %v3903, 7
    %v3905 = vsub.s32 7, %v3904
    %v3906 = vrot.slane %v3100, %v3905
    %v3907 = vlaneseq
    %v3908 = vshrl.u32 %v3907, 7
    %v3909 = vsub.s32 7, %v3908
    %v3910 = vrot.slane %v3102, %v3909
    %v3911 = vsub.f32 %v3336, %v3898
    %v3912 = vsub.f32 %v3337, %v3902
    %v3913 = vsub.f32 %v3338, %v3906
    %v3914 = vsub.f32 %v3339, %v3910
    %v3919 = vrot.slane %v3851, 4
    %v3920 = vrot.slane %v3852, 4
    %v3921 = vrot.slane %v3853, 4
    %v3922 = vrot.slane %v3854, 4
    %v3931 = vrot.slane %v3891, 4
    %v3932 = vrot.slane %v3892, 4
    %v3933 = vrot.slane %v3893, 4
    %v3934 = vrot.slane %v3894, 4
    %v3939 = vsel %vm1205, %v3919, %v3871
    %v3940 = vsel %vm1205, %v3920, %v3872
    %v3941 = vsel %vm1205, %v3921, %v3873
    %v3942 = vsel %vm1205, %v3922, %v3874
    %v3943 = vsel %vm1205, %v3931, %v3911
    %v3944 = vsel %vm1205, %v3932, %v3912
    %v3945 = vsel %vm1205, %v3933, %v3913
    %v3946 = vsel %vm1205, %v3934, %v3914
    %v3947 = vadd.f32 %v3939, %v3943
    %v3948 = vrot.slane %v3947, 4
    %v3949 = vadd.f32 %v3947, %v3948
    %v3950 = vrot.slane %v3949, 2
    %v3951 = vadd.f32 %v3949, %v3950
    %v3952 = vrot.slane %v3951, 1
    %v3953 = vadd.f32 %v3951, %v3952
    %v3954 = vadd.f32 %v3940, %v3944
    %v3955 = vrot.slane %v3954, 4
    %v3956 = vadd.f32 %v3954, %v3955
    %v3957 = vrot.slane %v3956, 2
    %v3958 = vadd.f32 %v3956, %v3957
    %v3959 = vrot.slane %v3958, 1
    %v3960 = vadd.f32 %v3958, %v3959
    %v3961 = vadd.f32 %v3941, %v3945
    %v3962 = vrot.slane %v3961, 4
    %v3963 = vadd.f32 %v3961, %v3962
    %v3964 = vrot.slane %v3963, 2
    %v3965 = vadd.f32 %v3963, %v3964
    %v3966 = vrot.slane %v3965, 1
    %v3967 = vadd.f32 %v3965, %v3966
    %v3968 = vadd.f32 %v3942, %v3946
    %v3969 = vrot.slane %v3968, 4
    %v3970 = vadd.f32 %v3968, %v3969
    %v3971 = vrot.slane %v3970, 2
    %v3972 = vadd.f32 %v3970, %v3971
    %v3973 = vrot.slane %v3972, 1
    %v3974 = vadd.f32 %v3972, %v3973
    %v3975 = vmul.f32 %v3953, %v1242
    %v3976 = vmul.f32 %v3960, %v1242
    %v3977 = vmul.f32 %v3967, %v1242
    %v3978 = vmul.f32 %v3974, %v1242
    %v3979 = vsub.f32 %v3939, %v3975
    %v3980 = vsub.f32 %v3940, %v3976
    %v3981 = vsub.f32 %v3941, %v3977
    %v3982 = vsub.f32 %v3942, %v3978
    %v3983 = vsub.f32 %v3943, %v3975
    %v3984 = vsub.f32 %v3944, %v3976
    %v3985 = vsub.f32 %v3945, %v3977
    %v3986 = vsub.f32 %v3946, %v3978
    %v3987 = vmul.f32 %v3979, %v3979
    %v3988 = vmul.f32 %v3980, %v3980
    %v3989 = vmul.f32 %v3981, %v3981
    %v3990 = vmul.f32 %v3982, %v3982
    %v3991 = vmul.f32 %v3983, %v3983
    %v3992 = vmul.f32 %v3984, %v3984
    %v3993 = vmul.f32 %v3985, %v3985
    %v3994 = vmul.f32 %v3986, %v3986
    %v3995 = vadd.f32 %v3987, %v3991
    %v3996 = vrot.slane %v3995, 4
    %v3997 = vadd.f32 %v3995, %v3996
    %v3998 = vrot.slane %v3997, 2
    %v3999 = vadd.f32 %v3997, %v3998
    %v4000 = vrot.slane %v3999, 1
    %v4001 = vadd.f32 %v3999, %v4000
    %v4002 = vadd.f32 %v3988, %v3992
    %v4003 = vrot.slane %v4002, 4
    %v4004 = vadd.f32 %v4002, %v4003
    %v4005 = vrot.slane %v4004, 2
    %v4006 = vadd.f32 %v4004, %v4005
    %v4007 = vrot.slane %v4006, 1
    %v4008 = vadd.f32 %v4006, %v4007
    %v4009 = vadd.f32 %v3989, %v3993
    %v4010 = vrot.slane %v4009, 4
    %v4011 = vadd.f32 %v4009, %v4010
    %v4012 = vrot.slane %v4011, 2
    %v4013 = vadd.f32 %v4011, %v4012
    %v4014 = vrot.slane %v4013, 1
    %v4015 = vadd.f32 %v4013, %v4014
    %v4016 = vadd.f32 %v3990, %v3994
    %v4017 = vrot.slane %v4016, 4
    %v4018 = vadd.f32 %v4016, %v4017
    %v4019 = vrot.slane %v4018, 2
    %v4020 = vadd.f32 %v4018, %v4019
    %v4021 = vrot.slane %v4020, 1
    %v4022 = vadd.f32 %v4020, %v4021
    %v4023 = vmul.f32 %v4001, %v1242
    %v4024 = vmul.f32 %v4008, %v1242
    %v4025 = vmul.f32 %v4015, %v1242
    %v4026 = vmul.f32 %v4022, %v1242
    %v4027 = vadd.f32 %v4023, 1e-05
    %v4028 = vadd.f32 %v4024, 1e-05
    %v4029 = vadd.f32 %v4025, 1e-05
    %v4030 = vadd.f32 %v4026, 1e-05
    %v4031 = vrsqrt.pop %v4027
    %v4032 = vrsqrt.pop %v4028
    %v4033 = vrsqrt.pop %v4029
    %v4034 = vrsqrt.pop %v4030
    %v4035 = vmul.f32 %v3979, %v4031
    %v4036 = vmul.f32 %v3980, %v4032
    %v4037 = vmul.f32 %v3981, %v4033
    %v4038 = vmul.f32 %v3982, %v4034
    %v4039 = vmul.f32 %v3983, %v4031
    %v4040 = vmul.f32 %v3984, %v4032
    %v4041 = vmul.f32 %v3985, %v4033
    %v4042 = vmul.f32 %v3986, %v4034
    %v4043 = vmax.f32 %v4035, 0.0
    %v4044 = vmax.f32 %v4036, 0.0
    %v4045 = vmax.f32 %v4037, 0.0
    %v4046 = vmax.f32 %v4038, 0.0
    %v4047 = vmax.f32 %v4039, 0.0
    %v4048 = vmax.f32 %v4040, 0.0
    %v4049 = vmax.f32 %v4041, 0.0
    %v4050 = vmax.f32 %v4042, 0.0
    %4051 = vmatprep.subr.mxu0 0.0
    %4052 = vmatpush1.msra.mxu0 %v3556
    %4053 = vmatprep.subr.mxu0 0.0
    %4054 = vmatpush1.msra.mxu0 %v3557
    %4055 = vmatprep.subr.mxu0 0.0
    %4056 = vmatpush1.msra.mxu0 %v3558
    %4057 = vmatprep.subr.mxu0 0.0
    %4058 = vmatpush1.msra.mxu0 %v3559
    %4059 = vmatprep.subr.mxu0 0.0
    %4060 = vmatpush1.msra.mxu0 %v3560
    %4061 = vmatprep.subr.mxu0 0.0
    %4062 = vmatpush1.msra.mxu0 %v3561
    %4063 = vmatprep.subr.mxu0 0.0
    %4064 = vmatpush1.msra.mxu0 %v3562
    %4065 = vmatprep.subr.mxu0 0.0
    %4066 = vmatpush1.msra.mxu0 %v3563
    %4067 = vmatprep.subr.mxu0 0.0
    %4068 = vmatpush1.msra.mxu0 %v3564
    %4069 = vmatprep.subr.mxu0 0.0
    %4070 = vmatpush1.msra.mxu0 %v3565
    %4071 = vmatprep.subr.mxu0 0.0
    %4072 = vmatpush1.msra.mxu0 %v3566
    %4073 = vmatprep.subr.mxu0 0.0
    %4074 = vmatpush1.msra.mxu0 %v3567
    %4075 = vmatprep.subr.mxu0 0.0
    %4076 = vmatpush1.msra.mxu0 %v3568
    %4077 = vmatprep.subr.mxu0 0.0
    %4078 = vmatpush1.msra.mxu0 %v3569
    %4079 = vmatprep.subr.mxu0 0.0
    %4080 = vmatpush1.msra.mxu0 %v3570
    %4081 = vmatprep.subr.mxu0 0.0
    %4082 = vmatpush1.msra.mxu0 %v3571
    %4083 = vmatprep.subr.mxu0 0.0
    %4084 = vmatpush1.msra.mxu0 %v3572
    %4085 = vmatprep.subr.mxu0 0.0
    %4086 = vmatpush1.msra.mxu0 %v3573
    %4087 = vmatprep.subr.mxu0 0.0
    %4088 = vmatpush1.msra.mxu0 %v3574
    %4089 = vmatprep.subr.mxu0 0.0
    %4090 = vmatpush1.msra.mxu0 %v3575
    %4091 = vmatprep.subr.mxu0 0.0
    %4092 = vmatpush1.msra.mxu0 %v3576
    %4093 = vmatprep.subr.mxu0 0.0
    %4094 = vmatpush1.msra.mxu0 %v3577
    %4095 = vmatprep.subr.mxu0 0.0
    %4096 = vmatpush1.msra.mxu0 %v3578
    %4097 = vmatprep.subr.mxu0 0.0
    %4098 = vmatpush1.msra.mxu0 %v3579
    %4099 = vmatprep.subr.mxu0 0.0
    %4100 = vmatpush1.msra.mxu0 %v3580
    %4101 = vmatprep.subr.mxu0 0.0
    %4102 = vmatpush1.msra.mxu0 %v3581
    %4103 = vmatprep.subr.mxu0 0.0
    %4104 = vmatpush1.msra.mxu0 %v3582
    %4105 = vmatprep.subr.mxu0 0.0
    %4106 = vmatpush1.msra.mxu0 %v3583
    %4107 = vmatprep.subr.mxu0 0.0
    %4108 = vmatpush1.msra.mxu0 %v3584
    %4109 = vmatprep.subr.mxu0 0.0
    %4110 = vmatpush1.msra.mxu0 %v3585
    %4111 = vmatprep.subr.mxu0 0.0
    %4112 = vmatpush1.msra.mxu0 %v3586
    %4113 = vmatprep.subr.mxu0 0.0
    %4114 = vmatpush1.msra.mxu0 %v3587
    %4115 = vmatprep.mubr.f32.mxu0 %v4044
    %4116 = vmatmul.mubr.f32.gmra.mrb[0].mxu0 %v4043
    %v4117 = vpop.f32.mrb[0].mxu0
    %v4118 = vadd.f32 %v3625, %v4117
    %v4119 = vpop.f32.mrb[0].mxu0
    %4120 = vmatprep.mubr.f32.mxu0 %v4048
    %4121 = vmatmul.mubr.f32.gmra.mrb[0].mxu0 %v4047
    %v4122 = vpop.f32.mrb[0].mxu0
    %v4123 = vadd.f32 %v3625, %v4122
    %v4124 = vpop.f32.mrb[0].mxu0
    %4125 = vdwg.mxu0
    %4126 = vmatprep.subr.mxu0 0.0
    %4127 = vmatpush1.msra.mxu0 %v3588
    %4128 = vmatprep.subr.mxu0 0.0
    %4129 = vmatpush1.msra.mxu0 %v3589
    %4130 = vmatprep.subr.mxu0 0.0
    %4131 = vmatpush1.msra.mxu0 %v3590
    %4132 = vmatprep.subr.mxu0 0.0
    %4133 = vmatpush1.msra.mxu0 %v3591
    %4134 = vmatprep.subr.mxu0 0.0
    %4135 = vmatpush1.msra.mxu0 %v3592
    %4136 = vmatprep.subr.mxu0 0.0
    %4137 = vmatpush1.msra.mxu0 %v3593
    %4138 = vmatprep.subr.mxu0 0.0
    %4139 = vmatpush1.msra.mxu0 %v3594
    %4140 = vmatprep.subr.mxu0 0.0
    %4141 = vmatpush1.msra.mxu0 %v3595
    %4142 = vmatprep.subr.mxu0 0.0
    %4143 = vmatpush1.msra.mxu0 %v3596
    %4144 = vmatprep.subr.mxu0 0.0
    %4145 = vmatpush1.msra.mxu0 %v3597
    %4146 = vmatprep.subr.mxu0 0.0
    %4147 = vmatpush1.msra.mxu0 %v3598
    %4148 = vmatprep.subr.mxu0 0.0
    %4149 = vmatpush1.msra.mxu0 %v3599
    %4150 = vmatprep.subr.mxu0 0.0
    %4151 = vmatpush1.msra.mxu0 %v3600
    %4152 = vmatprep.subr.mxu0 0.0
    %4153 = vmatpush1.msra.mxu0 %v3601
    %4154 = vmatprep.subr.mxu0 0.0
    %4155 = vmatpush1.msra.mxu0 %v3602
    %4156 = vmatprep.subr.mxu0 0.0
    %4157 = vmatpush1.msra.mxu0 %v3603
    %4158 = vmatprep.subr.mxu0 0.0
    %4159 = vmatpush1.msra.mxu0 %v3604
    %4160 = vmatprep.subr.mxu0 0.0
    %4161 = vmatpush1.msra.mxu0 %v3605
    %4162 = vmatprep.subr.mxu0 0.0
    %4163 = vmatpush1.msra.mxu0 %v3606
    %4164 = vmatprep.subr.mxu0 0.0
    %4165 = vmatpush1.msra.mxu0 %v3607
    %4166 = vmatprep.subr.mxu0 0.0
    %4167 = vmatpush1.msra.mxu0 %v3608
    %4168 = vmatprep.subr.mxu0 0.0
    %4169 = vmatpush1.msra.mxu0 %v3609
    %4170 = vmatprep.subr.mxu0 0.0
    %4171 = vmatpush1.msra.mxu0 %v3610
    %4172 = vmatprep.subr.mxu0 0.0
    %4173 = vmatpush1.msra.mxu0 %v3611
    %4174 = vmatprep.subr.mxu0 0.0
    %4175 = vmatpush1.msra.mxu0 %v3612
    %4176 = vmatprep.subr.mxu0 0.0
    %4177 = vmatpush1.msra.mxu0 %v3613
    %4178 = vmatprep.subr.mxu0 0.0
    %4179 = vmatpush1.msra.mxu0 %v3614
    %4180 = vmatprep.subr.mxu0 0.0
    %4181 = vmatpush1.msra.mxu0 %v3615
    %4182 = vmatprep.subr.mxu0 0.0
    %4183 = vmatpush1.msra.mxu0 %v3616
    %4184 = vmatprep.subr.mxu0 0.0
    %4185 = vmatpush1.msra.mxu0 %v3617
    %4186 = vmatprep.subr.mxu0 0.0
    %4187 = vmatpush1.msra.mxu0 %v3618
    %4188 = vmatprep.subr.mxu0 0.0
    %4189 = vmatpush1.msra.mxu0 %v3619
    %4190 = vmatprep.mubr.f32.mxu0 %v4046
    %4191 = vmatmul.mubr.f32.gmra.mrb[0].mxu0 %v4045
    %v4192 = vpop.f32.mrb[0].mxu0
    %v4193 = vadd.f32 %v4118, %v4192
    %v4194 = vpop.f32.mrb[0].mxu0
    %4195 = vmatprep.mubr.f32.mxu0 %v4050
    %4196 = vmatmul.mubr.f32.gmra.mrb[0].mxu0 %v4049
    %v4197 = vpop.f32.mrb[0].mxu0
    %v4198 = vadd.f32 %v4123, %v4197
    %v4199 = vpop.f32.mrb[0].mxu0
    %4200 = vdwg.mxu0
    %v4201 = vsel %vm1540, %v4193, 0.0
    %v4202 = vsel %vm1540, %v4198, 0.0
    %v4203 = vadd.f32 %v4201, %v4202
    %v4204 = vrot.slane %v4203, 4
    %v4205 = vadd.f32 %v4203, %v4204
    %v4206 = vrot.slane %v4205, 2
    %v4207 = vadd.f32 %v4205, %v4206
    %v4208 = vrot.slane %v4207, 1
    %v4209 = vadd.f32 %v4207, %v4208
    %v4210 = vmul.f32 %v4209, %v1242
    %v4211 = vsub.f32 %v4193, %v4210
    %v4212 = vsub.f32 %v4198, %v4210
    %v4213 = vmul.f32 %v4211, %v4211
    %v4214 = vmul.f32 %v4212, %v4212
    %v4215 = vsel %vm1540, %v4213, 0.0
    %v4216 = vsel %vm1540, %v4214, 0.0
    %v4217 = vadd.f32 %v4215, %v4216
    %v4218 = vrot.slane %v4217, 4
    %v4219 = vadd.f32 %v4217, %v4218
    %v4220 = vrot.slane %v4219, 2
    %v4221 = vadd.f32 %v4219, %v4220
    %v4222 = vrot.slane %v4221, 1
    %v4223 = vadd.f32 %v4221, %v4222
    %v4224 = vmul.f32 %v4223, %v1242
    %v4225 = vadd.f32 %v4224, 1e-05
    %v4226 = vrsqrt.pop %v4225
    %v4227 = vmul.f32 %v4211, %v4226
    %v4228 = vmul.f32 %v4212, %v4226
    %v4229 = vmax.f32 %v4227, 0.0
    %v4230 = vmax.f32 %v4228, 0.0
    %v4231 = vsel %vm1571, %v4229, -inf
    %v4232 = vrot.slane %v4231, 4
    %v4233 = vmax.f32 %v4231, %v4232
    %v4234 = vrot.slane %v4233, 2
    %v4235 = vmax.f32 %v4233, %v4234
    %v4236 = vrot.slane %v4235, 1
    %v4237 = vmax.f32 %v4235, %v4236
    %v4238 = vsel %vm1579, %v4229, -inf
    %v4239 = vrot.slane %v4238, 4
    %v4240 = vmax.f32 %v4238, %v4239
    %v4241 = vrot.slane %v4240, 2
    %v4242 = vmax.f32 %v4240, %v4241
    %v4243 = vrot.slane %v4242, 1
    %v4244 = vmax.f32 %v4242, %v4243
    %v4245 = vsel %vm1571, %v4230, -inf
    %v4246 = vrot.slane %v4245, 4
    %v4247 = vmax.f32 %v4245, %v4246
    %v4248 = vrot.slane %v4247, 2
    %v4249 = vmax.f32 %v4247, %v4248
    %v4250 = vrot.slane %v4249, 1
    %v4251 = vmax.f32 %v4249, %v4250
    %v4252 = vsel %vm1579, %v4230, -inf
    %v4253 = vrot.slane %v4252, 4
    %v4254 = vmax.f32 %v4252, %v4253
    %v4255 = vrot.slane %v4254, 2
    %v4256 = vmax.f32 %v4254, %v4255
    %v4257 = vrot.slane %v4256, 1
    %v4258 = vmax.f32 %v4256, %v4257
    %v4259 = vsel %vm2025, %v3813, %v3820
    %v4260 = vsel %vm2027, %v4259, %v3827
    %v4261 = vsel %vm2029, %v4260, %v3834
    %v4262 = vsel %vm1205, %v4261, %v4237
    %v4263 = vsel %vm2032, %v4262, %v4244
    %v4264 = vsel %vm2034, %v4263, %v4251
    %v4265 = vsel %vm2036, %v4264, %v4258
    %v4266 = vld [vmem:[%s13] sm:$0xff]
    %v4267 = vld [vmem:[%s13 + $0x8] sm:$0xff]
    %v4268 = vld [vmem:[%s13 + $0x10] sm:$0xff]
    %v4269 = vld [vmem:[%s13 + $0x18] sm:$0xff]
    %v4270 = vld [vmem:[%s13 + $0x20] sm:$0xff]
    %v4271 = vld [vmem:[%s13 + $0x28] sm:$0xff]
    %v4272 = vld [vmem:[%s13 + $0x30] sm:$0xff]
    %v4273 = vld [vmem:[%s13 + $0x38] sm:$0xff]
    %v4274 = vld [vmem:[%s13 + $0x40] sm:$0xff]
    %v4275 = vld [vmem:[%s13 + $0x48] sm:$0xff]
    %v4276 = vld [vmem:[%s13 + $0x50] sm:$0xff]
    %v4277 = vld [vmem:[%s13 + $0x58] sm:$0xff]
    %v4278 = vld [vmem:[%s13 + $0x60] sm:$0xff]
    %v4279 = vld [vmem:[%s13 + $0x68] sm:$0xff]
    %v4280 = vld [vmem:[%s13 + $0x70] sm:$0xff]
    %v4281 = vld [vmem:[%s13 + $0x78] sm:$0xff]
    %v4282 = vld [vmem:[%s14] sm:$0xff]
    %v4283 = vld [vmem:[%s14 + $0x8] sm:$0xff]
    %v4284 = vld [vmem:[%s14 + $0x10] sm:$0xff]
    %v4285 = vld [vmem:[%s14 + $0x18] sm:$0xff]
    %v4287 = vsel %vm1540, %v4265, 0
    %4289 = vmatprep.subr.mxu0 0.0
    %4290 = vmatpush1.msra.mxu0 %v4282
    %4291 = vmatprep.subr.mxu0 0.0
    %4292 = vmatpush1.msra.mxu0 %v4283
    %4293 = vmatprep.subr.mxu0 0.0
    %4294 = vmatpush1.msra.mxu0 %v4284
    %4295 = vmatprep.subr.mxu0 0.0
    %4296 = vmatpush1.msra.mxu0 %v4285
    %4297 = vmatprep.subr.mxu0 0.0
    %4298 = vmatpush1.msra.mxu0 0.0
    %4299 = vmatprep.subr.mxu0 0.0
    %4300 = vmatpush1.msra.mxu0 0.0
    %4301 = vmatprep.subr.mxu0 0.0
    %4302 = vmatpush1.msra.mxu0 0.0
    %4303 = vmatprep.subr.mxu0 0.0
    %4304 = vmatpush1.msra.mxu0 0.0
    %4305 = vmatprep.subr.mxu0 0.0
    %4306 = vmatpush1.msra.mxu0 0.0
    %4307 = vmatprep.subr.mxu0 0.0
    %4308 = vmatpush1.msra.mxu0 0.0
    %4309 = vmatprep.subr.mxu0 0.0
    %4310 = vmatpush1.msra.mxu0 0.0
    %4311 = vmatprep.subr.mxu0 0.0
    %4312 = vmatpush1.msra.mxu0 0.0
    %4313 = vmatprep.subr.mxu0 0.0
    %4314 = vmatpush1.msra.mxu0 0.0
    %4315 = vmatprep.subr.mxu0 0.0
    %4316 = vmatpush1.msra.mxu0 0.0
    %4317 = vmatprep.subr.mxu0 0.0
    %4318 = vmatpush1.msra.mxu0 0.0
    %4319 = vmatprep.subr.mxu0 0.0
    %4320 = vmatpush1.msra.mxu0 0.0
    %4321 = vmatprep.subr.mxu0 0.0
    %4322 = vmatpush1.msra.mxu0 0.0
    %4323 = vmatprep.subr.mxu0 0.0
    %4324 = vmatpush1.msra.mxu0 0.0
    %4325 = vmatprep.subr.mxu0 0.0
    %4326 = vmatpush1.msra.mxu0 0.0
    %4327 = vmatprep.subr.mxu0 0.0
    %4328 = vmatpush1.msra.mxu0 0.0
    %4329 = vmatprep.subr.mxu0 0.0
    %4330 = vmatpush1.msra.mxu0 0.0
    %4331 = vmatprep.subr.mxu0 0.0
    %4332 = vmatpush1.msra.mxu0 0.0
    %4333 = vmatprep.subr.mxu0 0.0
    %4334 = vmatpush1.msra.mxu0 0.0
    %4335 = vmatprep.subr.mxu0 0.0
    %4336 = vmatpush1.msra.mxu0 0.0
    %4337 = vmatprep.subr.mxu0 0.0
    %4338 = vmatpush1.msra.mxu0 0.0
    %4339 = vmatprep.subr.mxu0 0.0
    %4340 = vmatpush1.msra.mxu0 0.0
    %4341 = vmatprep.subr.mxu0 0.0
    %4342 = vmatpush1.msra.mxu0 0.0
    %4343 = vmatprep.subr.mxu0 0.0
    %4344 = vmatpush1.msra.mxu0 0.0
    %4345 = vmatprep.subr.mxu0 0.0
    %4346 = vmatpush1.msra.mxu0 0.0
    %4347 = vmatprep.subr.mxu0 0.0
    %4348 = vmatpush1.msra.mxu0 0.0
    %4349 = vmatprep.subr.mxu0 0.0
    %4350 = vmatpush1.msra.mxu0 0.0
    %4351 = vmatprep.subr.mxu0 0.0
    %4352 = vmatpush1.msra.mxu0 0.0
    %4353 = vmatprep.mubr.f32.mxu0 0.0
    %4354 = vmatmul.mubr.f32.gmra.mrb[0].mxu0 %v4287
    %v4355 = vpop.f32.mrb[0].mxu0
    %v4356 = vadd.f32 0.0, %v4355
    %v4357 = vpop.f32.mrb[0].mxu0
    %4358 = vdwg.mxu0
    %4359 = vmatprep.subr.mxu0 0.0
    %4360 = vmatpush1.msra.mxu0 %v4266
    %4361 = vmatprep.subr.mxu0 0.0
    %4362 = vmatpush1.msra.mxu0 %v4267
    %4363 = vmatprep.subr.mxu0 0.0
    %4364 = vmatpush1.msra.mxu0 %v4268
    %4365 = vmatprep.subr.mxu0 0.0
    %4366 = vmatpush1.msra.mxu0 %v4269
    %4367 = vmatprep.subr.mxu0 0.0
    %4368 = vmatpush1.msra.mxu0 %v4270
    %4369 = vmatprep.subr.mxu0 0.0
    %4370 = vmatpush1.msra.mxu0 %v4271
    %4371 = vmatprep.subr.mxu0 0.0
    %4372 = vmatpush1.msra.mxu0 %v4272
    %4373 = vmatprep.subr.mxu0 0.0
    %4374 = vmatpush1.msra.mxu0 %v4273
    %4375 = vmatprep.subr.mxu0 0.0
    %4376 = vmatpush1.msra.mxu0 %v4274
    %4377 = vmatprep.subr.mxu0 0.0
    %4378 = vmatpush1.msra.mxu0 %v4275
    %4379 = vmatprep.subr.mxu0 0.0
    %4380 = vmatpush1.msra.mxu0 %v4276
    %4381 = vmatprep.subr.mxu0 0.0
    %4382 = vmatpush1.msra.mxu0 %v4277
    %4383 = vmatprep.subr.mxu0 0.0
    %4384 = vmatpush1.msra.mxu0 %v4278
    %4385 = vmatprep.subr.mxu0 0.0
    %4386 = vmatpush1.msra.mxu0 %v4279
    %4387 = vmatprep.subr.mxu0 0.0
    %4388 = vmatpush1.msra.mxu0 %v4280
    %4389 = vmatprep.subr.mxu0 0.0
    %4390 = vmatpush1.msra.mxu0 %v4281
    %4391 = vmatprep.subr.mxu0 0.0
    %4392 = vmatpush1.msra.mxu0 0.0
    %4393 = vmatprep.subr.mxu0 0.0
    %4394 = vmatpush1.msra.mxu0 0.0
    %4395 = vmatprep.subr.mxu0 0.0
    %4396 = vmatpush1.msra.mxu0 0.0
    %4397 = vmatprep.subr.mxu0 0.0
    %4398 = vmatpush1.msra.mxu0 0.0
    %4399 = vmatprep.subr.mxu0 0.0
    %4400 = vmatpush1.msra.mxu0 0.0
    %4401 = vmatprep.subr.mxu0 0.0
    %4402 = vmatpush1.msra.mxu0 0.0
    %4403 = vmatprep.subr.mxu0 0.0
    %4404 = vmatpush1.msra.mxu0 0.0
    %4405 = vmatprep.subr.mxu0 0.0
    %4406 = vmatpush1.msra.mxu0 0.0
    %4407 = vmatprep.subr.mxu0 0.0
    %4408 = vmatpush1.msra.mxu0 0.0
    %4409 = vmatprep.subr.mxu0 0.0
    %4410 = vmatpush1.msra.mxu0 0.0
    %4411 = vmatprep.subr.mxu0 0.0
    %4412 = vmatpush1.msra.mxu0 0.0
    %4413 = vmatprep.subr.mxu0 0.0
    %4414 = vmatpush1.msra.mxu0 0.0
    %4415 = vmatprep.subr.mxu0 0.0
    %4416 = vmatpush1.msra.mxu0 0.0
    %4417 = vmatprep.subr.mxu0 0.0
    %4418 = vmatpush1.msra.mxu0 0.0
    %4419 = vmatprep.subr.mxu0 0.0
    %4420 = vmatpush1.msra.mxu0 0.0
    %4421 = vmatprep.subr.mxu0 0.0
    %4422 = vmatpush1.msra.mxu0 0.0
    %4423 = vmatprep.mubr.f32.mxu0 0.0
    %4424 = vmatmul.mubr.f32.gmra.mrb[0].mxu0 %v2803
    %v4425 = vpop.f32.mrb[0].mxu0
    %v4426 = vadd.f32 %v4356, %v4425
    %v4427 = vpop.f32.mrb[0].mxu0
    %4428 = vdwg.mxu0
    %v4429 = vld [vmem:[%s15] sm:$0x1]
    %v4431 = vlaneseq
    %v4432 = vshrl.u32 %v4431, 7
    %v4433 = vsub.s32 0, %v4432
    %v4434 = vrot.slane %v4429, %v4433
    %v4436 = vadd.f32 %v4426, %v4434
    %v4437 = vsel %vm2209, %v4436, 0.0
    %v4438 = vrot.slane %v4437, 4
    %v4439 = vadd.f32 %v4437, %v4438
    %v4440 = vrot.slane %v4439, 2
    %v4441 = vadd.f32 %v4439, %v4440
    %v4442 = vrot.slane %v4441, 1
    %v4443 = vadd.f32 %v4441, %v4442
    %v4444 = vmul.f32 %v4443, %v2217
    %v4445 = vsub.f32 %v4436, %v4444
    %v4446 = vmul.f32 %v4445, %v4445
    %v4447 = vsel %vm2209, %v4446, 0.0
    %v4448 = vrot.slane %v4447, 4
    %v4449 = vadd.f32 %v4447, %v4448
    %v4450 = vrot.slane %v4449, 2
    %v4451 = vadd.f32 %v4449, %v4450
    %v4452 = vrot.slane %v4451, 1
    %v4453 = vadd.f32 %v4451, %v4452
    %v4454 = vmul.f32 %v4453, %v2217
    %v4455 = vadd.f32 %v4454, 1e-05
    %v4456 = vrsqrt.pop %v4455
    %v4457 = vmul.f32 %v4445, %v4456
    %v4458 = vmax.f32 %v4457, 0.0
    %v4459 = vld [vmem:[%s16] sm:$0xff]
    %v4460 = vld [vmem:[%s16 + $0x8] sm:$0xff]
    %v4461 = vld [vmem:[%s16 + $0x10] sm:$0xff]
    %v4462 = vld [vmem:[%s16 + $0x18] sm:$0xff]
    %v4463 = vld [vmem:[%s16 + $0x20] sm:$0xff]
    %v4464 = vld [vmem:[%s16 + $0x28] sm:$0xff]
    %v4465 = vld [vmem:[%s16 + $0x30] sm:$0xff]
    %v4466 = vld [vmem:[%s16 + $0x38] sm:$0xff]
    %v4467 = vld [vmem:[%s17] sm:$0x1]
    %v4469 = vlaneseq
    %v4470 = vshrl.u32 %v4469, 7
    %v4471 = vsub.s32 0, %v4470
    %v4472 = vrot.slane %v4467, %v4471
    %v4475 = vsel %vm2209, %v4458, 0
    %4477 = vmatprep.subr.mxu0 0.0
    %4478 = vmatpush1.msra.mxu0 %v4459
    %4479 = vmatprep.subr.mxu0 0.0
    %4480 = vmatpush1.msra.mxu0 %v4460
    %4481 = vmatprep.subr.mxu0 0.0
    %4482 = vmatpush1.msra.mxu0 %v4461
    %4483 = vmatprep.subr.mxu0 0.0
    %4484 = vmatpush1.msra.mxu0 %v4462
    %4485 = vmatprep.subr.mxu0 0.0
    %4486 = vmatpush1.msra.mxu0 %v4463
    %4487 = vmatprep.subr.mxu0 0.0
    %4488 = vmatpush1.msra.mxu0 %v4464
    %4489 = vmatprep.subr.mxu0 0.0
    %4490 = vmatpush1.msra.mxu0 %v4465
    %4491 = vmatprep.subr.mxu0 0.0
    %4492 = vmatpush1.msra.mxu0 %v4466
    %4493 = vmatprep.subr.mxu0 0.0
    %4494 = vmatpush1.msra.mxu0 0.0
    %4495 = vmatprep.subr.mxu0 0.0
    %4496 = vmatpush1.msra.mxu0 0.0
    %4497 = vmatprep.subr.mxu0 0.0
    %4498 = vmatpush1.msra.mxu0 0.0
    %4499 = vmatprep.subr.mxu0 0.0
    %4500 = vmatpush1.msra.mxu0 0.0
    %4501 = vmatprep.subr.mxu0 0.0
    %4502 = vmatpush1.msra.mxu0 0.0
    %4503 = vmatprep.subr.mxu0 0.0
    %4504 = vmatpush1.msra.mxu0 0.0
    %4505 = vmatprep.subr.mxu0 0.0
    %4506 = vmatpush1.msra.mxu0 0.0
    %4507 = vmatprep.subr.mxu0 0.0
    %4508 = vmatpush1.msra.mxu0 0.0
    %4509 = vmatprep.subr.mxu0 0.0
    %4510 = vmatpush1.msra.mxu0 0.0
    %4511 = vmatprep.subr.mxu0 0.0
    %4512 = vmatpush1.msra.mxu0 0.0
    %4513 = vmatprep.subr.mxu0 0.0
    %4514 = vmatpush1.msra.mxu0 0.0
    %4515 = vmatprep.subr.mxu0 0.0
    %4516 = vmatpush1.msra.mxu0 0.0
    %4517 = vmatprep.subr.mxu0 0.0
    %4518 = vmatpush1.msra.mxu0 0.0
    %4519 = vmatprep.subr.mxu0 0.0
    %4520 = vmatpush1.msra.mxu0 0.0
    %4521 = vmatprep.subr.mxu0 0.0
    %4522 = vmatpush1.msra.mxu0 0.0
    %4523 = vmatprep.subr.mxu0 0.0
    %4524 = vmatpush1.msra.mxu0 0.0
    %4525 = vmatprep.subr.mxu0 0.0
    %4526 = vmatpush1.msra.mxu0 0.0
    %4527 = vmatprep.subr.mxu0 0.0
    %4528 = vmatpush1.msra.mxu0 0.0
    %4529 = vmatprep.subr.mxu0 0.0
    %4530 = vmatpush1.msra.mxu0 0.0
    %4531 = vmatprep.subr.mxu0 0.0
    %4532 = vmatpush1.msra.mxu0 0.0
    %4533 = vmatprep.subr.mxu0 0.0
    %4534 = vmatpush1.msra.mxu0 0.0
    %4535 = vmatprep.subr.mxu0 0.0
    %4536 = vmatpush1.msra.mxu0 0.0
    %4537 = vmatprep.subr.mxu0 0.0
    %4538 = vmatpush1.msra.mxu0 0.0
    %4539 = vmatprep.subr.mxu0 0.0
    %4540 = vmatpush1.msra.mxu0 0.0
    %4541 = vmatprep.mubr.f32.mxu0 0.0
    %4542 = vmatmul.mubr.f32.gmra.mrb[0].mxu0 %v4475
    %v4543 = vpop.f32.mrb[0].mxu0
    %v4544 = vadd.f32 %v4472, %v4543
    %v4545 = vpop.f32.mrb[0].mxu0
    %4546 = vdwg.mxu0
    %v4547 = vrot.slane %v4544, 4
    %v4548 = vadd.f32 %v4544, %v4547
    %v4549 = vrot.slane %v4548, 2
    %v4550 = vadd.f32 %v4548, %v4549
    %v4551 = vrot.slane %v4550, 1
    %v4552 = vadd.f32 %v4550, %v4551
    %v4553 = vmul.f32 %v4552, %v2217
    %v4554 = vsub.f32 %v4544, %v4553
    %v4555 = vmul.f32 %v4554, %v4554
    %v4556 = vrot.slane %v4555, 4
    %v4557 = vadd.f32 %v4555, %v4556
    %v4558 = vrot.slane %v4557, 2
    %v4559 = vadd.f32 %v4557, %v4558
    %v4560 = vrot.slane %v4559, 1
    %v4561 = vadd.f32 %v4559, %v4560
    %v4562 = vmul.f32 %v4561, %v2217
    %v4563 = vadd.f32 %v4562, 1e-05
    %v4564 = vrsqrt.pop %v4563
    %v4565 = vmul.f32 %v4554, %v4564
    %v4566 = vmax.f32 %v4565, 0.0
    %s4567 = scalar_lea.vmem %s18, 8
    %4568 = vst [vmem:[%s4567] sm:$0xff] %v2894
    %v4569 = vld [vmem:[%s3] sm:$0xff]
    %v4570 = vld [vmem:[%s3 + $0x8] sm:$0xff]
    %v4571 = vld [vmem:[%s3 + $0x10] sm:$0xff]
    %v4572 = vld [vmem:[%s3 + $0x18] sm:$0xff]
    %v4573 = vld [vmem:[%s3 + $0x20] sm:$0xff]
    %v4574 = vld [vmem:[%s3 + $0x28] sm:$0xff]
    %v4575 = vld [vmem:[%s3 + $0x30] sm:$0xff]
    %v4576 = vld [vmem:[%s3 + $0x38] sm:$0xff]
    %v4577 = vld [vmem:[%s3 + $0x40] sm:$0xff]
    %v4578 = vld [vmem:[%s3 + $0x48] sm:$0xff]
    %v4579 = vld [vmem:[%s3 + $0x50] sm:$0xff]
    %v4580 = vld [vmem:[%s3 + $0x58] sm:$0xff]
    %v4581 = vld [vmem:[%s3 + $0x60] sm:$0xff]
    %v4582 = vld [vmem:[%s3 + $0x68] sm:$0xff]
    %v4583 = vld [vmem:[%s3 + $0x70] sm:$0xff]
    %v4584 = vld [vmem:[%s3 + $0x78] sm:$0xff]
    %v4585 = vld [vmem:[%s3 + $0x80] sm:$0xff]
    %v4586 = vld [vmem:[%s3 + $0x88] sm:$0xff]
    %v4587 = vld [vmem:[%s3 + $0x90] sm:$0xff]
    %v4588 = vld [vmem:[%s3 + $0x98] sm:$0xff]
    %v4589 = vld [vmem:[%s3 + $0xa0] sm:$0xff]
    %v4590 = vld [vmem:[%s3 + $0xa8] sm:$0xff]
    %v4591 = vld [vmem:[%s3 + $0xb0] sm:$0xff]
    %v4592 = vld [vmem:[%s3 + $0xb8] sm:$0xff]
    %v4593 = vld [vmem:[%s3 + $0xc0] sm:$0xff]
    %v4594 = vld [vmem:[%s3 + $0xc8] sm:$0xff]
    %v4595 = vld [vmem:[%s3 + $0xd0] sm:$0xff]
    %v4596 = vld [vmem:[%s3 + $0xd8] sm:$0xff]
    %v4597 = vld [vmem:[%s3 + $0xe0] sm:$0xff]
    %v4598 = vld [vmem:[%s3 + $0xe8] sm:$0xff]
    %v4599 = vld [vmem:[%s3 + $0xf0] sm:$0xff]
    %v4600 = vld [vmem:[%s3 + $0xf8] sm:$0xff]
    %v4601 = vld [vmem:[%s3 + $0x100] sm:$0xff]
    %v4602 = vld [vmem:[%s3 + $0x108] sm:$0xff]
    %v4603 = vld [vmem:[%s3 + $0x110] sm:$0xff]
    %v4604 = vld [vmem:[%s3 + $0x118] sm:$0xff]
    %v4605 = vld [vmem:[%s3 + $0x120] sm:$0xff]
    %v4606 = vld [vmem:[%s3 + $0x128] sm:$0xff]
    %v4607 = vld [vmem:[%s3 + $0x130] sm:$0xff]
    %v4608 = vld [vmem:[%s3 + $0x138] sm:$0xff]
    %v4609 = vld [vmem:[%s3 + $0x140] sm:$0xff]
    %v4610 = vld [vmem:[%s3 + $0x148] sm:$0xff]
    %v4611 = vld [vmem:[%s3 + $0x150] sm:$0xff]
    %v4612 = vld [vmem:[%s3 + $0x158] sm:$0xff]
    %v4613 = vld [vmem:[%s3 + $0x160] sm:$0xff]
    %v4614 = vld [vmem:[%s3 + $0x168] sm:$0xff]
    %v4615 = vld [vmem:[%s3 + $0x170] sm:$0xff]
    %v4616 = vld [vmem:[%s3 + $0x178] sm:$0xff]
    %v4617 = vld [vmem:[%s3 + $0x180] sm:$0xff]
    %v4618 = vld [vmem:[%s3 + $0x188] sm:$0xff]
    %v4619 = vld [vmem:[%s3 + $0x190] sm:$0xff]
    %v4620 = vld [vmem:[%s3 + $0x198] sm:$0xff]
    %v4621 = vld [vmem:[%s3 + $0x1a0] sm:$0xff]
    %v4622 = vld [vmem:[%s3 + $0x1a8] sm:$0xff]
    %v4623 = vld [vmem:[%s3 + $0x1b0] sm:$0xff]
    %v4624 = vld [vmem:[%s3 + $0x1b8] sm:$0xff]
    %v4625 = vld [vmem:[%s3 + $0x1c0] sm:$0xff]
    %v4626 = vld [vmem:[%s3 + $0x1c8] sm:$0xff]
    %v4627 = vld [vmem:[%s3 + $0x1d0] sm:$0xff]
    %v4628 = vld [vmem:[%s3 + $0x1d8] sm:$0xff]
    %v4629 = vld [vmem:[%s3 + $0x1e0] sm:$0xff]
    %v4630 = vld [vmem:[%s3 + $0x1e8] sm:$0xff]
    %v4631 = vld [vmem:[%s3 + $0x1f0] sm:$0xff]
    %v4632 = vld [vmem:[%s3 + $0x1f8] sm:$0xff]
    %v4633 = vld [vmem:[#allocation2] sm:$0xff]
    %v4634 = vld [vmem:[#allocation2 + $0x8] sm:$0xff]
    %v4635 = vld [vmem:[#allocation2 + $0x10] sm:$0xff]
    %v4636 = vld [vmem:[#allocation2 + $0x18] sm:$0xff]
    %v4637 = vld [vmem:[#allocation2 + $0x20] sm:$0xff]
    %v4638 = vld [vmem:[#allocation2 + $0x28] sm:$0xff]
    %v4639 = vld [vmem:[#allocation2 + $0x30] sm:$0xff]
    %v4640 = vld [vmem:[#allocation2 + $0x38] sm:$0xff]
    %v4641 = vld [vmem:[#allocation2 + $0x40] sm:$0xff]
    %v4642 = vld [vmem:[#allocation2 + $0x48] sm:$0xff]
    %v4643 = vld [vmem:[#allocation2 + $0x50] sm:$0xff]
    %v4644 = vld [vmem:[#allocation2 + $0x58] sm:$0xff]
    %v4645 = vld [vmem:[#allocation2 + $0x60] sm:$0xff]
    %v4646 = vld [vmem:[#allocation2 + $0x68] sm:$0xff]
    %v4647 = vld [vmem:[#allocation2 + $0x70] sm:$0xff]
    %v4648 = vld [vmem:[#allocation2 + $0x78] sm:$0xff]
    %v4649 = vld [vmem:[#allocation2 + $0x80] sm:$0xff]
    %v4650 = vld [vmem:[#allocation2 + $0x88] sm:$0xff]
    %v4651 = vld [vmem:[#allocation2 + $0x90] sm:$0xff]
    %v4652 = vld [vmem:[#allocation2 + $0x98] sm:$0xff]
    %v4653 = vld [vmem:[#allocation2 + $0xa0] sm:$0xff]
    %v4654 = vld [vmem:[#allocation2 + $0xa8] sm:$0xff]
    %v4655 = vld [vmem:[#allocation2 + $0xb0] sm:$0xff]
    %v4656 = vld [vmem:[#allocation2 + $0xb8] sm:$0xff]
    %v4657 = vld [vmem:[#allocation2 + $0xc0] sm:$0xff]
    %v4658 = vld [vmem:[#allocation2 + $0xc8] sm:$0xff]
    %v4659 = vld [vmem:[#allocation2 + $0xd0] sm:$0xff]
    %v4660 = vld [vmem:[#allocation2 + $0xd8] sm:$0xff]
    %v4661 = vld [vmem:[#allocation2 + $0xe0] sm:$0xff]
    %v4662 = vld [vmem:[#allocation2 + $0xe8] sm:$0xff]
    %v4663 = vld [vmem:[#allocation2 + $0xf0] sm:$0xff]
    %v4664 = vld [vmem:[#allocation2 + $0xf8] sm:$0xff]
    %v4665 = vld [vmem:[#allocation2 + $0x100] sm:$0xff]
    %v4666 = vld [vmem:[#allocation2 + $0x108] sm:$0xff]
    %v4667 = vld [vmem:[#allocation2 + $0x110] sm:$0xff]
    %v4668 = vld [vmem:[#allocation2 + $0x118] sm:$0xff]
    %v4669 = vld [vmem:[#allocation2 + $0x120] sm:$0xff]
    %v4670 = vld [vmem:[#allocation2 + $0x128] sm:$0xff]
    %v4671 = vld [vmem:[#allocation2 + $0x130] sm:$0xff]
    %v4672 = vld [vmem:[#allocation2 + $0x138] sm:$0xff]
    %v4673 = vld [vmem:[#allocation2 + $0x140] sm:$0xff]
    %v4674 = vld [vmem:[#allocation2 + $0x148] sm:$0xff]
    %v4675 = vld [vmem:[#allocation2 + $0x150] sm:$0xff]
    %v4676 = vld [vmem:[#allocation2 + $0x158] sm:$0xff]
    %v4677 = vld [vmem:[#allocation2 + $0x160] sm:$0xff]
    %v4678 = vld [vmem:[#allocation2 + $0x168] sm:$0xff]
    %v4679 = vld [vmem:[#allocation2 + $0x170] sm:$0xff]
    %v4680 = vld [vmem:[#allocation2 + $0x178] sm:$0xff]
    %v4681 = vld [vmem:[#allocation2 + $0x180] sm:$0xff]
    %v4682 = vld [vmem:[#allocation2 + $0x188] sm:$0xff]
    %v4683 = vld [vmem:[#allocation2 + $0x190] sm:$0xff]
    %v4684 = vld [vmem:[#allocation2 + $0x198] sm:$0xff]
    %v4685 = vld [vmem:[#allocation2 + $0x1a0] sm:$0xff]
    %v4686 = vld [vmem:[#allocation2 + $0x1a8] sm:$0xff]
    %v4687 = vld [vmem:[#allocation2 + $0x1b0] sm:$0xff]
    %v4688 = vld [vmem:[#allocation2 + $0x1b8] sm:$0xff]
    %v4689 = vld [vmem:[#allocation2 + $0x1c0] sm:$0xff]
    %v4690 = vld [vmem:[#allocation2 + $0x1c8] sm:$0xff]
    %v4691 = vld [vmem:[#allocation2 + $0x1d0] sm:$0xff]
    %v4692 = vld [vmem:[#allocation2 + $0x1d8] sm:$0xff]
    %v4693 = vld [vmem:[#allocation2 + $0x1e0] sm:$0xff]
    %v4694 = vld [vmem:[#allocation2 + $0x1e8] sm:$0xff]
    %v4695 = vld [vmem:[#allocation2 + $0x1f0] sm:$0xff]
    %v4696 = vld [vmem:[#allocation2 + $0x1f8] sm:$0xff]
    %4697 = vmatprep.subr.mxu0 %v4634
    %4698 = vmatpush1.msra.mxu0 %v4633
    %4699 = vmatprep.subr.mxu0 %v4638
    %4700 = vmatpush1.msra.mxu0 %v4637
    %4701 = vmatprep.subr.mxu0 %v4642
    %4702 = vmatpush1.msra.mxu0 %v4641
    %4703 = vmatprep.subr.mxu0 %v4646
    %4704 = vmatpush1.msra.mxu0 %v4645
    %4705 = vmatprep.subr.mxu0 %v4650
    %4706 = vmatpush1.msra.mxu0 %v4649
    %4707 = vmatprep.subr.mxu0 %v4654
    %4708 = vmatpush1.msra.mxu0 %v4653
    %4709 = vmatprep.subr.mxu0 %v4658
    %4710 = vmatpush1.msra.mxu0 %v4657
    %4711 = vmatprep.subr.mxu0 %v4662
    %4712 = vmatpush1.msra.mxu0 %v4661
    %4713 = vmatprep.subr.mxu0 %v4666
    %4714 = vmatpush1.msra.mxu0 %v4665
    %4715 = vmatprep.subr.mxu0 %v4670
    %4716 = vmatpush1.msra.mxu0 %v4669
    %4717 = vmatprep.subr.mxu0 %v4674
    %4718 = vmatpush1.msra.mxu0 %v4673
    %4719 = vmatprep.subr.mxu0 %v4678
    %4720 = vmatpush1.msra.mxu0 %v4677
    %4721 = vmatprep.subr.mxu0 %v4682
    %4722 = vmatpush1.msra.mxu0 %v4681
    %4723 = vmatprep.subr.mxu0 %v4686
    %4724 = vmatpush1.msra.mxu0 %v4685
    %4725 = vmatprep.subr.mxu0 %v4690
    %4726 = vmatpush1.msra.mxu0 %v4689
    %4727 = vmatprep.subr.mxu0 %v4694
    %4728 = vmatpush1.msra.mxu0 %v4693
    %4729 = vmatprep.subr.mxu0 0.0
    %4730 = vmatpush1.msra.mxu0 0.0
    %4731 = vmatprep.subr.mxu0 0.0
    %4732 = vmatpush1.msra.mxu0 0.0
    %4733 = vmatprep.subr.mxu0 0.0
    %4734 = vmatpush1.msra.mxu0 0.0
    %4735 = vmatprep.subr.mxu0 0.0
    %4736 = vmatpush1.msra.mxu0 0.0
    %4737 = vmatprep.subr.mxu0 0.0
    %4738 = vmatpush1.msra.mxu0 0.0
    %4739 = vmatprep.subr.mxu0 0.0
    %4740 = vmatpush1.msra.mxu0 0.0
    %4741 = vmatprep.subr.mxu0 0.0
    %4742 = vmatpush1.msra.mxu0 0.0
    %4743 = vmatprep.subr.mxu0 0.0
    %4744 = vmatpush1.msra.mxu0 0.0
    %4745 = vmatprep.subr.mxu0 0.0
    %4746 = vmatpush1.msra.mxu0 0.0
    %4747 = vmatprep.subr.mxu0 0.0
    %4748 = vmatpush1.msra.mxu0 0.0
    %4749 = vmatprep.subr.mxu0 0.0
    %4750 = vmatpush1.msra.mxu0 0.0
    %4751 = vmatprep.subr.mxu0 0.0
    %4752 = vmatpush1.msra.mxu0 0.0
    %4753 = vmatprep.subr.mxu0 0.0
    %4754 = vmatpush1.msra.mxu0 0.0
    %4755 = vmatprep.subr.mxu0 0.0
    %4756 = vmatpush1.msra.mxu0 0.0
    %4757 = vmatprep.subr.mxu0 0.0
    %4758 = vmatpush1.msra.mxu0 0.0
    %4759 = vmatprep.subr.mxu0 0.0
    %4760 = vmatpush1.msra.mxu0 0.0
    %4761 = vmatprep.mubr.f32.mxu0 0.0
    %4762 = vmatmul.mubr.f32.gmra.mrb[0].mxu0 %v4566
    %v4763 = vpop.f32.mrb[0].mxu0
    %v4764 = vadd.f32 0.0, %v4763
    %v4765 = vpop.f32.mrb[0].mxu0
    %v4766 = vadd.f32 0.0, %v4765
    %4767 = vdwg.mxu0
    %4768 = vmatprep.subr.mxu0 %v4636
    %4769 = vmatpush1.msra.mxu0 %v4635
    %4770 = vmatprep.subr.mxu0 %v4640
    %4771 = vmatpush1.msra.mxu0 %v4639
    %4772 = vmatprep.subr.mxu0 %v4644
    %4773 = vmatpush1.msra.mxu0 %v4643
    %4774 = vmatprep.subr.mxu0 %v4648
    %4775 = vmatpush1.msra.mxu0 %v4647
    %4776 = vmatprep.subr.mxu0 %v4652
    %4777 = vmatpush1.msra.mxu0 %v4651
    %4778 = vmatprep.subr.mxu0 %v4656
    %4779 = vmatpush1.msra.mxu0 %v4655
    %4780 = vmatprep.subr.mxu0 %v4660
    %4781 = vmatpush1.msra.mxu0 %v4659
    %4782 = vmatprep.subr.mxu0 %v4664
    %4783 = vmatpush1.msra.mxu0 %v4663
    %4784 = vmatprep.subr.mxu0 %v4668
    %4785 = vmatpush1.msra.mxu0 %v4667
    %4786 = vmatprep.subr.mxu0 %v4672
    %4787 = vmatpush1.msra.mxu0 %v4671
    %4788 = vmatprep.subr.mxu0 %v4676
    %4789 = vmatpush1.msra.mxu0 %v4675
    %4790 = vmatprep.subr.mxu0 %v4680
    %4791 = vmatpush1.msra.mxu0 %v4679
    %4792 = vmatprep.subr.mxu0 %v4684
    %4793 = vmatpush1.msra.mxu0 %v4683
    %4794 = vmatprep.subr.mxu0 %v4688
    %4795 = vmatpush1.msra.mxu0 %v4687
    %4796 = vmatprep.subr.mxu0 %v4692
    %4797 = vmatpush1.msra.mxu0 %v4691
    %4798 = vmatprep.subr.mxu0 %v4696
    %4799 = vmatpush1.msra.mxu0 %v4695
    %4800 = vmatprep.subr.mxu0 0.0
    %4801 = vmatpush1.msra.mxu0 0.0
    %4802 = vmatprep.subr.mxu0 0.0
    %4803 = vmatpush1.msra.mxu0 0.0
    %4804 = vmatprep.subr.mxu0 0.0
    %4805 = vmatpush1.msra.mxu0 0.0
    %4806 = vmatprep.subr.mxu0 0.0
    %4807 = vmatpush1.msra.mxu0 0.0
    %4808 = vmatprep.subr.mxu0 0.0
    %4809 = vmatpush1.msra.mxu0 0.0
    %4810 = vmatprep.subr.mxu0 0.0
    %4811 = vmatpush1.msra.mxu0 0.0
    %4812 = vmatprep.subr.mxu0 0.0
    %4813 = vmatpush1.msra.mxu0 0.0
    %4814 = vmatprep.subr.mxu0 0.0
    %4815 = vmatpush1.msra.mxu0 0.0
    %4816 = vmatprep.subr.mxu0 0.0
    %4817 = vmatpush1.msra.mxu0 0.0
    %4818 = vmatprep.subr.mxu0 0.0
    %4819 = vmatpush1.msra.mxu0 0.0
    %4820 = vmatprep.subr.mxu0 0.0
    %4821 = vmatpush1.msra.mxu0 0.0
    %4822 = vmatprep.subr.mxu0 0.0
    %4823 = vmatpush1.msra.mxu0 0.0
    %4824 = vmatprep.subr.mxu0 0.0
    %4825 = vmatpush1.msra.mxu0 0.0
    %4826 = vmatprep.subr.mxu0 0.0
    %4827 = vmatpush1.msra.mxu0 0.0
    %4828 = vmatprep.subr.mxu0 0.0
    %4829 = vmatpush1.msra.mxu0 0.0
    %4830 = vmatprep.subr.mxu0 0.0
    %4831 = vmatpush1.msra.mxu0 0.0
    %4832 = vmatprep.mubr.f32.mxu0 0.0
    %4833 = vmatmul.mubr.f32.gmra.mrb[0].mxu0 %v4566
    %v4834 = vpop.f32.mrb[0].mxu0
    %v4835 = vadd.f32 0.0, %v4834
    %v4836 = vpop.f32.mrb[0].mxu0
    %v4837 = vadd.f32 0.0, %v4836
    %4838 = vdwg.mxu0
    %4839 = vmatprep.subr.mxu0 %v4570
    %4840 = vmatpush1.msra.mxu0 %v4569
    %4841 = vmatprep.subr.mxu0 %v4574
    %4842 = vmatpush1.msra.mxu0 %v4573
    %4843 = vmatprep.subr.mxu0 %v4578
    %4844 = vmatpush1.msra.mxu0 %v4577
    %4845 = vmatprep.subr.mxu0 %v4582
    %4846 = vmatpush1.msra.mxu0 %v4581
    %4847 = vmatprep.subr.mxu0 %v4586
    %4848 = vmatpush1.msra.mxu0 %v4585
    %4849 = vmatprep.subr.mxu0 %v4590
    %4850 = vmatpush1.msra.mxu0 %v4589
    %4851 = vmatprep.subr.mxu0 %v4594
    %4852 = vmatpush1.msra.mxu0 %v4593
    %4853 = vmatprep.subr.mxu0 %v4598
    %4854 = vmatpush1.msra.mxu0 %v4597
    %4855 = vmatprep.subr.mxu0 %v4602
    %4856 = vmatpush1.msra.mxu0 %v4601
    %4857 = vmatprep.subr.mxu0 %v4606
    %4858 = vmatpush1.msra.mxu0 %v4605
    %4859 = vmatprep.subr.mxu0 %v4610
    %4860 = vmatpush1.msra.mxu0 %v4609
    %4861 = vmatprep.subr.mxu0 %v4614
    %4862 = vmatpush1.msra.mxu0 %v4613
    %4863 = vmatprep.subr.mxu0 %v4618
    %4864 = vmatpush1.msra.mxu0 %v4617
    %4865 = vmatprep.subr.mxu0 %v4622
    %4866 = vmatpush1.msra.mxu0 %v4621
    %4867 = vmatprep.subr.mxu0 %v4626
    %4868 = vmatpush1.msra.mxu0 %v4625
    %4869 = vmatprep.subr.mxu0 %v4630
    %4870 = vmatpush1.msra.mxu0 %v4629
    %4871 = vmatprep.subr.mxu0 0.0
    %4872 = vmatpush1.msra.mxu0 0.0
    %4873 = vmatprep.subr.mxu0 0.0
    %4874 = vmatpush1.msra.mxu0 0.0
    %4875 = vmatprep.subr.mxu0 0.0
    %4876 = vmatpush1.msra.mxu0 0.0
    %4877 = vmatprep.subr.mxu0 0.0
    %4878 = vmatpush1.msra.mxu0 0.0
    %4879 = vmatprep.subr.mxu0 0.0
    %4880 = vmatpush1.msra.mxu0 0.0
    %4881 = vmatprep.subr.mxu0 0.0
    %4882 = vmatpush1.msra.mxu0 0.0
    %4883 = vmatprep.subr.mxu0 0.0
    %4884 = vmatpush1.msra.mxu0 0.0
    %4885 = vmatprep.subr.mxu0 0.0
    %4886 = vmatpush1.msra.mxu0 0.0
    %4887 = vmatprep.subr.mxu0 0.0
    %4888 = vmatpush1.msra.mxu0 0.0
    %4889 = vmatprep.subr.mxu0 0.0
    %4890 = vmatpush1.msra.mxu0 0.0
    %4891 = vmatprep.subr.mxu0 0.0
    %4892 = vmatpush1.msra.mxu0 0.0
    %4893 = vmatprep.subr.mxu0 0.0
    %4894 = vmatpush1.msra.mxu0 0.0
    %4895 = vmatprep.subr.mxu0 0.0
    %4896 = vmatpush1.msra.mxu0 0.0
    %4897 = vmatprep.subr.mxu0 0.0
    %4898 = vmatpush1.msra.mxu0 0.0
    %4899 = vmatprep.subr.mxu0 0.0
    %4900 = vmatpush1.msra.mxu0 0.0
    %4901 = vmatprep.subr.mxu0 0.0
    %4902 = vmatpush1.msra.mxu0 0.0
    %4903 = vmatprep.mubr.f32.mxu0 0.0
    %4904 = vmatmul.mubr.f32.gmra.mrb[0].mxu0 %v2894
    %v4905 = vpop.f32.mrb[0].mxu0
    %v4906 = vadd.f32 %v4764, %v4905
    %v4907 = vpop.f32.mrb[0].mxu0
    %v4908 = vadd.f32 %v4766, %v4907
    %4909 = vdwg.mxu0
    %4910 = vmatprep.subr.mxu0 %v4572
    %4911 = vmatpush1.msra.mxu0 %v4571
    %4912 = vmatprep.subr.mxu0 %v4576
    %4913 = vmatpush1.msra.mxu0 %v4575
    %4914 = vmatprep.subr.mxu0 %v4580
    %4915 = vmatpush1.msra.mxu0 %v4579
    %4916 = vmatprep.subr.mxu0 %v4584
    %4917 = vmatpush1.msra.mxu0 %v4583
    %4918 = vmatprep.subr.mxu0 %v4588
    %4919 = vmatpush1.msra.mxu0 %v4587
    %4920 = vmatprep.subr.mxu0 %v4592
    %4921 = vmatpush1.msra.mxu0 %v4591
    %4922 = vmatprep.subr.mxu0 %v4596
    %4923 = vmatpush1.msra.mxu0 %v4595
    %4924 = vmatprep.subr.mxu0 %v4600
    %4925 = vmatpush1.msra.mxu0 %v4599
    %4926 = vmatprep.subr.mxu0 %v4604
    %4927 = vmatpush1.msra.mxu0 %v4603
    %4928 = vmatprep.subr.mxu0 %v4608
    %4929 = vmatpush1.msra.mxu0 %v4607
    %4930 = vmatprep.subr.mxu0 %v4612
    %4931 = vmatpush1.msra.mxu0 %v4611
    %4932 = vmatprep.subr.mxu0 %v4616
    %4933 = vmatpush1.msra.mxu0 %v4615
    %4934 = vmatprep.subr.mxu0 %v4620
    %4935 = vmatpush1.msra.mxu0 %v4619
    %4936 = vmatprep.subr.mxu0 %v4624
    %4937 = vmatpush1.msra.mxu0 %v4623
    %4938 = vmatprep.subr.mxu0 %v4628
    %4939 = vmatpush1.msra.mxu0 %v4627
    %4940 = vmatprep.subr.mxu0 %v4632
    %4941 = vmatpush1.msra.mxu0 %v4631
    %4942 = vmatprep.subr.mxu0 0.0
    %4943 = vmatpush1.msra.mxu0 0.0
    %4944 = vmatprep.subr.mxu0 0.0
    %4945 = vmatpush1.msra.mxu0 0.0
    %4946 = vmatprep.subr.mxu0 0.0
    %4947 = vmatpush1.msra.mxu0 0.0
    %4948 = vmatprep.subr.mxu0 0.0
    %4949 = vmatpush1.msra.mxu0 0.0
    %4950 = vmatprep.subr.mxu0 0.0
    %4951 = vmatpush1.msra.mxu0 0.0
    %4952 = vmatprep.subr.mxu0 0.0
    %4953 = vmatpush1.msra.mxu0 0.0
    %4954 = vmatprep.subr.mxu0 0.0
    %4955 = vmatpush1.msra.mxu0 0.0
    %4956 = vmatprep.subr.mxu0 0.0
    %4957 = vmatpush1.msra.mxu0 0.0
    %4958 = vmatprep.subr.mxu0 0.0
    %4959 = vmatpush1.msra.mxu0 0.0
    %4960 = vmatprep.subr.mxu0 0.0
    %4961 = vmatpush1.msra.mxu0 0.0
    %4962 = vmatprep.subr.mxu0 0.0
    %4963 = vmatpush1.msra.mxu0 0.0
    %4964 = vmatprep.subr.mxu0 0.0
    %4965 = vmatpush1.msra.mxu0 0.0
    %4966 = vmatprep.subr.mxu0 0.0
    %4967 = vmatpush1.msra.mxu0 0.0
    %4968 = vmatprep.subr.mxu0 0.0
    %4969 = vmatpush1.msra.mxu0 0.0
    %4970 = vmatprep.subr.mxu0 0.0
    %4971 = vmatpush1.msra.mxu0 0.0
    %4972 = vmatprep.subr.mxu0 0.0
    %4973 = vmatpush1.msra.mxu0 0.0
    %4974 = vmatprep.mubr.f32.mxu0 0.0
    %4975 = vmatmul.mubr.f32.gmra.mrb[0].mxu0 %v2894
    %v4976 = vpop.f32.mrb[0].mxu0
    %v4977 = vadd.f32 %v4835, %v4976
    %v4978 = vpop.f32.mrb[0].mxu0
    %v4979 = vadd.f32 %v4837, %v4978
    %4980 = vdwg.mxu0
    %v4981 = vld [vmem:[%s5] sm:$0xf]
    %v4983 = vlaneseq
    %v4984 = vshrl.u32 %v4983, 7
    %v4985 = vsub.s32 0, %v4984
    %v4986 = vrot.slane %v4981, %v4985
    %v4987 = vlaneseq
    %v4988 = vshrl.u32 %v4987, 7
    %v4989 = vsub.s32 1, %v4988
    %v4990 = vrot.slane %v4981, %v4989
    %v4991 = vlaneseq
    %v4992 = vshrl.u32 %v4991, 7
    %v4993 = vsub.s32 2, %v4992
    %v4994 = vrot.slane %v4981, %v4993
    %v4995 = vlaneseq
    %v4996 = vshrl.u32 %v4995, 7
    %v4997 = vsub.s32 3, %v4996
    %v4998 = vrot.slane %v4981, %v4997
    %v5003 = vadd.f32 %v4906, %v4986
    %v5004 = vadd.f32 %v4908, %v4990
    %v5005 = vadd.f32 %v4977, %v4994
    %v5006 = vadd.f32 %v4979, %v4998
    %v5007 = vxor.u32 %v5003, 2147483648
    %v5008 = vmul.f32 %v5007, 1.442695
    %v5009 = vpow.pop %v5008
    %v5010 = vadd.f32 %v5009, 1.0
    %v5011 = vrcp.pop %v5010
    %v5012 = vmul.f32 1.0, %v5011
    %v5013 = vxor.u32 %v5004, 2147483648
    %v5014 = vmul.f32 %v5013, 1.442695
    %v5015 = vpow.pop %v5014
    %v5016 = vadd.f32 %v5015, 1.0
    %v5017 = vrcp.pop %v5016
    %v5018 = vmul.f32 1.0, %v5017
    %v5019 = vtanh.pop %v5005
    %v5020 = vxor.u32 %v5006, 2147483648
    %v5021 = vmul.f32 %v5020, 1.442695
    %v5022 = vpow.pop %v5021
    %v5023 = vadd.f32 %v5022, 1.0
    %v5024 = vrcp.pop %v5023
    %v5025 = vmul.f32 1.0, %v5024
    %v5026 = vmul.f32 %v5018, %v2801
    %v5027 = vmul.f32 %v5012, %v5019
    %v5028 = vadd.f32 %v5026, %v5027
    %v5029 = vtanh.pop %v5028
    %v5030 = vmul.f32 %v5025, %v5029
    %v5031 = vld [vmem:[%s6] sm:$0xff]
    %v5032 = vld [vmem:[%s6 + $0x8] sm:$0xff]
    %v5033 = vld [vmem:[%s6 + $0x10] sm:$0xff]
    %v5034 = vld [vmem:[%s6 + $0x18] sm:$0xff]
    %v5035 = vld [vmem:[%s6 + $0x20] sm:$0xff]
    %v5036 = vld [vmem:[%s6 + $0x28] sm:$0xff]
    %v5037 = vld [vmem:[%s6 + $0x30] sm:$0xff]
    %v5038 = vld [vmem:[%s6 + $0x38] sm:$0xff]
    %v5039 = vld [vmem:[%s6 + $0x40] sm:$0xff]
    %v5040 = vld [vmem:[%s6 + $0x48] sm:$0xff]
    %v5041 = vld [vmem:[%s6 + $0x50] sm:$0xff]
    %v5042 = vld [vmem:[%s6 + $0x58] sm:$0xff]
    %v5043 = vld [vmem:[%s6 + $0x60] sm:$0xff]
    %v5044 = vld [vmem:[%s6 + $0x68] sm:$0xff]
    %v5045 = vld [vmem:[%s6 + $0x70] sm:$0xff]
    %v5046 = vld [vmem:[%s6 + $0x78] sm:$0xff]
    %v5047 = vld [vmem:[%s7] sm:$0x1]
    %v5049 = vlaneseq
    %v5050 = vshrl.u32 %v5049, 7
    %v5051 = vsub.s32 0, %v5050
    %v5052 = vrot.slane %v5047, %v5051
    %5054 = vmatprep.subr.mxu0 0.0
    %5055 = vmatpush1.msra.mxu0 %v5031
    %5056 = vmatprep.subr.mxu0 0.0
    %5057 = vmatpush1.msra.mxu0 %v5032
    %5058 = vmatprep.subr.mxu0 0.0
    %5059 = vmatpush1.msra.mxu0 %v5033
    %5060 = vmatprep.subr.mxu0 0.0
    %5061 = vmatpush1.msra.mxu0 %v5034
    %5062 = vmatprep.subr.mxu0 0.0
    %5063 = vmatpush1.msra.mxu0 %v5035
    %5064 = vmatprep.subr.mxu0 0.0
    %5065 = vmatpush1.msra.mxu0 %v5036
    %5066 = vmatprep.subr.mxu0 0.0
    %5067 = vmatpush1.msra.mxu0 %v5037
    %5068 = vmatprep.subr.mxu0 0.0
    %5069 = vmatpush1.msra.mxu0 %v5038
    %5070 = vmatprep.subr.mxu0 0.0
    %5071 = vmatpush1.msra.mxu0 %v5039
    %5072 = vmatprep.subr.mxu0 0.0
    %5073 = vmatpush1.msra.mxu0 %v5040
    %5074 = vmatprep.subr.mxu0 0.0
    %5075 = vmatpush1.msra.mxu0 %v5041
    %5076 = vmatprep.subr.mxu0 0.0
    %5077 = vmatpush1.msra.mxu0 %v5042
    %5078 = vmatprep.subr.mxu0 0.0
    %5079 = vmatpush1.msra.mxu0 %v5043
    %5080 = vmatprep.subr.mxu0 0.0
    %5081 = vmatpush1.msra.mxu0 %v5044
    %5082 = vmatprep.subr.mxu0 0.0
    %5083 = vmatpush1.msra.mxu0 %v5045
    %5084 = vmatprep.subr.mxu0 0.0
    %5085 = vmatpush1.msra.mxu0 %v5046
    %5086 = vmatprep.subr.mxu0 0.0
    %5087 = vmatpush1.msra.mxu0 0.0
    %5088 = vmatprep.subr.mxu0 0.0
    %5089 = vmatpush1.msra.mxu0 0.0
    %5090 = vmatprep.subr.mxu0 0.0
    %5091 = vmatpush1.msra.mxu0 0.0
    %5092 = vmatprep.subr.mxu0 0.0
    %5093 = vmatpush1.msra.mxu0 0.0
    %5094 = vmatprep.subr.mxu0 0.0
    %5095 = vmatpush1.msra.mxu0 0.0
    %5096 = vmatprep.subr.mxu0 0.0
    %5097 = vmatpush1.msra.mxu0 0.0
    %5098 = vmatprep.subr.mxu0 0.0
    %5099 = vmatpush1.msra.mxu0 0.0
    %5100 = vmatprep.subr.mxu0 0.0
    %5101 = vmatpush1.msra.mxu0 0.0
    %5102 = vmatprep.subr.mxu0 0.0
    %5103 = vmatpush1.msra.mxu0 0.0
    %5104 = vmatprep.subr.mxu0 0.0
    %5105 = vmatpush1.msra.mxu0 0.0
    %5106 = vmatprep.subr.mxu0 0.0
    %5107 = vmatpush1.msra.mxu0 0.0
    %5108 = vmatprep.subr.mxu0 0.0
    %5109 = vmatpush1.msra.mxu0 0.0
    %5110 = vmatprep.subr.mxu0 0.0
    %5111 = vmatpush1.msra.mxu0 0.0
    %5112 = vmatprep.subr.mxu0 0.0
    %5113 = vmatpush1.msra.mxu0 0.0
    %5114 = vmatprep.subr.mxu0 0.0
    %5115 = vmatpush1.msra.mxu0 0.0
    %5116 = vmatprep.subr.mxu0 0.0
    %5117 = vmatpush1.msra.mxu0 0.0
    %5118 = vmatprep.mubr.f32.mxu0 0.0
    %5119 = vmatmul.mubr.f32.gmra.mrb[0].mxu0 %v5030
    %v5120 = vpop.f32.mrb[0].mxu0
    %v5121 = vadd.f32 %v5052, %v5120
    %v5122 = vpop.f32.mrb[0].mxu0
    %5123 = vdwg.mxu0
    %s5124 = scalar_lea.vmem %s18, 16
    %5125 = vst [vmem:[%s5124] sm:$0xff] %v5121
    // Predicated region
    $region86: #{trajectory_generator_st_forward.1} parent=1 // pred_check
      _
    $region87: #{trajectory_generator_st_forward.1} parent=1 // pred_check_branch
      %5127 = sbr.rel (0) target = $region89
    $region88: #{trajectory_generator_st_forward.1} parent=1 // pred_region
      _
    $region89: #{trajectory_generator_st_forward.1} parent=1 // pred_fallthru
      _
    // Predicated region
    $region90: #{trajectory_generator_st_forward.1} parent=1 // pred_check
      _
    $region91: #{trajectory_generator_st_forward.1} parent=1 // pred_check_branch
      %5129 = sbr.rel (0) target = $region93
    $region92: #{trajectory_generator_st_forward.1} parent=1 // pred_region
      _
    $region93: #{trajectory_generator_st_forward.1} parent=1 // pred_fallthru
      _
    %5130 = vsyncpa [#allocation3], 1
    %5131 = vsyncpa [#allocation5], 1

</llo_original>
